<compile_context>
chip_gen: v7x
topology: tpu7x:2x2x1
jax: 0.10.0
libtpu: 0.0.40
codegen_flags: <defaults>
</compile_context>

<pallas_src>
import jax
import jax.numpy as jnp
from jax.experimental import pallas as pl
from jax.experimental.pallas import tpu as pltpu

HIDDEN = 64
_HI = jax.lax.Precision.HIGHEST


def _round_up(n, m):
    return ((n + m - 1) // m) * m


def cppn_kernel(inp_ref, win_ref, wh_ref, bh_ref, wo_ref, bo_ref, out_ref):
    # inp_ref : (Cin_pad, BT) f32   fused [x; y; r; z; 1] input, feature-major
    # win_ref : (64, Cin_pad) f32   fused [wx; wy; wr; wz; bz] weight, transposed
    # wh_ref  : (64, 64)      f32   hidden weight (out, in)
    # bh_ref  : (64, 1)       f32   hidden bias (column)
    # wo_ref  : (64, 1)       f32   output weight (column)
    # bo_ref  : (1, 1)        f32   output bias
    # out_ref : (1, BT)       f32

    # Fused input projection on the MXU; bz is folded in via the constant-1 row.
    h = jnp.tanh(jnp.dot(win_ref[...], inp_ref[...],
                         preferred_element_type=jnp.float32, precision=_HI))
    residual = h

    wh = wh_ref[...]                      # resident for all 3 applications
    bh = bh_ref[...]                      # (64, 1): implicit lane-broadcast add
    for _ in range(3):                    # the same `self.hidden` layer, 3x
        h = jnp.dot(wh, h, preferred_element_type=jnp.float32, precision=_HI)
        h = jnp.tanh(h + bh)
    h = h + residual

    # Output Linear(64 -> 1): sublane (XLU) reduce, lane-dense (1, BT) store.
    logit = jnp.sum(h * wo_ref[...], axis=0, keepdims=True) + bo_ref[...]
    out_ref[...] = jax.nn.sigmoid(logit)


def generator_forward(x, y, r, z, params, *, b_tile=None, max_b_tile=8192):
    """x, y, r: (B, 1); z: (B, z_dim). Returns (B, 1) f32 (sigmoid output)."""
    B = x.shape[0]
    if b_tile is None:
        # >= 2 tiles (v7x megacore), lane-aligned, capped to bound VMEM scratch.
        b_tile = min(max_b_tile, max(128, _round_up(pl.cdiv(B, 2), 128)))
    else:
        b_tile = max(128, _round_up(b_tile, 128))      # (8,128) lane constraint
    num_tiles = pl.cdiv(B, b_tile)
    b_pad = num_tiles * b_tile

    # Fused, feature-major input [x; y; r; z; 1]: (Cin, B).  Built feature-major
    # so no full-array transpose pass is needed; under jit the small transposes,
    # pad and concat fuse around the pallas_call.
    # TODO(synk): for image-sized B, generate/cache the coordinate grid and z
    # already feature-major so even these small reshapes vanish per call.
    ones = jnp.ones((1, B), jnp.float32)
    inp_t = jnp.concatenate(
        [x.T, y.T, r.T, z.T, ones], axis=0).astype(jnp.float32)      # (Cin, B)
    cin = inp_t.shape[0]
    cin_pad = _round_up(cin, 8)
    inp_t = jnp.pad(inp_t, ((0, cin_pad - cin), (0, b_pad - B)))

    # Fused input weight [wx; wy; wr; wz; bz] -> (Cin, 64), padded + transposed.
    win = jnp.concatenate(
        [params["wx"], params["wy"], params["wr"], params["wz"], params["bz"]],
        axis=0)
    win_t = jnp.pad(win, ((0, cin_pad - cin), (0, 0))).T           # (64, Cin_pad)
    wh_t = params["wh"].T                                          # (64, 64)
    bh_c = params["bh"].T                                          # (64, 1)
    wo_c = params["wo"].T                                          # (64, 1)
    bo = params["bo"]                                              # (1, 1)

    const = lambda shape: pl.BlockSpec(shape, lambda i: (0, 0))

    out_t = pl.pallas_call(
        cppn_kernel,
        grid=(num_tiles,),
        in_specs=[
            pl.BlockSpec((cin_pad, b_tile), lambda i: (0, i)),   # input tile
            const((HIDDEN, cin_pad)),                            # fused in-weight
            const((HIDDEN, HIDDEN)),                             # wh
            const((HIDDEN, 1)),                                  # bh
            const((HIDDEN, 1)),                                  # wo
            const((1, 1)),                                       # bo
        ],
        out_specs=pl.BlockSpec((1, b_tile), lambda i: (0, i)),
        out_shape=jax.ShapeDtypeStruct((1, b_pad), jnp.float32),
        compiler_params=pltpu.CompilerParams(
            dimension_semantics=("parallel",),
            vmem_limit_bytes=32 * 1024 * 1024),
    )(inp_t, win_t, wh_t, bh_c, wo_c, bo)

    return out_t[:, :B].T                                          # (B, 1)


def init_params(key, z_dim, hidden_dim=HIDDEN, weight_std=1.5):
    keys = jax.random.split(key, 9)
    nrm = lambda k, shape, std: std * jax.random.normal(k, shape, dtype=jnp.float32)
    return {
        # weights ~ N(0, 1.5), biases ~ N(0, 1)  (matches init_weights)
        "wx": nrm(keys[0], (1, hidden_dim), weight_std),           # x_path.weight^T
        "wy": nrm(keys[1], (1, hidden_dim), weight_std),           # y_path.weight^T
        "wr": nrm(keys[2], (1, hidden_dim), weight_std),           # r_path.weight^T
        "wz": nrm(keys[3], (z_dim, hidden_dim), weight_std),       # z_path.weight^T
        "bz": nrm(keys[4], (1, hidden_dim), 1.0),                  # z_path.bias
        "wh": nrm(keys[5], (hidden_dim, hidden_dim), weight_std),  # hidden.weight^T
        "bh": nrm(keys[6], (1, hidden_dim), 1.0),                  # hidden.bias
        "wo": nrm(keys[7], (1, hidden_dim), weight_std),           # output.weight (1,64)
        "bo": nrm(keys[8], (1, 1), 1.0),                           # output.bias
    }


def reference_forward(x, y, r, z, p):
    """Pure-JAX f32 reference mirroring the PyTorch module."""
    inp = jnp.concatenate([x, y, r, z], axis=1)
    win = jnp.concatenate([p["wx"], p["wy"], p["wr"], p["wz"]], axis=0)
    h = jnp.tanh(jnp.dot(inp, win, precision=_HI) + p["bz"])
    residual = h
    for _ in range(3):
        h = jnp.tanh(jnp.dot(h, p["wh"], precision=_HI) + p["bh"])
    h = h + residual
    return jax.nn.sigmoid(jnp.dot(h, p["wo"].T, precision=_HI) + p["bo"])


if __name__ == "__main__":
    B, Z_DIM = 1000, 8       # small: auto tile -> b_tile=512, 2 grid steps
    key = jax.random.PRNGKey(0)
    kx, ky, kr, kz, kp = jax.random.split(key, 5)

    # x, y, r scaled to [0, 1]; z is the latent vector.
    x = jax.random.uniform(kx, (B, 1), dtype=jnp.float32)
    y = jax.random.uniform(ky, (B, 1), dtype=jnp.float32)
    r = jax.random.uniform(kr, (B, 1), dtype=jnp.float32)
    z = jax.random.normal(kz, (B, Z_DIM), dtype=jnp.float32)

    params = init_params(kp, Z_DIM)

    fwd = jax.jit(generator_forward)
    out = jax.block_until_ready(fwd(x, y, r, z, params))
    assert out.shape == (B, 1), out.shape

    ref = reference_forward(x, y, r, z, params)
    max_err = float(jnp.max(jnp.abs(out - ref)))
    assert jnp.allclose(out, ref, atol=5e-3, rtol=5e-3), f"mismatch, max_err={max_err}"

    print("KERNEL_OK")
</pallas_src>

<mosaic_0001>
module attributes {stable_mosaic.version = 11 : i64} {
  func.func @cppn_kernel(%arg0: i32, %arg1: memref<16x512xf32, #tpu.memory_space<vmem>>, %arg2: memref<64x16xf32, #tpu.memory_space<vmem>>, %arg3: memref<64x64xf32, #tpu.memory_space<vmem>>, %arg4: memref<64x1xf32, #tpu.memory_space<vmem>>, %arg5: memref<64x1xf32, #tpu.memory_space<vmem>>, %arg6: memref<1x1xf32, #tpu.memory_space<vmem>>, %arg7: memref<1x512xf32, #tpu.memory_space<vmem>>) attributes {dimension_semantics = [#tpu.dimension_semantics<parallel>], iteration_bounds = array<i64: 2>, scalar_prefetch = 0 : i64, scratch_operands = 0 : i64, tpu.core_type = #tpu.core_type<tc>, window_params = [{transform_indices = @transform_0, window_bounds = array<i64: 16, 512>}, {pipeline_mode = #tpu.pipeline_mode<synchronous>, transform_indices = @transform_1, window_bounds = array<i64: 64, 16>}, {pipeline_mode = #tpu.pipeline_mode<synchronous>, transform_indices = @transform_2, window_bounds = array<i64: 64, 64>}, {pipeline_mode = #tpu.pipeline_mode<synchronous>, transform_indices = @transform_3, window_bounds = array<i64: 64, 1>}, {pipeline_mode = #tpu.pipeline_mode<synchronous>, transform_indices = @transform_4, window_bounds = array<i64: 64, 1>}, {pipeline_mode = #tpu.pipeline_mode<synchronous>, transform_indices = @transform_5, window_bounds = array<i64: 1, 1>}, {transform_indices = @transform_6, window_bounds = array<i64: 1, 512>}]} {
    %c0 = arith.constant 0 : index
    %c0_0 = arith.constant 0 : index
    %0 = vector.load %arg2[%c0, %c0_0] : memref<64x16xf32, #tpu.memory_space<vmem>>, vector<64x16xf32>
    %c0_1 = arith.constant 0 : index
    %c0_2 = arith.constant 0 : index
    %1 = vector.load %arg1[%c0_1, %c0_2] : memref<16x512xf32, #tpu.memory_space<vmem>>, vector<16x512xf32>
    %cst = arith.constant dense<0.000000e+00> : vector<64x512xf32>
    %2 = tpu.matmul %0, %1, %cst {dimension_numbers = #tpu.dot_dimension_numbers<[1], [0], [0], [1], [0, 0, 1, 1], [], []>, precision = #tpu.contract_precision<fp32>} : vector<64x16xf32>, vector<16x512xf32>, vector<64x512xf32> -> vector<64x512xf32>
    %3 = math.tanh %2 : vector<64x512xf32>
    %c0_3 = arith.constant 0 : index
    %c0_4 = arith.constant 0 : index
    %4 = vector.load %arg3[%c0_3, %c0_4] : memref<64x64xf32, #tpu.memory_space<vmem>>, vector<64x64xf32>
    %c0_5 = arith.constant 0 : index
    %c0_6 = arith.constant 0 : index
    %5 = vector.load %arg4[%c0_5, %c0_6] : memref<64x1xf32, #tpu.memory_space<vmem>>, vector<64x1xf32>
    %cst_7 = arith.constant dense<0.000000e+00> : vector<64x512xf32>
    %6 = tpu.matmul %4, %3, %cst_7 {dimension_numbers = #tpu.dot_dimension_numbers<[1], [0], [0], [1], [0, 0, 1, 1], [], []>, precision = #tpu.contract_precision<fp32>} : vector<64x64xf32>, vector<64x512xf32>, vector<64x512xf32> -> vector<64x512xf32>
    %7 = vector.broadcast %5 : vector<64x1xf32> to vector<64x512xf32>
    %8 = arith.addf %6, %7 : vector<64x512xf32>
    %9 = math.tanh %8 : vector<64x512xf32>
    %cst_8 = arith.constant dense<0.000000e+00> : vector<64x512xf32>
    %10 = tpu.matmul %4, %9, %cst_8 {dimension_numbers = #tpu.dot_dimension_numbers<[1], [0], [0], [1], [0, 0, 1, 1], [], []>, precision = #tpu.contract_precision<fp32>} : vector<64x64xf32>, vector<64x512xf32>, vector<64x512xf32> -> vector<64x512xf32>
    %11 = vector.broadcast %5 : vector<64x1xf32> to vector<64x512xf32>
    %12 = arith.addf %10, %11 : vector<64x512xf32>
    %13 = math.tanh %12 : vector<64x512xf32>
    %cst_9 = arith.constant dense<0.000000e+00> : vector<64x512xf32>
    %14 = tpu.matmul %4, %13, %cst_9 {dimension_numbers = #tpu.dot_dimension_numbers<[1], [0], [0], [1], [0, 0, 1, 1], [], []>, precision = #tpu.contract_precision<fp32>} : vector<64x64xf32>, vector<64x512xf32>, vector<64x512xf32> -> vector<64x512xf32>
    %15 = vector.broadcast %5 : vector<64x1xf32> to vector<64x512xf32>
    %16 = arith.addf %14, %15 : vector<64x512xf32>
    %17 = math.tanh %16 : vector<64x512xf32>
    %18 = arith.addf %17, %3 : vector<64x512xf32>
    %c0_10 = arith.constant 0 : index
    %c0_11 = arith.constant 0 : index
    %19 = vector.load %arg5[%c0_10, %c0_11] : memref<64x1xf32, #tpu.memory_space<vmem>>, vector<64x1xf32>
    %20 = vector.broadcast %19 : vector<64x1xf32> to vector<64x512xf32>
    %21 = arith.mulf %18, %20 : vector<64x512xf32>
    %cst_12 = arith.constant dense<0.000000e+00> : vector<512xf32>
    %22 = vector.multi_reduction <add>, %21, %cst_12 [0] : vector<64x512xf32> to vector<512xf32>
    %23 = vector.shape_cast %22 : vector<512xf32> to vector<1x512xf32>
    %c0_13 = arith.constant 0 : index
    %c0_14 = arith.constant 0 : index
    %24 = vector.load %arg6[%c0_13, %c0_14] : memref<1x1xf32, #tpu.memory_space<vmem>>, vector<1x1xf32>
    %25 = vector.broadcast %24 : vector<1x1xf32> to vector<1x512xf32>
    %26 = arith.addf %23, %25 : vector<1x512xf32>
    %27 = arith.negf %26 : vector<1x512xf32>
    %28 = math.exp %27 : vector<1x512xf32>
    %cst_15 = arith.constant 1.000000e+00 : f32
    %29 = vector.broadcast %cst_15 : f32 to vector<1x512xf32>
    %30 = arith.addf %29, %28 : vector<1x512xf32>
    %31 = arith.divf %29, %30 : vector<1x512xf32>
    %c0_16 = arith.constant 0 : index
    %c0_17 = arith.constant 0 : index
    %32 = vector.load %arg7[%c0_16, %c0_17] : memref<1x512xf32, #tpu.memory_space<vmem>>, vector<1x512xf32>
    tpu.vector_store %arg7[%c0_16, %c0_17], %31 {strides = array<i32>} : memref<1x512xf32, #tpu.memory_space<vmem>>, vector<1x512xf32>,
    return
  }
  func.func @transform_0(%arg0: i32) -> (i32, i32) {
    %c0_i32 = arith.constant 0 : i32
    %c0_i32_0 = arith.constant 0 : i32
    return %c0_i32, %arg0 : i32, i32
  }
  func.func @transform_1(%arg0: i32) -> (i32, i32) {
    %c0_i32 = arith.constant 0 : i32
    %c0_i32_0 = arith.constant 0 : i32
    %c0_i32_1 = arith.constant 0 : i32
    return %c0_i32, %c0_i32_0 : i32, i32
  }
  func.func @transform_2(%arg0: i32) -> (i32, i32) {
    %c0_i32 = arith.constant 0 : i32
    %c0_i32_0 = arith.constant 0 : i32
    %c0_i32_1 = arith.constant 0 : i32
    return %c0_i32, %c0_i32_0 : i32, i32
  }
  func.func @transform_3(%arg0: i32) -> (i32, i32) {
    %c0_i32 = arith.constant 0 : i32
    %c0_i32_0 = arith.constant 0 : i32
    %c0_i32_1 = arith.constant 0 : i32
    return %c0_i32, %c0_i32_0 : i32, i32
  }
  func.func @transform_4(%arg0: i32) -> (i32, i32) {
    %c0_i32 = arith.constant 0 : i32
    %c0_i32_0 = arith.constant 0 : i32
    %c0_i32_1 = arith.constant 0 : i32
    return %c0_i32, %c0_i32_0 : i32, i32
  }
  func.func @transform_5(%arg0: i32) -> (i32, i32) {
    %c0_i32 = arith.constant 0 : i32
    %c0_i32_0 = arith.constant 0 : i32
    %c0_i32_1 = arith.constant 0 : i32
    return %c0_i32, %c0_i32_0 : i32, i32
  }
  func.func @transform_6(%arg0: i32) -> (i32, i32) {
    %c0_i32 = arith.constant 0 : i32
    %c0_i32_0 = arith.constant 0 : i32
    return %c0_i32, %arg0 : i32, i32
  }
}

</mosaic_0001>

<llo_original>
// kernel: generator_forward.1
$region0: #{generator_forward.1}
  #allocation0 [shape = 'u32[]', space=smem, size = 0x4, offset = 0x4, fixed_abs, tag = 'smem constant byte address 0x4 - core index']
  #allocation1 [shape = 'u32[144,128]{1,0:T(1,128)}', space=vmem, size = 0x12000, scoped, tag = 'internal scratch']
  #allocation2 [shape = 'f32[1,1]{1,0:T(1,128)S(1)}', space=vmem, size = 0x200, scoped, tag = 'scoped memory for generator_forward.1']
  %s0 = inlined_call_operand.vmem [shape: f32[16,1024], index: 0, kind: input, shape index: {}]
  %s1 = inlined_call_operand.vmem [shape: f32[64,16], index: 1, kind: input, shape index: {}]
  %s2 = inlined_call_operand.vmem [shape: f32[64,64], index: 2, kind: input, shape index: {}]
  %s3 = inlined_call_operand.vmem [shape: f32[64,1], index: 3, kind: input, shape index: {}]
  %s4 = inlined_call_operand.vmem [shape: f32[64,1], index: 4, kind: input, shape index: {}]
  %s5 = inlined_call_operand.<no memory space> [shape: f32[1,1], index: 5, kind: input, shape index: {}]
  %s6 = inlined_call_operand.vmem [shape: f32[1,1024], index: 6, kind: output, shape index: {}]
  %s7 = sld [smem:[#allocation0]]
  $region80: #{generator_forward.1} parent=0
    _
  %s9 = ssub.s32 1, %s7
  %s10 = scalar_select 0, %s9, %s7
  %v11 = vstv %s5
  %12 = vst [vmem:[#allocation2] sm:$0x1] %v11
  $region1: #{generator_forward.1} parent=0
    #allocation3 [shape = 'u8[65536]{0}', space=vmem, size = 0x10000, scoped, tag = 'input window, operand 0']
    loop: start=0, step=1, limit=4
    $region2: #{generator_forward.1} parent=1 // loop_pre_header
      _
    $region3: #{generator_forward.1} parent=1 // loop_header
      %s14 = sphi 0, %s18
      %p15 = scmp.ge.s32.totalorder %s14, 4
      %s24 = sphi 0, %s26
      %s27 = sphi 0, %s24
      %s28 = sphi 0, %s27
      %s44 = sphi 0, %s28
      %s48 = sphi 0, %s48
      %s50 = sphi 0, %s48
      %s51 = sphi 0, %s50
      %s65 = sphi 0, %s51
      %s69 = sphi 0, %s69
      %s71 = sphi 0, %s69
      %s72 = sphi 0, %s71
      %s86 = sphi 0, %s72
      %s90 = sphi 0, %s90
      %s92 = sphi 0, %s90
      %s93 = sphi 0, %s92
      %s107 = sphi 0, %s93
      %s111 = sphi 0, %s111
      %s113 = sphi 0, %s111
      %s114 = sphi 0, %s113
      %s128 = sphi 0, %s114
      %s132 = sphi 0, %s132
      %s134 = sphi 0, %s132
      %s135 = sphi 0, %s134
      %s149 = sphi 0, %s135
      %s155 = sphi 0, %s157
      %s158 = sphi 0, %s155
      %s159 = sphi 0, %s158
      %s175 = sphi 0, %s159
    $region4: #{generator_forward.1} parent=1 // loop_header_branch
      %17 = sbr.rel (%p15) target = $region8
    $region5: #{generator_forward.1} parent=1 // loop_body
      %s19 = ssub.s32 %s14, 1
      %s20 = ssub.s32 %s14, 2
      %s21 = sadd.s32 %s14, 1
      %s22 = ssub.s32 %s14, %s21
      %p23 = scmp.eq.s32.totalorder %s22, 0
      %s25 = sadd.s32 %s24, 1
      %s26 = scalar_select %p23, %s24, %s25
      %p29 = pneg %p23
      %p30 = scmp.eq.s32.totalorder %s14, 1
      %p31 = por %p29, %p30
      %p32 = scmp.ne.s32.totalorder %s24, %s27
      %p33 = scmp.eq.s32.totalorder %s14, 0
      %p34 = por %p32, %p33
      %p35 = scmp.ne.s32.totalorder %s24, %s27
      %p36 = scmp.eq.s32.totalorder %s19, 1
      %p37 = por %p35, %p36
      %p38 = scmp.ne.s32.totalorder %s27, %s28
      %p39 = scmp.eq.s32.totalorder %s19, 0
      %p40 = por %p38, %p39
      %p41 = scmp.ne.s32.totalorder %s27, %s28
      %p42 = scmp.eq.s32.totalorder %s20, 1
      %p43 = por %p41, %p42
      %p45 = scmp.ne.s32.totalorder %s28, %s44
      %p46 = scmp.eq.s32.totalorder %s20, 0
      %p47 = por %p45, %p46
      %s49 = sadd.s32 %s48, 1
      %p52 = scmp.eq.s32.totalorder %s14, 1
      %p53 = scmp.ne.s32.totalorder %s48, %s50
      %p54 = scmp.eq.s32.totalorder %s14, 0
      %p55 = por %p53, %p54
      %p56 = scmp.ne.s32.totalorder %s48, %s50
      %p57 = scmp.eq.s32.totalorder %s19, 1
      %p58 = por %p56, %p57
      %p59 = scmp.ne.s32.totalorder %s50, %s51
      %p60 = scmp.eq.s32.totalorder %s19, 0
      %p61 = por %p59, %p60
      %p62 = scmp.ne.s32.totalorder %s50, %s51
      %p63 = scmp.eq.s32.totalorder %s20, 1
      %p64 = por %p62, %p63
      %p66 = scmp.ne.s32.totalorder %s51, %s65
      %p67 = scmp.eq.s32.totalorder %s20, 0
      %p68 = por %p66, %p67
      %s70 = sadd.s32 %s69, 1
      %p73 = scmp.eq.s32.totalorder %s14, 1
      %p74 = scmp.ne.s32.totalorder %s69, %s71
      %p75 = scmp.eq.s32.totalorder %s14, 0
      %p76 = por %p74, %p75
      %p77 = scmp.ne.s32.totalorder %s69, %s71
      %p78 = scmp.eq.s32.totalorder %s19, 1
      %p79 = por %p77, %p78
      %p80 = scmp.ne.s32.totalorder %s71, %s72
      %p81 = scmp.eq.s32.totalorder %s19, 0
      %p82 = por %p80, %p81
      %p83 = scmp.ne.s32.totalorder %s71, %s72
      %p84 = scmp.eq.s32.totalorder %s20, 1
      %p85 = por %p83, %p84
      %p87 = scmp.ne.s32.totalorder %s72, %s86
      %p88 = scmp.eq.s32.totalorder %s20, 0
      %p89 = por %p87, %p88
      %s91 = sadd.s32 %s90, 1
      %p94 = scmp.eq.s32.totalorder %s14, 1
      %p95 = scmp.ne.s32.totalorder %s90, %s92
      %p96 = scmp.eq.s32.totalorder %s14, 0
      %p97 = por %p95, %p96
      %p98 = scmp.ne.s32.totalorder %s90, %s92
      %p99 = scmp.eq.s32.totalorder %s19, 1
      %p100 = por %p98, %p99
      %p101 = scmp.ne.s32.totalorder %s92, %s93
      %p102 = scmp.eq.s32.totalorder %s19, 0
      %p103 = por %p101, %p102
      %p104 = scmp.ne.s32.totalorder %s92, %s93
      %p105 = scmp.eq.s32.totalorder %s20, 1
      %p106 = por %p104, %p105
      %p108 = scmp.ne.s32.totalorder %s93, %s107
      %p109 = scmp.eq.s32.totalorder %s20, 0
      %p110 = por %p108, %p109
      %s112 = sadd.s32 %s111, 1
      %p115 = scmp.eq.s32.totalorder %s14, 1
      %p116 = scmp.ne.s32.totalorder %s111, %s113
      %p117 = scmp.eq.s32.totalorder %s14, 0
      %p118 = por %p116, %p117
      %p119 = scmp.ne.s32.totalorder %s111, %s113
      %p120 = scmp.eq.s32.totalorder %s19, 1
      %p121 = por %p119, %p120
      %p122 = scmp.ne.s32.totalorder %s113, %s114
      %p123 = scmp.eq.s32.totalorder %s19, 0
      %p124 = por %p122, %p123
      %p125 = scmp.ne.s32.totalorder %s113, %s114
      %p126 = scmp.eq.s32.totalorder %s20, 1
      %p127 = por %p125, %p126
      %p129 = scmp.ne.s32.totalorder %s114, %s128
      %p130 = scmp.eq.s32.totalorder %s20, 0
      %p131 = por %p129, %p130
      %s133 = sadd.s32 %s132, 1
      %p136 = scmp.eq.s32.totalorder %s14, 1
      %p137 = scmp.ne.s32.totalorder %s132, %s134
      %p138 = scmp.eq.s32.totalorder %s14, 0
      %p139 = por %p137, %p138
      %p140 = scmp.ne.s32.totalorder %s132, %s134
      %p141 = scmp.eq.s32.totalorder %s19, 1
      %p142 = por %p140, %p141
      %p143 = scmp.ne.s32.totalorder %s134, %s135
      %p144 = scmp.eq.s32.totalorder %s19, 0
      %p145 = por %p143, %p144
      %p146 = scmp.ne.s32.totalorder %s134, %s135
      %p147 = scmp.eq.s32.totalorder %s20, 1
      %p148 = por %p146, %p147
      %p150 = scmp.ne.s32.totalorder %s135, %s149
      %p151 = scmp.eq.s32.totalorder %s20, 0
      %p152 = por %p150, %p151
      %s153 = ssub.s32 %s14, %s21
      %p154 = scmp.eq.s32.totalorder %s153, 0
      %s156 = sadd.s32 %s155, 1
      %s157 = scalar_select %p154, %s155, %s156
      %p160 = pneg %p154
      %p161 = scmp.eq.s32.totalorder %s14, 1
      %p162 = por %p160, %p161
      %p163 = scmp.ne.s32.totalorder %s155, %s158
      %p164 = scmp.eq.s32.totalorder %s14, 0
      %p165 = por %p163, %p164
      %p166 = scmp.ne.s32.totalorder %s155, %s158
      %p167 = scmp.eq.s32.totalorder %s19, 1
      %p168 = por %p166, %p167
      %p169 = scmp.ne.s32.totalorder %s158, %s159
      %p170 = scmp.eq.s32.totalorder %s19, 0
      %p171 = por %p169, %p170
      %p172 = scmp.ne.s32.totalorder %s158, %s159
      %p173 = scmp.eq.s32.totalorder %s20, 1
      %p174 = por %p172, %p173
      %p176 = scmp.ne.s32.totalorder %s159, %s175
      %p177 = scmp.eq.s32.totalorder %s20, 0
      %p178 = por %p176, %p177
      %p179 = scmp.le.s32.totalorder 1, %s14
      %p180 = scmp.lt.s32.totalorder %s14, 3
      %p181 = pnand %p179, %p180
      %p182 = pneg %p181
      // Predicated region
      $region9: #{generator_forward.1} parent=5 // pred_check
        _
      $region10: #{generator_forward.1} parent=5 // pred_check_branch
        %184 = sbr.rel (%p181) target = $region12
      $region11: #{generator_forward.1} parent=5 // pred_region
        %s185 = ssub.s32 %s14, 1
        // Predicated region
        $region13: #{generator_forward.1} parent=11 // pred_check
          %p186 = pneg %p61
        $region14: #{generator_forward.1} parent=11 // pred_check_branch
          %188 = sbr.rel (%p186) target = $region16
        $region15: #{generator_forward.1} parent=11 // pred_region
          _
        $region16: #{generator_forward.1} parent=11 // pred_fallthru
          _
        // Predicated region
        $region17: #{generator_forward.1} parent=11 // pred_check
          %p189 = pneg %p82
        $region18: #{generator_forward.1} parent=11 // pred_check_branch
          %191 = sbr.rel (%p189) target = $region20
        $region19: #{generator_forward.1} parent=11 // pred_region
          _
        $region20: #{generator_forward.1} parent=11 // pred_fallthru
          _
        // Predicated region
        $region21: #{generator_forward.1} parent=11 // pred_check
          %p192 = pneg %p103
        $region22: #{generator_forward.1} parent=11 // pred_check_branch
          %194 = sbr.rel (%p192) target = $region24
        $region23: #{generator_forward.1} parent=11 // pred_region
          _
        $region24: #{generator_forward.1} parent=11 // pred_fallthru
          _
        // Predicated region
        $region25: #{generator_forward.1} parent=11 // pred_check
          %p195 = pneg %p124
        $region26: #{generator_forward.1} parent=11 // pred_check_branch
          %197 = sbr.rel (%p195) target = $region28
        $region27: #{generator_forward.1} parent=11 // pred_region
          _
        $region28: #{generator_forward.1} parent=11 // pred_fallthru
          _
        // Predicated region
        $region29: #{generator_forward.1} parent=11 // pred_check
          %p198 = pneg %p145
        $region30: #{generator_forward.1} parent=11 // pred_check_branch
          %200 = sbr.rel (%p198) target = $region32
        $region31: #{generator_forward.1} parent=11 // pred_region
          _
        $region32: #{generator_forward.1} parent=11 // pred_fallthru
          _
      $region12: #{generator_forward.1} parent=5 // pred_fallthru
        _
      %p201 = scmp.lt.s32.totalorder %s14, 2
      // Predicated region
      $region33: #{generator_forward.1} parent=5 // pred_check
        %p202 = pneg %p201
      $region34: #{generator_forward.1} parent=5 // pred_check_branch
        %204 = sbr.rel (%p202) target = $region36
      $region35: #{generator_forward.1} parent=5 // pred_region
        // Predicated region
        $region37: #{generator_forward.1} parent=35 // pred_check
          %p205 = pneg %p34
        $region38: #{generator_forward.1} parent=35 // pred_check_branch
          %207 = sbr.rel (%p205) target = $region40
        $region39: #{generator_forward.1} parent=35 // pred_region
          %s208 = sand.u32 %s24, 1
          %s209 = sand.u32 %s24, 1
          %s210 = smul.addr %s209, 64
          %s211 = scalar_lea.vmem [#allocation3], %s210
          %s212 = smul.u32 4, %s14
          %s213 = smul.addr %s212, 8
          %s214 = scalar_lea.vmem %s0, %s213
          // Predicated region
          $region41: #{generator_forward.1} parent=39 // pred_check
            _
          $region42: #{generator_forward.1} parent=39 // pred_check_branch
            %216 = sbr.rel (0) target = $region44
          $region43: #{generator_forward.1} parent=39 // pred_region
            // Predicated region
            $region45: #{generator_forward.1} parent=43 // pred_check
              _
            $region46: #{generator_forward.1} parent=43 // pred_check_branch
              %218 = sbr.rel (0) target = $region48
            $region47: #{generator_forward.1} parent=43 // pred_region
              loop: start=0, step=1, limit=1
              $region49: #{generator_forward.1} parent=47 // loop_pre_header
                _
              $region50: #{generator_forward.1} parent=47 // loop_header
                %s220 = sphi 0, %s224
                %p221 = scmp.ge.s32.totalorder %s220, 1
                %s225 = sphi %s214, %s214
                %s226 = sphi %s211, %s211
              $region51: #{generator_forward.1} parent=47 // loop_header_branch
                %223 = sbr.rel (%p221) target = $region55
              $region52: #{generator_forward.1} parent=47 // loop_body
                %v227 = vld [vmem:[%s225] sm:$0xff]
                %228 = vst [vmem:[%s226] sm:$0xff] %v227
                %v229 = vld [vmem:[%s225 + $0x8] sm:$0xff]
                %230 = vst [vmem:[%s226 + $0x8] sm:$0xff] %v229
                %v231 = vld [vmem:[%s225 + $0x10] sm:$0xff]
                %232 = vst [vmem:[%s226 + $0x10] sm:$0xff] %v231
                %v233 = vld [vmem:[%s225 + $0x18] sm:$0xff]
                %234 = vst [vmem:[%s226 + $0x18] sm:$0xff] %v233
                %v235 = vld [vmem:[%s225 + $0x40] sm:$0xff]
                %236 = vst [vmem:[%s226 + $0x20] sm:$0xff] %v235
                %v237 = vld [vmem:[%s225 + $0x48] sm:$0xff]
                %238 = vst [vmem:[%s226 + $0x28] sm:$0xff] %v237
                %v239 = vld [vmem:[%s225 + $0x50] sm:$0xff]
                %240 = vst [vmem:[%s226 + $0x30] sm:$0xff] %v239
                %v241 = vld [vmem:[%s225 + $0x58] sm:$0xff]
                %242 = vst [vmem:[%s226 + $0x38] sm:$0xff] %v241
              $region53: #{generator_forward.1} parent=47 // loop_footer
                %s224 = sadd.s32 1, %s220
              $region54: #{generator_forward.1} parent=47 // loop_footer_branch
                %219 = sbr.rel target = $region50
              $region55: #{generator_forward.1} parent=47 // loop_exit
                _
            $region48: #{generator_forward.1} parent=43 // pred_fallthru
              _
            // Predicated region
            $region56: #{generator_forward.1} parent=43 // pred_check
              _
            $region57: #{generator_forward.1} parent=43 // pred_check_branch
              %244 = sbr.rel target = $region59
            $region58: #{generator_forward.1} parent=43 // pred_region
              _
            $region59: #{generator_forward.1} parent=43 // pred_fallthru
              _
          $region44: #{generator_forward.1} parent=39 // pred_fallthru
            _
          %245 = vnop
        $region40: #{generator_forward.1} parent=35 // pred_fallthru
          _
      $region36: #{generator_forward.1} parent=5 // pred_fallthru
        _
      %p246 = scmp.le.s32.totalorder 1, %s14
      %p247 = scmp.lt.s32.totalorder %s14, 3
      %p248 = pnand %p246, %p247
      %p249 = pneg %p248
      // Predicated region
      $region60: #{generator_forward.1} parent=5 // pred_check
        _
      $region61: #{generator_forward.1} parent=5 // pred_check_branch
        %251 = sbr.rel (%p248) target = $region63
      $region62: #{generator_forward.1} parent=5 // pred_region
        %s252 = ssub.s32 %s14, 1
        %s253 = sand.u32 %s27, 1
        %s254 = sand.u32 %s27, 1
        %s255 = smul.addr %s254, 64
        %s256 = scalar_lea.vmem [#allocation3], %s255
        // Predicated region
        $region64: #{generator_forward.1} parent=62 // pred_check
          %p257 = pneg %p40
        $region65: #{generator_forward.1} parent=62 // pred_check_branch
          %259 = sbr.rel (%p257) target = $region67
        $region66: #{generator_forward.1} parent=62 // pred_region
          _
        $region67: #{generator_forward.1} parent=62 // pred_fallthru
          _
        %s260 = sand.u32 %s27, 1
        %s261 = sand.u32 %s27, 1
        %s262 = smul.addr %s261, 64
        %s263 = scalar_lea.vmem [#allocation3], %s262
        %p264 = pneg %p40
        %p265 = pneg %p37
        %p266 = pneg %p61
        %p267 = pneg %p58
        %p268 = pneg %p82
        %p269 = pneg %p79
        %p270 = pneg %p103
        %p271 = pneg %p100
        %p272 = pneg %p124
        %p273 = pneg %p121
        %p274 = pneg %p145
        %p275 = pneg %p142
        %p276 = pneg %p171
        %p277 = pneg %p168
        %s278 = smul.u32 4, %s19
        %p279 = scmp.lt.s32.totalorder %s278, 7
        %s280 = scalar_select %p279, %s278, 7
        %s281 = scalar_lea.vmem %s6, %s280
        %s282 = smul.u32 4, %s19
        %s283 = smul.u32 4, %s19
        %p284 = scmp.lt.s32.totalorder %s283, 7
        %s285 = scalar_select %p284, %s283, 7
        %s286 = scalar_lea.vmem %s6, %s285
        %s287 = smul.u32 4, %s19
        %v288 = vld [vmem:[%s1] sm:$0xff]
        %v289 = vld [vmem:[%s1 + $0x8] sm:$0xff]
        %v290 = vld [vmem:[%s1 + $0x10] sm:$0xff]
        %v291 = vld [vmem:[%s1 + $0x18] sm:$0xff]
        %v292 = vld [vmem:[%s1 + $0x20] sm:$0xff]
        %v293 = vld [vmem:[%s1 + $0x28] sm:$0xff]
        %v294 = vld [vmem:[%s1 + $0x30] sm:$0xff]
        %v295 = vld [vmem:[%s1 + $0x38] sm:$0xff]
        %v296 = vld [vmem:[%s256] sm:$0xff]
        %v297 = vld [vmem:[%s256 + $0x8] sm:$0xff]
        %v298 = vld [vmem:[%s256 + $0x10] sm:$0xff]
        %v299 = vld [vmem:[%s256 + $0x18] sm:$0xff]
        %v300 = vld [vmem:[%s256 + $0x20] sm:$0xff]
        %v301 = vld [vmem:[%s256 + $0x28] sm:$0xff]
        %v302 = vld [vmem:[%s256 + $0x30] sm:$0xff]
        %v303 = vld [vmem:[%s256 + $0x38] sm:$0xff]
        %vm304 = vcmask 130048
        %v306 = vsel %vm304, %v288, 0
        %v309 = vsel %vm304, %v289, 0
        %v312 = vsel %vm304, %v290, 0
        %v315 = vsel %vm304, %v291, 0
        %v318 = vsel %vm304, %v292, 0
        %v321 = vsel %vm304, %v293, 0
        %v324 = vsel %vm304, %v294, 0
        %v327 = vsel %vm304, %v295, 0
        %v329 = vand.u32 %v297, 4294901760
        %330 = vmatprep.subr.mxu0 %v329
        %v331 = vand.u32 %v296, 4294901760
        %332 = vmatpush1.msra.mxu0 %v331
        %v333 = vand.u32 %v301, 4294901760
        %334 = vmatprep.subr.mxu0 %v333
        %v335 = vand.u32 %v300, 4294901760
        %336 = vmatpush1.msra.mxu0 %v335
        %337 = vmatprep.subr.mxu0 0.0
        %338 = vmatpush1.msra.mxu0 0.0
        %339 = vmatprep.subr.mxu0 0.0
        %340 = vmatpush1.msra.mxu0 0.0
        %341 = vmatprep.subr.mxu0 0.0
        %342 = vmatpush1.msra.mxu0 0.0
        %343 = vmatprep.subr.mxu0 0.0
        %344 = vmatpush1.msra.mxu0 0.0
        %345 = vmatprep.subr.mxu0 0.0
        %346 = vmatpush1.msra.mxu0 0.0
        %347 = vmatprep.subr.mxu0 0.0
        %348 = vmatpush1.msra.mxu0 0.0
        %349 = vmatprep.subr.mxu0 0.0
        %350 = vmatpush1.msra.mxu0 0.0
        %351 = vmatprep.subr.mxu0 0.0
        %352 = vmatpush1.msra.mxu0 0.0
        %353 = vmatprep.subr.mxu0 0.0
        %354 = vmatpush1.msra.mxu0 0.0
        %355 = vmatprep.subr.mxu0 0.0
        %356 = vmatpush1.msra.mxu0 0.0
        %357 = vmatprep.subr.mxu0 0.0
        %358 = vmatpush1.msra.mxu0 0.0
        %359 = vmatprep.subr.mxu0 0.0
        %360 = vmatpush1.msra.mxu0 0.0
        %361 = vmatprep.subr.mxu0 0.0
        %362 = vmatpush1.msra.mxu0 0.0
        %363 = vmatprep.subr.mxu0 0.0
        %364 = vmatpush1.msra.mxu0 0.0
        %365 = vmatprep.subr.mxu0 0.0
        %366 = vmatpush1.msra.mxu0 0.0
        %367 = vmatprep.subr.mxu0 0.0
        %368 = vmatpush1.msra.mxu0 0.0
        %369 = vmatprep.subr.mxu0 0.0
        %370 = vmatpush1.msra.mxu0 0.0
        %371 = vmatprep.subr.mxu0 0.0
        %372 = vmatpush1.msra.mxu0 0.0
        %373 = vmatprep.subr.mxu0 0.0
        %374 = vmatpush1.msra.mxu0 0.0
        %375 = vmatprep.subr.mxu0 0.0
        %376 = vmatpush1.msra.mxu0 0.0
        %377 = vmatprep.subr.mxu0 0.0
        %378 = vmatpush1.msra.mxu0 0.0
        %379 = vmatprep.subr.mxu0 0.0
        %380 = vmatpush1.msra.mxu0 0.0
        %381 = vmatprep.subr.mxu0 0.0
        %382 = vmatpush1.msra.mxu0 0.0
        %383 = vmatprep.subr.mxu0 0.0
        %384 = vmatpush1.msra.mxu0 0.0
        %385 = vmatprep.subr.mxu0 0.0
        %386 = vmatpush1.msra.mxu0 0.0
        %387 = vmatprep.subr.mxu0 0.0
        %388 = vmatpush1.msra.mxu0 0.0
        %389 = vmatprep.subr.mxu0 0.0
        %390 = vmatpush1.msra.mxu0 0.0
        %391 = vmatprep.subr.mxu0 0.0
        %392 = vmatpush1.msra.mxu0 0.0
        %393 = vmatprep.subr.mxu0 0.0
        %394 = vmatpush1.msra.mxu0 0.0
        %395 = vmatprep.subr.mxu0 0.0
        %396 = vmatpush1.msra.mxu0 0.0
        %397 = vmatprep.mubr.f32.mxu0 0.0
        %v398 = vand.u32 %v306, 4294901760
        %v399 = vsub.f32 %v306, %v398
        %v400 = vand.u32 %v399, 4294901760
        %v401 = vsub.f32 %v399, %v400
        %v402 = vand.u32 %v401, 4294901760
        %403 = vmatmul.mubr.f32.gmra.mrb[0].mxu0 %v402
        %v404 = vpop.f32.mrb[0].mxu0
        %v405 = vadd.f32 0.0, %v404
        %v406 = vpop.f32.mrb[0].mxu0
        %v407 = vadd.f32 0.0, %v406
        %408 = vmatprep.mubr.f32.mxu0 0.0
        %v409 = vand.u32 %v309, 4294901760
        %v410 = vsub.f32 %v309, %v409
        %v411 = vand.u32 %v410, 4294901760
        %v412 = vsub.f32 %v410, %v411
        %v413 = vand.u32 %v412, 4294901760
        %414 = vmatmul.mubr.f32.gmra.mrb[0].mxu0 %v413
        %v415 = vpop.f32.mrb[0].mxu0
        %v416 = vadd.f32 0.0, %v415
        %v417 = vpop.f32.mrb[0].mxu0
        %v418 = vadd.f32 0.0, %v417
        %419 = vmatprep.mubr.f32.mxu0 0.0
        %v420 = vand.u32 %v312, 4294901760
        %v421 = vsub.f32 %v312, %v420
        %v422 = vand.u32 %v421, 4294901760
        %v423 = vsub.f32 %v421, %v422
        %v424 = vand.u32 %v423, 4294901760
        %425 = vmatmul.mubr.f32.gmra.mrb[0].mxu0 %v424
        %v426 = vpop.f32.mrb[0].mxu0
        %v427 = vadd.f32 0.0, %v426
        %v428 = vpop.f32.mrb[0].mxu0
        %v429 = vadd.f32 0.0, %v428
        %430 = vmatprep.mubr.f32.mxu0 0.0
        %v431 = vand.u32 %v315, 4294901760
        %v432 = vsub.f32 %v315, %v431
        %v433 = vand.u32 %v432, 4294901760
        %v434 = vsub.f32 %v432, %v433
        %v435 = vand.u32 %v434, 4294901760
        %436 = vmatmul.mubr.f32.gmra.mrb[0].mxu0 %v435
        %v437 = vpop.f32.mrb[0].mxu0
        %v438 = vadd.f32 0.0, %v437
        %v439 = vpop.f32.mrb[0].mxu0
        %v440 = vadd.f32 0.0, %v439
        %441 = vmatprep.mubr.f32.mxu0 0.0
        %v442 = vand.u32 %v318, 4294901760
        %v443 = vsub.f32 %v318, %v442
        %v444 = vand.u32 %v443, 4294901760
        %v445 = vsub.f32 %v443, %v444
        %v446 = vand.u32 %v445, 4294901760
        %447 = vmatmul.mubr.f32.gmra.mrb[0].mxu0 %v446
        %v448 = vpop.f32.mrb[0].mxu0
        %v449 = vadd.f32 0.0, %v448
        %v450 = vpop.f32.mrb[0].mxu0
        %v451 = vadd.f32 0.0, %v450
        %452 = vmatprep.mubr.f32.mxu0 0.0
        %v453 = vand.u32 %v321, 4294901760
        %v454 = vsub.f32 %v321, %v453
        %v455 = vand.u32 %v454, 4294901760
        %v456 = vsub.f32 %v454, %v455
        %v457 = vand.u32 %v456, 4294901760
        %458 = vmatmul.mubr.f32.gmra.mrb[0].mxu0 %v457
        %v459 = vpop.f32.mrb[0].mxu0
        %v460 = vadd.f32 0.0, %v459
        %v461 = vpop.f32.mrb[0].mxu0
        %v462 = vadd.f32 0.0, %v461
        %463 = vmatprep.mubr.f32.mxu0 0.0
        %v464 = vand.u32 %v324, 4294901760
        %v465 = vsub.f32 %v324, %v464
        %v466 = vand.u32 %v465, 4294901760
        %v467 = vsub.f32 %v465, %v466
        %v468 = vand.u32 %v467, 4294901760
        %469 = vmatmul.mubr.f32.gmra.mrb[0].mxu0 %v468
        %v470 = vpop.f32.mrb[0].mxu0
        %v471 = vadd.f32 0.0, %v470
        %v472 = vpop.f32.mrb[0].mxu0
        %v473 = vadd.f32 0.0, %v472
        %474 = vmatprep.mubr.f32.mxu0 0.0
        %v475 = vand.u32 %v327, 4294901760
        %v476 = vsub.f32 %v327, %v475
        %v477 = vand.u32 %v476, 4294901760
        %v478 = vsub.f32 %v476, %v477
        %v479 = vand.u32 %v478, 4294901760
        %480 = vmatmul.mubr.f32.gmra.mrb[0].mxu0 %v479
        %v481 = vpop.f32.mrb[0].mxu0
        %v482 = vadd.f32 0.0, %v481
        %v483 = vpop.f32.mrb[0].mxu0
        %v484 = vadd.f32 0.0, %v483
        %485 = vdwg.mxu0
        %v486 = vand.u32 %v297, 4294901760
        %v487 = vsub.f32 %v297, %v486
        %v488 = vand.u32 %v487, 4294901760
        %v489 = vsub.f32 %v487, %v488
        %v490 = vand.u32 %v489, 4294901760
        %491 = vmatprep.subr.mxu0 %v490
        %v492 = vand.u32 %v296, 4294901760
        %v493 = vsub.f32 %v296, %v492
        %v494 = vand.u32 %v493, 4294901760
        %v495 = vsub.f32 %v493, %v494
        %v496 = vand.u32 %v495, 4294901760
        %497 = vmatpush1.msra.mxu0 %v496
        %v498 = vand.u32 %v301, 4294901760
        %v499 = vsub.f32 %v301, %v498
        %v500 = vand.u32 %v499, 4294901760
        %v501 = vsub.f32 %v499, %v500
        %v502 = vand.u32 %v501, 4294901760
        %503 = vmatprep.subr.mxu0 %v502
        %v504 = vand.u32 %v300, 4294901760
        %v505 = vsub.f32 %v300, %v504
        %v506 = vand.u32 %v505, 4294901760
        %v507 = vsub.f32 %v505, %v506
        %v508 = vand.u32 %v507, 4294901760
        %509 = vmatpush1.msra.mxu0 %v508
        %510 = vmatprep.subr.mxu0 0.0
        %511 = vmatpush1.msra.mxu0 0.0
        %512 = vmatprep.subr.mxu0 0.0
        %513 = vmatpush1.msra.mxu0 0.0
        %514 = vmatprep.subr.mxu0 0.0
        %515 = vmatpush1.msra.mxu0 0.0
        %516 = vmatprep.subr.mxu0 0.0
        %517 = vmatpush1.msra.mxu0 0.0
        %518 = vmatprep.subr.mxu0 0.0
        %519 = vmatpush1.msra.mxu0 0.0
        %520 = vmatprep.subr.mxu0 0.0
        %521 = vmatpush1.msra.mxu0 0.0
        %522 = vmatprep.subr.mxu0 0.0
        %523 = vmatpush1.msra.mxu0 0.0
        %524 = vmatprep.subr.mxu0 0.0
        %525 = vmatpush1.msra.mxu0 0.0
        %526 = vmatprep.subr.mxu0 0.0
        %527 = vmatpush1.msra.mxu0 0.0
        %528 = vmatprep.subr.mxu0 0.0
        %529 = vmatpush1.msra.mxu0 0.0
        %530 = vmatprep.subr.mxu0 0.0
        %531 = vmatpush1.msra.mxu0 0.0
        %532 = vmatprep.subr.mxu0 0.0
        %533 = vmatpush1.msra.mxu0 0.0
        %534 = vmatprep.subr.mxu0 0.0
        %535 = vmatpush1.msra.mxu0 0.0
        %536 = vmatprep.subr.mxu0 0.0
        %537 = vmatpush1.msra.mxu0 0.0
        %538 = vmatprep.subr.mxu0 0.0
        %539 = vmatpush1.msra.mxu0 0.0
        %540 = vmatprep.subr.mxu0 0.0
        %541 = vmatpush1.msra.mxu0 0.0
        %542 = vmatprep.subr.mxu0 0.0
        %543 = vmatpush1.msra.mxu0 0.0
        %544 = vmatprep.subr.mxu0 0.0
        %545 = vmatpush1.msra.mxu0 0.0
        %546 = vmatprep.subr.mxu0 0.0
        %547 = vmatpush1.msra.mxu0 0.0
        %548 = vmatprep.subr.mxu0 0.0
        %549 = vmatpush1.msra.mxu0 0.0
        %550 = vmatprep.subr.mxu0 0.0
        %551 = vmatpush1.msra.mxu0 0.0
        %552 = vmatprep.subr.mxu0 0.0
        %553 = vmatpush1.msra.mxu0 0.0
        %554 = vmatprep.subr.mxu0 0.0
        %555 = vmatpush1.msra.mxu0 0.0
        %556 = vmatprep.subr.mxu0 0.0
        %557 = vmatpush1.msra.mxu0 0.0
        %558 = vmatprep.subr.mxu0 0.0
        %559 = vmatpush1.msra.mxu0 0.0
        %560 = vmatprep.subr.mxu0 0.0
        %561 = vmatpush1.msra.mxu0 0.0
        %562 = vmatprep.subr.mxu0 0.0
        %563 = vmatpush1.msra.mxu0 0.0
        %564 = vmatprep.subr.mxu0 0.0
        %565 = vmatpush1.msra.mxu0 0.0
        %566 = vmatprep.subr.mxu0 0.0
        %567 = vmatpush1.msra.mxu0 0.0
        %568 = vmatprep.subr.mxu0 0.0
        %569 = vmatpush1.msra.mxu0 0.0
        %570 = vmatprep.mubr.f32.mxu0 0.0
        %v571 = vand.u32 %v306, 4294901760
        %572 = vmatmul.mubr.f32.gmra.mrb[0].mxu0 %v571
        %v573 = vpop.f32.mrb[0].mxu0
        %v574 = vadd.f32 %v405, %v573
        %v575 = vpop.f32.mrb[0].mxu0
        %v576 = vadd.f32 %v407, %v575
        %577 = vmatprep.mubr.f32.mxu0 0.0
        %v578 = vand.u32 %v309, 4294901760
        %579 = vmatmul.mubr.f32.gmra.mrb[0].mxu0 %v578
        %v580 = vpop.f32.mrb[0].mxu0
        %v581 = vadd.f32 %v416, %v580
        %v582 = vpop.f32.mrb[0].mxu0
        %v583 = vadd.f32 %v418, %v582
        %584 = vmatprep.mubr.f32.mxu0 0.0
        %v585 = vand.u32 %v312, 4294901760
        %586 = vmatmul.mubr.f32.gmra.mrb[0].mxu0 %v585
        %v587 = vpop.f32.mrb[0].mxu0
        %v588 = vadd.f32 %v427, %v587
        %v589 = vpop.f32.mrb[0].mxu0
        %v590 = vadd.f32 %v429, %v589
        %591 = vmatprep.mubr.f32.mxu0 0.0
        %v592 = vand.u32 %v315, 4294901760
        %593 = vmatmul.mubr.f32.gmra.mrb[0].mxu0 %v592
        %v594 = vpop.f32.mrb[0].mxu0
        %v595 = vadd.f32 %v438, %v594
        %v596 = vpop.f32.mrb[0].mxu0
        %v597 = vadd.f32 %v440, %v596
        %598 = vmatprep.mubr.f32.mxu0 0.0
        %v599 = vand.u32 %v318, 4294901760
        %600 = vmatmul.mubr.f32.gmra.mrb[0].mxu0 %v599
        %v601 = vpop.f32.mrb[0].mxu0
        %v602 = vadd.f32 %v449, %v601
        %v603 = vpop.f32.mrb[0].mxu0
        %v604 = vadd.f32 %v451, %v603
        %605 = vmatprep.mubr.f32.mxu0 0.0
        %v606 = vand.u32 %v321, 4294901760
        %607 = vmatmul.mubr.f32.gmra.mrb[0].mxu0 %v606
        %v608 = vpop.f32.mrb[0].mxu0
        %v609 = vadd.f32 %v460, %v608
        %v610 = vpop.f32.mrb[0].mxu0
        %v611 = vadd.f32 %v462, %v610
        %612 = vmatprep.mubr.f32.mxu0 0.0
        %v613 = vand.u32 %v324, 4294901760
        %614 = vmatmul.mubr.f32.gmra.mrb[0].mxu0 %v613
        %v615 = vpop.f32.mrb[0].mxu0
        %v616 = vadd.f32 %v471, %v615
        %v617 = vpop.f32.mrb[0].mxu0
        %v618 = vadd.f32 %v473, %v617
        %619 = vmatprep.mubr.f32.mxu0 0.0
        %v620 = vand.u32 %v327, 4294901760
        %621 = vmatmul.mubr.f32.gmra.mrb[0].mxu0 %v620
        %v622 = vpop.f32.mrb[0].mxu0
        %v623 = vadd.f32 %v482, %v622
        %v624 = vpop.f32.mrb[0].mxu0
        %v625 = vadd.f32 %v484, %v624
        %626 = vdwg.mxu0
        %v627 = vand.u32 %v297, 4294901760
        %v628 = vsub.f32 %v297, %v627
        %629 = vmatprep.subr.mxu0 %v628
        %v630 = vand.u32 %v296, 4294901760
        %v631 = vsub.f32 %v296, %v630
        %632 = vmatpush1.msra.mxu0 %v631
        %v633 = vand.u32 %v301, 4294901760
        %v634 = vsub.f32 %v301, %v633
        %635 = vmatprep.subr.mxu0 %v634
        %v636 = vand.u32 %v300, 4294901760
        %v637 = vsub.f32 %v300, %v636
        %638 = vmatpush1.msra.mxu0 %v637
        %639 = vmatprep.subr.mxu0 0.0
        %640 = vmatpush1.msra.mxu0 0.0
        %641 = vmatprep.subr.mxu0 0.0
        %642 = vmatpush1.msra.mxu0 0.0
        %643 = vmatprep.subr.mxu0 0.0
        %644 = vmatpush1.msra.mxu0 0.0
        %645 = vmatprep.subr.mxu0 0.0
        %646 = vmatpush1.msra.mxu0 0.0
        %647 = vmatprep.subr.mxu0 0.0
        %648 = vmatpush1.msra.mxu0 0.0
        %649 = vmatprep.subr.mxu0 0.0
        %650 = vmatpush1.msra.mxu0 0.0
        %651 = vmatprep.subr.mxu0 0.0
        %652 = vmatpush1.msra.mxu0 0.0
        %653 = vmatprep.subr.mxu0 0.0
        %654 = vmatpush1.msra.mxu0 0.0
        %655 = vmatprep.subr.mxu0 0.0
        %656 = vmatpush1.msra.mxu0 0.0
        %657 = vmatprep.subr.mxu0 0.0
        %658 = vmatpush1.msra.mxu0 0.0
        %659 = vmatprep.subr.mxu0 0.0
        %660 = vmatpush1.msra.mxu0 0.0
        %661 = vmatprep.subr.mxu0 0.0
        %662 = vmatpush1.msra.mxu0 0.0
        %663 = vmatprep.subr.mxu0 0.0
        %664 = vmatpush1.msra.mxu0 0.0
        %665 = vmatprep.subr.mxu0 0.0
        %666 = vmatpush1.msra.mxu0 0.0
        %667 = vmatprep.subr.mxu0 0.0
        %668 = vmatpush1.msra.mxu0 0.0
        %669 = vmatprep.subr.mxu0 0.0
        %670 = vmatpush1.msra.mxu0 0.0
        %671 = vmatprep.subr.mxu0 0.0
        %672 = vmatpush1.msra.mxu0 0.0
        %673 = vmatprep.subr.mxu0 0.0
        %674 = vmatpush1.msra.mxu0 0.0
        %675 = vmatprep.subr.mxu0 0.0
        %676 = vmatpush1.msra.mxu0 0.0
        %677 = vmatprep.subr.mxu0 0.0
        %678 = vmatpush1.msra.mxu0 0.0
        %679 = vmatprep.subr.mxu0 0.0
        %680 = vmatpush1.msra.mxu0 0.0
        %681 = vmatprep.subr.mxu0 0.0
        %682 = vmatpush1.msra.mxu0 0.0
        %683 = vmatprep.subr.mxu0 0.0
        %684 = vmatpush1.msra.mxu0 0.0
        %685 = vmatprep.subr.mxu0 0.0
        %686 = vmatpush1.msra.mxu0 0.0
        %687 = vmatprep.subr.mxu0 0.0
        %688 = vmatpush1.msra.mxu0 0.0
        %689 = vmatprep.subr.mxu0 0.0
        %690 = vmatpush1.msra.mxu0 0.0
        %691 = vmatprep.subr.mxu0 0.0
        %692 = vmatpush1.msra.mxu0 0.0
        %693 = vmatprep.subr.mxu0 0.0
        %694 = vmatpush1.msra.mxu0 0.0
        %695 = vmatprep.subr.mxu0 0.0
        %696 = vmatpush1.msra.mxu0 0.0
        %697 = vmatprep.subr.mxu0 0.0
        %698 = vmatpush1.msra.mxu0 0.0
        %699 = vmatprep.mubr.f32.mxu0 0.0
        %v700 = vand.u32 %v306, 4294901760
        %v701 = vsub.f32 %v306, %v700
        %702 = vmatmul.mubr.f32.gmra.mrb[0].mxu0 %v701
        %v703 = vpop.f32.mrb[0].mxu0
        %v704 = vadd.f32 %v574, %v703
        %v705 = vpop.f32.mrb[0].mxu0
        %v706 = vadd.f32 %v576, %v705
        %707 = vmatprep.mubr.f32.mxu0 0.0
        %v708 = vand.u32 %v309, 4294901760
        %v709 = vsub.f32 %v309, %v708
        %710 = vmatmul.mubr.f32.gmra.mrb[0].mxu0 %v709
        %v711 = vpop.f32.mrb[0].mxu0
        %v712 = vadd.f32 %v581, %v711
        %v713 = vpop.f32.mrb[0].mxu0
        %v714 = vadd.f32 %v583, %v713
        %715 = vmatprep.mubr.f32.mxu0 0.0
        %v716 = vand.u32 %v312, 4294901760
        %v717 = vsub.f32 %v312, %v716
        %718 = vmatmul.mubr.f32.gmra.mrb[0].mxu0 %v717
        %v719 = vpop.f32.mrb[0].mxu0
        %v720 = vadd.f32 %v588, %v719
        %v721 = vpop.f32.mrb[0].mxu0
        %v722 = vadd.f32 %v590, %v721
        %723 = vmatprep.mubr.f32.mxu0 0.0
        %v724 = vand.u32 %v315, 4294901760
        %v725 = vsub.f32 %v315, %v724
        %726 = vmatmul.mubr.f32.gmra.mrb[0].mxu0 %v725
        %v727 = vpop.f32.mrb[0].mxu0
        %v728 = vadd.f32 %v595, %v727
        %v729 = vpop.f32.mrb[0].mxu0
        %v730 = vadd.f32 %v597, %v729
        %731 = vmatprep.mubr.f32.mxu0 0.0
        %v732 = vand.u32 %v318, 4294901760
        %v733 = vsub.f32 %v318, %v732
        %734 = vmatmul.mubr.f32.gmra.mrb[0].mxu0 %v733
        %v735 = vpop.f32.mrb[0].mxu0
        %v736 = vadd.f32 %v602, %v735
        %v737 = vpop.f32.mrb[0].mxu0
        %v738 = vadd.f32 %v604, %v737
        %739 = vmatprep.mubr.f32.mxu0 0.0
        %v740 = vand.u32 %v321, 4294901760
        %v741 = vsub.f32 %v321, %v740
        %742 = vmatmul.mubr.f32.gmra.mrb[0].mxu0 %v741
        %v743 = vpop.f32.mrb[0].mxu0
        %v744 = vadd.f32 %v609, %v743
        %v745 = vpop.f32.mrb[0].mxu0
        %v746 = vadd.f32 %v611, %v745
        %747 = vmatprep.mubr.f32.mxu0 0.0
        %v748 = vand.u32 %v324, 4294901760
        %v749 = vsub.f32 %v324, %v748
        %750 = vmatmul.mubr.f32.gmra.mrb[0].mxu0 %v749
        %v751 = vpop.f32.mrb[0].mxu0
        %v752 = vadd.f32 %v616, %v751
        %v753 = vpop.f32.mrb[0].mxu0
        %v754 = vadd.f32 %v618, %v753
        %755 = vmatprep.mubr.f32.mxu0 0.0
        %v756 = vand.u32 %v327, 4294901760
        %v757 = vsub.f32 %v327, %v756
        %758 = vmatmul.mubr.f32.gmra.mrb[0].mxu0 %v757
        %v759 = vpop.f32.mrb[0].mxu0
        %v760 = vadd.f32 %v623, %v759
        %v761 = vpop.f32.mrb[0].mxu0
        %v762 = vadd.f32 %v625, %v761
        %763 = vdwg.mxu0
        %v764 = vand.u32 %v297, 4294901760
        %765 = vmatprep.subr.mxu0 %v764
        %v766 = vand.u32 %v296, 4294901760
        %767 = vmatpush1.msra.mxu0 %v766
        %v768 = vand.u32 %v301, 4294901760
        %769 = vmatprep.subr.mxu0 %v768
        %v770 = vand.u32 %v300, 4294901760
        %771 = vmatpush1.msra.mxu0 %v770
        %772 = vmatprep.subr.mxu0 0.0
        %773 = vmatpush1.msra.mxu0 0.0
        %774 = vmatprep.subr.mxu0 0.0
        %775 = vmatpush1.msra.mxu0 0.0
        %776 = vmatprep.subr.mxu0 0.0
        %777 = vmatpush1.msra.mxu0 0.0
        %778 = vmatprep.subr.mxu0 0.0
        %779 = vmatpush1.msra.mxu0 0.0
        %780 = vmatprep.subr.mxu0 0.0
        %781 = vmatpush1.msra.mxu0 0.0
        %782 = vmatprep.subr.mxu0 0.0
        %783 = vmatpush1.msra.mxu0 0.0
        %784 = vmatprep.subr.mxu0 0.0
        %785 = vmatpush1.msra.mxu0 0.0
        %786 = vmatprep.subr.mxu0 0.0
        %787 = vmatpush1.msra.mxu0 0.0
        %788 = vmatprep.subr.mxu0 0.0
        %789 = vmatpush1.msra.mxu0 0.0
        %790 = vmatprep.subr.mxu0 0.0
        %791 = vmatpush1.msra.mxu0 0.0
        %792 = vmatprep.subr.mxu0 0.0
        %793 = vmatpush1.msra.mxu0 0.0
        %794 = vmatprep.subr.mxu0 0.0
        %795 = vmatpush1.msra.mxu0 0.0
        %796 = vmatprep.subr.mxu0 0.0
        %797 = vmatpush1.msra.mxu0 0.0
        %798 = vmatprep.subr.mxu0 0.0
        %799 = vmatpush1.msra.mxu0 0.0
        %800 = vmatprep.subr.mxu0 0.0
        %801 = vmatpush1.msra.mxu0 0.0
        %802 = vmatprep.subr.mxu0 0.0
        %803 = vmatpush1.msra.mxu0 0.0
        %804 = vmatprep.subr.mxu0 0.0
        %805 = vmatpush1.msra.mxu0 0.0
        %806 = vmatprep.subr.mxu0 0.0
        %807 = vmatpush1.msra.mxu0 0.0
        %808 = vmatprep.subr.mxu0 0.0
        %809 = vmatpush1.msra.mxu0 0.0
        %810 = vmatprep.subr.mxu0 0.0
        %811 = vmatpush1.msra.mxu0 0.0
        %812 = vmatprep.subr.mxu0 0.0
        %813 = vmatpush1.msra.mxu0 0.0
        %814 = vmatprep.subr.mxu0 0.0
        %815 = vmatpush1.msra.mxu0 0.0
        %816 = vmatprep.subr.mxu0 0.0
        %817 = vmatpush1.msra.mxu0 0.0
        %818 = vmatprep.subr.mxu0 0.0
        %819 = vmatpush1.msra.mxu0 0.0
        %820 = vmatprep.subr.mxu0 0.0
        %821 = vmatpush1.msra.mxu0 0.0
        %822 = vmatprep.subr.mxu0 0.0
        %823 = vmatpush1.msra.mxu0 0.0
        %824 = vmatprep.subr.mxu0 0.0
        %825 = vmatpush1.msra.mxu0 0.0
        %826 = vmatprep.subr.mxu0 0.0
        %827 = vmatpush1.msra.mxu0 0.0
        %828 = vmatprep.subr.mxu0 0.0
        %829 = vmatpush1.msra.mxu0 0.0
        %830 = vmatprep.subr.mxu0 0.0
        %831 = vmatpush1.msra.mxu0 0.0
        %832 = vmatprep.mubr.f32.mxu0 0.0
        %v833 = vand.u32 %v306, 4294901760
        %v834 = vsub.f32 %v306, %v833
        %v835 = vand.u32 %v834, 4294901760
        %836 = vmatmul.mubr.f32.gmra.mrb[0].mxu0 %v835
        %v837 = vpop.f32.mrb[0].mxu0
        %v838 = vadd.f32 %v704, %v837
        %v839 = vpop.f32.mrb[0].mxu0
        %v840 = vadd.f32 %v706, %v839
        %841 = vmatprep.mubr.f32.mxu0 0.0
        %v842 = vand.u32 %v309, 4294901760
        %v843 = vsub.f32 %v309, %v842
        %v844 = vand.u32 %v843, 4294901760
        %845 = vmatmul.mubr.f32.gmra.mrb[0].mxu0 %v844
        %v846 = vpop.f32.mrb[0].mxu0
        %v847 = vadd.f32 %v712, %v846
        %v848 = vpop.f32.mrb[0].mxu0
        %v849 = vadd.f32 %v714, %v848
        %850 = vmatprep.mubr.f32.mxu0 0.0
        %v851 = vand.u32 %v312, 4294901760
        %v852 = vsub.f32 %v312, %v851
        %v853 = vand.u32 %v852, 4294901760
        %854 = vmatmul.mubr.f32.gmra.mrb[0].mxu0 %v853
        %v855 = vpop.f32.mrb[0].mxu0
        %v856 = vadd.f32 %v720, %v855
        %v857 = vpop.f32.mrb[0].mxu0
        %v858 = vadd.f32 %v722, %v857
        %859 = vmatprep.mubr.f32.mxu0 0.0
        %v860 = vand.u32 %v315, 4294901760
        %v861 = vsub.f32 %v315, %v860
        %v862 = vand.u32 %v861, 4294901760
        %863 = vmatmul.mubr.f32.gmra.mrb[0].mxu0 %v862
        %v864 = vpop.f32.mrb[0].mxu0
        %v865 = vadd.f32 %v728, %v864
        %v866 = vpop.f32.mrb[0].mxu0
        %v867 = vadd.f32 %v730, %v866
        %868 = vmatprep.mubr.f32.mxu0 0.0
        %v869 = vand.u32 %v318, 4294901760
        %v870 = vsub.f32 %v318, %v869
        %v871 = vand.u32 %v870, 4294901760
        %872 = vmatmul.mubr.f32.gmra.mrb[0].mxu0 %v871
        %v873 = vpop.f32.mrb[0].mxu0
        %v874 = vadd.f32 %v736, %v873
        %v875 = vpop.f32.mrb[0].mxu0
        %v876 = vadd.f32 %v738, %v875
        %877 = vmatprep.mubr.f32.mxu0 0.0
        %v878 = vand.u32 %v321, 4294901760
        %v879 = vsub.f32 %v321, %v878
        %v880 = vand.u32 %v879, 4294901760
        %881 = vmatmul.mubr.f32.gmra.mrb[0].mxu0 %v880
        %v882 = vpop.f32.mrb[0].mxu0
        %v883 = vadd.f32 %v744, %v882
        %v884 = vpop.f32.mrb[0].mxu0
        %v885 = vadd.f32 %v746, %v884
        %886 = vmatprep.mubr.f32.mxu0 0.0
        %v887 = vand.u32 %v324, 4294901760
        %v888 = vsub.f32 %v324, %v887
        %v889 = vand.u32 %v888, 4294901760
        %890 = vmatmul.mubr.f32.gmra.mrb[0].mxu0 %v889
        %v891 = vpop.f32.mrb[0].mxu0
        %v892 = vadd.f32 %v752, %v891
        %v893 = vpop.f32.mrb[0].mxu0
        %v894 = vadd.f32 %v754, %v893
        %895 = vmatprep.mubr.f32.mxu0 0.0
        %v896 = vand.u32 %v327, 4294901760
        %v897 = vsub.f32 %v327, %v896
        %v898 = vand.u32 %v897, 4294901760
        %899 = vmatmul.mubr.f32.gmra.mrb[0].mxu0 %v898
        %v900 = vpop.f32.mrb[0].mxu0
        %v901 = vadd.f32 %v760, %v900
        %v902 = vpop.f32.mrb[0].mxu0
        %v903 = vadd.f32 %v762, %v902
        %904 = vdwg.mxu0
        %v905 = vand.u32 %v297, 4294901760
        %v906 = vsub.f32 %v297, %v905
        %v907 = vand.u32 %v906, 4294901760
        %908 = vmatprep.subr.mxu0 %v907
        %v909 = vand.u32 %v296, 4294901760
        %v910 = vsub.f32 %v296, %v909
        %v911 = vand.u32 %v910, 4294901760
        %912 = vmatpush1.msra.mxu0 %v911
        %v913 = vand.u32 %v301, 4294901760
        %v914 = vsub.f32 %v301, %v913
        %v915 = vand.u32 %v914, 4294901760
        %916 = vmatprep.subr.mxu0 %v915
        %v917 = vand.u32 %v300, 4294901760
        %v918 = vsub.f32 %v300, %v917
        %v919 = vand.u32 %v918, 4294901760
        %920 = vmatpush1.msra.mxu0 %v919
        %921 = vmatprep.subr.mxu0 0.0
        %922 = vmatpush1.msra.mxu0 0.0
        %923 = vmatprep.subr.mxu0 0.0
        %924 = vmatpush1.msra.mxu0 0.0
        %925 = vmatprep.subr.mxu0 0.0
        %926 = vmatpush1.msra.mxu0 0.0
        %927 = vmatprep.subr.mxu0 0.0
        %928 = vmatpush1.msra.mxu0 0.0
        %929 = vmatprep.subr.mxu0 0.0
        %930 = vmatpush1.msra.mxu0 0.0
        %931 = vmatprep.subr.mxu0 0.0
        %932 = vmatpush1.msra.mxu0 0.0
        %933 = vmatprep.subr.mxu0 0.0
        %934 = vmatpush1.msra.mxu0 0.0
        %935 = vmatprep.subr.mxu0 0.0
        %936 = vmatpush1.msra.mxu0 0.0
        %937 = vmatprep.subr.mxu0 0.0
        %938 = vmatpush1.msra.mxu0 0.0
        %939 = vmatprep.subr.mxu0 0.0
        %940 = vmatpush1.msra.mxu0 0.0
        %941 = vmatprep.subr.mxu0 0.0
        %942 = vmatpush1.msra.mxu0 0.0
        %943 = vmatprep.subr.mxu0 0.0
        %944 = vmatpush1.msra.mxu0 0.0
        %945 = vmatprep.subr.mxu0 0.0
        %946 = vmatpush1.msra.mxu0 0.0
        %947 = vmatprep.subr.mxu0 0.0
        %948 = vmatpush1.msra.mxu0 0.0
        %949 = vmatprep.subr.mxu0 0.0
        %950 = vmatpush1.msra.mxu0 0.0
        %951 = vmatprep.subr.mxu0 0.0
        %952 = vmatpush1.msra.mxu0 0.0
        %953 = vmatprep.subr.mxu0 0.0
        %954 = vmatpush1.msra.mxu0 0.0
        %955 = vmatprep.subr.mxu0 0.0
        %956 = vmatpush1.msra.mxu0 0.0
        %957 = vmatprep.subr.mxu0 0.0
        %958 = vmatpush1.msra.mxu0 0.0
        %959 = vmatprep.subr.mxu0 0.0
        %960 = vmatpush1.msra.mxu0 0.0
        %961 = vmatprep.subr.mxu0 0.0
        %962 = vmatpush1.msra.mxu0 0.0
        %963 = vmatprep.subr.mxu0 0.0
        %964 = vmatpush1.msra.mxu0 0.0
        %965 = vmatprep.subr.mxu0 0.0
        %966 = vmatpush1.msra.mxu0 0.0
        %967 = vmatprep.subr.mxu0 0.0
        %968 = vmatpush1.msra.mxu0 0.0
        %969 = vmatprep.subr.mxu0 0.0
        %970 = vmatpush1.msra.mxu0 0.0
        %971 = vmatprep.subr.mxu0 0.0
        %972 = vmatpush1.msra.mxu0 0.0
        %973 = vmatprep.subr.mxu0 0.0
        %974 = vmatpush1.msra.mxu0 0.0
        %975 = vmatprep.subr.mxu0 0.0
        %976 = vmatpush1.msra.mxu0 0.0
        %977 = vmatprep.subr.mxu0 0.0
        %978 = vmatpush1.msra.mxu0 0.0
        %979 = vmatprep.subr.mxu0 0.0
        %980 = vmatpush1.msra.mxu0 0.0
        %981 = vmatprep.mubr.f32.mxu0 0.0
        %v982 = vand.u32 %v306, 4294901760
        %983 = vmatmul.mubr.f32.gmra.mrb[0].mxu0 %v982
        %v984 = vpop.f32.mrb[0].mxu0
        %v985 = vadd.f32 %v838, %v984
        %v986 = vpop.f32.mrb[0].mxu0
        %v987 = vadd.f32 %v840, %v986
        %988 = vmatprep.mubr.f32.mxu0 0.0
        %v989 = vand.u32 %v309, 4294901760
        %990 = vmatmul.mubr.f32.gmra.mrb[0].mxu0 %v989
        %v991 = vpop.f32.mrb[0].mxu0
        %v992 = vadd.f32 %v847, %v991
        %v993 = vpop.f32.mrb[0].mxu0
        %v994 = vadd.f32 %v849, %v993
        %995 = vmatprep.mubr.f32.mxu0 0.0
        %v996 = vand.u32 %v312, 4294901760
        %997 = vmatmul.mubr.f32.gmra.mrb[0].mxu0 %v996
        %v998 = vpop.f32.mrb[0].mxu0
        %v999 = vadd.f32 %v856, %v998
        %v1000 = vpop.f32.mrb[0].mxu0
        %v1001 = vadd.f32 %v858, %v1000
        %1002 = vmatprep.mubr.f32.mxu0 0.0
        %v1003 = vand.u32 %v315, 4294901760
        %1004 = vmatmul.mubr.f32.gmra.mrb[0].mxu0 %v1003
        %v1005 = vpop.f32.mrb[0].mxu0
        %v1006 = vadd.f32 %v865, %v1005
        %v1007 = vpop.f32.mrb[0].mxu0
        %v1008 = vadd.f32 %v867, %v1007
        %1009 = vmatprep.mubr.f32.mxu0 0.0
        %v1010 = vand.u32 %v318, 4294901760
        %1011 = vmatmul.mubr.f32.gmra.mrb[0].mxu0 %v1010
        %v1012 = vpop.f32.mrb[0].mxu0
        %v1013 = vadd.f32 %v874, %v1012
        %v1014 = vpop.f32.mrb[0].mxu0
        %v1015 = vadd.f32 %v876, %v1014
        %1016 = vmatprep.mubr.f32.mxu0 0.0
        %v1017 = vand.u32 %v321, 4294901760
        %1018 = vmatmul.mubr.f32.gmra.mrb[0].mxu0 %v1017
        %v1019 = vpop.f32.mrb[0].mxu0
        %v1020 = vadd.f32 %v883, %v1019
        %v1021 = vpop.f32.mrb[0].mxu0
        %v1022 = vadd.f32 %v885, %v1021
        %1023 = vmatprep.mubr.f32.mxu0 0.0
        %v1024 = vand.u32 %v324, 4294901760
        %1025 = vmatmul.mubr.f32.gmra.mrb[0].mxu0 %v1024
        %v1026 = vpop.f32.mrb[0].mxu0
        %v1027 = vadd.f32 %v892, %v1026
        %v1028 = vpop.f32.mrb[0].mxu0
        %v1029 = vadd.f32 %v894, %v1028
        %1030 = vmatprep.mubr.f32.mxu0 0.0
        %v1031 = vand.u32 %v327, 4294901760
        %1032 = vmatmul.mubr.f32.gmra.mrb[0].mxu0 %v1031
        %v1033 = vpop.f32.mrb[0].mxu0
        %v1034 = vadd.f32 %v901, %v1033
        %v1035 = vpop.f32.mrb[0].mxu0
        %v1036 = vadd.f32 %v903, %v1035
        %1037 = vdwg.mxu0
        %v1038 = vand.u32 %v297, 4294901760
        %1039 = vmatprep.subr.mxu0 %v1038
        %v1040 = vand.u32 %v296, 4294901760
        %1041 = vmatpush1.msra.mxu0 %v1040
        %v1042 = vand.u32 %v301, 4294901760
        %1043 = vmatprep.subr.mxu0 %v1042
        %v1044 = vand.u32 %v300, 4294901760
        %1045 = vmatpush1.msra.mxu0 %v1044
        %1046 = vmatprep.subr.mxu0 0.0
        %1047 = vmatpush1.msra.mxu0 0.0
        %1048 = vmatprep.subr.mxu0 0.0
        %1049 = vmatpush1.msra.mxu0 0.0
        %1050 = vmatprep.subr.mxu0 0.0
        %1051 = vmatpush1.msra.mxu0 0.0
        %1052 = vmatprep.subr.mxu0 0.0
        %1053 = vmatpush1.msra.mxu0 0.0
        %1054 = vmatprep.subr.mxu0 0.0
        %1055 = vmatpush1.msra.mxu0 0.0
        %1056 = vmatprep.subr.mxu0 0.0
        %1057 = vmatpush1.msra.mxu0 0.0
        %1058 = vmatprep.subr.mxu0 0.0
        %1059 = vmatpush1.msra.mxu0 0.0
        %1060 = vmatprep.subr.mxu0 0.0
        %1061 = vmatpush1.msra.mxu0 0.0
        %1062 = vmatprep.subr.mxu0 0.0
        %1063 = vmatpush1.msra.mxu0 0.0
        %1064 = vmatprep.subr.mxu0 0.0
        %1065 = vmatpush1.msra.mxu0 0.0
        %1066 = vmatprep.subr.mxu0 0.0
        %1067 = vmatpush1.msra.mxu0 0.0
        %1068 = vmatprep.subr.mxu0 0.0
        %1069 = vmatpush1.msra.mxu0 0.0
        %1070 = vmatprep.subr.mxu0 0.0
        %1071 = vmatpush1.msra.mxu0 0.0
        %1072 = vmatprep.subr.mxu0 0.0
        %1073 = vmatpush1.msra.mxu0 0.0
        %1074 = vmatprep.subr.mxu0 0.0
        %1075 = vmatpush1.msra.mxu0 0.0
        %1076 = vmatprep.subr.mxu0 0.0
        %1077 = vmatpush1.msra.mxu0 0.0
        %1078 = vmatprep.subr.mxu0 0.0
        %1079 = vmatpush1.msra.mxu0 0.0
        %1080 = vmatprep.subr.mxu0 0.0
        %1081 = vmatpush1.msra.mxu0 0.0
        %1082 = vmatprep.subr.mxu0 0.0
        %1083 = vmatpush1.msra.mxu0 0.0
        %1084 = vmatprep.subr.mxu0 0.0
        %1085 = vmatpush1.msra.mxu0 0.0
        %1086 = vmatprep.subr.mxu0 0.0
        %1087 = vmatpush1.msra.mxu0 0.0
        %1088 = vmatprep.subr.mxu0 0.0
        %1089 = vmatpush1.msra.mxu0 0.0
        %1090 = vmatprep.subr.mxu0 0.0
        %1091 = vmatpush1.msra.mxu0 0.0
        %1092 = vmatprep.subr.mxu0 0.0
        %1093 = vmatpush1.msra.mxu0 0.0
        %1094 = vmatprep.subr.mxu0 0.0
        %1095 = vmatpush1.msra.mxu0 0.0
        %1096 = vmatprep.subr.mxu0 0.0
        %1097 = vmatpush1.msra.mxu0 0.0
        %1098 = vmatprep.subr.mxu0 0.0
        %1099 = vmatpush1.msra.mxu0 0.0
        %1100 = vmatprep.subr.mxu0 0.0
        %1101 = vmatpush1.msra.mxu0 0.0
        %1102 = vmatprep.subr.mxu0 0.0
        %1103 = vmatpush1.msra.mxu0 0.0
        %1104 = vmatprep.subr.mxu0 0.0
        %1105 = vmatpush1.msra.mxu0 0.0
        %1106 = vmatprep.mubr.f32.mxu0 0.0
        %v1107 = vand.u32 %v306, 4294901760
        %1108 = vmatmul.mubr.f32.gmra.mrb[0].mxu0 %v1107
        %v1109 = vpop.f32.mrb[0].mxu0
        %v1110 = vadd.f32 %v985, %v1109
        %v1111 = vpop.f32.mrb[0].mxu0
        %v1112 = vadd.f32 %v987, %v1111
        %1113 = vmatprep.mubr.f32.mxu0 0.0
        %v1114 = vand.u32 %v309, 4294901760
        %1115 = vmatmul.mubr.f32.gmra.mrb[0].mxu0 %v1114
        %v1116 = vpop.f32.mrb[0].mxu0
        %v1117 = vadd.f32 %v992, %v1116
        %v1118 = vpop.f32.mrb[0].mxu0
        %v1119 = vadd.f32 %v994, %v1118
        %1120 = vmatprep.mubr.f32.mxu0 0.0
        %v1121 = vand.u32 %v312, 4294901760
        %1122 = vmatmul.mubr.f32.gmra.mrb[0].mxu0 %v1121
        %v1123 = vpop.f32.mrb[0].mxu0
        %v1124 = vadd.f32 %v999, %v1123
        %v1125 = vpop.f32.mrb[0].mxu0
        %v1126 = vadd.f32 %v1001, %v1125
        %1127 = vmatprep.mubr.f32.mxu0 0.0
        %v1128 = vand.u32 %v315, 4294901760
        %1129 = vmatmul.mubr.f32.gmra.mrb[0].mxu0 %v1128
        %v1130 = vpop.f32.mrb[0].mxu0
        %v1131 = vadd.f32 %v1006, %v1130
        %v1132 = vpop.f32.mrb[0].mxu0
        %v1133 = vadd.f32 %v1008, %v1132
        %1134 = vmatprep.mubr.f32.mxu0 0.0
        %v1135 = vand.u32 %v318, 4294901760
        %1136 = vmatmul.mubr.f32.gmra.mrb[0].mxu0 %v1135
        %v1137 = vpop.f32.mrb[0].mxu0
        %v1138 = vadd.f32 %v1013, %v1137
        %v1139 = vpop.f32.mrb[0].mxu0
        %v1140 = vadd.f32 %v1015, %v1139
        %1141 = vmatprep.mubr.f32.mxu0 0.0
        %v1142 = vand.u32 %v321, 4294901760
        %1143 = vmatmul.mubr.f32.gmra.mrb[0].mxu0 %v1142
        %v1144 = vpop.f32.mrb[0].mxu0
        %v1145 = vadd.f32 %v1020, %v1144
        %v1146 = vpop.f32.mrb[0].mxu0
        %v1147 = vadd.f32 %v1022, %v1146
        %1148 = vmatprep.mubr.f32.mxu0 0.0
        %v1149 = vand.u32 %v324, 4294901760
        %1150 = vmatmul.mubr.f32.gmra.mrb[0].mxu0 %v1149
        %v1151 = vpop.f32.mrb[0].mxu0
        %v1152 = vadd.f32 %v1027, %v1151
        %v1153 = vpop.f32.mrb[0].mxu0
        %v1154 = vadd.f32 %v1029, %v1153
        %1155 = vmatprep.mubr.f32.mxu0 0.0
        %v1156 = vand.u32 %v327, 4294901760
        %1157 = vmatmul.mubr.f32.gmra.mrb[0].mxu0 %v1156
        %v1158 = vpop.f32.mrb[0].mxu0
        %v1159 = vadd.f32 %v1034, %v1158
        %v1160 = vpop.f32.mrb[0].mxu0
        %v1161 = vadd.f32 %v1036, %v1160
        %1162 = vdwg.mxu0
        %v1163 = vand.u32 %v299, 4294901760
        %1164 = vmatprep.subr.mxu0 %v1163
        %v1165 = vand.u32 %v298, 4294901760
        %1166 = vmatpush1.msra.mxu0 %v1165
        %v1167 = vand.u32 %v303, 4294901760
        %1168 = vmatprep.subr.mxu0 %v1167
        %v1169 = vand.u32 %v302, 4294901760
        %1170 = vmatpush1.msra.mxu0 %v1169
        %1171 = vmatprep.subr.mxu0 0.0
        %1172 = vmatpush1.msra.mxu0 0.0
        %1173 = vmatprep.subr.mxu0 0.0
        %1174 = vmatpush1.msra.mxu0 0.0
        %1175 = vmatprep.subr.mxu0 0.0
        %1176 = vmatpush1.msra.mxu0 0.0
        %1177 = vmatprep.subr.mxu0 0.0
        %1178 = vmatpush1.msra.mxu0 0.0
        %1179 = vmatprep.subr.mxu0 0.0
        %1180 = vmatpush1.msra.mxu0 0.0
        %1181 = vmatprep.subr.mxu0 0.0
        %1182 = vmatpush1.msra.mxu0 0.0
        %1183 = vmatprep.subr.mxu0 0.0
        %1184 = vmatpush1.msra.mxu0 0.0
        %1185 = vmatprep.subr.mxu0 0.0
        %1186 = vmatpush1.msra.mxu0 0.0
        %1187 = vmatprep.subr.mxu0 0.0
        %1188 = vmatpush1.msra.mxu0 0.0
        %1189 = vmatprep.subr.mxu0 0.0
        %1190 = vmatpush1.msra.mxu0 0.0
        %1191 = vmatprep.subr.mxu0 0.0
        %1192 = vmatpush1.msra.mxu0 0.0
        %1193 = vmatprep.subr.mxu0 0.0
        %1194 = vmatpush1.msra.mxu0 0.0
        %1195 = vmatprep.subr.mxu0 0.0
        %1196 = vmatpush1.msra.mxu0 0.0
        %1197 = vmatprep.subr.mxu0 0.0
        %1198 = vmatpush1.msra.mxu0 0.0
        %1199 = vmatprep.subr.mxu0 0.0
        %1200 = vmatpush1.msra.mxu0 0.0
        %1201 = vmatprep.subr.mxu0 0.0
        %1202 = vmatpush1.msra.mxu0 0.0
        %1203 = vmatprep.subr.mxu0 0.0
        %1204 = vmatpush1.msra.mxu0 0.0
        %1205 = vmatprep.subr.mxu0 0.0
        %1206 = vmatpush1.msra.mxu0 0.0
        %1207 = vmatprep.subr.mxu0 0.0
        %1208 = vmatpush1.msra.mxu0 0.0
        %1209 = vmatprep.subr.mxu0 0.0
        %1210 = vmatpush1.msra.mxu0 0.0
        %1211 = vmatprep.subr.mxu0 0.0
        %1212 = vmatpush1.msra.mxu0 0.0
        %1213 = vmatprep.subr.mxu0 0.0
        %1214 = vmatpush1.msra.mxu0 0.0
        %1215 = vmatprep.subr.mxu0 0.0
        %1216 = vmatpush1.msra.mxu0 0.0
        %1217 = vmatprep.subr.mxu0 0.0
        %1218 = vmatpush1.msra.mxu0 0.0
        %1219 = vmatprep.subr.mxu0 0.0
        %1220 = vmatpush1.msra.mxu0 0.0
        %1221 = vmatprep.subr.mxu0 0.0
        %1222 = vmatpush1.msra.mxu0 0.0
        %1223 = vmatprep.subr.mxu0 0.0
        %1224 = vmatpush1.msra.mxu0 0.0
        %1225 = vmatprep.subr.mxu0 0.0
        %1226 = vmatpush1.msra.mxu0 0.0
        %1227 = vmatprep.subr.mxu0 0.0
        %1228 = vmatpush1.msra.mxu0 0.0
        %1229 = vmatprep.subr.mxu0 0.0
        %1230 = vmatpush1.msra.mxu0 0.0
        %1231 = vmatprep.mubr.f32.mxu0 0.0
        %v1232 = vand.u32 %v306, 4294901760
        %v1233 = vsub.f32 %v306, %v1232
        %v1234 = vand.u32 %v1233, 4294901760
        %v1235 = vsub.f32 %v1233, %v1234
        %v1236 = vand.u32 %v1235, 4294901760
        %1237 = vmatmul.mubr.f32.gmra.mrb[0].mxu0 %v1236
        %v1238 = vpop.f32.mrb[0].mxu0
        %v1239 = vadd.f32 0.0, %v1238
        %v1240 = vpop.f32.mrb[0].mxu0
        %v1241 = vadd.f32 0.0, %v1240
        %1242 = vmatprep.mubr.f32.mxu0 0.0
        %v1243 = vand.u32 %v309, 4294901760
        %v1244 = vsub.f32 %v309, %v1243
        %v1245 = vand.u32 %v1244, 4294901760
        %v1246 = vsub.f32 %v1244, %v1245
        %v1247 = vand.u32 %v1246, 4294901760
        %1248 = vmatmul.mubr.f32.gmra.mrb[0].mxu0 %v1247
        %v1249 = vpop.f32.mrb[0].mxu0
        %v1250 = vadd.f32 0.0, %v1249
        %v1251 = vpop.f32.mrb[0].mxu0
        %v1252 = vadd.f32 0.0, %v1251
        %1253 = vmatprep.mubr.f32.mxu0 0.0
        %v1254 = vand.u32 %v312, 4294901760
        %v1255 = vsub.f32 %v312, %v1254
        %v1256 = vand.u32 %v1255, 4294901760
        %v1257 = vsub.f32 %v1255, %v1256
        %v1258 = vand.u32 %v1257, 4294901760
        %1259 = vmatmul.mubr.f32.gmra.mrb[0].mxu0 %v1258
        %v1260 = vpop.f32.mrb[0].mxu0
        %v1261 = vadd.f32 0.0, %v1260
        %v1262 = vpop.f32.mrb[0].mxu0
        %v1263 = vadd.f32 0.0, %v1262
        %1264 = vmatprep.mubr.f32.mxu0 0.0
        %v1265 = vand.u32 %v315, 4294901760
        %v1266 = vsub.f32 %v315, %v1265
        %v1267 = vand.u32 %v1266, 4294901760
        %v1268 = vsub.f32 %v1266, %v1267
        %v1269 = vand.u32 %v1268, 4294901760
        %1270 = vmatmul.mubr.f32.gmra.mrb[0].mxu0 %v1269
        %v1271 = vpop.f32.mrb[0].mxu0
        %v1272 = vadd.f32 0.0, %v1271
        %v1273 = vpop.f32.mrb[0].mxu0
        %v1274 = vadd.f32 0.0, %v1273
        %1275 = vmatprep.mubr.f32.mxu0 0.0
        %v1276 = vand.u32 %v318, 4294901760
        %v1277 = vsub.f32 %v318, %v1276
        %v1278 = vand.u32 %v1277, 4294901760
        %v1279 = vsub.f32 %v1277, %v1278
        %v1280 = vand.u32 %v1279, 4294901760
        %1281 = vmatmul.mubr.f32.gmra.mrb[0].mxu0 %v1280
        %v1282 = vpop.f32.mrb[0].mxu0
        %v1283 = vadd.f32 0.0, %v1282
        %v1284 = vpop.f32.mrb[0].mxu0
        %v1285 = vadd.f32 0.0, %v1284
        %1286 = vmatprep.mubr.f32.mxu0 0.0
        %v1287 = vand.u32 %v321, 4294901760
        %v1288 = vsub.f32 %v321, %v1287
        %v1289 = vand.u32 %v1288, 4294901760
        %v1290 = vsub.f32 %v1288, %v1289
        %v1291 = vand.u32 %v1290, 4294901760
        %1292 = vmatmul.mubr.f32.gmra.mrb[0].mxu0 %v1291
        %v1293 = vpop.f32.mrb[0].mxu0
        %v1294 = vadd.f32 0.0, %v1293
        %v1295 = vpop.f32.mrb[0].mxu0
        %v1296 = vadd.f32 0.0, %v1295
        %1297 = vmatprep.mubr.f32.mxu0 0.0
        %v1298 = vand.u32 %v324, 4294901760
        %v1299 = vsub.f32 %v324, %v1298
        %v1300 = vand.u32 %v1299, 4294901760
        %v1301 = vsub.f32 %v1299, %v1300
        %v1302 = vand.u32 %v1301, 4294901760
        %1303 = vmatmul.mubr.f32.gmra.mrb[0].mxu0 %v1302
        %v1304 = vpop.f32.mrb[0].mxu0
        %v1305 = vadd.f32 0.0, %v1304
        %v1306 = vpop.f32.mrb[0].mxu0
        %v1307 = vadd.f32 0.0, %v1306
        %1308 = vmatprep.mubr.f32.mxu0 0.0
        %v1309 = vand.u32 %v327, 4294901760
        %v1310 = vsub.f32 %v327, %v1309
        %v1311 = vand.u32 %v1310, 4294901760
        %v1312 = vsub.f32 %v1310, %v1311
        %v1313 = vand.u32 %v1312, 4294901760
        %1314 = vmatmul.mubr.f32.gmra.mrb[0].mxu0 %v1313
        %v1315 = vpop.f32.mrb[0].mxu0
        %v1316 = vadd.f32 0.0, %v1315
        %v1317 = vpop.f32.mrb[0].mxu0
        %v1318 = vadd.f32 0.0, %v1317
        %1319 = vdwg.mxu0
        %v1320 = vand.u32 %v299, 4294901760
        %v1321 = vsub.f32 %v299, %v1320
        %v1322 = vand.u32 %v1321, 4294901760
        %v1323 = vsub.f32 %v1321, %v1322
        %v1324 = vand.u32 %v1323, 4294901760
        %1325 = vmatprep.subr.mxu0 %v1324
        %v1326 = vand.u32 %v298, 4294901760
        %v1327 = vsub.f32 %v298, %v1326
        %v1328 = vand.u32 %v1327, 4294901760
        %v1329 = vsub.f32 %v1327, %v1328
        %v1330 = vand.u32 %v1329, 4294901760
        %1331 = vmatpush1.msra.mxu0 %v1330
        %v1332 = vand.u32 %v303, 4294901760
        %v1333 = vsub.f32 %v303, %v1332
        %v1334 = vand.u32 %v1333, 4294901760
        %v1335 = vsub.f32 %v1333, %v1334
        %v1336 = vand.u32 %v1335, 4294901760
        %1337 = vmatprep.subr.mxu0 %v1336
        %v1338 = vand.u32 %v302, 4294901760
        %v1339 = vsub.f32 %v302, %v1338
        %v1340 = vand.u32 %v1339, 4294901760
        %v1341 = vsub.f32 %v1339, %v1340
        %v1342 = vand.u32 %v1341, 4294901760
        %1343 = vmatpush1.msra.mxu0 %v1342
        %1344 = vmatprep.subr.mxu0 0.0
        %1345 = vmatpush1.msra.mxu0 0.0
        %1346 = vmatprep.subr.mxu0 0.0
        %1347 = vmatpush1.msra.mxu0 0.0
        %1348 = vmatprep.subr.mxu0 0.0
        %1349 = vmatpush1.msra.mxu0 0.0
        %1350 = vmatprep.subr.mxu0 0.0
        %1351 = vmatpush1.msra.mxu0 0.0
        %1352 = vmatprep.subr.mxu0 0.0
        %1353 = vmatpush1.msra.mxu0 0.0
        %1354 = vmatprep.subr.mxu0 0.0
        %1355 = vmatpush1.msra.mxu0 0.0
        %1356 = vmatprep.subr.mxu0 0.0
        %1357 = vmatpush1.msra.mxu0 0.0
        %1358 = vmatprep.subr.mxu0 0.0
        %1359 = vmatpush1.msra.mxu0 0.0
        %1360 = vmatprep.subr.mxu0 0.0
        %1361 = vmatpush1.msra.mxu0 0.0
        %1362 = vmatprep.subr.mxu0 0.0
        %1363 = vmatpush1.msra.mxu0 0.0
        %1364 = vmatprep.subr.mxu0 0.0
        %1365 = vmatpush1.msra.mxu0 0.0
        %1366 = vmatprep.subr.mxu0 0.0
        %1367 = vmatpush1.msra.mxu0 0.0
        %1368 = vmatprep.subr.mxu0 0.0
        %1369 = vmatpush1.msra.mxu0 0.0
        %1370 = vmatprep.subr.mxu0 0.0
        %1371 = vmatpush1.msra.mxu0 0.0
        %1372 = vmatprep.subr.mxu0 0.0
        %1373 = vmatpush1.msra.mxu0 0.0
        %1374 = vmatprep.subr.mxu0 0.0
        %1375 = vmatpush1.msra.mxu0 0.0
        %1376 = vmatprep.subr.mxu0 0.0
        %1377 = vmatpush1.msra.mxu0 0.0
        %1378 = vmatprep.subr.mxu0 0.0
        %1379 = vmatpush1.msra.mxu0 0.0
        %1380 = vmatprep.subr.mxu0 0.0
        %1381 = vmatpush1.msra.mxu0 0.0
        %1382 = vmatprep.subr.mxu0 0.0
        %1383 = vmatpush1.msra.mxu0 0.0
        %1384 = vmatprep.subr.mxu0 0.0
        %1385 = vmatpush1.msra.mxu0 0.0
        %1386 = vmatprep.subr.mxu0 0.0
        %1387 = vmatpush1.msra.mxu0 0.0
        %1388 = vmatprep.subr.mxu0 0.0
        %1389 = vmatpush1.msra.mxu0 0.0
        %1390 = vmatprep.subr.mxu0 0.0
        %1391 = vmatpush1.msra.mxu0 0.0
        %1392 = vmatprep.subr.mxu0 0.0
        %1393 = vmatpush1.msra.mxu0 0.0
        %1394 = vmatprep.subr.mxu0 0.0
        %1395 = vmatpush1.msra.mxu0 0.0
        %1396 = vmatprep.subr.mxu0 0.0
        %1397 = vmatpush1.msra.mxu0 0.0
        %1398 = vmatprep.subr.mxu0 0.0
        %1399 = vmatpush1.msra.mxu0 0.0
        %1400 = vmatprep.subr.mxu0 0.0
        %1401 = vmatpush1.msra.mxu0 0.0
        %1402 = vmatprep.subr.mxu0 0.0
        %1403 = vmatpush1.msra.mxu0 0.0
        %1404 = vmatprep.mubr.f32.mxu0 0.0
        %v1405 = vand.u32 %v306, 4294901760
        %1406 = vmatmul.mubr.f32.gmra.mrb[0].mxu0 %v1405
        %v1407 = vpop.f32.mrb[0].mxu0
        %v1408 = vadd.f32 %v1239, %v1407
        %v1409 = vpop.f32.mrb[0].mxu0
        %v1410 = vadd.f32 %v1241, %v1409
        %1411 = vmatprep.mubr.f32.mxu0 0.0
        %v1412 = vand.u32 %v309, 4294901760
        %1413 = vmatmul.mubr.f32.gmra.mrb[0].mxu0 %v1412
        %v1414 = vpop.f32.mrb[0].mxu0
        %v1415 = vadd.f32 %v1250, %v1414
        %v1416 = vpop.f32.mrb[0].mxu0
        %v1417 = vadd.f32 %v1252, %v1416
        %1418 = vmatprep.mubr.f32.mxu0 0.0
        %v1419 = vand.u32 %v312, 4294901760
        %1420 = vmatmul.mubr.f32.gmra.mrb[0].mxu0 %v1419
        %v1421 = vpop.f32.mrb[0].mxu0
        %v1422 = vadd.f32 %v1261, %v1421
        %v1423 = vpop.f32.mrb[0].mxu0
        %v1424 = vadd.f32 %v1263, %v1423
        %1425 = vmatprep.mubr.f32.mxu0 0.0
        %v1426 = vand.u32 %v315, 4294901760
        %1427 = vmatmul.mubr.f32.gmra.mrb[0].mxu0 %v1426
        %v1428 = vpop.f32.mrb[0].mxu0
        %v1429 = vadd.f32 %v1272, %v1428
        %v1430 = vpop.f32.mrb[0].mxu0
        %v1431 = vadd.f32 %v1274, %v1430
        %1432 = vmatprep.mubr.f32.mxu0 0.0
        %v1433 = vand.u32 %v318, 4294901760
        %1434 = vmatmul.mubr.f32.gmra.mrb[0].mxu0 %v1433
        %v1435 = vpop.f32.mrb[0].mxu0
        %v1436 = vadd.f32 %v1283, %v1435
        %v1437 = vpop.f32.mrb[0].mxu0
        %v1438 = vadd.f32 %v1285, %v1437
        %1439 = vmatprep.mubr.f32.mxu0 0.0
        %v1440 = vand.u32 %v321, 4294901760
        %1441 = vmatmul.mubr.f32.gmra.mrb[0].mxu0 %v1440
        %v1442 = vpop.f32.mrb[0].mxu0
        %v1443 = vadd.f32 %v1294, %v1442
        %v1444 = vpop.f32.mrb[0].mxu0
        %v1445 = vadd.f32 %v1296, %v1444
        %1446 = vmatprep.mubr.f32.mxu0 0.0
        %v1447 = vand.u32 %v324, 4294901760
        %1448 = vmatmul.mubr.f32.gmra.mrb[0].mxu0 %v1447
        %v1449 = vpop.f32.mrb[0].mxu0
        %v1450 = vadd.f32 %v1305, %v1449
        %v1451 = vpop.f32.mrb[0].mxu0
        %v1452 = vadd.f32 %v1307, %v1451
        %1453 = vmatprep.mubr.f32.mxu0 0.0
        %v1454 = vand.u32 %v327, 4294901760
        %1455 = vmatmul.mubr.f32.gmra.mrb[0].mxu0 %v1454
        %v1456 = vpop.f32.mrb[0].mxu0
        %v1457 = vadd.f32 %v1316, %v1456
        %v1458 = vpop.f32.mrb[0].mxu0
        %v1459 = vadd.f32 %v1318, %v1458
        %1460 = vdwg.mxu0
        %v1461 = vand.u32 %v299, 4294901760
        %v1462 = vsub.f32 %v299, %v1461
        %1463 = vmatprep.subr.mxu0 %v1462
        %v1464 = vand.u32 %v298, 4294901760
        %v1465 = vsub.f32 %v298, %v1464
        %1466 = vmatpush1.msra.mxu0 %v1465
        %v1467 = vand.u32 %v303, 4294901760
        %v1468 = vsub.f32 %v303, %v1467
        %1469 = vmatprep.subr.mxu0 %v1468
        %v1470 = vand.u32 %v302, 4294901760
        %v1471 = vsub.f32 %v302, %v1470
        %1472 = vmatpush1.msra.mxu0 %v1471
        %1473 = vmatprep.subr.mxu0 0.0
        %1474 = vmatpush1.msra.mxu0 0.0
        %1475 = vmatprep.subr.mxu0 0.0
        %1476 = vmatpush1.msra.mxu0 0.0
        %1477 = vmatprep.subr.mxu0 0.0
        %1478 = vmatpush1.msra.mxu0 0.0
        %1479 = vmatprep.subr.mxu0 0.0
        %1480 = vmatpush1.msra.mxu0 0.0
        %1481 = vmatprep.subr.mxu0 0.0
        %1482 = vmatpush1.msra.mxu0 0.0
        %1483 = vmatprep.subr.mxu0 0.0
        %1484 = vmatpush1.msra.mxu0 0.0
        %1485 = vmatprep.subr.mxu0 0.0
        %1486 = vmatpush1.msra.mxu0 0.0
        %1487 = vmatprep.subr.mxu0 0.0
        %1488 = vmatpush1.msra.mxu0 0.0
        %1489 = vmatprep.subr.mxu0 0.0
        %1490 = vmatpush1.msra.mxu0 0.0
        %1491 = vmatprep.subr.mxu0 0.0
        %1492 = vmatpush1.msra.mxu0 0.0
        %1493 = vmatprep.subr.mxu0 0.0
        %1494 = vmatpush1.msra.mxu0 0.0
        %1495 = vmatprep.subr.mxu0 0.0
        %1496 = vmatpush1.msra.mxu0 0.0
        %1497 = vmatprep.subr.mxu0 0.0
        %1498 = vmatpush1.msra.mxu0 0.0
        %1499 = vmatprep.subr.mxu0 0.0
        %1500 = vmatpush1.msra.mxu0 0.0
        %1501 = vmatprep.subr.mxu0 0.0
        %1502 = vmatpush1.msra.mxu0 0.0
        %1503 = vmatprep.subr.mxu0 0.0
        %1504 = vmatpush1.msra.mxu0 0.0
        %1505 = vmatprep.subr.mxu0 0.0
        %1506 = vmatpush1.msra.mxu0 0.0
        %1507 = vmatprep.subr.mxu0 0.0
        %1508 = vmatpush1.msra.mxu0 0.0
        %1509 = vmatprep.subr.mxu0 0.0
        %1510 = vmatpush1.msra.mxu0 0.0
        %1511 = vmatprep.subr.mxu0 0.0
        %1512 = vmatpush1.msra.mxu0 0.0
        %1513 = vmatprep.subr.mxu0 0.0
        %1514 = vmatpush1.msra.mxu0 0.0
        %1515 = vmatprep.subr.mxu0 0.0
        %1516 = vmatpush1.msra.mxu0 0.0
        %1517 = vmatprep.subr.mxu0 0.0
        %1518 = vmatpush1.msra.mxu0 0.0
        %1519 = vmatprep.subr.mxu0 0.0
        %1520 = vmatpush1.msra.mxu0 0.0
        %1521 = vmatprep.subr.mxu0 0.0
        %1522 = vmatpush1.msra.mxu0 0.0
        %1523 = vmatprep.subr.mxu0 0.0
        %1524 = vmatpush1.msra.mxu0 0.0
        %1525 = vmatprep.subr.mxu0 0.0
        %1526 = vmatpush1.msra.mxu0 0.0
        %1527 = vmatprep.subr.mxu0 0.0
        %1528 = vmatpush1.msra.mxu0 0.0
        %1529 = vmatprep.subr.mxu0 0.0
        %1530 = vmatpush1.msra.mxu0 0.0
        %1531 = vmatprep.subr.mxu0 0.0
        %1532 = vmatpush1.msra.mxu0 0.0
        %1533 = vmatprep.mubr.f32.mxu0 0.0
        %v1534 = vand.u32 %v306, 4294901760
        %v1535 = vsub.f32 %v306, %v1534
        %1536 = vmatmul.mubr.f32.gmra.mrb[0].mxu0 %v1535
        %v1537 = vpop.f32.mrb[0].mxu0
        %v1538 = vadd.f32 %v1408, %v1537
        %v1539 = vpop.f32.mrb[0].mxu0
        %v1540 = vadd.f32 %v1410, %v1539
        %1541 = vmatprep.mubr.f32.mxu0 0.0
        %v1542 = vand.u32 %v309, 4294901760
        %v1543 = vsub.f32 %v309, %v1542
        %1544 = vmatmul.mubr.f32.gmra.mrb[0].mxu0 %v1543
        %v1545 = vpop.f32.mrb[0].mxu0
        %v1546 = vadd.f32 %v1415, %v1545
        %v1547 = vpop.f32.mrb[0].mxu0
        %v1548 = vadd.f32 %v1417, %v1547
        %1549 = vmatprep.mubr.f32.mxu0 0.0
        %v1550 = vand.u32 %v312, 4294901760
        %v1551 = vsub.f32 %v312, %v1550
        %1552 = vmatmul.mubr.f32.gmra.mrb[0].mxu0 %v1551
        %v1553 = vpop.f32.mrb[0].mxu0
        %v1554 = vadd.f32 %v1422, %v1553
        %v1555 = vpop.f32.mrb[0].mxu0
        %v1556 = vadd.f32 %v1424, %v1555
        %1557 = vmatprep.mubr.f32.mxu0 0.0
        %v1558 = vand.u32 %v315, 4294901760
        %v1559 = vsub.f32 %v315, %v1558
        %1560 = vmatmul.mubr.f32.gmra.mrb[0].mxu0 %v1559
        %v1561 = vpop.f32.mrb[0].mxu0
        %v1562 = vadd.f32 %v1429, %v1561
        %v1563 = vpop.f32.mrb[0].mxu0
        %v1564 = vadd.f32 %v1431, %v1563
        %1565 = vmatprep.mubr.f32.mxu0 0.0
        %v1566 = vand.u32 %v318, 4294901760
        %v1567 = vsub.f32 %v318, %v1566
        %1568 = vmatmul.mubr.f32.gmra.mrb[0].mxu0 %v1567
        %v1569 = vpop.f32.mrb[0].mxu0
        %v1570 = vadd.f32 %v1436, %v1569
        %v1571 = vpop.f32.mrb[0].mxu0
        %v1572 = vadd.f32 %v1438, %v1571
        %1573 = vmatprep.mubr.f32.mxu0 0.0
        %v1574 = vand.u32 %v321, 4294901760
        %v1575 = vsub.f32 %v321, %v1574
        %1576 = vmatmul.mubr.f32.gmra.mrb[0].mxu0 %v1575
        %v1577 = vpop.f32.mrb[0].mxu0
        %v1578 = vadd.f32 %v1443, %v1577
        %v1579 = vpop.f32.mrb[0].mxu0
        %v1580 = vadd.f32 %v1445, %v1579
        %1581 = vmatprep.mubr.f32.mxu0 0.0
        %v1582 = vand.u32 %v324, 4294901760
        %v1583 = vsub.f32 %v324, %v1582
        %1584 = vmatmul.mubr.f32.gmra.mrb[0].mxu0 %v1583
        %v1585 = vpop.f32.mrb[0].mxu0
        %v1586 = vadd.f32 %v1450, %v1585
        %v1587 = vpop.f32.mrb[0].mxu0
        %v1588 = vadd.f32 %v1452, %v1587
        %1589 = vmatprep.mubr.f32.mxu0 0.0
        %v1590 = vand.u32 %v327, 4294901760
        %v1591 = vsub.f32 %v327, %v1590
        %1592 = vmatmul.mubr.f32.gmra.mrb[0].mxu0 %v1591
        %v1593 = vpop.f32.mrb[0].mxu0
        %v1594 = vadd.f32 %v1457, %v1593
        %v1595 = vpop.f32.mrb[0].mxu0
        %v1596 = vadd.f32 %v1459, %v1595
        %1597 = vdwg.mxu0
        %v1598 = vand.u32 %v299, 4294901760
        %1599 = vmatprep.subr.mxu0 %v1598
        %v1600 = vand.u32 %v298, 4294901760
        %1601 = vmatpush1.msra.mxu0 %v1600
        %v1602 = vand.u32 %v303, 4294901760
        %1603 = vmatprep.subr.mxu0 %v1602
        %v1604 = vand.u32 %v302, 4294901760
        %1605 = vmatpush1.msra.mxu0 %v1604
        %1606 = vmatprep.subr.mxu0 0.0
        %1607 = vmatpush1.msra.mxu0 0.0
        %1608 = vmatprep.subr.mxu0 0.0
        %1609 = vmatpush1.msra.mxu0 0.0
        %1610 = vmatprep.subr.mxu0 0.0
        %1611 = vmatpush1.msra.mxu0 0.0
        %1612 = vmatprep.subr.mxu0 0.0
        %1613 = vmatpush1.msra.mxu0 0.0
        %1614 = vmatprep.subr.mxu0 0.0
        %1615 = vmatpush1.msra.mxu0 0.0
        %1616 = vmatprep.subr.mxu0 0.0
        %1617 = vmatpush1.msra.mxu0 0.0
        %1618 = vmatprep.subr.mxu0 0.0
        %1619 = vmatpush1.msra.mxu0 0.0
        %1620 = vmatprep.subr.mxu0 0.0
        %1621 = vmatpush1.msra.mxu0 0.0
        %1622 = vmatprep.subr.mxu0 0.0
        %1623 = vmatpush1.msra.mxu0 0.0
        %1624 = vmatprep.subr.mxu0 0.0
        %1625 = vmatpush1.msra.mxu0 0.0
        %1626 = vmatprep.subr.mxu0 0.0
        %1627 = vmatpush1.msra.mxu0 0.0
        %1628 = vmatprep.subr.mxu0 0.0
        %1629 = vmatpush1.msra.mxu0 0.0
        %1630 = vmatprep.subr.mxu0 0.0
        %1631 = vmatpush1.msra.mxu0 0.0
        %1632 = vmatprep.subr.mxu0 0.0
        %1633 = vmatpush1.msra.mxu0 0.0
        %1634 = vmatprep.subr.mxu0 0.0
        %1635 = vmatpush1.msra.mxu0 0.0
        %1636 = vmatprep.subr.mxu0 0.0
        %1637 = vmatpush1.msra.mxu0 0.0
        %1638 = vmatprep.subr.mxu0 0.0
        %1639 = vmatpush1.msra.mxu0 0.0
        %1640 = vmatprep.subr.mxu0 0.0
        %1641 = vmatpush1.msra.mxu0 0.0
        %1642 = vmatprep.subr.mxu0 0.0
        %1643 = vmatpush1.msra.mxu0 0.0
        %1644 = vmatprep.subr.mxu0 0.0
        %1645 = vmatpush1.msra.mxu0 0.0
        %1646 = vmatprep.subr.mxu0 0.0
        %1647 = vmatpush1.msra.mxu0 0.0
        %1648 = vmatprep.subr.mxu0 0.0
        %1649 = vmatpush1.msra.mxu0 0.0
        %1650 = vmatprep.subr.mxu0 0.0
        %1651 = vmatpush1.msra.mxu0 0.0
        %1652 = vmatprep.subr.mxu0 0.0
        %1653 = vmatpush1.msra.mxu0 0.0
        %1654 = vmatprep.subr.mxu0 0.0
        %1655 = vmatpush1.msra.mxu0 0.0
        %1656 = vmatprep.subr.mxu0 0.0
        %1657 = vmatpush1.msra.mxu0 0.0
        %1658 = vmatprep.subr.mxu0 0.0
        %1659 = vmatpush1.msra.mxu0 0.0
        %1660 = vmatprep.subr.mxu0 0.0
        %1661 = vmatpush1.msra.mxu0 0.0
        %1662 = vmatprep.subr.mxu0 0.0
        %1663 = vmatpush1.msra.mxu0 0.0
        %1664 = vmatprep.subr.mxu0 0.0
        %1665 = vmatpush1.msra.mxu0 0.0
        %1666 = vmatprep.mubr.f32.mxu0 0.0
        %v1667 = vand.u32 %v306, 4294901760
        %v1668 = vsub.f32 %v306, %v1667
        %v1669 = vand.u32 %v1668, 4294901760
        %1670 = vmatmul.mubr.f32.gmra.mrb[0].mxu0 %v1669
        %v1671 = vpop.f32.mrb[0].mxu0
        %v1672 = vadd.f32 %v1538, %v1671
        %v1673 = vpop.f32.mrb[0].mxu0
        %v1674 = vadd.f32 %v1540, %v1673
        %1675 = vmatprep.mubr.f32.mxu0 0.0
        %v1676 = vand.u32 %v309, 4294901760
        %v1677 = vsub.f32 %v309, %v1676
        %v1678 = vand.u32 %v1677, 4294901760
        %1679 = vmatmul.mubr.f32.gmra.mrb[0].mxu0 %v1678
        %v1680 = vpop.f32.mrb[0].mxu0
        %v1681 = vadd.f32 %v1546, %v1680
        %v1682 = vpop.f32.mrb[0].mxu0
        %v1683 = vadd.f32 %v1548, %v1682
        %1684 = vmatprep.mubr.f32.mxu0 0.0
        %v1685 = vand.u32 %v312, 4294901760
        %v1686 = vsub.f32 %v312, %v1685
        %v1687 = vand.u32 %v1686, 4294901760
        %1688 = vmatmul.mubr.f32.gmra.mrb[0].mxu0 %v1687
        %v1689 = vpop.f32.mrb[0].mxu0
        %v1690 = vadd.f32 %v1554, %v1689
        %v1691 = vpop.f32.mrb[0].mxu0
        %v1692 = vadd.f32 %v1556, %v1691
        %1693 = vmatprep.mubr.f32.mxu0 0.0
        %v1694 = vand.u32 %v315, 4294901760
        %v1695 = vsub.f32 %v315, %v1694
        %v1696 = vand.u32 %v1695, 4294901760
        %1697 = vmatmul.mubr.f32.gmra.mrb[0].mxu0 %v1696
        %v1698 = vpop.f32.mrb[0].mxu0
        %v1699 = vadd.f32 %v1562, %v1698
        %v1700 = vpop.f32.mrb[0].mxu0
        %v1701 = vadd.f32 %v1564, %v1700
        %1702 = vmatprep.mubr.f32.mxu0 0.0
        %v1703 = vand.u32 %v318, 4294901760
        %v1704 = vsub.f32 %v318, %v1703
        %v1705 = vand.u32 %v1704, 4294901760
        %1706 = vmatmul.mubr.f32.gmra.mrb[0].mxu0 %v1705
        %v1707 = vpop.f32.mrb[0].mxu0
        %v1708 = vadd.f32 %v1570, %v1707
        %v1709 = vpop.f32.mrb[0].mxu0
        %v1710 = vadd.f32 %v1572, %v1709
        %1711 = vmatprep.mubr.f32.mxu0 0.0
        %v1712 = vand.u32 %v321, 4294901760
        %v1713 = vsub.f32 %v321, %v1712
        %v1714 = vand.u32 %v1713, 4294901760
        %1715 = vmatmul.mubr.f32.gmra.mrb[0].mxu0 %v1714
        %v1716 = vpop.f32.mrb[0].mxu0
        %v1717 = vadd.f32 %v1578, %v1716
        %v1718 = vpop.f32.mrb[0].mxu0
        %v1719 = vadd.f32 %v1580, %v1718
        %1720 = vmatprep.mubr.f32.mxu0 0.0
        %v1721 = vand.u32 %v324, 4294901760
        %v1722 = vsub.f32 %v324, %v1721
        %v1723 = vand.u32 %v1722, 4294901760
        %1724 = vmatmul.mubr.f32.gmra.mrb[0].mxu0 %v1723
        %v1725 = vpop.f32.mrb[0].mxu0
        %v1726 = vadd.f32 %v1586, %v1725
        %v1727 = vpop.f32.mrb[0].mxu0
        %v1728 = vadd.f32 %v1588, %v1727
        %1729 = vmatprep.mubr.f32.mxu0 0.0
        %v1730 = vand.u32 %v327, 4294901760
        %v1731 = vsub.f32 %v327, %v1730
        %v1732 = vand.u32 %v1731, 4294901760
        %1733 = vmatmul.mubr.f32.gmra.mrb[0].mxu0 %v1732
        %v1734 = vpop.f32.mrb[0].mxu0
        %v1735 = vadd.f32 %v1594, %v1734
        %v1736 = vpop.f32.mrb[0].mxu0
        %v1737 = vadd.f32 %v1596, %v1736
        %1738 = vdwg.mxu0
        %v1739 = vand.u32 %v299, 4294901760
        %v1740 = vsub.f32 %v299, %v1739
        %v1741 = vand.u32 %v1740, 4294901760
        %1742 = vmatprep.subr.mxu0 %v1741
        %v1743 = vand.u32 %v298, 4294901760
        %v1744 = vsub.f32 %v298, %v1743
        %v1745 = vand.u32 %v1744, 4294901760
        %1746 = vmatpush1.msra.mxu0 %v1745
        %v1747 = vand.u32 %v303, 4294901760
        %v1748 = vsub.f32 %v303, %v1747
        %v1749 = vand.u32 %v1748, 4294901760
        %1750 = vmatprep.subr.mxu0 %v1749
        %v1751 = vand.u32 %v302, 4294901760
        %v1752 = vsub.f32 %v302, %v1751
        %v1753 = vand.u32 %v1752, 4294901760
        %1754 = vmatpush1.msra.mxu0 %v1753
        %1755 = vmatprep.subr.mxu0 0.0
        %1756 = vmatpush1.msra.mxu0 0.0
        %1757 = vmatprep.subr.mxu0 0.0
        %1758 = vmatpush1.msra.mxu0 0.0
        %1759 = vmatprep.subr.mxu0 0.0
        %1760 = vmatpush1.msra.mxu0 0.0
        %1761 = vmatprep.subr.mxu0 0.0
        %1762 = vmatpush1.msra.mxu0 0.0
        %1763 = vmatprep.subr.mxu0 0.0
        %1764 = vmatpush1.msra.mxu0 0.0
        %1765 = vmatprep.subr.mxu0 0.0
        %1766 = vmatpush1.msra.mxu0 0.0
        %1767 = vmatprep.subr.mxu0 0.0
        %1768 = vmatpush1.msra.mxu0 0.0
        %1769 = vmatprep.subr.mxu0 0.0
        %1770 = vmatpush1.msra.mxu0 0.0
        %1771 = vmatprep.subr.mxu0 0.0
        %1772 = vmatpush1.msra.mxu0 0.0
        %1773 = vmatprep.subr.mxu0 0.0
        %1774 = vmatpush1.msra.mxu0 0.0
        %1775 = vmatprep.subr.mxu0 0.0
        %1776 = vmatpush1.msra.mxu0 0.0
        %1777 = vmatprep.subr.mxu0 0.0
        %1778 = vmatpush1.msra.mxu0 0.0
        %1779 = vmatprep.subr.mxu0 0.0
        %1780 = vmatpush1.msra.mxu0 0.0
        %1781 = vmatprep.subr.mxu0 0.0
        %1782 = vmatpush1.msra.mxu0 0.0
        %1783 = vmatprep.subr.mxu0 0.0
        %1784 = vmatpush1.msra.mxu0 0.0
        %1785 = vmatprep.subr.mxu0 0.0
        %1786 = vmatpush1.msra.mxu0 0.0
        %1787 = vmatprep.subr.mxu0 0.0
        %1788 = vmatpush1.msra.mxu0 0.0
        %1789 = vmatprep.subr.mxu0 0.0
        %1790 = vmatpush1.msra.mxu0 0.0
        %1791 = vmatprep.subr.mxu0 0.0
        %1792 = vmatpush1.msra.mxu0 0.0
        %1793 = vmatprep.subr.mxu0 0.0
        %1794 = vmatpush1.msra.mxu0 0.0
        %1795 = vmatprep.subr.mxu0 0.0
        %1796 = vmatpush1.msra.mxu0 0.0
        %1797 = vmatprep.subr.mxu0 0.0
        %1798 = vmatpush1.msra.mxu0 0.0
        %1799 = vmatprep.subr.mxu0 0.0
        %1800 = vmatpush1.msra.mxu0 0.0
        %1801 = vmatprep.subr.mxu0 0.0
        %1802 = vmatpush1.msra.mxu0 0.0
        %1803 = vmatprep.subr.mxu0 0.0
        %1804 = vmatpush1.msra.mxu0 0.0
        %1805 = vmatprep.subr.mxu0 0.0
        %1806 = vmatpush1.msra.mxu0 0.0
        %1807 = vmatprep.subr.mxu0 0.0
        %1808 = vmatpush1.msra.mxu0 0.0
        %1809 = vmatprep.subr.mxu0 0.0
        %1810 = vmatpush1.msra.mxu0 0.0
        %1811 = vmatprep.subr.mxu0 0.0
        %1812 = vmatpush1.msra.mxu0 0.0
        %1813 = vmatprep.subr.mxu0 0.0
        %1814 = vmatpush1.msra.mxu0 0.0
        %1815 = vmatprep.mubr.f32.mxu0 0.0
        %v1816 = vand.u32 %v306, 4294901760
        %1817 = vmatmul.mubr.f32.gmra.mrb[0].mxu0 %v1816
        %v1818 = vpop.f32.mrb[0].mxu0
        %v1819 = vadd.f32 %v1672, %v1818
        %v1820 = vpop.f32.mrb[0].mxu0
        %v1821 = vadd.f32 %v1674, %v1820
        %1822 = vmatprep.mubr.f32.mxu0 0.0
        %v1823 = vand.u32 %v309, 4294901760
        %1824 = vmatmul.mubr.f32.gmra.mrb[0].mxu0 %v1823
        %v1825 = vpop.f32.mrb[0].mxu0
        %v1826 = vadd.f32 %v1681, %v1825
        %v1827 = vpop.f32.mrb[0].mxu0
        %v1828 = vadd.f32 %v1683, %v1827
        %1829 = vmatprep.mubr.f32.mxu0 0.0
        %v1830 = vand.u32 %v312, 4294901760
        %1831 = vmatmul.mubr.f32.gmra.mrb[0].mxu0 %v1830
        %v1832 = vpop.f32.mrb[0].mxu0
        %v1833 = vadd.f32 %v1690, %v1832
        %v1834 = vpop.f32.mrb[0].mxu0
        %v1835 = vadd.f32 %v1692, %v1834
        %1836 = vmatprep.mubr.f32.mxu0 0.0
        %v1837 = vand.u32 %v315, 4294901760
        %1838 = vmatmul.mubr.f32.gmra.mrb[0].mxu0 %v1837
        %v1839 = vpop.f32.mrb[0].mxu0
        %v1840 = vadd.f32 %v1699, %v1839
        %v1841 = vpop.f32.mrb[0].mxu0
        %v1842 = vadd.f32 %v1701, %v1841
        %1843 = vmatprep.mubr.f32.mxu0 0.0
        %v1844 = vand.u32 %v318, 4294901760
        %1845 = vmatmul.mubr.f32.gmra.mrb[0].mxu0 %v1844
        %v1846 = vpop.f32.mrb[0].mxu0
        %v1847 = vadd.f32 %v1708, %v1846
        %v1848 = vpop.f32.mrb[0].mxu0
        %v1849 = vadd.f32 %v1710, %v1848
        %1850 = vmatprep.mubr.f32.mxu0 0.0
        %v1851 = vand.u32 %v321, 4294901760
        %1852 = vmatmul.mubr.f32.gmra.mrb[0].mxu0 %v1851
        %v1853 = vpop.f32.mrb[0].mxu0
        %v1854 = vadd.f32 %v1717, %v1853
        %v1855 = vpop.f32.mrb[0].mxu0
        %v1856 = vadd.f32 %v1719, %v1855
        %1857 = vmatprep.mubr.f32.mxu0 0.0
        %v1858 = vand.u32 %v324, 4294901760
        %1859 = vmatmul.mubr.f32.gmra.mrb[0].mxu0 %v1858
        %v1860 = vpop.f32.mrb[0].mxu0
        %v1861 = vadd.f32 %v1726, %v1860
        %v1862 = vpop.f32.mrb[0].mxu0
        %v1863 = vadd.f32 %v1728, %v1862
        %1864 = vmatprep.mubr.f32.mxu0 0.0
        %v1865 = vand.u32 %v327, 4294901760
        %1866 = vmatmul.mubr.f32.gmra.mrb[0].mxu0 %v1865
        %v1867 = vpop.f32.mrb[0].mxu0
        %v1868 = vadd.f32 %v1735, %v1867
        %v1869 = vpop.f32.mrb[0].mxu0
        %v1870 = vadd.f32 %v1737, %v1869
        %1871 = vdwg.mxu0
        %v1872 = vand.u32 %v299, 4294901760
        %1873 = vmatprep.subr.mxu0 %v1872
        %v1874 = vand.u32 %v298, 4294901760
        %1875 = vmatpush1.msra.mxu0 %v1874
        %v1876 = vand.u32 %v303, 4294901760
        %1877 = vmatprep.subr.mxu0 %v1876
        %v1878 = vand.u32 %v302, 4294901760
        %1879 = vmatpush1.msra.mxu0 %v1878
        %1880 = vmatprep.subr.mxu0 0.0
        %1881 = vmatpush1.msra.mxu0 0.0
        %1882 = vmatprep.subr.mxu0 0.0
        %1883 = vmatpush1.msra.mxu0 0.0
        %1884 = vmatprep.subr.mxu0 0.0
        %1885 = vmatpush1.msra.mxu0 0.0
        %1886 = vmatprep.subr.mxu0 0.0
        %1887 = vmatpush1.msra.mxu0 0.0
        %1888 = vmatprep.subr.mxu0 0.0
        %1889 = vmatpush1.msra.mxu0 0.0
        %1890 = vmatprep.subr.mxu0 0.0
        %1891 = vmatpush1.msra.mxu0 0.0
        %1892 = vmatprep.subr.mxu0 0.0
        %1893 = vmatpush1.msra.mxu0 0.0
        %1894 = vmatprep.subr.mxu0 0.0
        %1895 = vmatpush1.msra.mxu0 0.0
        %1896 = vmatprep.subr.mxu0 0.0
        %1897 = vmatpush1.msra.mxu0 0.0
        %1898 = vmatprep.subr.mxu0 0.0
        %1899 = vmatpush1.msra.mxu0 0.0
        %1900 = vmatprep.subr.mxu0 0.0
        %1901 = vmatpush1.msra.mxu0 0.0
        %1902 = vmatprep.subr.mxu0 0.0
        %1903 = vmatpush1.msra.mxu0 0.0
        %1904 = vmatprep.subr.mxu0 0.0
        %1905 = vmatpush1.msra.mxu0 0.0
        %1906 = vmatprep.subr.mxu0 0.0
        %1907 = vmatpush1.msra.mxu0 0.0
        %1908 = vmatprep.subr.mxu0 0.0
        %1909 = vmatpush1.msra.mxu0 0.0
        %1910 = vmatprep.subr.mxu0 0.0
        %1911 = vmatpush1.msra.mxu0 0.0
        %1912 = vmatprep.subr.mxu0 0.0
        %1913 = vmatpush1.msra.mxu0 0.0
        %1914 = vmatprep.subr.mxu0 0.0
        %1915 = vmatpush1.msra.mxu0 0.0
        %1916 = vmatprep.subr.mxu0 0.0
        %1917 = vmatpush1.msra.mxu0 0.0
        %1918 = vmatprep.subr.mxu0 0.0
        %1919 = vmatpush1.msra.mxu0 0.0
        %1920 = vmatprep.subr.mxu0 0.0
        %1921 = vmatpush1.msra.mxu0 0.0
        %1922 = vmatprep.subr.mxu0 0.0
        %1923 = vmatpush1.msra.mxu0 0.0
        %1924 = vmatprep.subr.mxu0 0.0
        %1925 = vmatpush1.msra.mxu0 0.0
        %1926 = vmatprep.subr.mxu0 0.0
        %1927 = vmatpush1.msra.mxu0 0.0
        %1928 = vmatprep.subr.mxu0 0.0
        %1929 = vmatpush1.msra.mxu0 0.0
        %1930 = vmatprep.subr.mxu0 0.0
        %1931 = vmatpush1.msra.mxu0 0.0
        %1932 = vmatprep.subr.mxu0 0.0
        %1933 = vmatpush1.msra.mxu0 0.0
        %1934 = vmatprep.subr.mxu0 0.0
        %1935 = vmatpush1.msra.mxu0 0.0
        %1936 = vmatprep.subr.mxu0 0.0
        %1937 = vmatpush1.msra.mxu0 0.0
        %1938 = vmatprep.subr.mxu0 0.0
        %1939 = vmatpush1.msra.mxu0 0.0
        %1940 = vmatprep.mubr.f32.mxu0 0.0
        %v1941 = vand.u32 %v306, 4294901760
        %1942 = vmatmul.mubr.f32.gmra.mrb[0].mxu0 %v1941
        %v1943 = vpop.f32.mrb[0].mxu0
        %v1944 = vadd.f32 %v1819, %v1943
        %v1945 = vpop.f32.mrb[0].mxu0
        %v1946 = vadd.f32 %v1821, %v1945
        %1947 = vmatprep.mubr.f32.mxu0 0.0
        %v1948 = vand.u32 %v309, 4294901760
        %1949 = vmatmul.mubr.f32.gmra.mrb[0].mxu0 %v1948
        %v1950 = vpop.f32.mrb[0].mxu0
        %v1951 = vadd.f32 %v1826, %v1950
        %v1952 = vpop.f32.mrb[0].mxu0
        %v1953 = vadd.f32 %v1828, %v1952
        %1954 = vmatprep.mubr.f32.mxu0 0.0
        %v1955 = vand.u32 %v312, 4294901760
        %1956 = vmatmul.mubr.f32.gmra.mrb[0].mxu0 %v1955
        %v1957 = vpop.f32.mrb[0].mxu0
        %v1958 = vadd.f32 %v1833, %v1957
        %v1959 = vpop.f32.mrb[0].mxu0
        %v1960 = vadd.f32 %v1835, %v1959
        %1961 = vmatprep.mubr.f32.mxu0 0.0
        %v1962 = vand.u32 %v315, 4294901760
        %1963 = vmatmul.mubr.f32.gmra.mrb[0].mxu0 %v1962
        %v1964 = vpop.f32.mrb[0].mxu0
        %v1965 = vadd.f32 %v1840, %v1964
        %v1966 = vpop.f32.mrb[0].mxu0
        %v1967 = vadd.f32 %v1842, %v1966
        %1968 = vmatprep.mubr.f32.mxu0 0.0
        %v1969 = vand.u32 %v318, 4294901760
        %1970 = vmatmul.mubr.f32.gmra.mrb[0].mxu0 %v1969
        %v1971 = vpop.f32.mrb[0].mxu0
        %v1972 = vadd.f32 %v1847, %v1971
        %v1973 = vpop.f32.mrb[0].mxu0
        %v1974 = vadd.f32 %v1849, %v1973
        %1975 = vmatprep.mubr.f32.mxu0 0.0
        %v1976 = vand.u32 %v321, 4294901760
        %1977 = vmatmul.mubr.f32.gmra.mrb[0].mxu0 %v1976
        %v1978 = vpop.f32.mrb[0].mxu0
        %v1979 = vadd.f32 %v1854, %v1978
        %v1980 = vpop.f32.mrb[0].mxu0
        %v1981 = vadd.f32 %v1856, %v1980
        %1982 = vmatprep.mubr.f32.mxu0 0.0
        %v1983 = vand.u32 %v324, 4294901760
        %1984 = vmatmul.mubr.f32.gmra.mrb[0].mxu0 %v1983
        %v1985 = vpop.f32.mrb[0].mxu0
        %v1986 = vadd.f32 %v1861, %v1985
        %v1987 = vpop.f32.mrb[0].mxu0
        %v1988 = vadd.f32 %v1863, %v1987
        %1989 = vmatprep.mubr.f32.mxu0 0.0
        %v1990 = vand.u32 %v327, 4294901760
        %1991 = vmatmul.mubr.f32.gmra.mrb[0].mxu0 %v1990
        %v1992 = vpop.f32.mrb[0].mxu0
        %v1993 = vadd.f32 %v1868, %v1992
        %v1994 = vpop.f32.mrb[0].mxu0
        %v1995 = vadd.f32 %v1870, %v1994
        %1996 = vdwg.mxu0
        %v1997 = vtanh.pop %v1110
        %v1998 = vtanh.pop %v1112
        %v1999 = vtanh.pop %v1944
        %v2000 = vtanh.pop %v1946
        %v2001 = vtanh.pop %v1117
        %v2002 = vtanh.pop %v1119
        %v2003 = vtanh.pop %v1951
        %v2004 = vtanh.pop %v1953
        %v2005 = vtanh.pop %v1124
        %v2006 = vtanh.pop %v1126
        %v2007 = vtanh.pop %v1958
        %v2008 = vtanh.pop %v1960
        %v2009 = vtanh.pop %v1131
        %v2010 = vtanh.pop %v1133
        %v2011 = vtanh.pop %v1965
        %v2012 = vtanh.pop %v1967
        %v2013 = vtanh.pop %v1138
        %v2014 = vtanh.pop %v1140
        %v2015 = vtanh.pop %v1972
        %v2016 = vtanh.pop %v1974
        %v2017 = vtanh.pop %v1145
        %v2018 = vtanh.pop %v1147
        %v2019 = vtanh.pop %v1979
        %v2020 = vtanh.pop %v1981
        %v2021 = vtanh.pop %v1152
        %v2022 = vtanh.pop %v1154
        %v2023 = vtanh.pop %v1986
        %v2024 = vtanh.pop %v1988
        %v2025 = vtanh.pop %v1159
        %v2026 = vtanh.pop %v1161
        %v2027 = vtanh.pop %v1993
        %v2028 = vtanh.pop %v1995
        %v2029 = vld [vmem:[%s2] sm:$0xff]
        %v2030 = vld [vmem:[%s2 + $0x8] sm:$0xff]
        %v2031 = vld [vmem:[%s2 + $0x10] sm:$0xff]
        %v2032 = vld [vmem:[%s2 + $0x18] sm:$0xff]
        %v2033 = vld [vmem:[%s2 + $0x20] sm:$0xff]
        %v2034 = vld [vmem:[%s2 + $0x28] sm:$0xff]
        %v2035 = vld [vmem:[%s2 + $0x30] sm:$0xff]
        %v2036 = vld [vmem:[%s2 + $0x38] sm:$0xff]
        %v2037 = vld [vmem:[%s3] sm:$0xff]
        %v2038 = vld [vmem:[%s3 + $0x8] sm:$0xff]
        %v2039 = vld [vmem:[%s3 + $0x10] sm:$0xff]
        %v2040 = vld [vmem:[%s3 + $0x18] sm:$0xff]
        %v2041 = vld [vmem:[%s3 + $0x20] sm:$0xff]
        %v2042 = vld [vmem:[%s3 + $0x28] sm:$0xff]
        %v2043 = vld [vmem:[%s3 + $0x30] sm:$0xff]
        %v2044 = vld [vmem:[%s3 + $0x38] sm:$0xff]
        %2046 = vset.pattern.permute.xlu0 0
        %2047 = vperm.xlu0 %2046, %v2037
        %v2048 = vpop.permute.xlu0 %2047
        %2051 = vset.pattern.permute.xlu0 0
        %2052 = vperm.xlu0 %2051, %v2038
        %v2053 = vpop.permute.xlu0 %2052
        %2056 = vset.pattern.permute.xlu0 0
        %2057 = vperm.xlu0 %2056, %v2039
        %v2058 = vpop.permute.xlu0 %2057
        %2061 = vset.pattern.permute.xlu0 0
        %2062 = vperm.xlu0 %2061, %v2040
        %v2063 = vpop.permute.xlu0 %2062
        %2066 = vset.pattern.permute.xlu0 0
        %2067 = vperm.xlu0 %2066, %v2041
        %v2068 = vpop.permute.xlu0 %2067
        %2071 = vset.pattern.permute.xlu0 0
        %2072 = vperm.xlu0 %2071, %v2042
        %v2073 = vpop.permute.xlu0 %2072
        %2076 = vset.pattern.permute.xlu0 0
        %2077 = vperm.xlu0 %2076, %v2043
        %v2078 = vpop.permute.xlu0 %2077
        %2081 = vset.pattern.permute.xlu0 0
        %2082 = vperm.xlu0 %2081, %v2044
        %v2083 = vpop.permute.xlu0 %2082
        %vm2085 = vcmask 523264
        %v2087 = vsel %vm2085, %v2029, 0
        %v2090 = vsel %vm2085, %v2030, 0
        %v2093 = vsel %vm2085, %v2031, 0
        %v2096 = vsel %vm2085, %v2032, 0
        %v2099 = vsel %vm2085, %v2033, 0
        %v2102 = vsel %vm2085, %v2034, 0
        %v2105 = vsel %vm2085, %v2035, 0
        %v2108 = vsel %vm2085, %v2036, 0
        %v2110 = vand.u32 %v1998, 4294901760
        %2111 = vmatprep.subr.mxu0 %v2110
        %v2112 = vand.u32 %v1997, 4294901760
        %2113 = vmatpush1.msra.mxu0 %v2112
        %v2114 = vand.u32 %v2002, 4294901760
        %2115 = vmatprep.subr.mxu0 %v2114
        %v2116 = vand.u32 %v2001, 4294901760
        %2117 = vmatpush1.msra.mxu0 %v2116
        %v2118 = vand.u32 %v2006, 4294901760
        %2119 = vmatprep.subr.mxu0 %v2118
        %v2120 = vand.u32 %v2005, 4294901760
        %2121 = vmatpush1.msra.mxu0 %v2120
        %v2122 = vand.u32 %v2010, 4294901760
        %2123 = vmatprep.subr.mxu0 %v2122
        %v2124 = vand.u32 %v2009, 4294901760
        %2125 = vmatpush1.msra.mxu0 %v2124
        %v2126 = vand.u32 %v2014, 4294901760
        %2127 = vmatprep.subr.mxu0 %v2126
        %v2128 = vand.u32 %v2013, 4294901760
        %2129 = vmatpush1.msra.mxu0 %v2128
        %v2130 = vand.u32 %v2018, 4294901760
        %2131 = vmatprep.subr.mxu0 %v2130
        %v2132 = vand.u32 %v2017, 4294901760
        %2133 = vmatpush1.msra.mxu0 %v2132
        %v2134 = vand.u32 %v2022, 4294901760
        %2135 = vmatprep.subr.mxu0 %v2134
        %v2136 = vand.u32 %v2021, 4294901760
        %2137 = vmatpush1.msra.mxu0 %v2136
        %v2138 = vand.u32 %v2026, 4294901760
        %2139 = vmatprep.subr.mxu0 %v2138
        %v2140 = vand.u32 %v2025, 4294901760
        %2141 = vmatpush1.msra.mxu0 %v2140
        %2142 = vmatprep.subr.mxu0 0.0
        %2143 = vmatpush1.msra.mxu0 0.0
        %2144 = vmatprep.subr.mxu0 0.0
        %2145 = vmatpush1.msra.mxu0 0.0
        %2146 = vmatprep.subr.mxu0 0.0
        %2147 = vmatpush1.msra.mxu0 0.0
        %2148 = vmatprep.subr.mxu0 0.0
        %2149 = vmatpush1.msra.mxu0 0.0
        %2150 = vmatprep.subr.mxu0 0.0
        %2151 = vmatpush1.msra.mxu0 0.0
        %2152 = vmatprep.subr.mxu0 0.0
        %2153 = vmatpush1.msra.mxu0 0.0
        %2154 = vmatprep.subr.mxu0 0.0
        %2155 = vmatpush1.msra.mxu0 0.0
        %2156 = vmatprep.subr.mxu0 0.0
        %2157 = vmatpush1.msra.mxu0 0.0
        %2158 = vmatprep.subr.mxu0 0.0
        %2159 = vmatpush1.msra.mxu0 0.0
        %2160 = vmatprep.subr.mxu0 0.0
        %2161 = vmatpush1.msra.mxu0 0.0
        %2162 = vmatprep.subr.mxu0 0.0
        %2163 = vmatpush1.msra.mxu0 0.0
        %2164 = vmatprep.subr.mxu0 0.0
        %2165 = vmatpush1.msra.mxu0 0.0
        %2166 = vmatprep.subr.mxu0 0.0
        %2167 = vmatpush1.msra.mxu0 0.0
        %2168 = vmatprep.subr.mxu0 0.0
        %2169 = vmatpush1.msra.mxu0 0.0
        %2170 = vmatprep.subr.mxu0 0.0
        %2171 = vmatpush1.msra.mxu0 0.0
        %2172 = vmatprep.subr.mxu0 0.0
        %2173 = vmatpush1.msra.mxu0 0.0
        %2174 = vmatprep.subr.mxu0 0.0
        %2175 = vmatpush1.msra.mxu0 0.0
        %2176 = vmatprep.subr.mxu0 0.0
        %2177 = vmatpush1.msra.mxu0 0.0
        %2178 = vmatprep.subr.mxu0 0.0
        %2179 = vmatpush1.msra.mxu0 0.0
        %2180 = vmatprep.subr.mxu0 0.0
        %2181 = vmatpush1.msra.mxu0 0.0
        %2182 = vmatprep.subr.mxu0 0.0
        %2183 = vmatpush1.msra.mxu0 0.0
        %2184 = vmatprep.subr.mxu0 0.0
        %2185 = vmatpush1.msra.mxu0 0.0
        %2186 = vmatprep.subr.mxu0 0.0
        %2187 = vmatpush1.msra.mxu0 0.0
        %2188 = vmatprep.subr.mxu0 0.0
        %2189 = vmatpush1.msra.mxu0 0.0
        %2190 = vmatprep.mubr.f32.mxu0 0.0
        %v2191 = vand.u32 %v2087, 4294901760
        %v2192 = vsub.f32 %v2087, %v2191
        %v2193 = vand.u32 %v2192, 4294901760
        %v2194 = vsub.f32 %v2192, %v2193
        %v2195 = vand.u32 %v2194, 4294901760
        %2196 = vmatmul.mubr.f32.gmra.mrb[0].mxu0 %v2195
        %v2197 = vpop.f32.mrb[0].mxu0
        %v2198 = vadd.f32 %v2048, %v2197
        %v2199 = vpop.f32.mrb[0].mxu0
        %v2200 = vadd.f32 %v2048, %v2199
        %2201 = vmatprep.mubr.f32.mxu0 0.0
        %v2202 = vand.u32 %v2090, 4294901760
        %v2203 = vsub.f32 %v2090, %v2202
        %v2204 = vand.u32 %v2203, 4294901760
        %v2205 = vsub.f32 %v2203, %v2204
        %v2206 = vand.u32 %v2205, 4294901760
        %2207 = vmatmul.mubr.f32.gmra.mrb[0].mxu0 %v2206
        %v2208 = vpop.f32.mrb[0].mxu0
        %v2209 = vadd.f32 %v2053, %v2208
        %v2210 = vpop.f32.mrb[0].mxu0
        %v2211 = vadd.f32 %v2053, %v2210
        %2212 = vmatprep.mubr.f32.mxu0 0.0
        %v2213 = vand.u32 %v2093, 4294901760
        %v2214 = vsub.f32 %v2093, %v2213
        %v2215 = vand.u32 %v2214, 4294901760
        %v2216 = vsub.f32 %v2214, %v2215
        %v2217 = vand.u32 %v2216, 4294901760
        %2218 = vmatmul.mubr.f32.gmra.mrb[0].mxu0 %v2217
        %v2219 = vpop.f32.mrb[0].mxu0
        %v2220 = vadd.f32 %v2058, %v2219
        %v2221 = vpop.f32.mrb[0].mxu0
        %v2222 = vadd.f32 %v2058, %v2221
        %2223 = vmatprep.mubr.f32.mxu0 0.0
        %v2224 = vand.u32 %v2096, 4294901760
        %v2225 = vsub.f32 %v2096, %v2224
        %v2226 = vand.u32 %v2225, 4294901760
        %v2227 = vsub.f32 %v2225, %v2226
        %v2228 = vand.u32 %v2227, 4294901760
        %2229 = vmatmul.mubr.f32.gmra.mrb[0].mxu0 %v2228
        %v2230 = vpop.f32.mrb[0].mxu0
        %v2231 = vadd.f32 %v2063, %v2230
        %v2232 = vpop.f32.mrb[0].mxu0
        %v2233 = vadd.f32 %v2063, %v2232
        %2234 = vmatprep.mubr.f32.mxu0 0.0
        %v2235 = vand.u32 %v2099, 4294901760
        %v2236 = vsub.f32 %v2099, %v2235
        %v2237 = vand.u32 %v2236, 4294901760
        %v2238 = vsub.f32 %v2236, %v2237
        %v2239 = vand.u32 %v2238, 4294901760
        %2240 = vmatmul.mubr.f32.gmra.mrb[0].mxu0 %v2239
        %v2241 = vpop.f32.mrb[0].mxu0
        %v2242 = vadd.f32 %v2068, %v2241
        %v2243 = vpop.f32.mrb[0].mxu0
        %v2244 = vadd.f32 %v2068, %v2243
        %2245 = vmatprep.mubr.f32.mxu0 0.0
        %v2246 = vand.u32 %v2102, 4294901760
        %v2247 = vsub.f32 %v2102, %v2246
        %v2248 = vand.u32 %v2247, 4294901760
        %v2249 = vsub.f32 %v2247, %v2248
        %v2250 = vand.u32 %v2249, 4294901760
        %2251 = vmatmul.mubr.f32.gmra.mrb[0].mxu0 %v2250
        %v2252 = vpop.f32.mrb[0].mxu0
        %v2253 = vadd.f32 %v2073, %v2252
        %v2254 = vpop.f32.mrb[0].mxu0
        %v2255 = vadd.f32 %v2073, %v2254
        %2256 = vmatprep.mubr.f32.mxu0 0.0
        %v2257 = vand.u32 %v2105, 4294901760
        %v2258 = vsub.f32 %v2105, %v2257
        %v2259 = vand.u32 %v2258, 4294901760
        %v2260 = vsub.f32 %v2258, %v2259
        %v2261 = vand.u32 %v2260, 4294901760
        %2262 = vmatmul.mubr.f32.gmra.mrb[0].mxu0 %v2261
        %v2263 = vpop.f32.mrb[0].mxu0
        %v2264 = vadd.f32 %v2078, %v2263
        %v2265 = vpop.f32.mrb[0].mxu0
        %v2266 = vadd.f32 %v2078, %v2265
        %2267 = vmatprep.mubr.f32.mxu0 0.0
        %v2268 = vand.u32 %v2108, 4294901760
        %v2269 = vsub.f32 %v2108, %v2268
        %v2270 = vand.u32 %v2269, 4294901760
        %v2271 = vsub.f32 %v2269, %v2270
        %v2272 = vand.u32 %v2271, 4294901760
        %2273 = vmatmul.mubr.f32.gmra.mrb[0].mxu0 %v2272
        %v2274 = vpop.f32.mrb[0].mxu0
        %v2275 = vadd.f32 %v2083, %v2274
        %v2276 = vpop.f32.mrb[0].mxu0
        %v2277 = vadd.f32 %v2083, %v2276
        %2278 = vdwg.mxu0
        %v2279 = vand.u32 %v1998, 4294901760
        %v2280 = vsub.f32 %v1998, %v2279
        %v2281 = vand.u32 %v2280, 4294901760
        %v2282 = vsub.f32 %v2280, %v2281
        %v2283 = vand.u32 %v2282, 4294901760
        %2284 = vmatprep.subr.mxu0 %v2283
        %v2285 = vand.u32 %v1997, 4294901760
        %v2286 = vsub.f32 %v1997, %v2285
        %v2287 = vand.u32 %v2286, 4294901760
        %v2288 = vsub.f32 %v2286, %v2287
        %v2289 = vand.u32 %v2288, 4294901760
        %2290 = vmatpush1.msra.mxu0 %v2289
        %v2291 = vand.u32 %v2002, 4294901760
        %v2292 = vsub.f32 %v2002, %v2291
        %v2293 = vand.u32 %v2292, 4294901760
        %v2294 = vsub.f32 %v2292, %v2293
        %v2295 = vand.u32 %v2294, 4294901760
        %2296 = vmatprep.subr.mxu0 %v2295
        %v2297 = vand.u32 %v2001, 4294901760
        %v2298 = vsub.f32 %v2001, %v2297
        %v2299 = vand.u32 %v2298, 4294901760
        %v2300 = vsub.f32 %v2298, %v2299
        %v2301 = vand.u32 %v2300, 4294901760
        %2302 = vmatpush1.msra.mxu0 %v2301
        %v2303 = vand.u32 %v2006, 4294901760
        %v2304 = vsub.f32 %v2006, %v2303
        %v2305 = vand.u32 %v2304, 4294901760
        %v2306 = vsub.f32 %v2304, %v2305
        %v2307 = vand.u32 %v2306, 4294901760
        %2308 = vmatprep.subr.mxu0 %v2307
        %v2309 = vand.u32 %v2005, 4294901760
        %v2310 = vsub.f32 %v2005, %v2309
        %v2311 = vand.u32 %v2310, 4294901760
        %v2312 = vsub.f32 %v2310, %v2311
        %v2313 = vand.u32 %v2312, 4294901760
        %2314 = vmatpush1.msra.mxu0 %v2313
        %v2315 = vand.u32 %v2010, 4294901760
        %v2316 = vsub.f32 %v2010, %v2315
        %v2317 = vand.u32 %v2316, 4294901760
        %v2318 = vsub.f32 %v2316, %v2317
        %v2319 = vand.u32 %v2318, 4294901760
        %2320 = vmatprep.subr.mxu0 %v2319
        %v2321 = vand.u32 %v2009, 4294901760
        %v2322 = vsub.f32 %v2009, %v2321
        %v2323 = vand.u32 %v2322, 4294901760
        %v2324 = vsub.f32 %v2322, %v2323
        %v2325 = vand.u32 %v2324, 4294901760
        %2326 = vmatpush1.msra.mxu0 %v2325
        %v2327 = vand.u32 %v2014, 4294901760
        %v2328 = vsub.f32 %v2014, %v2327
        %v2329 = vand.u32 %v2328, 4294901760
        %v2330 = vsub.f32 %v2328, %v2329
        %v2331 = vand.u32 %v2330, 4294901760
        %2332 = vmatprep.subr.mxu0 %v2331
        %v2333 = vand.u32 %v2013, 4294901760
        %v2334 = vsub.f32 %v2013, %v2333
        %v2335 = vand.u32 %v2334, 4294901760
        %v2336 = vsub.f32 %v2334, %v2335
        %v2337 = vand.u32 %v2336, 4294901760
        %2338 = vmatpush1.msra.mxu0 %v2337
        %v2339 = vand.u32 %v2018, 4294901760
        %v2340 = vsub.f32 %v2018, %v2339
        %v2341 = vand.u32 %v2340, 4294901760
        %v2342 = vsub.f32 %v2340, %v2341
        %v2343 = vand.u32 %v2342, 4294901760
        %2344 = vmatprep.subr.mxu0 %v2343
        %v2345 = vand.u32 %v2017, 4294901760
        %v2346 = vsub.f32 %v2017, %v2345
        %v2347 = vand.u32 %v2346, 4294901760
        %v2348 = vsub.f32 %v2346, %v2347
        %v2349 = vand.u32 %v2348, 4294901760
        %2350 = vmatpush1.msra.mxu0 %v2349
        %v2351 = vand.u32 %v2022, 4294901760
        %v2352 = vsub.f32 %v2022, %v2351
        %v2353 = vand.u32 %v2352, 4294901760
        %v2354 = vsub.f32 %v2352, %v2353
        %v2355 = vand.u32 %v2354, 4294901760
        %2356 = vmatprep.subr.mxu0 %v2355
        %v2357 = vand.u32 %v2021, 4294901760
        %v2358 = vsub.f32 %v2021, %v2357
        %v2359 = vand.u32 %v2358, 4294901760
        %v2360 = vsub.f32 %v2358, %v2359
        %v2361 = vand.u32 %v2360, 4294901760
        %2362 = vmatpush1.msra.mxu0 %v2361
        %v2363 = vand.u32 %v2026, 4294901760
        %v2364 = vsub.f32 %v2026, %v2363
        %v2365 = vand.u32 %v2364, 4294901760
        %v2366 = vsub.f32 %v2364, %v2365
        %v2367 = vand.u32 %v2366, 4294901760
        %2368 = vmatprep.subr.mxu0 %v2367
        %v2369 = vand.u32 %v2025, 4294901760
        %v2370 = vsub.f32 %v2025, %v2369
        %v2371 = vand.u32 %v2370, 4294901760
        %v2372 = vsub.f32 %v2370, %v2371
        %v2373 = vand.u32 %v2372, 4294901760
        %2374 = vmatpush1.msra.mxu0 %v2373
        %2375 = vmatprep.subr.mxu0 0.0
        %2376 = vmatpush1.msra.mxu0 0.0
        %2377 = vmatprep.subr.mxu0 0.0
        %2378 = vmatpush1.msra.mxu0 0.0
        %2379 = vmatprep.subr.mxu0 0.0
        %2380 = vmatpush1.msra.mxu0 0.0
        %2381 = vmatprep.subr.mxu0 0.0
        %2382 = vmatpush1.msra.mxu0 0.0
        %2383 = vmatprep.subr.mxu0 0.0
        %2384 = vmatpush1.msra.mxu0 0.0
        %2385 = vmatprep.subr.mxu0 0.0
        %2386 = vmatpush1.msra.mxu0 0.0
        %2387 = vmatprep.subr.mxu0 0.0
        %2388 = vmatpush1.msra.mxu0 0.0
        %2389 = vmatprep.subr.mxu0 0.0
        %2390 = vmatpush1.msra.mxu0 0.0
        %2391 = vmatprep.subr.mxu0 0.0
        %2392 = vmatpush1.msra.mxu0 0.0
        %2393 = vmatprep.subr.mxu0 0.0
        %2394 = vmatpush1.msra.mxu0 0.0
        %2395 = vmatprep.subr.mxu0 0.0
        %2396 = vmatpush1.msra.mxu0 0.0
        %2397 = vmatprep.subr.mxu0 0.0
        %2398 = vmatpush1.msra.mxu0 0.0
        %2399 = vmatprep.subr.mxu0 0.0
        %2400 = vmatpush1.msra.mxu0 0.0
        %2401 = vmatprep.subr.mxu0 0.0
        %2402 = vmatpush1.msra.mxu0 0.0
        %2403 = vmatprep.subr.mxu0 0.0
        %2404 = vmatpush1.msra.mxu0 0.0
        %2405 = vmatprep.subr.mxu0 0.0
        %2406 = vmatpush1.msra.mxu0 0.0
        %2407 = vmatprep.subr.mxu0 0.0
        %2408 = vmatpush1.msra.mxu0 0.0
        %2409 = vmatprep.subr.mxu0 0.0
        %2410 = vmatpush1.msra.mxu0 0.0
        %2411 = vmatprep.subr.mxu0 0.0
        %2412 = vmatpush1.msra.mxu0 0.0
        %2413 = vmatprep.subr.mxu0 0.0
        %2414 = vmatpush1.msra.mxu0 0.0
        %2415 = vmatprep.subr.mxu0 0.0
        %2416 = vmatpush1.msra.mxu0 0.0
        %2417 = vmatprep.subr.mxu0 0.0
        %2418 = vmatpush1.msra.mxu0 0.0
        %2419 = vmatprep.subr.mxu0 0.0
        %2420 = vmatpush1.msra.mxu0 0.0
        %2421 = vmatprep.subr.mxu0 0.0
        %2422 = vmatpush1.msra.mxu0 0.0
        %2423 = vmatprep.mubr.f32.mxu0 0.0
        %v2424 = vand.u32 %v2087, 4294901760
        %2425 = vmatmul.mubr.f32.gmra.mrb[0].mxu0 %v2424
        %v2426 = vpop.f32.mrb[0].mxu0
        %v2427 = vadd.f32 %v2198, %v2426
        %v2428 = vpop.f32.mrb[0].mxu0
        %v2429 = vadd.f32 %v2200, %v2428
        %2430 = vmatprep.mubr.f32.mxu0 0.0
        %v2431 = vand.u32 %v2090, 4294901760
        %2432 = vmatmul.mubr.f32.gmra.mrb[0].mxu0 %v2431
        %v2433 = vpop.f32.mrb[0].mxu0
        %v2434 = vadd.f32 %v2209, %v2433
        %v2435 = vpop.f32.mrb[0].mxu0
        %v2436 = vadd.f32 %v2211, %v2435
        %2437 = vmatprep.mubr.f32.mxu0 0.0
        %v2438 = vand.u32 %v2093, 4294901760
        %2439 = vmatmul.mubr.f32.gmra.mrb[0].mxu0 %v2438
        %v2440 = vpop.f32.mrb[0].mxu0
        %v2441 = vadd.f32 %v2220, %v2440
        %v2442 = vpop.f32.mrb[0].mxu0
        %v2443 = vadd.f32 %v2222, %v2442
        %2444 = vmatprep.mubr.f32.mxu0 0.0
        %v2445 = vand.u32 %v2096, 4294901760
        %2446 = vmatmul.mubr.f32.gmra.mrb[0].mxu0 %v2445
        %v2447 = vpop.f32.mrb[0].mxu0
        %v2448 = vadd.f32 %v2231, %v2447
        %v2449 = vpop.f32.mrb[0].mxu0
        %v2450 = vadd.f32 %v2233, %v2449
        %2451 = vmatprep.mubr.f32.mxu0 0.0
        %v2452 = vand.u32 %v2099, 4294901760
        %2453 = vmatmul.mubr.f32.gmra.mrb[0].mxu0 %v2452
        %v2454 = vpop.f32.mrb[0].mxu0
        %v2455 = vadd.f32 %v2242, %v2454
        %v2456 = vpop.f32.mrb[0].mxu0
        %v2457 = vadd.f32 %v2244, %v2456
        %2458 = vmatprep.mubr.f32.mxu0 0.0
        %v2459 = vand.u32 %v2102, 4294901760
        %2460 = vmatmul.mubr.f32.gmra.mrb[0].mxu0 %v2459
        %v2461 = vpop.f32.mrb[0].mxu0
        %v2462 = vadd.f32 %v2253, %v2461
        %v2463 = vpop.f32.mrb[0].mxu0
        %v2464 = vadd.f32 %v2255, %v2463
        %2465 = vmatprep.mubr.f32.mxu0 0.0
        %v2466 = vand.u32 %v2105, 4294901760
        %2467 = vmatmul.mubr.f32.gmra.mrb[0].mxu0 %v2466
        %v2468 = vpop.f32.mrb[0].mxu0
        %v2469 = vadd.f32 %v2264, %v2468
        %v2470 = vpop.f32.mrb[0].mxu0
        %v2471 = vadd.f32 %v2266, %v2470
        %2472 = vmatprep.mubr.f32.mxu0 0.0
        %v2473 = vand.u32 %v2108, 4294901760
        %2474 = vmatmul.mubr.f32.gmra.mrb[0].mxu0 %v2473
        %v2475 = vpop.f32.mrb[0].mxu0
        %v2476 = vadd.f32 %v2275, %v2475
        %v2477 = vpop.f32.mrb[0].mxu0
        %v2478 = vadd.f32 %v2277, %v2477
        %2479 = vdwg.mxu0
        %v2480 = vand.u32 %v1998, 4294901760
        %v2481 = vsub.f32 %v1998, %v2480
        %2482 = vmatprep.subr.mxu0 %v2481
        %v2483 = vand.u32 %v1997, 4294901760
        %v2484 = vsub.f32 %v1997, %v2483
        %2485 = vmatpush1.msra.mxu0 %v2484
        %v2486 = vand.u32 %v2002, 4294901760
        %v2487 = vsub.f32 %v2002, %v2486
        %2488 = vmatprep.subr.mxu0 %v2487
        %v2489 = vand.u32 %v2001, 4294901760
        %v2490 = vsub.f32 %v2001, %v2489
        %2491 = vmatpush1.msra.mxu0 %v2490
        %v2492 = vand.u32 %v2006, 4294901760
        %v2493 = vsub.f32 %v2006, %v2492
        %2494 = vmatprep.subr.mxu0 %v2493
        %v2495 = vand.u32 %v2005, 4294901760
        %v2496 = vsub.f32 %v2005, %v2495
        %2497 = vmatpush1.msra.mxu0 %v2496
        %v2498 = vand.u32 %v2010, 4294901760
        %v2499 = vsub.f32 %v2010, %v2498
        %2500 = vmatprep.subr.mxu0 %v2499
        %v2501 = vand.u32 %v2009, 4294901760
        %v2502 = vsub.f32 %v2009, %v2501
        %2503 = vmatpush1.msra.mxu0 %v2502
        %v2504 = vand.u32 %v2014, 4294901760
        %v2505 = vsub.f32 %v2014, %v2504
        %2506 = vmatprep.subr.mxu0 %v2505
        %v2507 = vand.u32 %v2013, 4294901760
        %v2508 = vsub.f32 %v2013, %v2507
        %2509 = vmatpush1.msra.mxu0 %v2508
        %v2510 = vand.u32 %v2018, 4294901760
        %v2511 = vsub.f32 %v2018, %v2510
        %2512 = vmatprep.subr.mxu0 %v2511
        %v2513 = vand.u32 %v2017, 4294901760
        %v2514 = vsub.f32 %v2017, %v2513
        %2515 = vmatpush1.msra.mxu0 %v2514
        %v2516 = vand.u32 %v2022, 4294901760
        %v2517 = vsub.f32 %v2022, %v2516
        %2518 = vmatprep.subr.mxu0 %v2517
        %v2519 = vand.u32 %v2021, 4294901760
        %v2520 = vsub.f32 %v2021, %v2519
        %2521 = vmatpush1.msra.mxu0 %v2520
        %v2522 = vand.u32 %v2026, 4294901760
        %v2523 = vsub.f32 %v2026, %v2522
        %2524 = vmatprep.subr.mxu0 %v2523
        %v2525 = vand.u32 %v2025, 4294901760
        %v2526 = vsub.f32 %v2025, %v2525
        %2527 = vmatpush1.msra.mxu0 %v2526
        %2528 = vmatprep.subr.mxu0 0.0
        %2529 = vmatpush1.msra.mxu0 0.0
        %2530 = vmatprep.subr.mxu0 0.0
        %2531 = vmatpush1.msra.mxu0 0.0
        %2532 = vmatprep.subr.mxu0 0.0
        %2533 = vmatpush1.msra.mxu0 0.0
        %2534 = vmatprep.subr.mxu0 0.0
        %2535 = vmatpush1.msra.mxu0 0.0
        %2536 = vmatprep.subr.mxu0 0.0
        %2537 = vmatpush1.msra.mxu0 0.0
        %2538 = vmatprep.subr.mxu0 0.0
        %2539 = vmatpush1.msra.mxu0 0.0
        %2540 = vmatprep.subr.mxu0 0.0
        %2541 = vmatpush1.msra.mxu0 0.0
        %2542 = vmatprep.subr.mxu0 0.0
        %2543 = vmatpush1.msra.mxu0 0.0
        %2544 = vmatprep.subr.mxu0 0.0
        %2545 = vmatpush1.msra.mxu0 0.0
        %2546 = vmatprep.subr.mxu0 0.0
        %2547 = vmatpush1.msra.mxu0 0.0
        %2548 = vmatprep.subr.mxu0 0.0
        %2549 = vmatpush1.msra.mxu0 0.0
        %2550 = vmatprep.subr.mxu0 0.0
        %2551 = vmatpush1.msra.mxu0 0.0
        %2552 = vmatprep.subr.mxu0 0.0
        %2553 = vmatpush1.msra.mxu0 0.0
        %2554 = vmatprep.subr.mxu0 0.0
        %2555 = vmatpush1.msra.mxu0 0.0
        %2556 = vmatprep.subr.mxu0 0.0
        %2557 = vmatpush1.msra.mxu0 0.0
        %2558 = vmatprep.subr.mxu0 0.0
        %2559 = vmatpush1.msra.mxu0 0.0
        %2560 = vmatprep.subr.mxu0 0.0
        %2561 = vmatpush1.msra.mxu0 0.0
        %2562 = vmatprep.subr.mxu0 0.0
        %2563 = vmatpush1.msra.mxu0 0.0
        %2564 = vmatprep.subr.mxu0 0.0
        %2565 = vmatpush1.msra.mxu0 0.0
        %2566 = vmatprep.subr.mxu0 0.0
        %2567 = vmatpush1.msra.mxu0 0.0
        %2568 = vmatprep.subr.mxu0 0.0
        %2569 = vmatpush1.msra.mxu0 0.0
        %2570 = vmatprep.subr.mxu0 0.0
        %2571 = vmatpush1.msra.mxu0 0.0
        %2572 = vmatprep.subr.mxu0 0.0
        %2573 = vmatpush1.msra.mxu0 0.0
        %2574 = vmatprep.subr.mxu0 0.0
        %2575 = vmatpush1.msra.mxu0 0.0
        %2576 = vmatprep.mubr.f32.mxu0 0.0
        %v2577 = vand.u32 %v2087, 4294901760
        %v2578 = vsub.f32 %v2087, %v2577
        %2579 = vmatmul.mubr.f32.gmra.mrb[0].mxu0 %v2578
        %v2580 = vpop.f32.mrb[0].mxu0
        %v2581 = vadd.f32 %v2427, %v2580
        %v2582 = vpop.f32.mrb[0].mxu0
        %v2583 = vadd.f32 %v2429, %v2582
        %2584 = vmatprep.mubr.f32.mxu0 0.0
        %v2585 = vand.u32 %v2090, 4294901760
        %v2586 = vsub.f32 %v2090, %v2585
        %2587 = vmatmul.mubr.f32.gmra.mrb[0].mxu0 %v2586
        %v2588 = vpop.f32.mrb[0].mxu0
        %v2589 = vadd.f32 %v2434, %v2588
        %v2590 = vpop.f32.mrb[0].mxu0
        %v2591 = vadd.f32 %v2436, %v2590
        %2592 = vmatprep.mubr.f32.mxu0 0.0
        %v2593 = vand.u32 %v2093, 4294901760
        %v2594 = vsub.f32 %v2093, %v2593
        %2595 = vmatmul.mubr.f32.gmra.mrb[0].mxu0 %v2594
        %v2596 = vpop.f32.mrb[0].mxu0
        %v2597 = vadd.f32 %v2441, %v2596
        %v2598 = vpop.f32.mrb[0].mxu0
        %v2599 = vadd.f32 %v2443, %v2598
        %2600 = vmatprep.mubr.f32.mxu0 0.0
        %v2601 = vand.u32 %v2096, 4294901760
        %v2602 = vsub.f32 %v2096, %v2601
        %2603 = vmatmul.mubr.f32.gmra.mrb[0].mxu0 %v2602
        %v2604 = vpop.f32.mrb[0].mxu0
        %v2605 = vadd.f32 %v2448, %v2604
        %v2606 = vpop.f32.mrb[0].mxu0
        %v2607 = vadd.f32 %v2450, %v2606
        %2608 = vmatprep.mubr.f32.mxu0 0.0
        %v2609 = vand.u32 %v2099, 4294901760
        %v2610 = vsub.f32 %v2099, %v2609
        %2611 = vmatmul.mubr.f32.gmra.mrb[0].mxu0 %v2610
        %v2612 = vpop.f32.mrb[0].mxu0
        %v2613 = vadd.f32 %v2455, %v2612
        %v2614 = vpop.f32.mrb[0].mxu0
        %v2615 = vadd.f32 %v2457, %v2614
        %2616 = vmatprep.mubr.f32.mxu0 0.0
        %v2617 = vand.u32 %v2102, 4294901760
        %v2618 = vsub.f32 %v2102, %v2617
        %2619 = vmatmul.mubr.f32.gmra.mrb[0].mxu0 %v2618
        %v2620 = vpop.f32.mrb[0].mxu0
        %v2621 = vadd.f32 %v2462, %v2620
        %v2622 = vpop.f32.mrb[0].mxu0
        %v2623 = vadd.f32 %v2464, %v2622
        %2624 = vmatprep.mubr.f32.mxu0 0.0
        %v2625 = vand.u32 %v2105, 4294901760
        %v2626 = vsub.f32 %v2105, %v2625
        %2627 = vmatmul.mubr.f32.gmra.mrb[0].mxu0 %v2626
        %v2628 = vpop.f32.mrb[0].mxu0
        %v2629 = vadd.f32 %v2469, %v2628
        %v2630 = vpop.f32.mrb[0].mxu0
        %v2631 = vadd.f32 %v2471, %v2630
        %2632 = vmatprep.mubr.f32.mxu0 0.0
        %v2633 = vand.u32 %v2108, 4294901760
        %v2634 = vsub.f32 %v2108, %v2633
        %2635 = vmatmul.mubr.f32.gmra.mrb[0].mxu0 %v2634
        %v2636 = vpop.f32.mrb[0].mxu0
        %v2637 = vadd.f32 %v2476, %v2636
        %v2638 = vpop.f32.mrb[0].mxu0
        %v2639 = vadd.f32 %v2478, %v2638
        %2640 = vdwg.mxu0
        %v2641 = vand.u32 %v1998, 4294901760
        %2642 = vmatprep.subr.mxu0 %v2641
        %v2643 = vand.u32 %v1997, 4294901760
        %2644 = vmatpush1.msra.mxu0 %v2643
        %v2645 = vand.u32 %v2002, 4294901760
        %2646 = vmatprep.subr.mxu0 %v2645
        %v2647 = vand.u32 %v2001, 4294901760
        %2648 = vmatpush1.msra.mxu0 %v2647
        %v2649 = vand.u32 %v2006, 4294901760
        %2650 = vmatprep.subr.mxu0 %v2649
        %v2651 = vand.u32 %v2005, 4294901760
        %2652 = vmatpush1.msra.mxu0 %v2651
        %v2653 = vand.u32 %v2010, 4294901760
        %2654 = vmatprep.subr.mxu0 %v2653
        %v2655 = vand.u32 %v2009, 4294901760
        %2656 = vmatpush1.msra.mxu0 %v2655
        %v2657 = vand.u32 %v2014, 4294901760
        %2658 = vmatprep.subr.mxu0 %v2657
        %v2659 = vand.u32 %v2013, 4294901760
        %2660 = vmatpush1.msra.mxu0 %v2659
        %v2661 = vand.u32 %v2018, 4294901760
        %2662 = vmatprep.subr.mxu0 %v2661
        %v2663 = vand.u32 %v2017, 4294901760
        %2664 = vmatpush1.msra.mxu0 %v2663
        %v2665 = vand.u32 %v2022, 4294901760
        %2666 = vmatprep.subr.mxu0 %v2665
        %v2667 = vand.u32 %v2021, 4294901760
        %2668 = vmatpush1.msra.mxu0 %v2667
        %v2669 = vand.u32 %v2026, 4294901760
        %2670 = vmatprep.subr.mxu0 %v2669
        %v2671 = vand.u32 %v2025, 4294901760
        %2672 = vmatpush1.msra.mxu0 %v2671
        %2673 = vmatprep.subr.mxu0 0.0
        %2674 = vmatpush1.msra.mxu0 0.0
        %2675 = vmatprep.subr.mxu0 0.0
        %2676 = vmatpush1.msra.mxu0 0.0
        %2677 = vmatprep.subr.mxu0 0.0
        %2678 = vmatpush1.msra.mxu0 0.0
        %2679 = vmatprep.subr.mxu0 0.0
        %2680 = vmatpush1.msra.mxu0 0.0
        %2681 = vmatprep.subr.mxu0 0.0
        %2682 = vmatpush1.msra.mxu0 0.0
        %2683 = vmatprep.subr.mxu0 0.0
        %2684 = vmatpush1.msra.mxu0 0.0
        %2685 = vmatprep.subr.mxu0 0.0
        %2686 = vmatpush1.msra.mxu0 0.0
        %2687 = vmatprep.subr.mxu0 0.0
        %2688 = vmatpush1.msra.mxu0 0.0
        %2689 = vmatprep.subr.mxu0 0.0
        %2690 = vmatpush1.msra.mxu0 0.0
        %2691 = vmatprep.subr.mxu0 0.0
        %2692 = vmatpush1.msra.mxu0 0.0
        %2693 = vmatprep.subr.mxu0 0.0
        %2694 = vmatpush1.msra.mxu0 0.0
        %2695 = vmatprep.subr.mxu0 0.0
        %2696 = vmatpush1.msra.mxu0 0.0
        %2697 = vmatprep.subr.mxu0 0.0
        %2698 = vmatpush1.msra.mxu0 0.0
        %2699 = vmatprep.subr.mxu0 0.0
        %2700 = vmatpush1.msra.mxu0 0.0
        %2701 = vmatprep.subr.mxu0 0.0
        %2702 = vmatpush1.msra.mxu0 0.0
        %2703 = vmatprep.subr.mxu0 0.0
        %2704 = vmatpush1.msra.mxu0 0.0
        %2705 = vmatprep.subr.mxu0 0.0
        %2706 = vmatpush1.msra.mxu0 0.0
        %2707 = vmatprep.subr.mxu0 0.0
        %2708 = vmatpush1.msra.mxu0 0.0
        %2709 = vmatprep.subr.mxu0 0.0
        %2710 = vmatpush1.msra.mxu0 0.0
        %2711 = vmatprep.subr.mxu0 0.0
        %2712 = vmatpush1.msra.mxu0 0.0
        %2713 = vmatprep.subr.mxu0 0.0
        %2714 = vmatpush1.msra.mxu0 0.0
        %2715 = vmatprep.subr.mxu0 0.0
        %2716 = vmatpush1.msra.mxu0 0.0
        %2717 = vmatprep.subr.mxu0 0.0
        %2718 = vmatpush1.msra.mxu0 0.0
        %2719 = vmatprep.subr.mxu0 0.0
        %2720 = vmatpush1.msra.mxu0 0.0
        %2721 = vmatprep.mubr.f32.mxu0 0.0
        %v2722 = vand.u32 %v2087, 4294901760
        %v2723 = vsub.f32 %v2087, %v2722
        %v2724 = vand.u32 %v2723, 4294901760
        %2725 = vmatmul.mubr.f32.gmra.mrb[0].mxu0 %v2724
        %v2726 = vpop.f32.mrb[0].mxu0
        %v2727 = vadd.f32 %v2581, %v2726
        %v2728 = vpop.f32.mrb[0].mxu0
        %v2729 = vadd.f32 %v2583, %v2728
        %2730 = vmatprep.mubr.f32.mxu0 0.0
        %v2731 = vand.u32 %v2090, 4294901760
        %v2732 = vsub.f32 %v2090, %v2731
        %v2733 = vand.u32 %v2732, 4294901760
        %2734 = vmatmul.mubr.f32.gmra.mrb[0].mxu0 %v2733
        %v2735 = vpop.f32.mrb[0].mxu0
        %v2736 = vadd.f32 %v2589, %v2735
        %v2737 = vpop.f32.mrb[0].mxu0
        %v2738 = vadd.f32 %v2591, %v2737
        %2739 = vmatprep.mubr.f32.mxu0 0.0
        %v2740 = vand.u32 %v2093, 4294901760
        %v2741 = vsub.f32 %v2093, %v2740
        %v2742 = vand.u32 %v2741, 4294901760
        %2743 = vmatmul.mubr.f32.gmra.mrb[0].mxu0 %v2742
        %v2744 = vpop.f32.mrb[0].mxu0
        %v2745 = vadd.f32 %v2597, %v2744
        %v2746 = vpop.f32.mrb[0].mxu0
        %v2747 = vadd.f32 %v2599, %v2746
        %2748 = vmatprep.mubr.f32.mxu0 0.0
        %v2749 = vand.u32 %v2096, 4294901760
        %v2750 = vsub.f32 %v2096, %v2749
        %v2751 = vand.u32 %v2750, 4294901760
        %2752 = vmatmul.mubr.f32.gmra.mrb[0].mxu0 %v2751
        %v2753 = vpop.f32.mrb[0].mxu0
        %v2754 = vadd.f32 %v2605, %v2753
        %v2755 = vpop.f32.mrb[0].mxu0
        %v2756 = vadd.f32 %v2607, %v2755
        %2757 = vmatprep.mubr.f32.mxu0 0.0
        %v2758 = vand.u32 %v2099, 4294901760
        %v2759 = vsub.f32 %v2099, %v2758
        %v2760 = vand.u32 %v2759, 4294901760
        %2761 = vmatmul.mubr.f32.gmra.mrb[0].mxu0 %v2760
        %v2762 = vpop.f32.mrb[0].mxu0
        %v2763 = vadd.f32 %v2613, %v2762
        %v2764 = vpop.f32.mrb[0].mxu0
        %v2765 = vadd.f32 %v2615, %v2764
        %2766 = vmatprep.mubr.f32.mxu0 0.0
        %v2767 = vand.u32 %v2102, 4294901760
        %v2768 = vsub.f32 %v2102, %v2767
        %v2769 = vand.u32 %v2768, 4294901760
        %2770 = vmatmul.mubr.f32.gmra.mrb[0].mxu0 %v2769
        %v2771 = vpop.f32.mrb[0].mxu0
        %v2772 = vadd.f32 %v2621, %v2771
        %v2773 = vpop.f32.mrb[0].mxu0
        %v2774 = vadd.f32 %v2623, %v2773
        %2775 = vmatprep.mubr.f32.mxu0 0.0
        %v2776 = vand.u32 %v2105, 4294901760
        %v2777 = vsub.f32 %v2105, %v2776
        %v2778 = vand.u32 %v2777, 4294901760
        %2779 = vmatmul.mubr.f32.gmra.mrb[0].mxu0 %v2778
        %v2780 = vpop.f32.mrb[0].mxu0
        %v2781 = vadd.f32 %v2629, %v2780
        %v2782 = vpop.f32.mrb[0].mxu0
        %v2783 = vadd.f32 %v2631, %v2782
        %2784 = vmatprep.mubr.f32.mxu0 0.0
        %v2785 = vand.u32 %v2108, 4294901760
        %v2786 = vsub.f32 %v2108, %v2785
        %v2787 = vand.u32 %v2786, 4294901760
        %2788 = vmatmul.mubr.f32.gmra.mrb[0].mxu0 %v2787
        %v2789 = vpop.f32.mrb[0].mxu0
        %v2790 = vadd.f32 %v2637, %v2789
        %v2791 = vpop.f32.mrb[0].mxu0
        %v2792 = vadd.f32 %v2639, %v2791
        %2793 = vdwg.mxu0
        %v2794 = vand.u32 %v1998, 4294901760
        %v2795 = vsub.f32 %v1998, %v2794
        %v2796 = vand.u32 %v2795, 4294901760
        %2797 = vmatprep.subr.mxu0 %v2796
        %v2798 = vand.u32 %v1997, 4294901760
        %v2799 = vsub.f32 %v1997, %v2798
        %v2800 = vand.u32 %v2799, 4294901760
        %2801 = vmatpush1.msra.mxu0 %v2800
        %v2802 = vand.u32 %v2002, 4294901760
        %v2803 = vsub.f32 %v2002, %v2802
        %v2804 = vand.u32 %v2803, 4294901760
        %2805 = vmatprep.subr.mxu0 %v2804
        %v2806 = vand.u32 %v2001, 4294901760
        %v2807 = vsub.f32 %v2001, %v2806
        %v2808 = vand.u32 %v2807, 4294901760
        %2809 = vmatpush1.msra.mxu0 %v2808
        %v2810 = vand.u32 %v2006, 4294901760
        %v2811 = vsub.f32 %v2006, %v2810
        %v2812 = vand.u32 %v2811, 4294901760
        %2813 = vmatprep.subr.mxu0 %v2812
        %v2814 = vand.u32 %v2005, 4294901760
        %v2815 = vsub.f32 %v2005, %v2814
        %v2816 = vand.u32 %v2815, 4294901760
        %2817 = vmatpush1.msra.mxu0 %v2816
        %v2818 = vand.u32 %v2010, 4294901760
        %v2819 = vsub.f32 %v2010, %v2818
        %v2820 = vand.u32 %v2819, 4294901760
        %2821 = vmatprep.subr.mxu0 %v2820
        %v2822 = vand.u32 %v2009, 4294901760
        %v2823 = vsub.f32 %v2009, %v2822
        %v2824 = vand.u32 %v2823, 4294901760
        %2825 = vmatpush1.msra.mxu0 %v2824
        %v2826 = vand.u32 %v2014, 4294901760
        %v2827 = vsub.f32 %v2014, %v2826
        %v2828 = vand.u32 %v2827, 4294901760
        %2829 = vmatprep.subr.mxu0 %v2828
        %v2830 = vand.u32 %v2013, 4294901760
        %v2831 = vsub.f32 %v2013, %v2830
        %v2832 = vand.u32 %v2831, 4294901760
        %2833 = vmatpush1.msra.mxu0 %v2832
        %v2834 = vand.u32 %v2018, 4294901760
        %v2835 = vsub.f32 %v2018, %v2834
        %v2836 = vand.u32 %v2835, 4294901760
        %2837 = vmatprep.subr.mxu0 %v2836
        %v2838 = vand.u32 %v2017, 4294901760
        %v2839 = vsub.f32 %v2017, %v2838
        %v2840 = vand.u32 %v2839, 4294901760
        %2841 = vmatpush1.msra.mxu0 %v2840
        %v2842 = vand.u32 %v2022, 4294901760
        %v2843 = vsub.f32 %v2022, %v2842
        %v2844 = vand.u32 %v2843, 4294901760
        %2845 = vmatprep.subr.mxu0 %v2844
        %v2846 = vand.u32 %v2021, 4294901760
        %v2847 = vsub.f32 %v2021, %v2846
        %v2848 = vand.u32 %v2847, 4294901760
        %2849 = vmatpush1.msra.mxu0 %v2848
        %v2850 = vand.u32 %v2026, 4294901760
        %v2851 = vsub.f32 %v2026, %v2850
        %v2852 = vand.u32 %v2851, 4294901760
        %2853 = vmatprep.subr.mxu0 %v2852
        %v2854 = vand.u32 %v2025, 4294901760
        %v2855 = vsub.f32 %v2025, %v2854
        %v2856 = vand.u32 %v2855, 4294901760
        %2857 = vmatpush1.msra.mxu0 %v2856
        %2858 = vmatprep.subr.mxu0 0.0
        %2859 = vmatpush1.msra.mxu0 0.0
        %2860 = vmatprep.subr.mxu0 0.0
        %2861 = vmatpush1.msra.mxu0 0.0
        %2862 = vmatprep.subr.mxu0 0.0
        %2863 = vmatpush1.msra.mxu0 0.0
        %2864 = vmatprep.subr.mxu0 0.0
        %2865 = vmatpush1.msra.mxu0 0.0
        %2866 = vmatprep.subr.mxu0 0.0
        %2867 = vmatpush1.msra.mxu0 0.0
        %2868 = vmatprep.subr.mxu0 0.0
        %2869 = vmatpush1.msra.mxu0 0.0
        %2870 = vmatprep.subr.mxu0 0.0
        %2871 = vmatpush1.msra.mxu0 0.0
        %2872 = vmatprep.subr.mxu0 0.0
        %2873 = vmatpush1.msra.mxu0 0.0
        %2874 = vmatprep.subr.mxu0 0.0
        %2875 = vmatpush1.msra.mxu0 0.0
        %2876 = vmatprep.subr.mxu0 0.0
        %2877 = vmatpush1.msra.mxu0 0.0
        %2878 = vmatprep.subr.mxu0 0.0
        %2879 = vmatpush1.msra.mxu0 0.0
        %2880 = vmatprep.subr.mxu0 0.0
        %2881 = vmatpush1.msra.mxu0 0.0
        %2882 = vmatprep.subr.mxu0 0.0
        %2883 = vmatpush1.msra.mxu0 0.0
        %2884 = vmatprep.subr.mxu0 0.0
        %2885 = vmatpush1.msra.mxu0 0.0
        %2886 = vmatprep.subr.mxu0 0.0
        %2887 = vmatpush1.msra.mxu0 0.0
        %2888 = vmatprep.subr.mxu0 0.0
        %2889 = vmatpush1.msra.mxu0 0.0
        %2890 = vmatprep.subr.mxu0 0.0
        %2891 = vmatpush1.msra.mxu0 0.0
        %2892 = vmatprep.subr.mxu0 0.0
        %2893 = vmatpush1.msra.mxu0 0.0
        %2894 = vmatprep.subr.mxu0 0.0
        %2895 = vmatpush1.msra.mxu0 0.0
        %2896 = vmatprep.subr.mxu0 0.0
        %2897 = vmatpush1.msra.mxu0 0.0
        %2898 = vmatprep.subr.mxu0 0.0
        %2899 = vmatpush1.msra.mxu0 0.0
        %2900 = vmatprep.subr.mxu0 0.0
        %2901 = vmatpush1.msra.mxu0 0.0
        %2902 = vmatprep.subr.mxu0 0.0
        %2903 = vmatpush1.msra.mxu0 0.0
        %2904 = vmatprep.subr.mxu0 0.0
        %2905 = vmatpush1.msra.mxu0 0.0
        %2906 = vmatprep.mubr.f32.mxu0 0.0
        %v2907 = vand.u32 %v2087, 4294901760
        %2908 = vmatmul.mubr.f32.gmra.mrb[0].mxu0 %v2907
        %v2909 = vpop.f32.mrb[0].mxu0
        %v2910 = vadd.f32 %v2727, %v2909
        %v2911 = vpop.f32.mrb[0].mxu0
        %v2912 = vadd.f32 %v2729, %v2911
        %2913 = vmatprep.mubr.f32.mxu0 0.0
        %v2914 = vand.u32 %v2090, 4294901760
        %2915 = vmatmul.mubr.f32.gmra.mrb[0].mxu0 %v2914
        %v2916 = vpop.f32.mrb[0].mxu0
        %v2917 = vadd.f32 %v2736, %v2916
        %v2918 = vpop.f32.mrb[0].mxu0
        %v2919 = vadd.f32 %v2738, %v2918
        %2920 = vmatprep.mubr.f32.mxu0 0.0
        %v2921 = vand.u32 %v2093, 4294901760
        %2922 = vmatmul.mubr.f32.gmra.mrb[0].mxu0 %v2921
        %v2923 = vpop.f32.mrb[0].mxu0
        %v2924 = vadd.f32 %v2745, %v2923
        %v2925 = vpop.f32.mrb[0].mxu0
        %v2926 = vadd.f32 %v2747, %v2925
        %2927 = vmatprep.mubr.f32.mxu0 0.0
        %v2928 = vand.u32 %v2096, 4294901760
        %2929 = vmatmul.mubr.f32.gmra.mrb[0].mxu0 %v2928
        %v2930 = vpop.f32.mrb[0].mxu0
        %v2931 = vadd.f32 %v2754, %v2930
        %v2932 = vpop.f32.mrb[0].mxu0
        %v2933 = vadd.f32 %v2756, %v2932
        %2934 = vmatprep.mubr.f32.mxu0 0.0
        %v2935 = vand.u32 %v2099, 4294901760
        %2936 = vmatmul.mubr.f32.gmra.mrb[0].mxu0 %v2935
        %v2937 = vpop.f32.mrb[0].mxu0
        %v2938 = vadd.f32 %v2763, %v2937
        %v2939 = vpop.f32.mrb[0].mxu0
        %v2940 = vadd.f32 %v2765, %v2939
        %2941 = vmatprep.mubr.f32.mxu0 0.0
        %v2942 = vand.u32 %v2102, 4294901760
        %2943 = vmatmul.mubr.f32.gmra.mrb[0].mxu0 %v2942
        %v2944 = vpop.f32.mrb[0].mxu0
        %v2945 = vadd.f32 %v2772, %v2944
        %v2946 = vpop.f32.mrb[0].mxu0
        %v2947 = vadd.f32 %v2774, %v2946
        %2948 = vmatprep.mubr.f32.mxu0 0.0
        %v2949 = vand.u32 %v2105, 4294901760
        %2950 = vmatmul.mubr.f32.gmra.mrb[0].mxu0 %v2949
        %v2951 = vpop.f32.mrb[0].mxu0
        %v2952 = vadd.f32 %v2781, %v2951
        %v2953 = vpop.f32.mrb[0].mxu0
        %v2954 = vadd.f32 %v2783, %v2953
        %2955 = vmatprep.mubr.f32.mxu0 0.0
        %v2956 = vand.u32 %v2108, 4294901760
        %2957 = vmatmul.mubr.f32.gmra.mrb[0].mxu0 %v2956
        %v2958 = vpop.f32.mrb[0].mxu0
        %v2959 = vadd.f32 %v2790, %v2958
        %v2960 = vpop.f32.mrb[0].mxu0
        %v2961 = vadd.f32 %v2792, %v2960
        %2962 = vdwg.mxu0
        %v2963 = vand.u32 %v1998, 4294901760
        %2964 = vmatprep.subr.mxu0 %v2963
        %v2965 = vand.u32 %v1997, 4294901760
        %2966 = vmatpush1.msra.mxu0 %v2965
        %v2967 = vand.u32 %v2002, 4294901760
        %2968 = vmatprep.subr.mxu0 %v2967
        %v2969 = vand.u32 %v2001, 4294901760
        %2970 = vmatpush1.msra.mxu0 %v2969
        %v2971 = vand.u32 %v2006, 4294901760
        %2972 = vmatprep.subr.mxu0 %v2971
        %v2973 = vand.u32 %v2005, 4294901760
        %2974 = vmatpush1.msra.mxu0 %v2973
        %v2975 = vand.u32 %v2010, 4294901760
        %2976 = vmatprep.subr.mxu0 %v2975
        %v2977 = vand.u32 %v2009, 4294901760
        %2978 = vmatpush1.msra.mxu0 %v2977
        %v2979 = vand.u32 %v2014, 4294901760
        %2980 = vmatprep.subr.mxu0 %v2979
        %v2981 = vand.u32 %v2013, 4294901760
        %2982 = vmatpush1.msra.mxu0 %v2981
        %v2983 = vand.u32 %v2018, 4294901760
        %2984 = vmatprep.subr.mxu0 %v2983
        %v2985 = vand.u32 %v2017, 4294901760
        %2986 = vmatpush1.msra.mxu0 %v2985
        %v2987 = vand.u32 %v2022, 4294901760
        %2988 = vmatprep.subr.mxu0 %v2987
        %v2989 = vand.u32 %v2021, 4294901760
        %2990 = vmatpush1.msra.mxu0 %v2989
        %v2991 = vand.u32 %v2026, 4294901760
        %2992 = vmatprep.subr.mxu0 %v2991
        %v2993 = vand.u32 %v2025, 4294901760
        %2994 = vmatpush1.msra.mxu0 %v2993
        %2995 = vmatprep.subr.mxu0 0.0
        %2996 = vmatpush1.msra.mxu0 0.0
        %2997 = vmatprep.subr.mxu0 0.0
        %2998 = vmatpush1.msra.mxu0 0.0
        %2999 = vmatprep.subr.mxu0 0.0
        %3000 = vmatpush1.msra.mxu0 0.0
        %3001 = vmatprep.subr.mxu0 0.0
        %3002 = vmatpush1.msra.mxu0 0.0
        %3003 = vmatprep.subr.mxu0 0.0
        %3004 = vmatpush1.msra.mxu0 0.0
        %3005 = vmatprep.subr.mxu0 0.0
        %3006 = vmatpush1.msra.mxu0 0.0
        %3007 = vmatprep.subr.mxu0 0.0
        %3008 = vmatpush1.msra.mxu0 0.0
        %3009 = vmatprep.subr.mxu0 0.0
        %3010 = vmatpush1.msra.mxu0 0.0
        %3011 = vmatprep.subr.mxu0 0.0
        %3012 = vmatpush1.msra.mxu0 0.0
        %3013 = vmatprep.subr.mxu0 0.0
        %3014 = vmatpush1.msra.mxu0 0.0
        %3015 = vmatprep.subr.mxu0 0.0
        %3016 = vmatpush1.msra.mxu0 0.0
        %3017 = vmatprep.subr.mxu0 0.0
        %3018 = vmatpush1.msra.mxu0 0.0
        %3019 = vmatprep.subr.mxu0 0.0
        %3020 = vmatpush1.msra.mxu0 0.0
        %3021 = vmatprep.subr.mxu0 0.0
        %3022 = vmatpush1.msra.mxu0 0.0
        %3023 = vmatprep.subr.mxu0 0.0
        %3024 = vmatpush1.msra.mxu0 0.0
        %3025 = vmatprep.subr.mxu0 0.0
        %3026 = vmatpush1.msra.mxu0 0.0
        %3027 = vmatprep.subr.mxu0 0.0
        %3028 = vmatpush1.msra.mxu0 0.0
        %3029 = vmatprep.subr.mxu0 0.0
        %3030 = vmatpush1.msra.mxu0 0.0
        %3031 = vmatprep.subr.mxu0 0.0
        %3032 = vmatpush1.msra.mxu0 0.0
        %3033 = vmatprep.subr.mxu0 0.0
        %3034 = vmatpush1.msra.mxu0 0.0
        %3035 = vmatprep.subr.mxu0 0.0
        %3036 = vmatpush1.msra.mxu0 0.0
        %3037 = vmatprep.subr.mxu0 0.0
        %3038 = vmatpush1.msra.mxu0 0.0
        %3039 = vmatprep.subr.mxu0 0.0
        %3040 = vmatpush1.msra.mxu0 0.0
        %3041 = vmatprep.subr.mxu0 0.0
        %3042 = vmatpush1.msra.mxu0 0.0
        %3043 = vmatprep.mubr.f32.mxu0 0.0
        %v3044 = vand.u32 %v2087, 4294901760
        %3045 = vmatmul.mubr.f32.gmra.mrb[0].mxu0 %v3044
        %v3046 = vpop.f32.mrb[0].mxu0
        %v3047 = vadd.f32 %v2910, %v3046
        %v3048 = vpop.f32.mrb[0].mxu0
        %v3049 = vadd.f32 %v2912, %v3048
        %3050 = vmatprep.mubr.f32.mxu0 0.0
        %v3051 = vand.u32 %v2090, 4294901760
        %3052 = vmatmul.mubr.f32.gmra.mrb[0].mxu0 %v3051
        %v3053 = vpop.f32.mrb[0].mxu0
        %v3054 = vadd.f32 %v2917, %v3053
        %v3055 = vpop.f32.mrb[0].mxu0
        %v3056 = vadd.f32 %v2919, %v3055
        %3057 = vmatprep.mubr.f32.mxu0 0.0
        %v3058 = vand.u32 %v2093, 4294901760
        %3059 = vmatmul.mubr.f32.gmra.mrb[0].mxu0 %v3058
        %v3060 = vpop.f32.mrb[0].mxu0
        %v3061 = vadd.f32 %v2924, %v3060
        %v3062 = vpop.f32.mrb[0].mxu0
        %v3063 = vadd.f32 %v2926, %v3062
        %3064 = vmatprep.mubr.f32.mxu0 0.0
        %v3065 = vand.u32 %v2096, 4294901760
        %3066 = vmatmul.mubr.f32.gmra.mrb[0].mxu0 %v3065
        %v3067 = vpop.f32.mrb[0].mxu0
        %v3068 = vadd.f32 %v2931, %v3067
        %v3069 = vpop.f32.mrb[0].mxu0
        %v3070 = vadd.f32 %v2933, %v3069
        %3071 = vmatprep.mubr.f32.mxu0 0.0
        %v3072 = vand.u32 %v2099, 4294901760
        %3073 = vmatmul.mubr.f32.gmra.mrb[0].mxu0 %v3072
        %v3074 = vpop.f32.mrb[0].mxu0
        %v3075 = vadd.f32 %v2938, %v3074
        %v3076 = vpop.f32.mrb[0].mxu0
        %v3077 = vadd.f32 %v2940, %v3076
        %3078 = vmatprep.mubr.f32.mxu0 0.0
        %v3079 = vand.u32 %v2102, 4294901760
        %3080 = vmatmul.mubr.f32.gmra.mrb[0].mxu0 %v3079
        %v3081 = vpop.f32.mrb[0].mxu0
        %v3082 = vadd.f32 %v2945, %v3081
        %v3083 = vpop.f32.mrb[0].mxu0
        %v3084 = vadd.f32 %v2947, %v3083
        %3085 = vmatprep.mubr.f32.mxu0 0.0
        %v3086 = vand.u32 %v2105, 4294901760
        %3087 = vmatmul.mubr.f32.gmra.mrb[0].mxu0 %v3086
        %v3088 = vpop.f32.mrb[0].mxu0
        %v3089 = vadd.f32 %v2952, %v3088
        %v3090 = vpop.f32.mrb[0].mxu0
        %v3091 = vadd.f32 %v2954, %v3090
        %3092 = vmatprep.mubr.f32.mxu0 0.0
        %v3093 = vand.u32 %v2108, 4294901760
        %3094 = vmatmul.mubr.f32.gmra.mrb[0].mxu0 %v3093
        %v3095 = vpop.f32.mrb[0].mxu0
        %v3096 = vadd.f32 %v2959, %v3095
        %v3097 = vpop.f32.mrb[0].mxu0
        %v3098 = vadd.f32 %v2961, %v3097
        %3099 = vdwg.mxu0
        %v3100 = vand.u32 %v2000, 4294901760
        %3101 = vmatprep.subr.mxu0 %v3100
        %v3102 = vand.u32 %v1999, 4294901760
        %3103 = vmatpush1.msra.mxu0 %v3102
        %v3104 = vand.u32 %v2004, 4294901760
        %3105 = vmatprep.subr.mxu0 %v3104
        %v3106 = vand.u32 %v2003, 4294901760
        %3107 = vmatpush1.msra.mxu0 %v3106
        %v3108 = vand.u32 %v2008, 4294901760
        %3109 = vmatprep.subr.mxu0 %v3108
        %v3110 = vand.u32 %v2007, 4294901760
        %3111 = vmatpush1.msra.mxu0 %v3110
        %v3112 = vand.u32 %v2012, 4294901760
        %3113 = vmatprep.subr.mxu0 %v3112
        %v3114 = vand.u32 %v2011, 4294901760
        %3115 = vmatpush1.msra.mxu0 %v3114
        %v3116 = vand.u32 %v2016, 4294901760
        %3117 = vmatprep.subr.mxu0 %v3116
        %v3118 = vand.u32 %v2015, 4294901760
        %3119 = vmatpush1.msra.mxu0 %v3118
        %v3120 = vand.u32 %v2020, 4294901760
        %3121 = vmatprep.subr.mxu0 %v3120
        %v3122 = vand.u32 %v2019, 4294901760
        %3123 = vmatpush1.msra.mxu0 %v3122
        %v3124 = vand.u32 %v2024, 4294901760
        %3125 = vmatprep.subr.mxu0 %v3124
        %v3126 = vand.u32 %v2023, 4294901760
        %3127 = vmatpush1.msra.mxu0 %v3126
        %v3128 = vand.u32 %v2028, 4294901760
        %3129 = vmatprep.subr.mxu0 %v3128
        %v3130 = vand.u32 %v2027, 4294901760
        %3131 = vmatpush1.msra.mxu0 %v3130
        %3132 = vmatprep.subr.mxu0 0.0
        %3133 = vmatpush1.msra.mxu0 0.0
        %3134 = vmatprep.subr.mxu0 0.0
        %3135 = vmatpush1.msra.mxu0 0.0
        %3136 = vmatprep.subr.mxu0 0.0
        %3137 = vmatpush1.msra.mxu0 0.0
        %3138 = vmatprep.subr.mxu0 0.0
        %3139 = vmatpush1.msra.mxu0 0.0
        %3140 = vmatprep.subr.mxu0 0.0
        %3141 = vmatpush1.msra.mxu0 0.0
        %3142 = vmatprep.subr.mxu0 0.0
        %3143 = vmatpush1.msra.mxu0 0.0
        %3144 = vmatprep.subr.mxu0 0.0
        %3145 = vmatpush1.msra.mxu0 0.0
        %3146 = vmatprep.subr.mxu0 0.0
        %3147 = vmatpush1.msra.mxu0 0.0
        %3148 = vmatprep.subr.mxu0 0.0
        %3149 = vmatpush1.msra.mxu0 0.0
        %3150 = vmatprep.subr.mxu0 0.0
        %3151 = vmatpush1.msra.mxu0 0.0
        %3152 = vmatprep.subr.mxu0 0.0
        %3153 = vmatpush1.msra.mxu0 0.0
        %3154 = vmatprep.subr.mxu0 0.0
        %3155 = vmatpush1.msra.mxu0 0.0
        %3156 = vmatprep.subr.mxu0 0.0
        %3157 = vmatpush1.msra.mxu0 0.0
        %3158 = vmatprep.subr.mxu0 0.0
        %3159 = vmatpush1.msra.mxu0 0.0
        %3160 = vmatprep.subr.mxu0 0.0
        %3161 = vmatpush1.msra.mxu0 0.0
        %3162 = vmatprep.subr.mxu0 0.0
        %3163 = vmatpush1.msra.mxu0 0.0
        %3164 = vmatprep.subr.mxu0 0.0
        %3165 = vmatpush1.msra.mxu0 0.0
        %3166 = vmatprep.subr.mxu0 0.0
        %3167 = vmatpush1.msra.mxu0 0.0
        %3168 = vmatprep.subr.mxu0 0.0
        %3169 = vmatpush1.msra.mxu0 0.0
        %3170 = vmatprep.subr.mxu0 0.0
        %3171 = vmatpush1.msra.mxu0 0.0
        %3172 = vmatprep.subr.mxu0 0.0
        %3173 = vmatpush1.msra.mxu0 0.0
        %3174 = vmatprep.subr.mxu0 0.0
        %3175 = vmatpush1.msra.mxu0 0.0
        %3176 = vmatprep.subr.mxu0 0.0
        %3177 = vmatpush1.msra.mxu0 0.0
        %3178 = vmatprep.subr.mxu0 0.0
        %3179 = vmatpush1.msra.mxu0 0.0
        %3180 = vmatprep.mubr.f32.mxu0 0.0
        %v3181 = vand.u32 %v2087, 4294901760
        %v3182 = vsub.f32 %v2087, %v3181
        %v3183 = vand.u32 %v3182, 4294901760
        %v3184 = vsub.f32 %v3182, %v3183
        %v3185 = vand.u32 %v3184, 4294901760
        %3186 = vmatmul.mubr.f32.gmra.mrb[0].mxu0 %v3185
        %v3187 = vpop.f32.mrb[0].mxu0
        %v3188 = vadd.f32 %v2048, %v3187
        %v3189 = vpop.f32.mrb[0].mxu0
        %v3190 = vadd.f32 %v2048, %v3189
        %3191 = vmatprep.mubr.f32.mxu0 0.0
        %v3192 = vand.u32 %v2090, 4294901760
        %v3193 = vsub.f32 %v2090, %v3192
        %v3194 = vand.u32 %v3193, 4294901760
        %v3195 = vsub.f32 %v3193, %v3194
        %v3196 = vand.u32 %v3195, 4294901760
        %3197 = vmatmul.mubr.f32.gmra.mrb[0].mxu0 %v3196
        %v3198 = vpop.f32.mrb[0].mxu0
        %v3199 = vadd.f32 %v2053, %v3198
        %v3200 = vpop.f32.mrb[0].mxu0
        %v3201 = vadd.f32 %v2053, %v3200
        %3202 = vmatprep.mubr.f32.mxu0 0.0
        %v3203 = vand.u32 %v2093, 4294901760
        %v3204 = vsub.f32 %v2093, %v3203
        %v3205 = vand.u32 %v3204, 4294901760
        %v3206 = vsub.f32 %v3204, %v3205
        %v3207 = vand.u32 %v3206, 4294901760
        %3208 = vmatmul.mubr.f32.gmra.mrb[0].mxu0 %v3207
        %v3209 = vpop.f32.mrb[0].mxu0
        %v3210 = vadd.f32 %v2058, %v3209
        %v3211 = vpop.f32.mrb[0].mxu0
        %v3212 = vadd.f32 %v2058, %v3211
        %3213 = vmatprep.mubr.f32.mxu0 0.0
        %v3214 = vand.u32 %v2096, 4294901760
        %v3215 = vsub.f32 %v2096, %v3214
        %v3216 = vand.u32 %v3215, 4294901760
        %v3217 = vsub.f32 %v3215, %v3216
        %v3218 = vand.u32 %v3217, 4294901760
        %3219 = vmatmul.mubr.f32.gmra.mrb[0].mxu0 %v3218
        %v3220 = vpop.f32.mrb[0].mxu0
        %v3221 = vadd.f32 %v2063, %v3220
        %v3222 = vpop.f32.mrb[0].mxu0
        %v3223 = vadd.f32 %v2063, %v3222
        %3224 = vmatprep.mubr.f32.mxu0 0.0
        %v3225 = vand.u32 %v2099, 4294901760
        %v3226 = vsub.f32 %v2099, %v3225
        %v3227 = vand.u32 %v3226, 4294901760
        %v3228 = vsub.f32 %v3226, %v3227
        %v3229 = vand.u32 %v3228, 4294901760
        %3230 = vmatmul.mubr.f32.gmra.mrb[0].mxu0 %v3229
        %v3231 = vpop.f32.mrb[0].mxu0
        %v3232 = vadd.f32 %v2068, %v3231
        %v3233 = vpop.f32.mrb[0].mxu0
        %v3234 = vadd.f32 %v2068, %v3233
        %3235 = vmatprep.mubr.f32.mxu0 0.0
        %v3236 = vand.u32 %v2102, 4294901760
        %v3237 = vsub.f32 %v2102, %v3236
        %v3238 = vand.u32 %v3237, 4294901760
        %v3239 = vsub.f32 %v3237, %v3238
        %v3240 = vand.u32 %v3239, 4294901760
        %3241 = vmatmul.mubr.f32.gmra.mrb[0].mxu0 %v3240
        %v3242 = vpop.f32.mrb[0].mxu0
        %v3243 = vadd.f32 %v2073, %v3242
        %v3244 = vpop.f32.mrb[0].mxu0
        %v3245 = vadd.f32 %v2073, %v3244
        %3246 = vmatprep.mubr.f32.mxu0 0.0
        %v3247 = vand.u32 %v2105, 4294901760
        %v3248 = vsub.f32 %v2105, %v3247
        %v3249 = vand.u32 %v3248, 4294901760
        %v3250 = vsub.f32 %v3248, %v3249
        %v3251 = vand.u32 %v3250, 4294901760
        %3252 = vmatmul.mubr.f32.gmra.mrb[0].mxu0 %v3251
        %v3253 = vpop.f32.mrb[0].mxu0
        %v3254 = vadd.f32 %v2078, %v3253
        %v3255 = vpop.f32.mrb[0].mxu0
        %v3256 = vadd.f32 %v2078, %v3255
        %3257 = vmatprep.mubr.f32.mxu0 0.0
        %v3258 = vand.u32 %v2108, 4294901760
        %v3259 = vsub.f32 %v2108, %v3258
        %v3260 = vand.u32 %v3259, 4294901760
        %v3261 = vsub.f32 %v3259, %v3260
        %v3262 = vand.u32 %v3261, 4294901760
        %3263 = vmatmul.mubr.f32.gmra.mrb[0].mxu0 %v3262
        %v3264 = vpop.f32.mrb[0].mxu0
        %v3265 = vadd.f32 %v2083, %v3264
        %v3266 = vpop.f32.mrb[0].mxu0
        %v3267 = vadd.f32 %v2083, %v3266
        %3268 = vdwg.mxu0
        %v3269 = vand.u32 %v2000, 4294901760
        %v3270 = vsub.f32 %v2000, %v3269
        %v3271 = vand.u32 %v3270, 4294901760
        %v3272 = vsub.f32 %v3270, %v3271
        %v3273 = vand.u32 %v3272, 4294901760
        %3274 = vmatprep.subr.mxu0 %v3273
        %v3275 = vand.u32 %v1999, 4294901760
        %v3276 = vsub.f32 %v1999, %v3275
        %v3277 = vand.u32 %v3276, 4294901760
        %v3278 = vsub.f32 %v3276, %v3277
        %v3279 = vand.u32 %v3278, 4294901760
        %3280 = vmatpush1.msra.mxu0 %v3279
        %v3281 = vand.u32 %v2004, 4294901760
        %v3282 = vsub.f32 %v2004, %v3281
        %v3283 = vand.u32 %v3282, 4294901760
        %v3284 = vsub.f32 %v3282, %v3283
        %v3285 = vand.u32 %v3284, 4294901760
        %3286 = vmatprep.subr.mxu0 %v3285
        %v3287 = vand.u32 %v2003, 4294901760
        %v3288 = vsub.f32 %v2003, %v3287
        %v3289 = vand.u32 %v3288, 4294901760
        %v3290 = vsub.f32 %v3288, %v3289
        %v3291 = vand.u32 %v3290, 4294901760
        %3292 = vmatpush1.msra.mxu0 %v3291
        %v3293 = vand.u32 %v2008, 4294901760
        %v3294 = vsub.f32 %v2008, %v3293
        %v3295 = vand.u32 %v3294, 4294901760
        %v3296 = vsub.f32 %v3294, %v3295
        %v3297 = vand.u32 %v3296, 4294901760
        %3298 = vmatprep.subr.mxu0 %v3297
        %v3299 = vand.u32 %v2007, 4294901760
        %v3300 = vsub.f32 %v2007, %v3299
        %v3301 = vand.u32 %v3300, 4294901760
        %v3302 = vsub.f32 %v3300, %v3301
        %v3303 = vand.u32 %v3302, 4294901760
        %3304 = vmatpush1.msra.mxu0 %v3303
        %v3305 = vand.u32 %v2012, 4294901760
        %v3306 = vsub.f32 %v2012, %v3305
        %v3307 = vand.u32 %v3306, 4294901760
        %v3308 = vsub.f32 %v3306, %v3307
        %v3309 = vand.u32 %v3308, 4294901760
        %3310 = vmatprep.subr.mxu0 %v3309
        %v3311 = vand.u32 %v2011, 4294901760
        %v3312 = vsub.f32 %v2011, %v3311
        %v3313 = vand.u32 %v3312, 4294901760
        %v3314 = vsub.f32 %v3312, %v3313
        %v3315 = vand.u32 %v3314, 4294901760
        %3316 = vmatpush1.msra.mxu0 %v3315
        %v3317 = vand.u32 %v2016, 4294901760
        %v3318 = vsub.f32 %v2016, %v3317
        %v3319 = vand.u32 %v3318, 4294901760
        %v3320 = vsub.f32 %v3318, %v3319
        %v3321 = vand.u32 %v3320, 4294901760
        %3322 = vmatprep.subr.mxu0 %v3321
        %v3323 = vand.u32 %v2015, 4294901760
        %v3324 = vsub.f32 %v2015, %v3323
        %v3325 = vand.u32 %v3324, 4294901760
        %v3326 = vsub.f32 %v3324, %v3325
        %v3327 = vand.u32 %v3326, 4294901760
        %3328 = vmatpush1.msra.mxu0 %v3327
        %v3329 = vand.u32 %v2020, 4294901760
        %v3330 = vsub.f32 %v2020, %v3329
        %v3331 = vand.u32 %v3330, 4294901760
        %v3332 = vsub.f32 %v3330, %v3331
        %v3333 = vand.u32 %v3332, 4294901760
        %3334 = vmatprep.subr.mxu0 %v3333
        %v3335 = vand.u32 %v2019, 4294901760
        %v3336 = vsub.f32 %v2019, %v3335
        %v3337 = vand.u32 %v3336, 4294901760
        %v3338 = vsub.f32 %v3336, %v3337
        %v3339 = vand.u32 %v3338, 4294901760
        %3340 = vmatpush1.msra.mxu0 %v3339
        %v3341 = vand.u32 %v2024, 4294901760
        %v3342 = vsub.f32 %v2024, %v3341
        %v3343 = vand.u32 %v3342, 4294901760
        %v3344 = vsub.f32 %v3342, %v3343
        %v3345 = vand.u32 %v3344, 4294901760
        %3346 = vmatprep.subr.mxu0 %v3345
        %v3347 = vand.u32 %v2023, 4294901760
        %v3348 = vsub.f32 %v2023, %v3347
        %v3349 = vand.u32 %v3348, 4294901760
        %v3350 = vsub.f32 %v3348, %v3349
        %v3351 = vand.u32 %v3350, 4294901760
        %3352 = vmatpush1.msra.mxu0 %v3351
        %v3353 = vand.u32 %v2028, 4294901760
        %v3354 = vsub.f32 %v2028, %v3353
        %v3355 = vand.u32 %v3354, 4294901760
        %v3356 = vsub.f32 %v3354, %v3355
        %v3357 = vand.u32 %v3356, 4294901760
        %3358 = vmatprep.subr.mxu0 %v3357
        %v3359 = vand.u32 %v2027, 4294901760
        %v3360 = vsub.f32 %v2027, %v3359
        %v3361 = vand.u32 %v3360, 4294901760
        %v3362 = vsub.f32 %v3360, %v3361
        %v3363 = vand.u32 %v3362, 4294901760
        %3364 = vmatpush1.msra.mxu0 %v3363
        %3365 = vmatprep.subr.mxu0 0.0
        %3366 = vmatpush1.msra.mxu0 0.0
        %3367 = vmatprep.subr.mxu0 0.0
        %3368 = vmatpush1.msra.mxu0 0.0
        %3369 = vmatprep.subr.mxu0 0.0
        %3370 = vmatpush1.msra.mxu0 0.0
        %3371 = vmatprep.subr.mxu0 0.0
        %3372 = vmatpush1.msra.mxu0 0.0
        %3373 = vmatprep.subr.mxu0 0.0
        %3374 = vmatpush1.msra.mxu0 0.0
        %3375 = vmatprep.subr.mxu0 0.0
        %3376 = vmatpush1.msra.mxu0 0.0
        %3377 = vmatprep.subr.mxu0 0.0
        %3378 = vmatpush1.msra.mxu0 0.0
        %3379 = vmatprep.subr.mxu0 0.0
        %3380 = vmatpush1.msra.mxu0 0.0
        %3381 = vmatprep.subr.mxu0 0.0
        %3382 = vmatpush1.msra.mxu0 0.0
        %3383 = vmatprep.subr.mxu0 0.0
        %3384 = vmatpush1.msra.mxu0 0.0
        %3385 = vmatprep.subr.mxu0 0.0
        %3386 = vmatpush1.msra.mxu0 0.0
        %3387 = vmatprep.subr.mxu0 0.0
        %3388 = vmatpush1.msra.mxu0 0.0
        %3389 = vmatprep.subr.mxu0 0.0
        %3390 = vmatpush1.msra.mxu0 0.0
        %3391 = vmatprep.subr.mxu0 0.0
        %3392 = vmatpush1.msra.mxu0 0.0
        %3393 = vmatprep.subr.mxu0 0.0
        %3394 = vmatpush1.msra.mxu0 0.0
        %3395 = vmatprep.subr.mxu0 0.0
        %3396 = vmatpush1.msra.mxu0 0.0
        %3397 = vmatprep.subr.mxu0 0.0
        %3398 = vmatpush1.msra.mxu0 0.0
        %3399 = vmatprep.subr.mxu0 0.0
        %3400 = vmatpush1.msra.mxu0 0.0
        %3401 = vmatprep.subr.mxu0 0.0
        %3402 = vmatpush1.msra.mxu0 0.0
        %3403 = vmatprep.subr.mxu0 0.0
        %3404 = vmatpush1.msra.mxu0 0.0
        %3405 = vmatprep.subr.mxu0 0.0
        %3406 = vmatpush1.msra.mxu0 0.0
        %3407 = vmatprep.subr.mxu0 0.0
        %3408 = vmatpush1.msra.mxu0 0.0
        %3409 = vmatprep.subr.mxu0 0.0
        %3410 = vmatpush1.msra.mxu0 0.0
        %3411 = vmatprep.subr.mxu0 0.0
        %3412 = vmatpush1.msra.mxu0 0.0
        %3413 = vmatprep.mubr.f32.mxu0 0.0
        %v3414 = vand.u32 %v2087, 4294901760
        %3415 = vmatmul.mubr.f32.gmra.mrb[0].mxu0 %v3414
        %v3416 = vpop.f32.mrb[0].mxu0
        %v3417 = vadd.f32 %v3188, %v3416
        %v3418 = vpop.f32.mrb[0].mxu0
        %v3419 = vadd.f32 %v3190, %v3418
        %3420 = vmatprep.mubr.f32.mxu0 0.0
        %v3421 = vand.u32 %v2090, 4294901760
        %3422 = vmatmul.mubr.f32.gmra.mrb[0].mxu0 %v3421
        %v3423 = vpop.f32.mrb[0].mxu0
        %v3424 = vadd.f32 %v3199, %v3423
        %v3425 = vpop.f32.mrb[0].mxu0
        %v3426 = vadd.f32 %v3201, %v3425
        %3427 = vmatprep.mubr.f32.mxu0 0.0
        %v3428 = vand.u32 %v2093, 4294901760
        %3429 = vmatmul.mubr.f32.gmra.mrb[0].mxu0 %v3428
        %v3430 = vpop.f32.mrb[0].mxu0
        %v3431 = vadd.f32 %v3210, %v3430
        %v3432 = vpop.f32.mrb[0].mxu0
        %v3433 = vadd.f32 %v3212, %v3432
        %3434 = vmatprep.mubr.f32.mxu0 0.0
        %v3435 = vand.u32 %v2096, 4294901760
        %3436 = vmatmul.mubr.f32.gmra.mrb[0].mxu0 %v3435
        %v3437 = vpop.f32.mrb[0].mxu0
        %v3438 = vadd.f32 %v3221, %v3437
        %v3439 = vpop.f32.mrb[0].mxu0
        %v3440 = vadd.f32 %v3223, %v3439
        %3441 = vmatprep.mubr.f32.mxu0 0.0
        %v3442 = vand.u32 %v2099, 4294901760
        %3443 = vmatmul.mubr.f32.gmra.mrb[0].mxu0 %v3442
        %v3444 = vpop.f32.mrb[0].mxu0
        %v3445 = vadd.f32 %v3232, %v3444
        %v3446 = vpop.f32.mrb[0].mxu0
        %v3447 = vadd.f32 %v3234, %v3446
        %3448 = vmatprep.mubr.f32.mxu0 0.0
        %v3449 = vand.u32 %v2102, 4294901760
        %3450 = vmatmul.mubr.f32.gmra.mrb[0].mxu0 %v3449
        %v3451 = vpop.f32.mrb[0].mxu0
        %v3452 = vadd.f32 %v3243, %v3451
        %v3453 = vpop.f32.mrb[0].mxu0
        %v3454 = vadd.f32 %v3245, %v3453
        %3455 = vmatprep.mubr.f32.mxu0 0.0
        %v3456 = vand.u32 %v2105, 4294901760
        %3457 = vmatmul.mubr.f32.gmra.mrb[0].mxu0 %v3456
        %v3458 = vpop.f32.mrb[0].mxu0
        %v3459 = vadd.f32 %v3254, %v3458
        %v3460 = vpop.f32.mrb[0].mxu0
        %v3461 = vadd.f32 %v3256, %v3460
        %3462 = vmatprep.mubr.f32.mxu0 0.0
        %v3463 = vand.u32 %v2108, 4294901760
        %3464 = vmatmul.mubr.f32.gmra.mrb[0].mxu0 %v3463
        %v3465 = vpop.f32.mrb[0].mxu0
        %v3466 = vadd.f32 %v3265, %v3465
        %v3467 = vpop.f32.mrb[0].mxu0
        %v3468 = vadd.f32 %v3267, %v3467
        %3469 = vdwg.mxu0
        %v3470 = vand.u32 %v2000, 4294901760
        %v3471 = vsub.f32 %v2000, %v3470
        %3472 = vmatprep.subr.mxu0 %v3471
        %v3473 = vand.u32 %v1999, 4294901760
        %v3474 = vsub.f32 %v1999, %v3473
        %3475 = vmatpush1.msra.mxu0 %v3474
        %v3476 = vand.u32 %v2004, 4294901760
        %v3477 = vsub.f32 %v2004, %v3476
        %3478 = vmatprep.subr.mxu0 %v3477
        %v3479 = vand.u32 %v2003, 4294901760
        %v3480 = vsub.f32 %v2003, %v3479
        %3481 = vmatpush1.msra.mxu0 %v3480
        %v3482 = vand.u32 %v2008, 4294901760
        %v3483 = vsub.f32 %v2008, %v3482
        %3484 = vmatprep.subr.mxu0 %v3483
        %v3485 = vand.u32 %v2007, 4294901760
        %v3486 = vsub.f32 %v2007, %v3485
        %3487 = vmatpush1.msra.mxu0 %v3486
        %v3488 = vand.u32 %v2012, 4294901760
        %v3489 = vsub.f32 %v2012, %v3488
        %3490 = vmatprep.subr.mxu0 %v3489
        %v3491 = vand.u32 %v2011, 4294901760
        %v3492 = vsub.f32 %v2011, %v3491
        %3493 = vmatpush1.msra.mxu0 %v3492
        %v3494 = vand.u32 %v2016, 4294901760
        %v3495 = vsub.f32 %v2016, %v3494
        %3496 = vmatprep.subr.mxu0 %v3495
        %v3497 = vand.u32 %v2015, 4294901760
        %v3498 = vsub.f32 %v2015, %v3497
        %3499 = vmatpush1.msra.mxu0 %v3498
        %v3500 = vand.u32 %v2020, 4294901760
        %v3501 = vsub.f32 %v2020, %v3500
        %3502 = vmatprep.subr.mxu0 %v3501
        %v3503 = vand.u32 %v2019, 4294901760
        %v3504 = vsub.f32 %v2019, %v3503
        %3505 = vmatpush1.msra.mxu0 %v3504
        %v3506 = vand.u32 %v2024, 4294901760
        %v3507 = vsub.f32 %v2024, %v3506
        %3508 = vmatprep.subr.mxu0 %v3507
        %v3509 = vand.u32 %v2023, 4294901760
        %v3510 = vsub.f32 %v2023, %v3509
        %3511 = vmatpush1.msra.mxu0 %v3510
        %v3512 = vand.u32 %v2028, 4294901760
        %v3513 = vsub.f32 %v2028, %v3512
        %3514 = vmatprep.subr.mxu0 %v3513
        %v3515 = vand.u32 %v2027, 4294901760
        %v3516 = vsub.f32 %v2027, %v3515
        %3517 = vmatpush1.msra.mxu0 %v3516
        %3518 = vmatprep.subr.mxu0 0.0
        %3519 = vmatpush1.msra.mxu0 0.0
        %3520 = vmatprep.subr.mxu0 0.0
        %3521 = vmatpush1.msra.mxu0 0.0
        %3522 = vmatprep.subr.mxu0 0.0
        %3523 = vmatpush1.msra.mxu0 0.0
        %3524 = vmatprep.subr.mxu0 0.0
        %3525 = vmatpush1.msra.mxu0 0.0
        %3526 = vmatprep.subr.mxu0 0.0
        %3527 = vmatpush1.msra.mxu0 0.0
        %3528 = vmatprep.subr.mxu0 0.0
        %3529 = vmatpush1.msra.mxu0 0.0
        %3530 = vmatprep.subr.mxu0 0.0
        %3531 = vmatpush1.msra.mxu0 0.0
        %3532 = vmatprep.subr.mxu0 0.0
        %3533 = vmatpush1.msra.mxu0 0.0
        %3534 = vmatprep.subr.mxu0 0.0
        %3535 = vmatpush1.msra.mxu0 0.0
        %3536 = vmatprep.subr.mxu0 0.0
        %3537 = vmatpush1.msra.mxu0 0.0
        %3538 = vmatprep.subr.mxu0 0.0
        %3539 = vmatpush1.msra.mxu0 0.0
        %3540 = vmatprep.subr.mxu0 0.0
        %3541 = vmatpush1.msra.mxu0 0.0
        %3542 = vmatprep.subr.mxu0 0.0
        %3543 = vmatpush1.msra.mxu0 0.0
        %3544 = vmatprep.subr.mxu0 0.0
        %3545 = vmatpush1.msra.mxu0 0.0
        %3546 = vmatprep.subr.mxu0 0.0
        %3547 = vmatpush1.msra.mxu0 0.0
        %3548 = vmatprep.subr.mxu0 0.0
        %3549 = vmatpush1.msra.mxu0 0.0
        %3550 = vmatprep.subr.mxu0 0.0
        %3551 = vmatpush1.msra.mxu0 0.0
        %3552 = vmatprep.subr.mxu0 0.0
        %3553 = vmatpush1.msra.mxu0 0.0
        %3554 = vmatprep.subr.mxu0 0.0
        %3555 = vmatpush1.msra.mxu0 0.0
        %3556 = vmatprep.subr.mxu0 0.0
        %3557 = vmatpush1.msra.mxu0 0.0
        %3558 = vmatprep.subr.mxu0 0.0
        %3559 = vmatpush1.msra.mxu0 0.0
        %3560 = vmatprep.subr.mxu0 0.0
        %3561 = vmatpush1.msra.mxu0 0.0
        %3562 = vmatprep.subr.mxu0 0.0
        %3563 = vmatpush1.msra.mxu0 0.0
        %3564 = vmatprep.subr.mxu0 0.0
        %3565 = vmatpush1.msra.mxu0 0.0
        %3566 = vmatprep.mubr.f32.mxu0 0.0
        %v3567 = vand.u32 %v2087, 4294901760
        %v3568 = vsub.f32 %v2087, %v3567
        %3569 = vmatmul.mubr.f32.gmra.mrb[0].mxu0 %v3568
        %v3570 = vpop.f32.mrb[0].mxu0
        %v3571 = vadd.f32 %v3417, %v3570
        %v3572 = vpop.f32.mrb[0].mxu0
        %v3573 = vadd.f32 %v3419, %v3572
        %3574 = vmatprep.mubr.f32.mxu0 0.0
        %v3575 = vand.u32 %v2090, 4294901760
        %v3576 = vsub.f32 %v2090, %v3575
        %3577 = vmatmul.mubr.f32.gmra.mrb[0].mxu0 %v3576
        %v3578 = vpop.f32.mrb[0].mxu0
        %v3579 = vadd.f32 %v3424, %v3578
        %v3580 = vpop.f32.mrb[0].mxu0
        %v3581 = vadd.f32 %v3426, %v3580
        %3582 = vmatprep.mubr.f32.mxu0 0.0
        %v3583 = vand.u32 %v2093, 4294901760
        %v3584 = vsub.f32 %v2093, %v3583
        %3585 = vmatmul.mubr.f32.gmra.mrb[0].mxu0 %v3584
        %v3586 = vpop.f32.mrb[0].mxu0
        %v3587 = vadd.f32 %v3431, %v3586
        %v3588 = vpop.f32.mrb[0].mxu0
        %v3589 = vadd.f32 %v3433, %v3588
        %3590 = vmatprep.mubr.f32.mxu0 0.0
        %v3591 = vand.u32 %v2096, 4294901760
        %v3592 = vsub.f32 %v2096, %v3591
        %3593 = vmatmul.mubr.f32.gmra.mrb[0].mxu0 %v3592
        %v3594 = vpop.f32.mrb[0].mxu0
        %v3595 = vadd.f32 %v3438, %v3594
        %v3596 = vpop.f32.mrb[0].mxu0
        %v3597 = vadd.f32 %v3440, %v3596
        %3598 = vmatprep.mubr.f32.mxu0 0.0
        %v3599 = vand.u32 %v2099, 4294901760
        %v3600 = vsub.f32 %v2099, %v3599
        %3601 = vmatmul.mubr.f32.gmra.mrb[0].mxu0 %v3600
        %v3602 = vpop.f32.mrb[0].mxu0
        %v3603 = vadd.f32 %v3445, %v3602
        %v3604 = vpop.f32.mrb[0].mxu0
        %v3605 = vadd.f32 %v3447, %v3604
        %3606 = vmatprep.mubr.f32.mxu0 0.0
        %v3607 = vand.u32 %v2102, 4294901760
        %v3608 = vsub.f32 %v2102, %v3607
        %3609 = vmatmul.mubr.f32.gmra.mrb[0].mxu0 %v3608
        %v3610 = vpop.f32.mrb[0].mxu0
        %v3611 = vadd.f32 %v3452, %v3610
        %v3612 = vpop.f32.mrb[0].mxu0
        %v3613 = vadd.f32 %v3454, %v3612
        %3614 = vmatprep.mubr.f32.mxu0 0.0
        %v3615 = vand.u32 %v2105, 4294901760
        %v3616 = vsub.f32 %v2105, %v3615
        %3617 = vmatmul.mubr.f32.gmra.mrb[0].mxu0 %v3616
        %v3618 = vpop.f32.mrb[0].mxu0
        %v3619 = vadd.f32 %v3459, %v3618
        %v3620 = vpop.f32.mrb[0].mxu0
        %v3621 = vadd.f32 %v3461, %v3620
        %3622 = vmatprep.mubr.f32.mxu0 0.0
        %v3623 = vand.u32 %v2108, 4294901760
        %v3624 = vsub.f32 %v2108, %v3623
        %3625 = vmatmul.mubr.f32.gmra.mrb[0].mxu0 %v3624
        %v3626 = vpop.f32.mrb[0].mxu0
        %v3627 = vadd.f32 %v3466, %v3626
        %v3628 = vpop.f32.mrb[0].mxu0
        %v3629 = vadd.f32 %v3468, %v3628
        %3630 = vdwg.mxu0
        %v3631 = vand.u32 %v2000, 4294901760
        %3632 = vmatprep.subr.mxu0 %v3631
        %v3633 = vand.u32 %v1999, 4294901760
        %3634 = vmatpush1.msra.mxu0 %v3633
        %v3635 = vand.u32 %v2004, 4294901760
        %3636 = vmatprep.subr.mxu0 %v3635
        %v3637 = vand.u32 %v2003, 4294901760
        %3638 = vmatpush1.msra.mxu0 %v3637
        %v3639 = vand.u32 %v2008, 4294901760
        %3640 = vmatprep.subr.mxu0 %v3639
        %v3641 = vand.u32 %v2007, 4294901760
        %3642 = vmatpush1.msra.mxu0 %v3641
        %v3643 = vand.u32 %v2012, 4294901760
        %3644 = vmatprep.subr.mxu0 %v3643
        %v3645 = vand.u32 %v2011, 4294901760
        %3646 = vmatpush1.msra.mxu0 %v3645
        %v3647 = vand.u32 %v2016, 4294901760
        %3648 = vmatprep.subr.mxu0 %v3647
        %v3649 = vand.u32 %v2015, 4294901760
        %3650 = vmatpush1.msra.mxu0 %v3649
        %v3651 = vand.u32 %v2020, 4294901760
        %3652 = vmatprep.subr.mxu0 %v3651
        %v3653 = vand.u32 %v2019, 4294901760
        %3654 = vmatpush1.msra.mxu0 %v3653
        %v3655 = vand.u32 %v2024, 4294901760
        %3656 = vmatprep.subr.mxu0 %v3655
        %v3657 = vand.u32 %v2023, 4294901760
        %3658 = vmatpush1.msra.mxu0 %v3657
        %v3659 = vand.u32 %v2028, 4294901760
        %3660 = vmatprep.subr.mxu0 %v3659
        %v3661 = vand.u32 %v2027, 4294901760
        %3662 = vmatpush1.msra.mxu0 %v3661
        %3663 = vmatprep.subr.mxu0 0.0
        %3664 = vmatpush1.msra.mxu0 0.0
        %3665 = vmatprep.subr.mxu0 0.0
        %3666 = vmatpush1.msra.mxu0 0.0
        %3667 = vmatprep.subr.mxu0 0.0
        %3668 = vmatpush1.msra.mxu0 0.0
        %3669 = vmatprep.subr.mxu0 0.0
        %3670 = vmatpush1.msra.mxu0 0.0
        %3671 = vmatprep.subr.mxu0 0.0
        %3672 = vmatpush1.msra.mxu0 0.0
        %3673 = vmatprep.subr.mxu0 0.0
        %3674 = vmatpush1.msra.mxu0 0.0
        %3675 = vmatprep.subr.mxu0 0.0
        %3676 = vmatpush1.msra.mxu0 0.0
        %3677 = vmatprep.subr.mxu0 0.0
        %3678 = vmatpush1.msra.mxu0 0.0
        %3679 = vmatprep.subr.mxu0 0.0
        %3680 = vmatpush1.msra.mxu0 0.0
        %3681 = vmatprep.subr.mxu0 0.0
        %3682 = vmatpush1.msra.mxu0 0.0
        %3683 = vmatprep.subr.mxu0 0.0
        %3684 = vmatpush1.msra.mxu0 0.0
        %3685 = vmatprep.subr.mxu0 0.0
        %3686 = vmatpush1.msra.mxu0 0.0
        %3687 = vmatprep.subr.mxu0 0.0
        %3688 = vmatpush1.msra.mxu0 0.0
        %3689 = vmatprep.subr.mxu0 0.0
        %3690 = vmatpush1.msra.mxu0 0.0
        %3691 = vmatprep.subr.mxu0 0.0
        %3692 = vmatpush1.msra.mxu0 0.0
        %3693 = vmatprep.subr.mxu0 0.0
        %3694 = vmatpush1.msra.mxu0 0.0
        %3695 = vmatprep.subr.mxu0 0.0
        %3696 = vmatpush1.msra.mxu0 0.0
        %3697 = vmatprep.subr.mxu0 0.0
        %3698 = vmatpush1.msra.mxu0 0.0
        %3699 = vmatprep.subr.mxu0 0.0
        %3700 = vmatpush1.msra.mxu0 0.0
        %3701 = vmatprep.subr.mxu0 0.0
        %3702 = vmatpush1.msra.mxu0 0.0
        %3703 = vmatprep.subr.mxu0 0.0
        %3704 = vmatpush1.msra.mxu0 0.0
        %3705 = vmatprep.subr.mxu0 0.0
        %3706 = vmatpush1.msra.mxu0 0.0
        %3707 = vmatprep.subr.mxu0 0.0
        %3708 = vmatpush1.msra.mxu0 0.0
        %3709 = vmatprep.subr.mxu0 0.0
        %3710 = vmatpush1.msra.mxu0 0.0
        %3711 = vmatprep.mubr.f32.mxu0 0.0
        %v3712 = vand.u32 %v2087, 4294901760
        %v3713 = vsub.f32 %v2087, %v3712
        %v3714 = vand.u32 %v3713, 4294901760
        %3715 = vmatmul.mubr.f32.gmra.mrb[0].mxu0 %v3714
        %v3716 = vpop.f32.mrb[0].mxu0
        %v3717 = vadd.f32 %v3571, %v3716
        %v3718 = vpop.f32.mrb[0].mxu0
        %v3719 = vadd.f32 %v3573, %v3718
        %3720 = vmatprep.mubr.f32.mxu0 0.0
        %v3721 = vand.u32 %v2090, 4294901760
        %v3722 = vsub.f32 %v2090, %v3721
        %v3723 = vand.u32 %v3722, 4294901760
        %3724 = vmatmul.mubr.f32.gmra.mrb[0].mxu0 %v3723
        %v3725 = vpop.f32.mrb[0].mxu0
        %v3726 = vadd.f32 %v3579, %v3725
        %v3727 = vpop.f32.mrb[0].mxu0
        %v3728 = vadd.f32 %v3581, %v3727
        %3729 = vmatprep.mubr.f32.mxu0 0.0
        %v3730 = vand.u32 %v2093, 4294901760
        %v3731 = vsub.f32 %v2093, %v3730
        %v3732 = vand.u32 %v3731, 4294901760
        %3733 = vmatmul.mubr.f32.gmra.mrb[0].mxu0 %v3732
        %v3734 = vpop.f32.mrb[0].mxu0
        %v3735 = vadd.f32 %v3587, %v3734
        %v3736 = vpop.f32.mrb[0].mxu0
        %v3737 = vadd.f32 %v3589, %v3736
        %3738 = vmatprep.mubr.f32.mxu0 0.0
        %v3739 = vand.u32 %v2096, 4294901760
        %v3740 = vsub.f32 %v2096, %v3739
        %v3741 = vand.u32 %v3740, 4294901760
        %3742 = vmatmul.mubr.f32.gmra.mrb[0].mxu0 %v3741
        %v3743 = vpop.f32.mrb[0].mxu0
        %v3744 = vadd.f32 %v3595, %v3743
        %v3745 = vpop.f32.mrb[0].mxu0
        %v3746 = vadd.f32 %v3597, %v3745
        %3747 = vmatprep.mubr.f32.mxu0 0.0
        %v3748 = vand.u32 %v2099, 4294901760
        %v3749 = vsub.f32 %v2099, %v3748
        %v3750 = vand.u32 %v3749, 4294901760
        %3751 = vmatmul.mubr.f32.gmra.mrb[0].mxu0 %v3750
        %v3752 = vpop.f32.mrb[0].mxu0
        %v3753 = vadd.f32 %v3603, %v3752
        %v3754 = vpop.f32.mrb[0].mxu0
        %v3755 = vadd.f32 %v3605, %v3754
        %3756 = vmatprep.mubr.f32.mxu0 0.0
        %v3757 = vand.u32 %v2102, 4294901760
        %v3758 = vsub.f32 %v2102, %v3757
        %v3759 = vand.u32 %v3758, 4294901760
        %3760 = vmatmul.mubr.f32.gmra.mrb[0].mxu0 %v3759
        %v3761 = vpop.f32.mrb[0].mxu0
        %v3762 = vadd.f32 %v3611, %v3761
        %v3763 = vpop.f32.mrb[0].mxu0
        %v3764 = vadd.f32 %v3613, %v3763
        %3765 = vmatprep.mubr.f32.mxu0 0.0
        %v3766 = vand.u32 %v2105, 4294901760
        %v3767 = vsub.f32 %v2105, %v3766
        %v3768 = vand.u32 %v3767, 4294901760
        %3769 = vmatmul.mubr.f32.gmra.mrb[0].mxu0 %v3768
        %v3770 = vpop.f32.mrb[0].mxu0
        %v3771 = vadd.f32 %v3619, %v3770
        %v3772 = vpop.f32.mrb[0].mxu0
        %v3773 = vadd.f32 %v3621, %v3772
        %3774 = vmatprep.mubr.f32.mxu0 0.0
        %v3775 = vand.u32 %v2108, 4294901760
        %v3776 = vsub.f32 %v2108, %v3775
        %v3777 = vand.u32 %v3776, 4294901760
        %3778 = vmatmul.mubr.f32.gmra.mrb[0].mxu0 %v3777
        %v3779 = vpop.f32.mrb[0].mxu0
        %v3780 = vadd.f32 %v3627, %v3779
        %v3781 = vpop.f32.mrb[0].mxu0
        %v3782 = vadd.f32 %v3629, %v3781
        %3783 = vdwg.mxu0
        %v3784 = vand.u32 %v2000, 4294901760
        %v3785 = vsub.f32 %v2000, %v3784
        %v3786 = vand.u32 %v3785, 4294901760
        %3787 = vmatprep.subr.mxu0 %v3786
        %v3788 = vand.u32 %v1999, 4294901760
        %v3789 = vsub.f32 %v1999, %v3788
        %v3790 = vand.u32 %v3789, 4294901760
        %3791 = vmatpush1.msra.mxu0 %v3790
        %v3792 = vand.u32 %v2004, 4294901760
        %v3793 = vsub.f32 %v2004, %v3792
        %v3794 = vand.u32 %v3793, 4294901760
        %3795 = vmatprep.subr.mxu0 %v3794
        %v3796 = vand.u32 %v2003, 4294901760
        %v3797 = vsub.f32 %v2003, %v3796
        %v3798 = vand.u32 %v3797, 4294901760
        %3799 = vmatpush1.msra.mxu0 %v3798
        %v3800 = vand.u32 %v2008, 4294901760
        %v3801 = vsub.f32 %v2008, %v3800
        %v3802 = vand.u32 %v3801, 4294901760
        %3803 = vmatprep.subr.mxu0 %v3802
        %v3804 = vand.u32 %v2007, 4294901760
        %v3805 = vsub.f32 %v2007, %v3804
        %v3806 = vand.u32 %v3805, 4294901760
        %3807 = vmatpush1.msra.mxu0 %v3806
        %v3808 = vand.u32 %v2012, 4294901760
        %v3809 = vsub.f32 %v2012, %v3808
        %v3810 = vand.u32 %v3809, 4294901760
        %3811 = vmatprep.subr.mxu0 %v3810
        %v3812 = vand.u32 %v2011, 4294901760
        %v3813 = vsub.f32 %v2011, %v3812
        %v3814 = vand.u32 %v3813, 4294901760
        %3815 = vmatpush1.msra.mxu0 %v3814
        %v3816 = vand.u32 %v2016, 4294901760
        %v3817 = vsub.f32 %v2016, %v3816
        %v3818 = vand.u32 %v3817, 4294901760
        %3819 = vmatprep.subr.mxu0 %v3818
        %v3820 = vand.u32 %v2015, 4294901760
        %v3821 = vsub.f32 %v2015, %v3820
        %v3822 = vand.u32 %v3821, 4294901760
        %3823 = vmatpush1.msra.mxu0 %v3822
        %v3824 = vand.u32 %v2020, 4294901760
        %v3825 = vsub.f32 %v2020, %v3824
        %v3826 = vand.u32 %v3825, 4294901760
        %3827 = vmatprep.subr.mxu0 %v3826
        %v3828 = vand.u32 %v2019, 4294901760
        %v3829 = vsub.f32 %v2019, %v3828
        %v3830 = vand.u32 %v3829, 4294901760
        %3831 = vmatpush1.msra.mxu0 %v3830
        %v3832 = vand.u32 %v2024, 4294901760
        %v3833 = vsub.f32 %v2024, %v3832
        %v3834 = vand.u32 %v3833, 4294901760
        %3835 = vmatprep.subr.mxu0 %v3834
        %v3836 = vand.u32 %v2023, 4294901760
        %v3837 = vsub.f32 %v2023, %v3836
        %v3838 = vand.u32 %v3837, 4294901760
        %3839 = vmatpush1.msra.mxu0 %v3838
        %v3840 = vand.u32 %v2028, 4294901760
        %v3841 = vsub.f32 %v2028, %v3840
        %v3842 = vand.u32 %v3841, 4294901760
        %3843 = vmatprep.subr.mxu0 %v3842
        %v3844 = vand.u32 %v2027, 4294901760
        %v3845 = vsub.f32 %v2027, %v3844
        %v3846 = vand.u32 %v3845, 4294901760
        %3847 = vmatpush1.msra.mxu0 %v3846
        %3848 = vmatprep.subr.mxu0 0.0
        %3849 = vmatpush1.msra.mxu0 0.0
        %3850 = vmatprep.subr.mxu0 0.0
        %3851 = vmatpush1.msra.mxu0 0.0
        %3852 = vmatprep.subr.mxu0 0.0
        %3853 = vmatpush1.msra.mxu0 0.0
        %3854 = vmatprep.subr.mxu0 0.0
        %3855 = vmatpush1.msra.mxu0 0.0
        %3856 = vmatprep.subr.mxu0 0.0
        %3857 = vmatpush1.msra.mxu0 0.0
        %3858 = vmatprep.subr.mxu0 0.0
        %3859 = vmatpush1.msra.mxu0 0.0
        %3860 = vmatprep.subr.mxu0 0.0
        %3861 = vmatpush1.msra.mxu0 0.0
        %3862 = vmatprep.subr.mxu0 0.0
        %3863 = vmatpush1.msra.mxu0 0.0
        %3864 = vmatprep.subr.mxu0 0.0
        %3865 = vmatpush1.msra.mxu0 0.0
        %3866 = vmatprep.subr.mxu0 0.0
        %3867 = vmatpush1.msra.mxu0 0.0
        %3868 = vmatprep.subr.mxu0 0.0
        %3869 = vmatpush1.msra.mxu0 0.0
        %3870 = vmatprep.subr.mxu0 0.0
        %3871 = vmatpush1.msra.mxu0 0.0
        %3872 = vmatprep.subr.mxu0 0.0
        %3873 = vmatpush1.msra.mxu0 0.0
        %3874 = vmatprep.subr.mxu0 0.0
        %3875 = vmatpush1.msra.mxu0 0.0
        %3876 = vmatprep.subr.mxu0 0.0
        %3877 = vmatpush1.msra.mxu0 0.0
        %3878 = vmatprep.subr.mxu0 0.0
        %3879 = vmatpush1.msra.mxu0 0.0
        %3880 = vmatprep.subr.mxu0 0.0
        %3881 = vmatpush1.msra.mxu0 0.0
        %3882 = vmatprep.subr.mxu0 0.0
        %3883 = vmatpush1.msra.mxu0 0.0
        %3884 = vmatprep.subr.mxu0 0.0
        %3885 = vmatpush1.msra.mxu0 0.0
        %3886 = vmatprep.subr.mxu0 0.0
        %3887 = vmatpush1.msra.mxu0 0.0
        %3888 = vmatprep.subr.mxu0 0.0
        %3889 = vmatpush1.msra.mxu0 0.0
        %3890 = vmatprep.subr.mxu0 0.0
        %3891 = vmatpush1.msra.mxu0 0.0
        %3892 = vmatprep.subr.mxu0 0.0
        %3893 = vmatpush1.msra.mxu0 0.0
        %3894 = vmatprep.subr.mxu0 0.0
        %3895 = vmatpush1.msra.mxu0 0.0
        %3896 = vmatprep.mubr.f32.mxu0 0.0
        %v3897 = vand.u32 %v2087, 4294901760
        %3898 = vmatmul.mubr.f32.gmra.mrb[0].mxu0 %v3897
        %v3899 = vpop.f32.mrb[0].mxu0
        %v3900 = vadd.f32 %v3717, %v3899
        %v3901 = vpop.f32.mrb[0].mxu0
        %v3902 = vadd.f32 %v3719, %v3901
        %3903 = vmatprep.mubr.f32.mxu0 0.0
        %v3904 = vand.u32 %v2090, 4294901760
        %3905 = vmatmul.mubr.f32.gmra.mrb[0].mxu0 %v3904
        %v3906 = vpop.f32.mrb[0].mxu0
        %v3907 = vadd.f32 %v3726, %v3906
        %v3908 = vpop.f32.mrb[0].mxu0
        %v3909 = vadd.f32 %v3728, %v3908
        %3910 = vmatprep.mubr.f32.mxu0 0.0
        %v3911 = vand.u32 %v2093, 4294901760
        %3912 = vmatmul.mubr.f32.gmra.mrb[0].mxu0 %v3911
        %v3913 = vpop.f32.mrb[0].mxu0
        %v3914 = vadd.f32 %v3735, %v3913
        %v3915 = vpop.f32.mrb[0].mxu0
        %v3916 = vadd.f32 %v3737, %v3915
        %3917 = vmatprep.mubr.f32.mxu0 0.0
        %v3918 = vand.u32 %v2096, 4294901760
        %3919 = vmatmul.mubr.f32.gmra.mrb[0].mxu0 %v3918
        %v3920 = vpop.f32.mrb[0].mxu0
        %v3921 = vadd.f32 %v3744, %v3920
        %v3922 = vpop.f32.mrb[0].mxu0
        %v3923 = vadd.f32 %v3746, %v3922
        %3924 = vmatprep.mubr.f32.mxu0 0.0
        %v3925 = vand.u32 %v2099, 4294901760
        %3926 = vmatmul.mubr.f32.gmra.mrb[0].mxu0 %v3925
        %v3927 = vpop.f32.mrb[0].mxu0
        %v3928 = vadd.f32 %v3753, %v3927
        %v3929 = vpop.f32.mrb[0].mxu0
        %v3930 = vadd.f32 %v3755, %v3929
        %3931 = vmatprep.mubr.f32.mxu0 0.0
        %v3932 = vand.u32 %v2102, 4294901760
        %3933 = vmatmul.mubr.f32.gmra.mrb[0].mxu0 %v3932
        %v3934 = vpop.f32.mrb[0].mxu0
        %v3935 = vadd.f32 %v3762, %v3934
        %v3936 = vpop.f32.mrb[0].mxu0
        %v3937 = vadd.f32 %v3764, %v3936
        %3938 = vmatprep.mubr.f32.mxu0 0.0
        %v3939 = vand.u32 %v2105, 4294901760
        %3940 = vmatmul.mubr.f32.gmra.mrb[0].mxu0 %v3939
        %v3941 = vpop.f32.mrb[0].mxu0
        %v3942 = vadd.f32 %v3771, %v3941
        %v3943 = vpop.f32.mrb[0].mxu0
        %v3944 = vadd.f32 %v3773, %v3943
        %3945 = vmatprep.mubr.f32.mxu0 0.0
        %v3946 = vand.u32 %v2108, 4294901760
        %3947 = vmatmul.mubr.f32.gmra.mrb[0].mxu0 %v3946
        %v3948 = vpop.f32.mrb[0].mxu0
        %v3949 = vadd.f32 %v3780, %v3948
        %v3950 = vpop.f32.mrb[0].mxu0
        %v3951 = vadd.f32 %v3782, %v3950
        %3952 = vdwg.mxu0
        %v3953 = vand.u32 %v2000, 4294901760
        %3954 = vmatprep.subr.mxu0 %v3953
        %v3955 = vand.u32 %v1999, 4294901760
        %3956 = vmatpush1.msra.mxu0 %v3955
        %v3957 = vand.u32 %v2004, 4294901760
        %3958 = vmatprep.subr.mxu0 %v3957
        %v3959 = vand.u32 %v2003, 4294901760
        %3960 = vmatpush1.msra.mxu0 %v3959
        %v3961 = vand.u32 %v2008, 4294901760
        %3962 = vmatprep.subr.mxu0 %v3961
        %v3963 = vand.u32 %v2007, 4294901760
        %3964 = vmatpush1.msra.mxu0 %v3963
        %v3965 = vand.u32 %v2012, 4294901760
        %3966 = vmatprep.subr.mxu0 %v3965
        %v3967 = vand.u32 %v2011, 4294901760
        %3968 = vmatpush1.msra.mxu0 %v3967
        %v3969 = vand.u32 %v2016, 4294901760
        %3970 = vmatprep.subr.mxu0 %v3969
        %v3971 = vand.u32 %v2015, 4294901760
        %3972 = vmatpush1.msra.mxu0 %v3971
        %v3973 = vand.u32 %v2020, 4294901760
        %3974 = vmatprep.subr.mxu0 %v3973
        %v3975 = vand.u32 %v2019, 4294901760
        %3976 = vmatpush1.msra.mxu0 %v3975
        %v3977 = vand.u32 %v2024, 4294901760
        %3978 = vmatprep.subr.mxu0 %v3977
        %v3979 = vand.u32 %v2023, 4294901760
        %3980 = vmatpush1.msra.mxu0 %v3979
        %v3981 = vand.u32 %v2028, 4294901760
        %3982 = vmatprep.subr.mxu0 %v3981
        %v3983 = vand.u32 %v2027, 4294901760
        %3984 = vmatpush1.msra.mxu0 %v3983
        %3985 = vmatprep.subr.mxu0 0.0
        %3986 = vmatpush1.msra.mxu0 0.0
        %3987 = vmatprep.subr.mxu0 0.0
        %3988 = vmatpush1.msra.mxu0 0.0
        %3989 = vmatprep.subr.mxu0 0.0
        %3990 = vmatpush1.msra.mxu0 0.0
        %3991 = vmatprep.subr.mxu0 0.0
        %3992 = vmatpush1.msra.mxu0 0.0
        %3993 = vmatprep.subr.mxu0 0.0
        %3994 = vmatpush1.msra.mxu0 0.0
        %3995 = vmatprep.subr.mxu0 0.0
        %3996 = vmatpush1.msra.mxu0 0.0
        %3997 = vmatprep.subr.mxu0 0.0
        %3998 = vmatpush1.msra.mxu0 0.0
        %3999 = vmatprep.subr.mxu0 0.0
        %4000 = vmatpush1.msra.mxu0 0.0
        %4001 = vmatprep.subr.mxu0 0.0
        %4002 = vmatpush1.msra.mxu0 0.0
        %4003 = vmatprep.subr.mxu0 0.0
        %4004 = vmatpush1.msra.mxu0 0.0
        %4005 = vmatprep.subr.mxu0 0.0
        %4006 = vmatpush1.msra.mxu0 0.0
        %4007 = vmatprep.subr.mxu0 0.0
        %4008 = vmatpush1.msra.mxu0 0.0
        %4009 = vmatprep.subr.mxu0 0.0
        %4010 = vmatpush1.msra.mxu0 0.0
        %4011 = vmatprep.subr.mxu0 0.0
        %4012 = vmatpush1.msra.mxu0 0.0
        %4013 = vmatprep.subr.mxu0 0.0
        %4014 = vmatpush1.msra.mxu0 0.0
        %4015 = vmatprep.subr.mxu0 0.0
        %4016 = vmatpush1.msra.mxu0 0.0
        %4017 = vmatprep.subr.mxu0 0.0
        %4018 = vmatpush1.msra.mxu0 0.0
        %4019 = vmatprep.subr.mxu0 0.0
        %4020 = vmatpush1.msra.mxu0 0.0
        %4021 = vmatprep.subr.mxu0 0.0
        %4022 = vmatpush1.msra.mxu0 0.0
        %4023 = vmatprep.subr.mxu0 0.0
        %4024 = vmatpush1.msra.mxu0 0.0
        %4025 = vmatprep.subr.mxu0 0.0
        %4026 = vmatpush1.msra.mxu0 0.0
        %4027 = vmatprep.subr.mxu0 0.0
        %4028 = vmatpush1.msra.mxu0 0.0
        %4029 = vmatprep.subr.mxu0 0.0
        %4030 = vmatpush1.msra.mxu0 0.0
        %4031 = vmatprep.subr.mxu0 0.0
        %4032 = vmatpush1.msra.mxu0 0.0
        %4033 = vmatprep.mubr.f32.mxu0 0.0
        %v4034 = vand.u32 %v2087, 4294901760
        %4035 = vmatmul.mubr.f32.gmra.mrb[0].mxu0 %v4034
        %v4036 = vpop.f32.mrb[0].mxu0
        %v4037 = vadd.f32 %v3900, %v4036
        %v4038 = vpop.f32.mrb[0].mxu0
        %v4039 = vadd.f32 %v3902, %v4038
        %4040 = vmatprep.mubr.f32.mxu0 0.0
        %v4041 = vand.u32 %v2090, 4294901760
        %4042 = vmatmul.mubr.f32.gmra.mrb[0].mxu0 %v4041
        %v4043 = vpop.f32.mrb[0].mxu0
        %v4044 = vadd.f32 %v3907, %v4043
        %v4045 = vpop.f32.mrb[0].mxu0
        %v4046 = vadd.f32 %v3909, %v4045
        %4047 = vmatprep.mubr.f32.mxu0 0.0
        %v4048 = vand.u32 %v2093, 4294901760
        %4049 = vmatmul.mubr.f32.gmra.mrb[0].mxu0 %v4048
        %v4050 = vpop.f32.mrb[0].mxu0
        %v4051 = vadd.f32 %v3914, %v4050
        %v4052 = vpop.f32.mrb[0].mxu0
        %v4053 = vadd.f32 %v3916, %v4052
        %4054 = vmatprep.mubr.f32.mxu0 0.0
        %v4055 = vand.u32 %v2096, 4294901760
        %4056 = vmatmul.mubr.f32.gmra.mrb[0].mxu0 %v4055
        %v4057 = vpop.f32.mrb[0].mxu0
        %v4058 = vadd.f32 %v3921, %v4057
        %v4059 = vpop.f32.mrb[0].mxu0
        %v4060 = vadd.f32 %v3923, %v4059
        %4061 = vmatprep.mubr.f32.mxu0 0.0
        %v4062 = vand.u32 %v2099, 4294901760
        %4063 = vmatmul.mubr.f32.gmra.mrb[0].mxu0 %v4062
        %v4064 = vpop.f32.mrb[0].mxu0
        %v4065 = vadd.f32 %v3928, %v4064
        %v4066 = vpop.f32.mrb[0].mxu0
        %v4067 = vadd.f32 %v3930, %v4066
        %4068 = vmatprep.mubr.f32.mxu0 0.0
        %v4069 = vand.u32 %v2102, 4294901760
        %4070 = vmatmul.mubr.f32.gmra.mrb[0].mxu0 %v4069
        %v4071 = vpop.f32.mrb[0].mxu0
        %v4072 = vadd.f32 %v3935, %v4071
        %v4073 = vpop.f32.mrb[0].mxu0
        %v4074 = vadd.f32 %v3937, %v4073
        %4075 = vmatprep.mubr.f32.mxu0 0.0
        %v4076 = vand.u32 %v2105, 4294901760
        %4077 = vmatmul.mubr.f32.gmra.mrb[0].mxu0 %v4076
        %v4078 = vpop.f32.mrb[0].mxu0
        %v4079 = vadd.f32 %v3942, %v4078
        %v4080 = vpop.f32.mrb[0].mxu0
        %v4081 = vadd.f32 %v3944, %v4080
        %4082 = vmatprep.mubr.f32.mxu0 0.0
        %v4083 = vand.u32 %v2108, 4294901760
        %4084 = vmatmul.mubr.f32.gmra.mrb[0].mxu0 %v4083
        %v4085 = vpop.f32.mrb[0].mxu0
        %v4086 = vadd.f32 %v3949, %v4085
        %v4087 = vpop.f32.mrb[0].mxu0
        %v4088 = vadd.f32 %v3951, %v4087
        %4089 = vdwg.mxu0
        %v4090 = vtanh.pop %v3047
        %v4091 = vtanh.pop %v3049
        %v4092 = vtanh.pop %v4037
        %v4093 = vtanh.pop %v4039
        %v4094 = vtanh.pop %v3054
        %v4095 = vtanh.pop %v3056
        %v4096 = vtanh.pop %v4044
        %v4097 = vtanh.pop %v4046
        %v4098 = vtanh.pop %v3061
        %v4099 = vtanh.pop %v3063
        %v4100 = vtanh.pop %v4051
        %v4101 = vtanh.pop %v4053
        %v4102 = vtanh.pop %v3068
        %v4103 = vtanh.pop %v3070
        %v4104 = vtanh.pop %v4058
        %v4105 = vtanh.pop %v4060
        %v4106 = vtanh.pop %v3075
        %v4107 = vtanh.pop %v3077
        %v4108 = vtanh.pop %v4065
        %v4109 = vtanh.pop %v4067
        %v4110 = vtanh.pop %v3082
        %v4111 = vtanh.pop %v3084
        %v4112 = vtanh.pop %v4072
        %v4113 = vtanh.pop %v4074
        %v4114 = vtanh.pop %v3089
        %v4115 = vtanh.pop %v3091
        %v4116 = vtanh.pop %v4079
        %v4117 = vtanh.pop %v4081
        %v4118 = vtanh.pop %v3096
        %v4119 = vtanh.pop %v3098
        %v4120 = vtanh.pop %v4086
        %v4121 = vtanh.pop %v4088
        %v4122 = vand.u32 %v4091, 4294901760
        %4123 = vmatprep.subr.mxu0 %v4122
        %v4124 = vand.u32 %v4090, 4294901760
        %4125 = vmatpush1.msra.mxu0 %v4124
        %v4126 = vand.u32 %v4095, 4294901760
        %4127 = vmatprep.subr.mxu0 %v4126
        %v4128 = vand.u32 %v4094, 4294901760
        %4129 = vmatpush1.msra.mxu0 %v4128
        %v4130 = vand.u32 %v4099, 4294901760
        %4131 = vmatprep.subr.mxu0 %v4130
        %v4132 = vand.u32 %v4098, 4294901760
        %4133 = vmatpush1.msra.mxu0 %v4132
        %v4134 = vand.u32 %v4103, 4294901760
        %4135 = vmatprep.subr.mxu0 %v4134
        %v4136 = vand.u32 %v4102, 4294901760
        %4137 = vmatpush1.msra.mxu0 %v4136
        %v4138 = vand.u32 %v4107, 4294901760
        %4139 = vmatprep.subr.mxu0 %v4138
        %v4140 = vand.u32 %v4106, 4294901760
        %4141 = vmatpush1.msra.mxu0 %v4140
        %v4142 = vand.u32 %v4111, 4294901760
        %4143 = vmatprep.subr.mxu0 %v4142
        %v4144 = vand.u32 %v4110, 4294901760
        %4145 = vmatpush1.msra.mxu0 %v4144
        %v4146 = vand.u32 %v4115, 4294901760
        %4147 = vmatprep.subr.mxu0 %v4146
        %v4148 = vand.u32 %v4114, 4294901760
        %4149 = vmatpush1.msra.mxu0 %v4148
        %v4150 = vand.u32 %v4119, 4294901760
        %4151 = vmatprep.subr.mxu0 %v4150
        %v4152 = vand.u32 %v4118, 4294901760
        %4153 = vmatpush1.msra.mxu0 %v4152
        %4154 = vmatprep.subr.mxu0 0.0
        %4155 = vmatpush1.msra.mxu0 0.0
        %4156 = vmatprep.subr.mxu0 0.0
        %4157 = vmatpush1.msra.mxu0 0.0
        %4158 = vmatprep.subr.mxu0 0.0
        %4159 = vmatpush1.msra.mxu0 0.0
        %4160 = vmatprep.subr.mxu0 0.0
        %4161 = vmatpush1.msra.mxu0 0.0
        %4162 = vmatprep.subr.mxu0 0.0
        %4163 = vmatpush1.msra.mxu0 0.0
        %4164 = vmatprep.subr.mxu0 0.0
        %4165 = vmatpush1.msra.mxu0 0.0
        %4166 = vmatprep.subr.mxu0 0.0
        %4167 = vmatpush1.msra.mxu0 0.0
        %4168 = vmatprep.subr.mxu0 0.0
        %4169 = vmatpush1.msra.mxu0 0.0
        %4170 = vmatprep.subr.mxu0 0.0
        %4171 = vmatpush1.msra.mxu0 0.0
        %4172 = vmatprep.subr.mxu0 0.0
        %4173 = vmatpush1.msra.mxu0 0.0
        %4174 = vmatprep.subr.mxu0 0.0
        %4175 = vmatpush1.msra.mxu0 0.0
        %4176 = vmatprep.subr.mxu0 0.0
        %4177 = vmatpush1.msra.mxu0 0.0
        %4178 = vmatprep.subr.mxu0 0.0
        %4179 = vmatpush1.msra.mxu0 0.0
        %4180 = vmatprep.subr.mxu0 0.0
        %4181 = vmatpush1.msra.mxu0 0.0
        %4182 = vmatprep.subr.mxu0 0.0
        %4183 = vmatpush1.msra.mxu0 0.0
        %4184 = vmatprep.subr.mxu0 0.0
        %4185 = vmatpush1.msra.mxu0 0.0
        %4186 = vmatprep.subr.mxu0 0.0
        %4187 = vmatpush1.msra.mxu0 0.0
        %4188 = vmatprep.subr.mxu0 0.0
        %4189 = vmatpush1.msra.mxu0 0.0
        %4190 = vmatprep.subr.mxu0 0.0
        %4191 = vmatpush1.msra.mxu0 0.0
        %4192 = vmatprep.subr.mxu0 0.0
        %4193 = vmatpush1.msra.mxu0 0.0
        %4194 = vmatprep.subr.mxu0 0.0
        %4195 = vmatpush1.msra.mxu0 0.0
        %4196 = vmatprep.subr.mxu0 0.0
        %4197 = vmatpush1.msra.mxu0 0.0
        %4198 = vmatprep.subr.mxu0 0.0
        %4199 = vmatpush1.msra.mxu0 0.0
        %4200 = vmatprep.subr.mxu0 0.0
        %4201 = vmatpush1.msra.mxu0 0.0
        %4202 = vmatprep.mubr.f32.mxu0 0.0
        %v4203 = vand.u32 %v2087, 4294901760
        %v4204 = vsub.f32 %v2087, %v4203
        %v4205 = vand.u32 %v4204, 4294901760
        %v4206 = vsub.f32 %v4204, %v4205
        %v4207 = vand.u32 %v4206, 4294901760
        %4208 = vmatmul.mubr.f32.gmra.mrb[0].mxu0 %v4207
        %v4209 = vpop.f32.mrb[0].mxu0
        %v4210 = vadd.f32 %v2048, %v4209
        %v4211 = vpop.f32.mrb[0].mxu0
        %v4212 = vadd.f32 %v2048, %v4211
        %4213 = vmatprep.mubr.f32.mxu0 0.0
        %v4214 = vand.u32 %v2090, 4294901760
        %v4215 = vsub.f32 %v2090, %v4214
        %v4216 = vand.u32 %v4215, 4294901760
        %v4217 = vsub.f32 %v4215, %v4216
        %v4218 = vand.u32 %v4217, 4294901760
        %4219 = vmatmul.mubr.f32.gmra.mrb[0].mxu0 %v4218
        %v4220 = vpop.f32.mrb[0].mxu0
        %v4221 = vadd.f32 %v2053, %v4220
        %v4222 = vpop.f32.mrb[0].mxu0
        %v4223 = vadd.f32 %v2053, %v4222
        %4224 = vmatprep.mubr.f32.mxu0 0.0
        %v4225 = vand.u32 %v2093, 4294901760
        %v4226 = vsub.f32 %v2093, %v4225
        %v4227 = vand.u32 %v4226, 4294901760
        %v4228 = vsub.f32 %v4226, %v4227
        %v4229 = vand.u32 %v4228, 4294901760
        %4230 = vmatmul.mubr.f32.gmra.mrb[0].mxu0 %v4229
        %v4231 = vpop.f32.mrb[0].mxu0
        %v4232 = vadd.f32 %v2058, %v4231
        %v4233 = vpop.f32.mrb[0].mxu0
        %v4234 = vadd.f32 %v2058, %v4233
        %4235 = vmatprep.mubr.f32.mxu0 0.0
        %v4236 = vand.u32 %v2096, 4294901760
        %v4237 = vsub.f32 %v2096, %v4236
        %v4238 = vand.u32 %v4237, 4294901760
        %v4239 = vsub.f32 %v4237, %v4238
        %v4240 = vand.u32 %v4239, 4294901760
        %4241 = vmatmul.mubr.f32.gmra.mrb[0].mxu0 %v4240
        %v4242 = vpop.f32.mrb[0].mxu0
        %v4243 = vadd.f32 %v2063, %v4242
        %v4244 = vpop.f32.mrb[0].mxu0
        %v4245 = vadd.f32 %v2063, %v4244
        %4246 = vmatprep.mubr.f32.mxu0 0.0
        %v4247 = vand.u32 %v2099, 4294901760
        %v4248 = vsub.f32 %v2099, %v4247
        %v4249 = vand.u32 %v4248, 4294901760
        %v4250 = vsub.f32 %v4248, %v4249
        %v4251 = vand.u32 %v4250, 4294901760
        %4252 = vmatmul.mubr.f32.gmra.mrb[0].mxu0 %v4251
        %v4253 = vpop.f32.mrb[0].mxu0
        %v4254 = vadd.f32 %v2068, %v4253
        %v4255 = vpop.f32.mrb[0].mxu0
        %v4256 = vadd.f32 %v2068, %v4255
        %4257 = vmatprep.mubr.f32.mxu0 0.0
        %v4258 = vand.u32 %v2102, 4294901760
        %v4259 = vsub.f32 %v2102, %v4258
        %v4260 = vand.u32 %v4259, 4294901760
        %v4261 = vsub.f32 %v4259, %v4260
        %v4262 = vand.u32 %v4261, 4294901760
        %4263 = vmatmul.mubr.f32.gmra.mrb[0].mxu0 %v4262
        %v4264 = vpop.f32.mrb[0].mxu0
        %v4265 = vadd.f32 %v2073, %v4264
        %v4266 = vpop.f32.mrb[0].mxu0
        %v4267 = vadd.f32 %v2073, %v4266
        %4268 = vmatprep.mubr.f32.mxu0 0.0
        %v4269 = vand.u32 %v2105, 4294901760
        %v4270 = vsub.f32 %v2105, %v4269
        %v4271 = vand.u32 %v4270, 4294901760
        %v4272 = vsub.f32 %v4270, %v4271
        %v4273 = vand.u32 %v4272, 4294901760
        %4274 = vmatmul.mubr.f32.gmra.mrb[0].mxu0 %v4273
        %v4275 = vpop.f32.mrb[0].mxu0
        %v4276 = vadd.f32 %v2078, %v4275
        %v4277 = vpop.f32.mrb[0].mxu0
        %v4278 = vadd.f32 %v2078, %v4277
        %4279 = vmatprep.mubr.f32.mxu0 0.0
        %v4280 = vand.u32 %v2108, 4294901760
        %v4281 = vsub.f32 %v2108, %v4280
        %v4282 = vand.u32 %v4281, 4294901760
        %v4283 = vsub.f32 %v4281, %v4282
        %v4284 = vand.u32 %v4283, 4294901760
        %4285 = vmatmul.mubr.f32.gmra.mrb[0].mxu0 %v4284
        %v4286 = vpop.f32.mrb[0].mxu0
        %v4287 = vadd.f32 %v2083, %v4286
        %v4288 = vpop.f32.mrb[0].mxu0
        %v4289 = vadd.f32 %v2083, %v4288
        %4290 = vdwg.mxu0
        %v4291 = vand.u32 %v4091, 4294901760
        %v4292 = vsub.f32 %v4091, %v4291
        %v4293 = vand.u32 %v4292, 4294901760
        %v4294 = vsub.f32 %v4292, %v4293
        %v4295 = vand.u32 %v4294, 4294901760
        %4296 = vmatprep.subr.mxu0 %v4295
        %v4297 = vand.u32 %v4090, 4294901760
        %v4298 = vsub.f32 %v4090, %v4297
        %v4299 = vand.u32 %v4298, 4294901760
        %v4300 = vsub.f32 %v4298, %v4299
        %v4301 = vand.u32 %v4300, 4294901760
        %4302 = vmatpush1.msra.mxu0 %v4301
        %v4303 = vand.u32 %v4095, 4294901760
        %v4304 = vsub.f32 %v4095, %v4303
        %v4305 = vand.u32 %v4304, 4294901760
        %v4306 = vsub.f32 %v4304, %v4305
        %v4307 = vand.u32 %v4306, 4294901760
        %4308 = vmatprep.subr.mxu0 %v4307
        %v4309 = vand.u32 %v4094, 4294901760
        %v4310 = vsub.f32 %v4094, %v4309
        %v4311 = vand.u32 %v4310, 4294901760
        %v4312 = vsub.f32 %v4310, %v4311
        %v4313 = vand.u32 %v4312, 4294901760
        %4314 = vmatpush1.msra.mxu0 %v4313
        %v4315 = vand.u32 %v4099, 4294901760
        %v4316 = vsub.f32 %v4099, %v4315
        %v4317 = vand.u32 %v4316, 4294901760
        %v4318 = vsub.f32 %v4316, %v4317
        %v4319 = vand.u32 %v4318, 4294901760
        %4320 = vmatprep.subr.mxu0 %v4319
        %v4321 = vand.u32 %v4098, 4294901760
        %v4322 = vsub.f32 %v4098, %v4321
        %v4323 = vand.u32 %v4322, 4294901760
        %v4324 = vsub.f32 %v4322, %v4323
        %v4325 = vand.u32 %v4324, 4294901760
        %4326 = vmatpush1.msra.mxu0 %v4325
        %v4327 = vand.u32 %v4103, 4294901760
        %v4328 = vsub.f32 %v4103, %v4327
        %v4329 = vand.u32 %v4328, 4294901760
        %v4330 = vsub.f32 %v4328, %v4329
        %v4331 = vand.u32 %v4330, 4294901760
        %4332 = vmatprep.subr.mxu0 %v4331
        %v4333 = vand.u32 %v4102, 4294901760
        %v4334 = vsub.f32 %v4102, %v4333
        %v4335 = vand.u32 %v4334, 4294901760
        %v4336 = vsub.f32 %v4334, %v4335
        %v4337 = vand.u32 %v4336, 4294901760
        %4338 = vmatpush1.msra.mxu0 %v4337
        %v4339 = vand.u32 %v4107, 4294901760
        %v4340 = vsub.f32 %v4107, %v4339
        %v4341 = vand.u32 %v4340, 4294901760
        %v4342 = vsub.f32 %v4340, %v4341
        %v4343 = vand.u32 %v4342, 4294901760
        %4344 = vmatprep.subr.mxu0 %v4343
        %v4345 = vand.u32 %v4106, 4294901760
        %v4346 = vsub.f32 %v4106, %v4345
        %v4347 = vand.u32 %v4346, 4294901760
        %v4348 = vsub.f32 %v4346, %v4347
        %v4349 = vand.u32 %v4348, 4294901760
        %4350 = vmatpush1.msra.mxu0 %v4349
        %v4351 = vand.u32 %v4111, 4294901760
        %v4352 = vsub.f32 %v4111, %v4351
        %v4353 = vand.u32 %v4352, 4294901760
        %v4354 = vsub.f32 %v4352, %v4353
        %v4355 = vand.u32 %v4354, 4294901760
        %4356 = vmatprep.subr.mxu0 %v4355
        %v4357 = vand.u32 %v4110, 4294901760
        %v4358 = vsub.f32 %v4110, %v4357
        %v4359 = vand.u32 %v4358, 4294901760
        %v4360 = vsub.f32 %v4358, %v4359
        %v4361 = vand.u32 %v4360, 4294901760
        %4362 = vmatpush1.msra.mxu0 %v4361
        %v4363 = vand.u32 %v4115, 4294901760
        %v4364 = vsub.f32 %v4115, %v4363
        %v4365 = vand.u32 %v4364, 4294901760
        %v4366 = vsub.f32 %v4364, %v4365
        %v4367 = vand.u32 %v4366, 4294901760
        %4368 = vmatprep.subr.mxu0 %v4367
        %v4369 = vand.u32 %v4114, 4294901760
        %v4370 = vsub.f32 %v4114, %v4369
        %v4371 = vand.u32 %v4370, 4294901760
        %v4372 = vsub.f32 %v4370, %v4371
        %v4373 = vand.u32 %v4372, 4294901760
        %4374 = vmatpush1.msra.mxu0 %v4373
        %v4375 = vand.u32 %v4119, 4294901760
        %v4376 = vsub.f32 %v4119, %v4375
        %v4377 = vand.u32 %v4376, 4294901760
        %v4378 = vsub.f32 %v4376, %v4377
        %v4379 = vand.u32 %v4378, 4294901760
        %4380 = vmatprep.subr.mxu0 %v4379
        %v4381 = vand.u32 %v4118, 4294901760
        %v4382 = vsub.f32 %v4118, %v4381
        %v4383 = vand.u32 %v4382, 4294901760
        %v4384 = vsub.f32 %v4382, %v4383
        %v4385 = vand.u32 %v4384, 4294901760
        %4386 = vmatpush1.msra.mxu0 %v4385
        %4387 = vmatprep.subr.mxu0 0.0
        %4388 = vmatpush1.msra.mxu0 0.0
        %4389 = vmatprep.subr.mxu0 0.0
        %4390 = vmatpush1.msra.mxu0 0.0
        %4391 = vmatprep.subr.mxu0 0.0
        %4392 = vmatpush1.msra.mxu0 0.0
        %4393 = vmatprep.subr.mxu0 0.0
        %4394 = vmatpush1.msra.mxu0 0.0
        %4395 = vmatprep.subr.mxu0 0.0
        %4396 = vmatpush1.msra.mxu0 0.0
        %4397 = vmatprep.subr.mxu0 0.0
        %4398 = vmatpush1.msra.mxu0 0.0
        %4399 = vmatprep.subr.mxu0 0.0
        %4400 = vmatpush1.msra.mxu0 0.0
        %4401 = vmatprep.subr.mxu0 0.0
        %4402 = vmatpush1.msra.mxu0 0.0
        %4403 = vmatprep.subr.mxu0 0.0
        %4404 = vmatpush1.msra.mxu0 0.0
        %4405 = vmatprep.subr.mxu0 0.0
        %4406 = vmatpush1.msra.mxu0 0.0
        %4407 = vmatprep.subr.mxu0 0.0
        %4408 = vmatpush1.msra.mxu0 0.0
        %4409 = vmatprep.subr.mxu0 0.0
        %4410 = vmatpush1.msra.mxu0 0.0
        %4411 = vmatprep.subr.mxu0 0.0
        %4412 = vmatpush1.msra.mxu0 0.0
        %4413 = vmatprep.subr.mxu0 0.0
        %4414 = vmatpush1.msra.mxu0 0.0
        %4415 = vmatprep.subr.mxu0 0.0
        %4416 = vmatpush1.msra.mxu0 0.0
        %4417 = vmatprep.subr.mxu0 0.0
        %4418 = vmatpush1.msra.mxu0 0.0
        %4419 = vmatprep.subr.mxu0 0.0
        %4420 = vmatpush1.msra.mxu0 0.0
        %4421 = vmatprep.subr.mxu0 0.0
        %4422 = vmatpush1.msra.mxu0 0.0
        %4423 = vmatprep.subr.mxu0 0.0
        %4424 = vmatpush1.msra.mxu0 0.0
        %4425 = vmatprep.subr.mxu0 0.0
        %4426 = vmatpush1.msra.mxu0 0.0
        %4427 = vmatprep.subr.mxu0 0.0
        %4428 = vmatpush1.msra.mxu0 0.0
        %4429 = vmatprep.subr.mxu0 0.0
        %4430 = vmatpush1.msra.mxu0 0.0
        %4431 = vmatprep.subr.mxu0 0.0
        %4432 = vmatpush1.msra.mxu0 0.0
        %4433 = vmatprep.subr.mxu0 0.0
        %4434 = vmatpush1.msra.mxu0 0.0
        %4435 = vmatprep.mubr.f32.mxu0 0.0
        %v4436 = vand.u32 %v2087, 4294901760
        %4437 = vmatmul.mubr.f32.gmra.mrb[0].mxu0 %v4436
        %v4438 = vpop.f32.mrb[0].mxu0
        %v4439 = vadd.f32 %v4210, %v4438
        %v4440 = vpop.f32.mrb[0].mxu0
        %v4441 = vadd.f32 %v4212, %v4440
        %4442 = vmatprep.mubr.f32.mxu0 0.0
        %v4443 = vand.u32 %v2090, 4294901760
        %4444 = vmatmul.mubr.f32.gmra.mrb[0].mxu0 %v4443
        %v4445 = vpop.f32.mrb[0].mxu0
        %v4446 = vadd.f32 %v4221, %v4445
        %v4447 = vpop.f32.mrb[0].mxu0
        %v4448 = vadd.f32 %v4223, %v4447
        %4449 = vmatprep.mubr.f32.mxu0 0.0
        %v4450 = vand.u32 %v2093, 4294901760
        %4451 = vmatmul.mubr.f32.gmra.mrb[0].mxu0 %v4450
        %v4452 = vpop.f32.mrb[0].mxu0
        %v4453 = vadd.f32 %v4232, %v4452
        %v4454 = vpop.f32.mrb[0].mxu0
        %v4455 = vadd.f32 %v4234, %v4454
        %4456 = vmatprep.mubr.f32.mxu0 0.0
        %v4457 = vand.u32 %v2096, 4294901760
        %4458 = vmatmul.mubr.f32.gmra.mrb[0].mxu0 %v4457
        %v4459 = vpop.f32.mrb[0].mxu0
        %v4460 = vadd.f32 %v4243, %v4459
        %v4461 = vpop.f32.mrb[0].mxu0
        %v4462 = vadd.f32 %v4245, %v4461
        %4463 = vmatprep.mubr.f32.mxu0 0.0
        %v4464 = vand.u32 %v2099, 4294901760
        %4465 = vmatmul.mubr.f32.gmra.mrb[0].mxu0 %v4464
        %v4466 = vpop.f32.mrb[0].mxu0
        %v4467 = vadd.f32 %v4254, %v4466
        %v4468 = vpop.f32.mrb[0].mxu0
        %v4469 = vadd.f32 %v4256, %v4468
        %4470 = vmatprep.mubr.f32.mxu0 0.0
        %v4471 = vand.u32 %v2102, 4294901760
        %4472 = vmatmul.mubr.f32.gmra.mrb[0].mxu0 %v4471
        %v4473 = vpop.f32.mrb[0].mxu0
        %v4474 = vadd.f32 %v4265, %v4473
        %v4475 = vpop.f32.mrb[0].mxu0
        %v4476 = vadd.f32 %v4267, %v4475
        %4477 = vmatprep.mubr.f32.mxu0 0.0
        %v4478 = vand.u32 %v2105, 4294901760
        %4479 = vmatmul.mubr.f32.gmra.mrb[0].mxu0 %v4478
        %v4480 = vpop.f32.mrb[0].mxu0
        %v4481 = vadd.f32 %v4276, %v4480
        %v4482 = vpop.f32.mrb[0].mxu0
        %v4483 = vadd.f32 %v4278, %v4482
        %4484 = vmatprep.mubr.f32.mxu0 0.0
        %v4485 = vand.u32 %v2108, 4294901760
        %4486 = vmatmul.mubr.f32.gmra.mrb[0].mxu0 %v4485
        %v4487 = vpop.f32.mrb[0].mxu0
        %v4488 = vadd.f32 %v4287, %v4487
        %v4489 = vpop.f32.mrb[0].mxu0
        %v4490 = vadd.f32 %v4289, %v4489
        %4491 = vdwg.mxu0
        %v4492 = vand.u32 %v4091, 4294901760
        %v4493 = vsub.f32 %v4091, %v4492
        %4494 = vmatprep.subr.mxu0 %v4493
        %v4495 = vand.u32 %v4090, 4294901760
        %v4496 = vsub.f32 %v4090, %v4495
        %4497 = vmatpush1.msra.mxu0 %v4496
        %v4498 = vand.u32 %v4095, 4294901760
        %v4499 = vsub.f32 %v4095, %v4498
        %4500 = vmatprep.subr.mxu0 %v4499
        %v4501 = vand.u32 %v4094, 4294901760
        %v4502 = vsub.f32 %v4094, %v4501
        %4503 = vmatpush1.msra.mxu0 %v4502
        %v4504 = vand.u32 %v4099, 4294901760
        %v4505 = vsub.f32 %v4099, %v4504
        %4506 = vmatprep.subr.mxu0 %v4505
        %v4507 = vand.u32 %v4098, 4294901760
        %v4508 = vsub.f32 %v4098, %v4507
        %4509 = vmatpush1.msra.mxu0 %v4508
        %v4510 = vand.u32 %v4103, 4294901760
        %v4511 = vsub.f32 %v4103, %v4510
        %4512 = vmatprep.subr.mxu0 %v4511
        %v4513 = vand.u32 %v4102, 4294901760
        %v4514 = vsub.f32 %v4102, %v4513
        %4515 = vmatpush1.msra.mxu0 %v4514
        %v4516 = vand.u32 %v4107, 4294901760
        %v4517 = vsub.f32 %v4107, %v4516
        %4518 = vmatprep.subr.mxu0 %v4517
        %v4519 = vand.u32 %v4106, 4294901760
        %v4520 = vsub.f32 %v4106, %v4519
        %4521 = vmatpush1.msra.mxu0 %v4520
        %v4522 = vand.u32 %v4111, 4294901760
        %v4523 = vsub.f32 %v4111, %v4522
        %4524 = vmatprep.subr.mxu0 %v4523
        %v4525 = vand.u32 %v4110, 4294901760
        %v4526 = vsub.f32 %v4110, %v4525
        %4527 = vmatpush1.msra.mxu0 %v4526
        %v4528 = vand.u32 %v4115, 4294901760
        %v4529 = vsub.f32 %v4115, %v4528
        %4530 = vmatprep.subr.mxu0 %v4529
        %v4531 = vand.u32 %v4114, 4294901760
        %v4532 = vsub.f32 %v4114, %v4531
        %4533 = vmatpush1.msra.mxu0 %v4532
        %v4534 = vand.u32 %v4119, 4294901760
        %v4535 = vsub.f32 %v4119, %v4534
        %4536 = vmatprep.subr.mxu0 %v4535
        %v4537 = vand.u32 %v4118, 4294901760
        %v4538 = vsub.f32 %v4118, %v4537
        %4539 = vmatpush1.msra.mxu0 %v4538
        %4540 = vmatprep.subr.mxu0 0.0
        %4541 = vmatpush1.msra.mxu0 0.0
        %4542 = vmatprep.subr.mxu0 0.0
        %4543 = vmatpush1.msra.mxu0 0.0
        %4544 = vmatprep.subr.mxu0 0.0
        %4545 = vmatpush1.msra.mxu0 0.0
        %4546 = vmatprep.subr.mxu0 0.0
        %4547 = vmatpush1.msra.mxu0 0.0
        %4548 = vmatprep.subr.mxu0 0.0
        %4549 = vmatpush1.msra.mxu0 0.0
        %4550 = vmatprep.subr.mxu0 0.0
        %4551 = vmatpush1.msra.mxu0 0.0
        %4552 = vmatprep.subr.mxu0 0.0
        %4553 = vmatpush1.msra.mxu0 0.0
        %4554 = vmatprep.subr.mxu0 0.0
        %4555 = vmatpush1.msra.mxu0 0.0
        %4556 = vmatprep.subr.mxu0 0.0
        %4557 = vmatpush1.msra.mxu0 0.0
        %4558 = vmatprep.subr.mxu0 0.0
        %4559 = vmatpush1.msra.mxu0 0.0
        %4560 = vmatprep.subr.mxu0 0.0
        %4561 = vmatpush1.msra.mxu0 0.0
        %4562 = vmatprep.subr.mxu0 0.0
        %4563 = vmatpush1.msra.mxu0 0.0
        %4564 = vmatprep.subr.mxu0 0.0
        %4565 = vmatpush1.msra.mxu0 0.0
        %4566 = vmatprep.subr.mxu0 0.0
        %4567 = vmatpush1.msra.mxu0 0.0
        %4568 = vmatprep.subr.mxu0 0.0
        %4569 = vmatpush1.msra.mxu0 0.0
        %4570 = vmatprep.subr.mxu0 0.0
        %4571 = vmatpush1.msra.mxu0 0.0
        %4572 = vmatprep.subr.mxu0 0.0
        %4573 = vmatpush1.msra.mxu0 0.0
        %4574 = vmatprep.subr.mxu0 0.0
        %4575 = vmatpush1.msra.mxu0 0.0
        %4576 = vmatprep.subr.mxu0 0.0
        %4577 = vmatpush1.msra.mxu0 0.0
        %4578 = vmatprep.subr.mxu0 0.0
        %4579 = vmatpush1.msra.mxu0 0.0
        %4580 = vmatprep.subr.mxu0 0.0
        %4581 = vmatpush1.msra.mxu0 0.0
        %4582 = vmatprep.subr.mxu0 0.0
        %4583 = vmatpush1.msra.mxu0 0.0
        %4584 = vmatprep.subr.mxu0 0.0
        %4585 = vmatpush1.msra.mxu0 0.0
        %4586 = vmatprep.subr.mxu0 0.0
        %4587 = vmatpush1.msra.mxu0 0.0
        %4588 = vmatprep.mubr.f32.mxu0 0.0
        %v4589 = vand.u32 %v2087, 4294901760
        %v4590 = vsub.f32 %v2087, %v4589
        %4591 = vmatmul.mubr.f32.gmra.mrb[0].mxu0 %v4590
        %v4592 = vpop.f32.mrb[0].mxu0
        %v4593 = vadd.f32 %v4439, %v4592
        %v4594 = vpop.f32.mrb[0].mxu0
        %v4595 = vadd.f32 %v4441, %v4594
        %4596 = vmatprep.mubr.f32.mxu0 0.0
        %v4597 = vand.u32 %v2090, 4294901760
        %v4598 = vsub.f32 %v2090, %v4597
        %4599 = vmatmul.mubr.f32.gmra.mrb[0].mxu0 %v4598
        %v4600 = vpop.f32.mrb[0].mxu0
        %v4601 = vadd.f32 %v4446, %v4600
        %v4602 = vpop.f32.mrb[0].mxu0
        %v4603 = vadd.f32 %v4448, %v4602
        %4604 = vmatprep.mubr.f32.mxu0 0.0
        %v4605 = vand.u32 %v2093, 4294901760
        %v4606 = vsub.f32 %v2093, %v4605
        %4607 = vmatmul.mubr.f32.gmra.mrb[0].mxu0 %v4606
        %v4608 = vpop.f32.mrb[0].mxu0
        %v4609 = vadd.f32 %v4453, %v4608
        %v4610 = vpop.f32.mrb[0].mxu0
        %v4611 = vadd.f32 %v4455, %v4610
        %4612 = vmatprep.mubr.f32.mxu0 0.0
        %v4613 = vand.u32 %v2096, 4294901760
        %v4614 = vsub.f32 %v2096, %v4613
        %4615 = vmatmul.mubr.f32.gmra.mrb[0].mxu0 %v4614
        %v4616 = vpop.f32.mrb[0].mxu0
        %v4617 = vadd.f32 %v4460, %v4616
        %v4618 = vpop.f32.mrb[0].mxu0
        %v4619 = vadd.f32 %v4462, %v4618
        %4620 = vmatprep.mubr.f32.mxu0 0.0
        %v4621 = vand.u32 %v2099, 4294901760
        %v4622 = vsub.f32 %v2099, %v4621
        %4623 = vmatmul.mubr.f32.gmra.mrb[0].mxu0 %v4622
        %v4624 = vpop.f32.mrb[0].mxu0
        %v4625 = vadd.f32 %v4467, %v4624
        %v4626 = vpop.f32.mrb[0].mxu0
        %v4627 = vadd.f32 %v4469, %v4626
        %4628 = vmatprep.mubr.f32.mxu0 0.0
        %v4629 = vand.u32 %v2102, 4294901760
        %v4630 = vsub.f32 %v2102, %v4629
        %4631 = vmatmul.mubr.f32.gmra.mrb[0].mxu0 %v4630
        %v4632 = vpop.f32.mrb[0].mxu0
        %v4633 = vadd.f32 %v4474, %v4632
        %v4634 = vpop.f32.mrb[0].mxu0
        %v4635 = vadd.f32 %v4476, %v4634
        %4636 = vmatprep.mubr.f32.mxu0 0.0
        %v4637 = vand.u32 %v2105, 4294901760
        %v4638 = vsub.f32 %v2105, %v4637
        %4639 = vmatmul.mubr.f32.gmra.mrb[0].mxu0 %v4638
        %v4640 = vpop.f32.mrb[0].mxu0
        %v4641 = vadd.f32 %v4481, %v4640
        %v4642 = vpop.f32.mrb[0].mxu0
        %v4643 = vadd.f32 %v4483, %v4642
        %4644 = vmatprep.mubr.f32.mxu0 0.0
        %v4645 = vand.u32 %v2108, 4294901760
        %v4646 = vsub.f32 %v2108, %v4645
        %4647 = vmatmul.mubr.f32.gmra.mrb[0].mxu0 %v4646
        %v4648 = vpop.f32.mrb[0].mxu0
        %v4649 = vadd.f32 %v4488, %v4648
        %v4650 = vpop.f32.mrb[0].mxu0
        %v4651 = vadd.f32 %v4490, %v4650
        %4652 = vdwg.mxu0
        %v4653 = vand.u32 %v4091, 4294901760
        %4654 = vmatprep.subr.mxu0 %v4653
        %v4655 = vand.u32 %v4090, 4294901760
        %4656 = vmatpush1.msra.mxu0 %v4655
        %v4657 = vand.u32 %v4095, 4294901760
        %4658 = vmatprep.subr.mxu0 %v4657
        %v4659 = vand.u32 %v4094, 4294901760
        %4660 = vmatpush1.msra.mxu0 %v4659
        %v4661 = vand.u32 %v4099, 4294901760
        %4662 = vmatprep.subr.mxu0 %v4661
        %v4663 = vand.u32 %v4098, 4294901760
        %4664 = vmatpush1.msra.mxu0 %v4663
        %v4665 = vand.u32 %v4103, 4294901760
        %4666 = vmatprep.subr.mxu0 %v4665
        %v4667 = vand.u32 %v4102, 4294901760
        %4668 = vmatpush1.msra.mxu0 %v4667
        %v4669 = vand.u32 %v4107, 4294901760
        %4670 = vmatprep.subr.mxu0 %v4669
        %v4671 = vand.u32 %v4106, 4294901760
        %4672 = vmatpush1.msra.mxu0 %v4671
        %v4673 = vand.u32 %v4111, 4294901760
        %4674 = vmatprep.subr.mxu0 %v4673
        %v4675 = vand.u32 %v4110, 4294901760
        %4676 = vmatpush1.msra.mxu0 %v4675
        %v4677 = vand.u32 %v4115, 4294901760
        %4678 = vmatprep.subr.mxu0 %v4677
        %v4679 = vand.u32 %v4114, 4294901760
        %4680 = vmatpush1.msra.mxu0 %v4679
        %v4681 = vand.u32 %v4119, 4294901760
        %4682 = vmatprep.subr.mxu0 %v4681
        %v4683 = vand.u32 %v4118, 4294901760
        %4684 = vmatpush1.msra.mxu0 %v4683
        %4685 = vmatprep.subr.mxu0 0.0
        %4686 = vmatpush1.msra.mxu0 0.0
        %4687 = vmatprep.subr.mxu0 0.0
        %4688 = vmatpush1.msra.mxu0 0.0
        %4689 = vmatprep.subr.mxu0 0.0
        %4690 = vmatpush1.msra.mxu0 0.0
        %4691 = vmatprep.subr.mxu0 0.0
        %4692 = vmatpush1.msra.mxu0 0.0
        %4693 = vmatprep.subr.mxu0 0.0
        %4694 = vmatpush1.msra.mxu0 0.0
        %4695 = vmatprep.subr.mxu0 0.0
        %4696 = vmatpush1.msra.mxu0 0.0
        %4697 = vmatprep.subr.mxu0 0.0
        %4698 = vmatpush1.msra.mxu0 0.0
        %4699 = vmatprep.subr.mxu0 0.0
        %4700 = vmatpush1.msra.mxu0 0.0
        %4701 = vmatprep.subr.mxu0 0.0
        %4702 = vmatpush1.msra.mxu0 0.0
        %4703 = vmatprep.subr.mxu0 0.0
        %4704 = vmatpush1.msra.mxu0 0.0
        %4705 = vmatprep.subr.mxu0 0.0
        %4706 = vmatpush1.msra.mxu0 0.0
        %4707 = vmatprep.subr.mxu0 0.0
        %4708 = vmatpush1.msra.mxu0 0.0
        %4709 = vmatprep.subr.mxu0 0.0
        %4710 = vmatpush1.msra.mxu0 0.0
        %4711 = vmatprep.subr.mxu0 0.0
        %4712 = vmatpush1.msra.mxu0 0.0
        %4713 = vmatprep.subr.mxu0 0.0
        %4714 = vmatpush1.msra.mxu0 0.0
        %4715 = vmatprep.subr.mxu0 0.0
        %4716 = vmatpush1.msra.mxu0 0.0
        %4717 = vmatprep.subr.mxu0 0.0
        %4718 = vmatpush1.msra.mxu0 0.0
        %4719 = vmatprep.subr.mxu0 0.0
        %4720 = vmatpush1.msra.mxu0 0.0
        %4721 = vmatprep.subr.mxu0 0.0
        %4722 = vmatpush1.msra.mxu0 0.0
        %4723 = vmatprep.subr.mxu0 0.0
        %4724 = vmatpush1.msra.mxu0 0.0
        %4725 = vmatprep.subr.mxu0 0.0
        %4726 = vmatpush1.msra.mxu0 0.0
        %4727 = vmatprep.subr.mxu0 0.0
        %4728 = vmatpush1.msra.mxu0 0.0
        %4729 = vmatprep.subr.mxu0 0.0
        %4730 = vmatpush1.msra.mxu0 0.0
        %4731 = vmatprep.subr.mxu0 0.0
        %4732 = vmatpush1.msra.mxu0 0.0
        %4733 = vmatprep.mubr.f32.mxu0 0.0
        %v4734 = vand.u32 %v2087, 4294901760
        %v4735 = vsub.f32 %v2087, %v4734
        %v4736 = vand.u32 %v4735, 4294901760
        %4737 = vmatmul.mubr.f32.gmra.mrb[0].mxu0 %v4736
        %v4738 = vpop.f32.mrb[0].mxu0
        %v4739 = vadd.f32 %v4593, %v4738
        %v4740 = vpop.f32.mrb[0].mxu0
        %v4741 = vadd.f32 %v4595, %v4740
        %4742 = vmatprep.mubr.f32.mxu0 0.0
        %v4743 = vand.u32 %v2090, 4294901760
        %v4744 = vsub.f32 %v2090, %v4743
        %v4745 = vand.u32 %v4744, 4294901760
        %4746 = vmatmul.mubr.f32.gmra.mrb[0].mxu0 %v4745
        %v4747 = vpop.f32.mrb[0].mxu0
        %v4748 = vadd.f32 %v4601, %v4747
        %v4749 = vpop.f32.mrb[0].mxu0
        %v4750 = vadd.f32 %v4603, %v4749
        %4751 = vmatprep.mubr.f32.mxu0 0.0
        %v4752 = vand.u32 %v2093, 4294901760
        %v4753 = vsub.f32 %v2093, %v4752
        %v4754 = vand.u32 %v4753, 4294901760
        %4755 = vmatmul.mubr.f32.gmra.mrb[0].mxu0 %v4754
        %v4756 = vpop.f32.mrb[0].mxu0
        %v4757 = vadd.f32 %v4609, %v4756
        %v4758 = vpop.f32.mrb[0].mxu0
        %v4759 = vadd.f32 %v4611, %v4758
        %4760 = vmatprep.mubr.f32.mxu0 0.0
        %v4761 = vand.u32 %v2096, 4294901760
        %v4762 = vsub.f32 %v2096, %v4761
        %v4763 = vand.u32 %v4762, 4294901760
        %4764 = vmatmul.mubr.f32.gmra.mrb[0].mxu0 %v4763
        %v4765 = vpop.f32.mrb[0].mxu0
        %v4766 = vadd.f32 %v4617, %v4765
        %v4767 = vpop.f32.mrb[0].mxu0
        %v4768 = vadd.f32 %v4619, %v4767
        %4769 = vmatprep.mubr.f32.mxu0 0.0
        %v4770 = vand.u32 %v2099, 4294901760
        %v4771 = vsub.f32 %v2099, %v4770
        %v4772 = vand.u32 %v4771, 4294901760
        %4773 = vmatmul.mubr.f32.gmra.mrb[0].mxu0 %v4772
        %v4774 = vpop.f32.mrb[0].mxu0
        %v4775 = vadd.f32 %v4625, %v4774
        %v4776 = vpop.f32.mrb[0].mxu0
        %v4777 = vadd.f32 %v4627, %v4776
        %4778 = vmatprep.mubr.f32.mxu0 0.0
        %v4779 = vand.u32 %v2102, 4294901760
        %v4780 = vsub.f32 %v2102, %v4779
        %v4781 = vand.u32 %v4780, 4294901760
        %4782 = vmatmul.mubr.f32.gmra.mrb[0].mxu0 %v4781
        %v4783 = vpop.f32.mrb[0].mxu0
        %v4784 = vadd.f32 %v4633, %v4783
        %v4785 = vpop.f32.mrb[0].mxu0
        %v4786 = vadd.f32 %v4635, %v4785
        %4787 = vmatprep.mubr.f32.mxu0 0.0
        %v4788 = vand.u32 %v2105, 4294901760
        %v4789 = vsub.f32 %v2105, %v4788
        %v4790 = vand.u32 %v4789, 4294901760
        %4791 = vmatmul.mubr.f32.gmra.mrb[0].mxu0 %v4790
        %v4792 = vpop.f32.mrb[0].mxu0
        %v4793 = vadd.f32 %v4641, %v4792
        %v4794 = vpop.f32.mrb[0].mxu0
        %v4795 = vadd.f32 %v4643, %v4794
        %4796 = vmatprep.mubr.f32.mxu0 0.0
        %v4797 = vand.u32 %v2108, 4294901760
        %v4798 = vsub.f32 %v2108, %v4797
        %v4799 = vand.u32 %v4798, 4294901760
        %4800 = vmatmul.mubr.f32.gmra.mrb[0].mxu0 %v4799
        %v4801 = vpop.f32.mrb[0].mxu0
        %v4802 = vadd.f32 %v4649, %v4801
        %v4803 = vpop.f32.mrb[0].mxu0
        %v4804 = vadd.f32 %v4651, %v4803
        %4805 = vdwg.mxu0
        %v4806 = vand.u32 %v4091, 4294901760
        %v4807 = vsub.f32 %v4091, %v4806
        %v4808 = vand.u32 %v4807, 4294901760
        %4809 = vmatprep.subr.mxu0 %v4808
        %v4810 = vand.u32 %v4090, 4294901760
        %v4811 = vsub.f32 %v4090, %v4810
        %v4812 = vand.u32 %v4811, 4294901760
        %4813 = vmatpush1.msra.mxu0 %v4812
        %v4814 = vand.u32 %v4095, 4294901760
        %v4815 = vsub.f32 %v4095, %v4814
        %v4816 = vand.u32 %v4815, 4294901760
        %4817 = vmatprep.subr.mxu0 %v4816
        %v4818 = vand.u32 %v4094, 4294901760
        %v4819 = vsub.f32 %v4094, %v4818
        %v4820 = vand.u32 %v4819, 4294901760
        %4821 = vmatpush1.msra.mxu0 %v4820
        %v4822 = vand.u32 %v4099, 4294901760
        %v4823 = vsub.f32 %v4099, %v4822
        %v4824 = vand.u32 %v4823, 4294901760
        %4825 = vmatprep.subr.mxu0 %v4824
        %v4826 = vand.u32 %v4098, 4294901760
        %v4827 = vsub.f32 %v4098, %v4826
        %v4828 = vand.u32 %v4827, 4294901760
        %4829 = vmatpush1.msra.mxu0 %v4828
        %v4830 = vand.u32 %v4103, 4294901760
        %v4831 = vsub.f32 %v4103, %v4830
        %v4832 = vand.u32 %v4831, 4294901760
        %4833 = vmatprep.subr.mxu0 %v4832
        %v4834 = vand.u32 %v4102, 4294901760
        %v4835 = vsub.f32 %v4102, %v4834
        %v4836 = vand.u32 %v4835, 4294901760
        %4837 = vmatpush1.msra.mxu0 %v4836
        %v4838 = vand.u32 %v4107, 4294901760
        %v4839 = vsub.f32 %v4107, %v4838
        %v4840 = vand.u32 %v4839, 4294901760
        %4841 = vmatprep.subr.mxu0 %v4840
        %v4842 = vand.u32 %v4106, 4294901760
        %v4843 = vsub.f32 %v4106, %v4842
        %v4844 = vand.u32 %v4843, 4294901760
        %4845 = vmatpush1.msra.mxu0 %v4844
        %v4846 = vand.u32 %v4111, 4294901760
        %v4847 = vsub.f32 %v4111, %v4846
        %v4848 = vand.u32 %v4847, 4294901760
        %4849 = vmatprep.subr.mxu0 %v4848
        %v4850 = vand.u32 %v4110, 4294901760
        %v4851 = vsub.f32 %v4110, %v4850
        %v4852 = vand.u32 %v4851, 4294901760
        %4853 = vmatpush1.msra.mxu0 %v4852
        %v4854 = vand.u32 %v4115, 4294901760
        %v4855 = vsub.f32 %v4115, %v4854
        %v4856 = vand.u32 %v4855, 4294901760
        %4857 = vmatprep.subr.mxu0 %v4856
        %v4858 = vand.u32 %v4114, 4294901760
        %v4859 = vsub.f32 %v4114, %v4858
        %v4860 = vand.u32 %v4859, 4294901760
        %4861 = vmatpush1.msra.mxu0 %v4860
        %v4862 = vand.u32 %v4119, 4294901760
        %v4863 = vsub.f32 %v4119, %v4862
        %v4864 = vand.u32 %v4863, 4294901760
        %4865 = vmatprep.subr.mxu0 %v4864
        %v4866 = vand.u32 %v4118, 4294901760
        %v4867 = vsub.f32 %v4118, %v4866
        %v4868 = vand.u32 %v4867, 4294901760
        %4869 = vmatpush1.msra.mxu0 %v4868
        %4870 = vmatprep.subr.mxu0 0.0
        %4871 = vmatpush1.msra.mxu0 0.0
        %4872 = vmatprep.subr.mxu0 0.0
        %4873 = vmatpush1.msra.mxu0 0.0
        %4874 = vmatprep.subr.mxu0 0.0
        %4875 = vmatpush1.msra.mxu0 0.0
        %4876 = vmatprep.subr.mxu0 0.0
        %4877 = vmatpush1.msra.mxu0 0.0
        %4878 = vmatprep.subr.mxu0 0.0
        %4879 = vmatpush1.msra.mxu0 0.0
        %4880 = vmatprep.subr.mxu0 0.0
        %4881 = vmatpush1.msra.mxu0 0.0
        %4882 = vmatprep.subr.mxu0 0.0
        %4883 = vmatpush1.msra.mxu0 0.0
        %4884 = vmatprep.subr.mxu0 0.0
        %4885 = vmatpush1.msra.mxu0 0.0
        %4886 = vmatprep.subr.mxu0 0.0
        %4887 = vmatpush1.msra.mxu0 0.0
        %4888 = vmatprep.subr.mxu0 0.0
        %4889 = vmatpush1.msra.mxu0 0.0
        %4890 = vmatprep.subr.mxu0 0.0
        %4891 = vmatpush1.msra.mxu0 0.0
        %4892 = vmatprep.subr.mxu0 0.0
        %4893 = vmatpush1.msra.mxu0 0.0
        %4894 = vmatprep.subr.mxu0 0.0
        %4895 = vmatpush1.msra.mxu0 0.0
        %4896 = vmatprep.subr.mxu0 0.0
        %4897 = vmatpush1.msra.mxu0 0.0
        %4898 = vmatprep.subr.mxu0 0.0
        %4899 = vmatpush1.msra.mxu0 0.0
        %4900 = vmatprep.subr.mxu0 0.0
        %4901 = vmatpush1.msra.mxu0 0.0
        %4902 = vmatprep.subr.mxu0 0.0
        %4903 = vmatpush1.msra.mxu0 0.0
        %4904 = vmatprep.subr.mxu0 0.0
        %4905 = vmatpush1.msra.mxu0 0.0
        %4906 = vmatprep.subr.mxu0 0.0
        %4907 = vmatpush1.msra.mxu0 0.0
        %4908 = vmatprep.subr.mxu0 0.0
        %4909 = vmatpush1.msra.mxu0 0.0
        %4910 = vmatprep.subr.mxu0 0.0
        %4911 = vmatpush1.msra.mxu0 0.0
        %4912 = vmatprep.subr.mxu0 0.0
        %4913 = vmatpush1.msra.mxu0 0.0
        %4914 = vmatprep.subr.mxu0 0.0
        %4915 = vmatpush1.msra.mxu0 0.0
        %4916 = vmatprep.subr.mxu0 0.0
        %4917 = vmatpush1.msra.mxu0 0.0
        %4918 = vmatprep.mubr.f32.mxu0 0.0
        %v4919 = vand.u32 %v2087, 4294901760
        %4920 = vmatmul.mubr.f32.gmra.mrb[0].mxu0 %v4919
        %v4921 = vpop.f32.mrb[0].mxu0
        %v4922 = vadd.f32 %v4739, %v4921
        %v4923 = vpop.f32.mrb[0].mxu0
        %v4924 = vadd.f32 %v4741, %v4923
        %4925 = vmatprep.mubr.f32.mxu0 0.0
        %v4926 = vand.u32 %v2090, 4294901760
        %4927 = vmatmul.mubr.f32.gmra.mrb[0].mxu0 %v4926
        %v4928 = vpop.f32.mrb[0].mxu0
        %v4929 = vadd.f32 %v4748, %v4928
        %v4930 = vpop.f32.mrb[0].mxu0
        %v4931 = vadd.f32 %v4750, %v4930
        %4932 = vmatprep.mubr.f32.mxu0 0.0
        %v4933 = vand.u32 %v2093, 4294901760
        %4934 = vmatmul.mubr.f32.gmra.mrb[0].mxu0 %v4933
        %v4935 = vpop.f32.mrb[0].mxu0
        %v4936 = vadd.f32 %v4757, %v4935
        %v4937 = vpop.f32.mrb[0].mxu0
        %v4938 = vadd.f32 %v4759, %v4937
        %4939 = vmatprep.mubr.f32.mxu0 0.0
        %v4940 = vand.u32 %v2096, 4294901760
        %4941 = vmatmul.mubr.f32.gmra.mrb[0].mxu0 %v4940
        %v4942 = vpop.f32.mrb[0].mxu0
        %v4943 = vadd.f32 %v4766, %v4942
        %v4944 = vpop.f32.mrb[0].mxu0
        %v4945 = vadd.f32 %v4768, %v4944
        %4946 = vmatprep.mubr.f32.mxu0 0.0
        %v4947 = vand.u32 %v2099, 4294901760
        %4948 = vmatmul.mubr.f32.gmra.mrb[0].mxu0 %v4947
        %v4949 = vpop.f32.mrb[0].mxu0
        %v4950 = vadd.f32 %v4775, %v4949
        %v4951 = vpop.f32.mrb[0].mxu0
        %v4952 = vadd.f32 %v4777, %v4951
        %4953 = vmatprep.mubr.f32.mxu0 0.0
        %v4954 = vand.u32 %v2102, 4294901760
        %4955 = vmatmul.mubr.f32.gmra.mrb[0].mxu0 %v4954
        %v4956 = vpop.f32.mrb[0].mxu0
        %v4957 = vadd.f32 %v4784, %v4956
        %v4958 = vpop.f32.mrb[0].mxu0
        %v4959 = vadd.f32 %v4786, %v4958
        %4960 = vmatprep.mubr.f32.mxu0 0.0
        %v4961 = vand.u32 %v2105, 4294901760
        %4962 = vmatmul.mubr.f32.gmra.mrb[0].mxu0 %v4961
        %v4963 = vpop.f32.mrb[0].mxu0
        %v4964 = vadd.f32 %v4793, %v4963
        %v4965 = vpop.f32.mrb[0].mxu0
        %v4966 = vadd.f32 %v4795, %v4965
        %4967 = vmatprep.mubr.f32.mxu0 0.0
        %v4968 = vand.u32 %v2108, 4294901760
        %4969 = vmatmul.mubr.f32.gmra.mrb[0].mxu0 %v4968
        %v4970 = vpop.f32.mrb[0].mxu0
        %v4971 = vadd.f32 %v4802, %v4970
        %v4972 = vpop.f32.mrb[0].mxu0
        %v4973 = vadd.f32 %v4804, %v4972
        %4974 = vdwg.mxu0
        %v4975 = vand.u32 %v4091, 4294901760
        %4976 = vmatprep.subr.mxu0 %v4975
        %v4977 = vand.u32 %v4090, 4294901760
        %4978 = vmatpush1.msra.mxu0 %v4977
        %v4979 = vand.u32 %v4095, 4294901760
        %4980 = vmatprep.subr.mxu0 %v4979
        %v4981 = vand.u32 %v4094, 4294901760
        %4982 = vmatpush1.msra.mxu0 %v4981
        %v4983 = vand.u32 %v4099, 4294901760
        %4984 = vmatprep.subr.mxu0 %v4983
        %v4985 = vand.u32 %v4098, 4294901760
        %4986 = vmatpush1.msra.mxu0 %v4985
        %v4987 = vand.u32 %v4103, 4294901760
        %4988 = vmatprep.subr.mxu0 %v4987
        %v4989 = vand.u32 %v4102, 4294901760
        %4990 = vmatpush1.msra.mxu0 %v4989
        %v4991 = vand.u32 %v4107, 4294901760
        %4992 = vmatprep.subr.mxu0 %v4991
        %v4993 = vand.u32 %v4106, 4294901760
        %4994 = vmatpush1.msra.mxu0 %v4993
        %v4995 = vand.u32 %v4111, 4294901760
        %4996 = vmatprep.subr.mxu0 %v4995
        %v4997 = vand.u32 %v4110, 4294901760
        %4998 = vmatpush1.msra.mxu0 %v4997
        %v4999 = vand.u32 %v4115, 4294901760
        %5000 = vmatprep.subr.mxu0 %v4999
        %v5001 = vand.u32 %v4114, 4294901760
        %5002 = vmatpush1.msra.mxu0 %v5001
        %v5003 = vand.u32 %v4119, 4294901760
        %5004 = vmatprep.subr.mxu0 %v5003
        %v5005 = vand.u32 %v4118, 4294901760
        %5006 = vmatpush1.msra.mxu0 %v5005
        %5007 = vmatprep.subr.mxu0 0.0
        %5008 = vmatpush1.msra.mxu0 0.0
        %5009 = vmatprep.subr.mxu0 0.0
        %5010 = vmatpush1.msra.mxu0 0.0
        %5011 = vmatprep.subr.mxu0 0.0
        %5012 = vmatpush1.msra.mxu0 0.0
        %5013 = vmatprep.subr.mxu0 0.0
        %5014 = vmatpush1.msra.mxu0 0.0
        %5015 = vmatprep.subr.mxu0 0.0
        %5016 = vmatpush1.msra.mxu0 0.0
        %5017 = vmatprep.subr.mxu0 0.0
        %5018 = vmatpush1.msra.mxu0 0.0
        %5019 = vmatprep.subr.mxu0 0.0
        %5020 = vmatpush1.msra.mxu0 0.0
        %5021 = vmatprep.subr.mxu0 0.0
        %5022 = vmatpush1.msra.mxu0 0.0
        %5023 = vmatprep.subr.mxu0 0.0
        %5024 = vmatpush1.msra.mxu0 0.0
        %5025 = vmatprep.subr.mxu0 0.0
        %5026 = vmatpush1.msra.mxu0 0.0
        %5027 = vmatprep.subr.mxu0 0.0
        %5028 = vmatpush1.msra.mxu0 0.0
        %5029 = vmatprep.subr.mxu0 0.0
        %5030 = vmatpush1.msra.mxu0 0.0
        %5031 = vmatprep.subr.mxu0 0.0
        %5032 = vmatpush1.msra.mxu0 0.0
        %5033 = vmatprep.subr.mxu0 0.0
        %5034 = vmatpush1.msra.mxu0 0.0
        %5035 = vmatprep.subr.mxu0 0.0
        %5036 = vmatpush1.msra.mxu0 0.0
        %5037 = vmatprep.subr.mxu0 0.0
        %5038 = vmatpush1.msra.mxu0 0.0
        %5039 = vmatprep.subr.mxu0 0.0
        %5040 = vmatpush1.msra.mxu0 0.0
        %5041 = vmatprep.subr.mxu0 0.0
        %5042 = vmatpush1.msra.mxu0 0.0
        %5043 = vmatprep.subr.mxu0 0.0
        %5044 = vmatpush1.msra.mxu0 0.0
        %5045 = vmatprep.subr.mxu0 0.0
        %5046 = vmatpush1.msra.mxu0 0.0
        %5047 = vmatprep.subr.mxu0 0.0
        %5048 = vmatpush1.msra.mxu0 0.0
        %5049 = vmatprep.subr.mxu0 0.0
        %5050 = vmatpush1.msra.mxu0 0.0
        %5051 = vmatprep.subr.mxu0 0.0
        %5052 = vmatpush1.msra.mxu0 0.0
        %5053 = vmatprep.subr.mxu0 0.0
        %5054 = vmatpush1.msra.mxu0 0.0
        %5055 = vmatprep.mubr.f32.mxu0 0.0
        %v5056 = vand.u32 %v2087, 4294901760
        %5057 = vmatmul.mubr.f32.gmra.mrb[0].mxu0 %v5056
        %v5058 = vpop.f32.mrb[0].mxu0
        %v5059 = vadd.f32 %v4922, %v5058
        %v5060 = vpop.f32.mrb[0].mxu0
        %v5061 = vadd.f32 %v4924, %v5060
        %5062 = vmatprep.mubr.f32.mxu0 0.0
        %v5063 = vand.u32 %v2090, 4294901760
        %5064 = vmatmul.mubr.f32.gmra.mrb[0].mxu0 %v5063
        %v5065 = vpop.f32.mrb[0].mxu0
        %v5066 = vadd.f32 %v4929, %v5065
        %v5067 = vpop.f32.mrb[0].mxu0
        %v5068 = vadd.f32 %v4931, %v5067
        %5069 = vmatprep.mubr.f32.mxu0 0.0
        %v5070 = vand.u32 %v2093, 4294901760
        %5071 = vmatmul.mubr.f32.gmra.mrb[0].mxu0 %v5070
        %v5072 = vpop.f32.mrb[0].mxu0
        %v5073 = vadd.f32 %v4936, %v5072
        %v5074 = vpop.f32.mrb[0].mxu0
        %v5075 = vadd.f32 %v4938, %v5074
        %5076 = vmatprep.mubr.f32.mxu0 0.0
        %v5077 = vand.u32 %v2096, 4294901760
        %5078 = vmatmul.mubr.f32.gmra.mrb[0].mxu0 %v5077
        %v5079 = vpop.f32.mrb[0].mxu0
        %v5080 = vadd.f32 %v4943, %v5079
        %v5081 = vpop.f32.mrb[0].mxu0
        %v5082 = vadd.f32 %v4945, %v5081
        %5083 = vmatprep.mubr.f32.mxu0 0.0
        %v5084 = vand.u32 %v2099, 4294901760
        %5085 = vmatmul.mubr.f32.gmra.mrb[0].mxu0 %v5084
        %v5086 = vpop.f32.mrb[0].mxu0
        %v5087 = vadd.f32 %v4950, %v5086
        %v5088 = vpop.f32.mrb[0].mxu0
        %v5089 = vadd.f32 %v4952, %v5088
        %5090 = vmatprep.mubr.f32.mxu0 0.0
        %v5091 = vand.u32 %v2102, 4294901760
        %5092 = vmatmul.mubr.f32.gmra.mrb[0].mxu0 %v5091
        %v5093 = vpop.f32.mrb[0].mxu0
        %v5094 = vadd.f32 %v4957, %v5093
        %v5095 = vpop.f32.mrb[0].mxu0
        %v5096 = vadd.f32 %v4959, %v5095
        %5097 = vmatprep.mubr.f32.mxu0 0.0
        %v5098 = vand.u32 %v2105, 4294901760
        %5099 = vmatmul.mubr.f32.gmra.mrb[0].mxu0 %v5098
        %v5100 = vpop.f32.mrb[0].mxu0
        %v5101 = vadd.f32 %v4964, %v5100
        %v5102 = vpop.f32.mrb[0].mxu0
        %v5103 = vadd.f32 %v4966, %v5102
        %5104 = vmatprep.mubr.f32.mxu0 0.0
        %v5105 = vand.u32 %v2108, 4294901760
        %5106 = vmatmul.mubr.f32.gmra.mrb[0].mxu0 %v5105
        %v5107 = vpop.f32.mrb[0].mxu0
        %v5108 = vadd.f32 %v4971, %v5107
        %v5109 = vpop.f32.mrb[0].mxu0
        %v5110 = vadd.f32 %v4973, %v5109
        %5111 = vdwg.mxu0
        %v5112 = vand.u32 %v4093, 4294901760
        %5113 = vmatprep.subr.mxu0 %v5112
        %v5114 = vand.u32 %v4092, 4294901760
        %5115 = vmatpush1.msra.mxu0 %v5114
        %v5116 = vand.u32 %v4097, 4294901760
        %5117 = vmatprep.subr.mxu0 %v5116
        %v5118 = vand.u32 %v4096, 4294901760
        %5119 = vmatpush1.msra.mxu0 %v5118
        %v5120 = vand.u32 %v4101, 4294901760
        %5121 = vmatprep.subr.mxu0 %v5120
        %v5122 = vand.u32 %v4100, 4294901760
        %5123 = vmatpush1.msra.mxu0 %v5122
        %v5124 = vand.u32 %v4105, 4294901760
        %5125 = vmatprep.subr.mxu0 %v5124
        %v5126 = vand.u32 %v4104, 4294901760
        %5127 = vmatpush1.msra.mxu0 %v5126
        %v5128 = vand.u32 %v4109, 4294901760
        %5129 = vmatprep.subr.mxu0 %v5128
        %v5130 = vand.u32 %v4108, 4294901760
        %5131 = vmatpush1.msra.mxu0 %v5130
        %v5132 = vand.u32 %v4113, 4294901760
        %5133 = vmatprep.subr.mxu0 %v5132
        %v5134 = vand.u32 %v4112, 4294901760
        %5135 = vmatpush1.msra.mxu0 %v5134
        %v5136 = vand.u32 %v4117, 4294901760
        %5137 = vmatprep.subr.mxu0 %v5136
        %v5138 = vand.u32 %v4116, 4294901760
        %5139 = vmatpush1.msra.mxu0 %v5138
        %v5140 = vand.u32 %v4121, 4294901760
        %5141 = vmatprep.subr.mxu0 %v5140
        %v5142 = vand.u32 %v4120, 4294901760
        %5143 = vmatpush1.msra.mxu0 %v5142
        %5144 = vmatprep.subr.mxu0 0.0
        %5145 = vmatpush1.msra.mxu0 0.0
        %5146 = vmatprep.subr.mxu0 0.0
        %5147 = vmatpush1.msra.mxu0 0.0
        %5148 = vmatprep.subr.mxu0 0.0
        %5149 = vmatpush1.msra.mxu0 0.0
        %5150 = vmatprep.subr.mxu0 0.0
        %5151 = vmatpush1.msra.mxu0 0.0
        %5152 = vmatprep.subr.mxu0 0.0
        %5153 = vmatpush1.msra.mxu0 0.0
        %5154 = vmatprep.subr.mxu0 0.0
        %5155 = vmatpush1.msra.mxu0 0.0
        %5156 = vmatprep.subr.mxu0 0.0
        %5157 = vmatpush1.msra.mxu0 0.0
        %5158 = vmatprep.subr.mxu0 0.0
        %5159 = vmatpush1.msra.mxu0 0.0
        %5160 = vmatprep.subr.mxu0 0.0
        %5161 = vmatpush1.msra.mxu0 0.0
        %5162 = vmatprep.subr.mxu0 0.0
        %5163 = vmatpush1.msra.mxu0 0.0
        %5164 = vmatprep.subr.mxu0 0.0
        %5165 = vmatpush1.msra.mxu0 0.0
        %5166 = vmatprep.subr.mxu0 0.0
        %5167 = vmatpush1.msra.mxu0 0.0
        %5168 = vmatprep.subr.mxu0 0.0
        %5169 = vmatpush1.msra.mxu0 0.0
        %5170 = vmatprep.subr.mxu0 0.0
        %5171 = vmatpush1.msra.mxu0 0.0
        %5172 = vmatprep.subr.mxu0 0.0
        %5173 = vmatpush1.msra.mxu0 0.0
        %5174 = vmatprep.subr.mxu0 0.0
        %5175 = vmatpush1.msra.mxu0 0.0
        %5176 = vmatprep.subr.mxu0 0.0
        %5177 = vmatpush1.msra.mxu0 0.0
        %5178 = vmatprep.subr.mxu0 0.0
        %5179 = vmatpush1.msra.mxu0 0.0
        %5180 = vmatprep.subr.mxu0 0.0
        %5181 = vmatpush1.msra.mxu0 0.0
        %5182 = vmatprep.subr.mxu0 0.0
        %5183 = vmatpush1.msra.mxu0 0.0
        %5184 = vmatprep.subr.mxu0 0.0
        %5185 = vmatpush1.msra.mxu0 0.0
        %5186 = vmatprep.subr.mxu0 0.0
        %5187 = vmatpush1.msra.mxu0 0.0
        %5188 = vmatprep.subr.mxu0 0.0
        %5189 = vmatpush1.msra.mxu0 0.0
        %5190 = vmatprep.subr.mxu0 0.0
        %5191 = vmatpush1.msra.mxu0 0.0
        %5192 = vmatprep.mubr.f32.mxu0 0.0
        %v5193 = vand.u32 %v2087, 4294901760
        %v5194 = vsub.f32 %v2087, %v5193
        %v5195 = vand.u32 %v5194, 4294901760
        %v5196 = vsub.f32 %v5194, %v5195
        %v5197 = vand.u32 %v5196, 4294901760
        %5198 = vmatmul.mubr.f32.gmra.mrb[0].mxu0 %v5197
        %v5199 = vpop.f32.mrb[0].mxu0
        %v5200 = vadd.f32 %v2048, %v5199
        %v5201 = vpop.f32.mrb[0].mxu0
        %v5202 = vadd.f32 %v2048, %v5201
        %5203 = vmatprep.mubr.f32.mxu0 0.0
        %v5204 = vand.u32 %v2090, 4294901760
        %v5205 = vsub.f32 %v2090, %v5204
        %v5206 = vand.u32 %v5205, 4294901760
        %v5207 = vsub.f32 %v5205, %v5206
        %v5208 = vand.u32 %v5207, 4294901760
        %5209 = vmatmul.mubr.f32.gmra.mrb[0].mxu0 %v5208
        %v5210 = vpop.f32.mrb[0].mxu0
        %v5211 = vadd.f32 %v2053, %v5210
        %v5212 = vpop.f32.mrb[0].mxu0
        %v5213 = vadd.f32 %v2053, %v5212
        %5214 = vmatprep.mubr.f32.mxu0 0.0
        %v5215 = vand.u32 %v2093, 4294901760
        %v5216 = vsub.f32 %v2093, %v5215
        %v5217 = vand.u32 %v5216, 4294901760
        %v5218 = vsub.f32 %v5216, %v5217
        %v5219 = vand.u32 %v5218, 4294901760
        %5220 = vmatmul.mubr.f32.gmra.mrb[0].mxu0 %v5219
        %v5221 = vpop.f32.mrb[0].mxu0
        %v5222 = vadd.f32 %v2058, %v5221
        %v5223 = vpop.f32.mrb[0].mxu0
        %v5224 = vadd.f32 %v2058, %v5223
        %5225 = vmatprep.mubr.f32.mxu0 0.0
        %v5226 = vand.u32 %v2096, 4294901760
        %v5227 = vsub.f32 %v2096, %v5226
        %v5228 = vand.u32 %v5227, 4294901760
        %v5229 = vsub.f32 %v5227, %v5228
        %v5230 = vand.u32 %v5229, 4294901760
        %5231 = vmatmul.mubr.f32.gmra.mrb[0].mxu0 %v5230
        %v5232 = vpop.f32.mrb[0].mxu0
        %v5233 = vadd.f32 %v2063, %v5232
        %v5234 = vpop.f32.mrb[0].mxu0
        %v5235 = vadd.f32 %v2063, %v5234
        %5236 = vmatprep.mubr.f32.mxu0 0.0
        %v5237 = vand.u32 %v2099, 4294901760
        %v5238 = vsub.f32 %v2099, %v5237
        %v5239 = vand.u32 %v5238, 4294901760
        %v5240 = vsub.f32 %v5238, %v5239
        %v5241 = vand.u32 %v5240, 4294901760
        %5242 = vmatmul.mubr.f32.gmra.mrb[0].mxu0 %v5241
        %v5243 = vpop.f32.mrb[0].mxu0
        %v5244 = vadd.f32 %v2068, %v5243
        %v5245 = vpop.f32.mrb[0].mxu0
        %v5246 = vadd.f32 %v2068, %v5245
        %5247 = vmatprep.mubr.f32.mxu0 0.0
        %v5248 = vand.u32 %v2102, 4294901760
        %v5249 = vsub.f32 %v2102, %v5248
        %v5250 = vand.u32 %v5249, 4294901760
        %v5251 = vsub.f32 %v5249, %v5250
        %v5252 = vand.u32 %v5251, 4294901760
        %5253 = vmatmul.mubr.f32.gmra.mrb[0].mxu0 %v5252
        %v5254 = vpop.f32.mrb[0].mxu0
        %v5255 = vadd.f32 %v2073, %v5254
        %v5256 = vpop.f32.mrb[0].mxu0
        %v5257 = vadd.f32 %v2073, %v5256
        %5258 = vmatprep.mubr.f32.mxu0 0.0
        %v5259 = vand.u32 %v2105, 4294901760
        %v5260 = vsub.f32 %v2105, %v5259
        %v5261 = vand.u32 %v5260, 4294901760
        %v5262 = vsub.f32 %v5260, %v5261
        %v5263 = vand.u32 %v5262, 4294901760
        %5264 = vmatmul.mubr.f32.gmra.mrb[0].mxu0 %v5263
        %v5265 = vpop.f32.mrb[0].mxu0
        %v5266 = vadd.f32 %v2078, %v5265
        %v5267 = vpop.f32.mrb[0].mxu0
        %v5268 = vadd.f32 %v2078, %v5267
        %5269 = vmatprep.mubr.f32.mxu0 0.0
        %v5270 = vand.u32 %v2108, 4294901760
        %v5271 = vsub.f32 %v2108, %v5270
        %v5272 = vand.u32 %v5271, 4294901760
        %v5273 = vsub.f32 %v5271, %v5272
        %v5274 = vand.u32 %v5273, 4294901760
        %5275 = vmatmul.mubr.f32.gmra.mrb[0].mxu0 %v5274
        %v5276 = vpop.f32.mrb[0].mxu0
        %v5277 = vadd.f32 %v2083, %v5276
        %v5278 = vpop.f32.mrb[0].mxu0
        %v5279 = vadd.f32 %v2083, %v5278
        %5280 = vdwg.mxu0
        %v5281 = vand.u32 %v4093, 4294901760
        %v5282 = vsub.f32 %v4093, %v5281
        %v5283 = vand.u32 %v5282, 4294901760
        %v5284 = vsub.f32 %v5282, %v5283
        %v5285 = vand.u32 %v5284, 4294901760
        %5286 = vmatprep.subr.mxu0 %v5285
        %v5287 = vand.u32 %v4092, 4294901760
        %v5288 = vsub.f32 %v4092, %v5287
        %v5289 = vand.u32 %v5288, 4294901760
        %v5290 = vsub.f32 %v5288, %v5289
        %v5291 = vand.u32 %v5290, 4294901760
        %5292 = vmatpush1.msra.mxu0 %v5291
        %v5293 = vand.u32 %v4097, 4294901760
        %v5294 = vsub.f32 %v4097, %v5293
        %v5295 = vand.u32 %v5294, 4294901760
        %v5296 = vsub.f32 %v5294, %v5295
        %v5297 = vand.u32 %v5296, 4294901760
        %5298 = vmatprep.subr.mxu0 %v5297
        %v5299 = vand.u32 %v4096, 4294901760
        %v5300 = vsub.f32 %v4096, %v5299
        %v5301 = vand.u32 %v5300, 4294901760
        %v5302 = vsub.f32 %v5300, %v5301
        %v5303 = vand.u32 %v5302, 4294901760
        %5304 = vmatpush1.msra.mxu0 %v5303
        %v5305 = vand.u32 %v4101, 4294901760
        %v5306 = vsub.f32 %v4101, %v5305
        %v5307 = vand.u32 %v5306, 4294901760
        %v5308 = vsub.f32 %v5306, %v5307
        %v5309 = vand.u32 %v5308, 4294901760
        %5310 = vmatprep.subr.mxu0 %v5309
        %v5311 = vand.u32 %v4100, 4294901760
        %v5312 = vsub.f32 %v4100, %v5311
        %v5313 = vand.u32 %v5312, 4294901760
        %v5314 = vsub.f32 %v5312, %v5313
        %v5315 = vand.u32 %v5314, 4294901760
        %5316 = vmatpush1.msra.mxu0 %v5315
        %v5317 = vand.u32 %v4105, 4294901760
        %v5318 = vsub.f32 %v4105, %v5317
        %v5319 = vand.u32 %v5318, 4294901760
        %v5320 = vsub.f32 %v5318, %v5319
        %v5321 = vand.u32 %v5320, 4294901760
        %5322 = vmatprep.subr.mxu0 %v5321
        %v5323 = vand.u32 %v4104, 4294901760
        %v5324 = vsub.f32 %v4104, %v5323
        %v5325 = vand.u32 %v5324, 4294901760
        %v5326 = vsub.f32 %v5324, %v5325
        %v5327 = vand.u32 %v5326, 4294901760
        %5328 = vmatpush1.msra.mxu0 %v5327
        %v5329 = vand.u32 %v4109, 4294901760
        %v5330 = vsub.f32 %v4109, %v5329
        %v5331 = vand.u32 %v5330, 4294901760
        %v5332 = vsub.f32 %v5330, %v5331
        %v5333 = vand.u32 %v5332, 4294901760
        %5334 = vmatprep.subr.mxu0 %v5333
        %v5335 = vand.u32 %v4108, 4294901760
        %v5336 = vsub.f32 %v4108, %v5335
        %v5337 = vand.u32 %v5336, 4294901760
        %v5338 = vsub.f32 %v5336, %v5337
        %v5339 = vand.u32 %v5338, 4294901760
        %5340 = vmatpush1.msra.mxu0 %v5339
        %v5341 = vand.u32 %v4113, 4294901760
        %v5342 = vsub.f32 %v4113, %v5341
        %v5343 = vand.u32 %v5342, 4294901760
        %v5344 = vsub.f32 %v5342, %v5343
        %v5345 = vand.u32 %v5344, 4294901760
        %5346 = vmatprep.subr.mxu0 %v5345
        %v5347 = vand.u32 %v4112, 4294901760
        %v5348 = vsub.f32 %v4112, %v5347
        %v5349 = vand.u32 %v5348, 4294901760
        %v5350 = vsub.f32 %v5348, %v5349
        %v5351 = vand.u32 %v5350, 4294901760
        %5352 = vmatpush1.msra.mxu0 %v5351
        %v5353 = vand.u32 %v4117, 4294901760
        %v5354 = vsub.f32 %v4117, %v5353
        %v5355 = vand.u32 %v5354, 4294901760
        %v5356 = vsub.f32 %v5354, %v5355
        %v5357 = vand.u32 %v5356, 4294901760
        %5358 = vmatprep.subr.mxu0 %v5357
        %v5359 = vand.u32 %v4116, 4294901760
        %v5360 = vsub.f32 %v4116, %v5359
        %v5361 = vand.u32 %v5360, 4294901760
        %v5362 = vsub.f32 %v5360, %v5361
        %v5363 = vand.u32 %v5362, 4294901760
        %5364 = vmatpush1.msra.mxu0 %v5363
        %v5365 = vand.u32 %v4121, 4294901760
        %v5366 = vsub.f32 %v4121, %v5365
        %v5367 = vand.u32 %v5366, 4294901760
        %v5368 = vsub.f32 %v5366, %v5367
        %v5369 = vand.u32 %v5368, 4294901760
        %5370 = vmatprep.subr.mxu0 %v5369
        %v5371 = vand.u32 %v4120, 4294901760
        %v5372 = vsub.f32 %v4120, %v5371
        %v5373 = vand.u32 %v5372, 4294901760
        %v5374 = vsub.f32 %v5372, %v5373
        %v5375 = vand.u32 %v5374, 4294901760
        %5376 = vmatpush1.msra.mxu0 %v5375
        %5377 = vmatprep.subr.mxu0 0.0
        %5378 = vmatpush1.msra.mxu0 0.0
        %5379 = vmatprep.subr.mxu0 0.0
        %5380 = vmatpush1.msra.mxu0 0.0
        %5381 = vmatprep.subr.mxu0 0.0
        %5382 = vmatpush1.msra.mxu0 0.0
        %5383 = vmatprep.subr.mxu0 0.0
        %5384 = vmatpush1.msra.mxu0 0.0
        %5385 = vmatprep.subr.mxu0 0.0
        %5386 = vmatpush1.msra.mxu0 0.0
        %5387 = vmatprep.subr.mxu0 0.0
        %5388 = vmatpush1.msra.mxu0 0.0
        %5389 = vmatprep.subr.mxu0 0.0
        %5390 = vmatpush1.msra.mxu0 0.0
        %5391 = vmatprep.subr.mxu0 0.0
        %5392 = vmatpush1.msra.mxu0 0.0
        %5393 = vmatprep.subr.mxu0 0.0
        %5394 = vmatpush1.msra.mxu0 0.0
        %5395 = vmatprep.subr.mxu0 0.0
        %5396 = vmatpush1.msra.mxu0 0.0
        %5397 = vmatprep.subr.mxu0 0.0
        %5398 = vmatpush1.msra.mxu0 0.0
        %5399 = vmatprep.subr.mxu0 0.0
        %5400 = vmatpush1.msra.mxu0 0.0
        %5401 = vmatprep.subr.mxu0 0.0
        %5402 = vmatpush1.msra.mxu0 0.0
        %5403 = vmatprep.subr.mxu0 0.0
        %5404 = vmatpush1.msra.mxu0 0.0
        %5405 = vmatprep.subr.mxu0 0.0
        %5406 = vmatpush1.msra.mxu0 0.0
        %5407 = vmatprep.subr.mxu0 0.0
        %5408 = vmatpush1.msra.mxu0 0.0
        %5409 = vmatprep.subr.mxu0 0.0
        %5410 = vmatpush1.msra.mxu0 0.0
        %5411 = vmatprep.subr.mxu0 0.0
        %5412 = vmatpush1.msra.mxu0 0.0
        %5413 = vmatprep.subr.mxu0 0.0
        %5414 = vmatpush1.msra.mxu0 0.0
        %5415 = vmatprep.subr.mxu0 0.0
        %5416 = vmatpush1.msra.mxu0 0.0
        %5417 = vmatprep.subr.mxu0 0.0
        %5418 = vmatpush1.msra.mxu0 0.0
        %5419 = vmatprep.subr.mxu0 0.0
        %5420 = vmatpush1.msra.mxu0 0.0
        %5421 = vmatprep.subr.mxu0 0.0
        %5422 = vmatpush1.msra.mxu0 0.0
        %5423 = vmatprep.subr.mxu0 0.0
        %5424 = vmatpush1.msra.mxu0 0.0
        %5425 = vmatprep.mubr.f32.mxu0 0.0
        %v5426 = vand.u32 %v2087, 4294901760
        %5427 = vmatmul.mubr.f32.gmra.mrb[0].mxu0 %v5426
        %v5428 = vpop.f32.mrb[0].mxu0
        %v5429 = vadd.f32 %v5200, %v5428
        %v5430 = vpop.f32.mrb[0].mxu0
        %v5431 = vadd.f32 %v5202, %v5430
        %5432 = vmatprep.mubr.f32.mxu0 0.0
        %v5433 = vand.u32 %v2090, 4294901760
        %5434 = vmatmul.mubr.f32.gmra.mrb[0].mxu0 %v5433
        %v5435 = vpop.f32.mrb[0].mxu0
        %v5436 = vadd.f32 %v5211, %v5435
        %v5437 = vpop.f32.mrb[0].mxu0
        %v5438 = vadd.f32 %v5213, %v5437
        %5439 = vmatprep.mubr.f32.mxu0 0.0
        %v5440 = vand.u32 %v2093, 4294901760
        %5441 = vmatmul.mubr.f32.gmra.mrb[0].mxu0 %v5440
        %v5442 = vpop.f32.mrb[0].mxu0
        %v5443 = vadd.f32 %v5222, %v5442
        %v5444 = vpop.f32.mrb[0].mxu0
        %v5445 = vadd.f32 %v5224, %v5444
        %5446 = vmatprep.mubr.f32.mxu0 0.0
        %v5447 = vand.u32 %v2096, 4294901760
        %5448 = vmatmul.mubr.f32.gmra.mrb[0].mxu0 %v5447
        %v5449 = vpop.f32.mrb[0].mxu0
        %v5450 = vadd.f32 %v5233, %v5449
        %v5451 = vpop.f32.mrb[0].mxu0
        %v5452 = vadd.f32 %v5235, %v5451
        %5453 = vmatprep.mubr.f32.mxu0 0.0
        %v5454 = vand.u32 %v2099, 4294901760
        %5455 = vmatmul.mubr.f32.gmra.mrb[0].mxu0 %v5454
        %v5456 = vpop.f32.mrb[0].mxu0
        %v5457 = vadd.f32 %v5244, %v5456
        %v5458 = vpop.f32.mrb[0].mxu0
        %v5459 = vadd.f32 %v5246, %v5458
        %5460 = vmatprep.mubr.f32.mxu0 0.0
        %v5461 = vand.u32 %v2102, 4294901760
        %5462 = vmatmul.mubr.f32.gmra.mrb[0].mxu0 %v5461
        %v5463 = vpop.f32.mrb[0].mxu0
        %v5464 = vadd.f32 %v5255, %v5463
        %v5465 = vpop.f32.mrb[0].mxu0
        %v5466 = vadd.f32 %v5257, %v5465
        %5467 = vmatprep.mubr.f32.mxu0 0.0
        %v5468 = vand.u32 %v2105, 4294901760
        %5469 = vmatmul.mubr.f32.gmra.mrb[0].mxu0 %v5468
        %v5470 = vpop.f32.mrb[0].mxu0
        %v5471 = vadd.f32 %v5266, %v5470
        %v5472 = vpop.f32.mrb[0].mxu0
        %v5473 = vadd.f32 %v5268, %v5472
        %5474 = vmatprep.mubr.f32.mxu0 0.0
        %v5475 = vand.u32 %v2108, 4294901760
        %5476 = vmatmul.mubr.f32.gmra.mrb[0].mxu0 %v5475
        %v5477 = vpop.f32.mrb[0].mxu0
        %v5478 = vadd.f32 %v5277, %v5477
        %v5479 = vpop.f32.mrb[0].mxu0
        %v5480 = vadd.f32 %v5279, %v5479
        %5481 = vdwg.mxu0
        %v5482 = vand.u32 %v4093, 4294901760
        %v5483 = vsub.f32 %v4093, %v5482
        %5484 = vmatprep.subr.mxu0 %v5483
        %v5485 = vand.u32 %v4092, 4294901760
        %v5486 = vsub.f32 %v4092, %v5485
        %5487 = vmatpush1.msra.mxu0 %v5486
        %v5488 = vand.u32 %v4097, 4294901760
        %v5489 = vsub.f32 %v4097, %v5488
        %5490 = vmatprep.subr.mxu0 %v5489
        %v5491 = vand.u32 %v4096, 4294901760
        %v5492 = vsub.f32 %v4096, %v5491
        %5493 = vmatpush1.msra.mxu0 %v5492
        %v5494 = vand.u32 %v4101, 4294901760
        %v5495 = vsub.f32 %v4101, %v5494
        %5496 = vmatprep.subr.mxu0 %v5495
        %v5497 = vand.u32 %v4100, 4294901760
        %v5498 = vsub.f32 %v4100, %v5497
        %5499 = vmatpush1.msra.mxu0 %v5498
        %v5500 = vand.u32 %v4105, 4294901760
        %v5501 = vsub.f32 %v4105, %v5500
        %5502 = vmatprep.subr.mxu0 %v5501
        %v5503 = vand.u32 %v4104, 4294901760
        %v5504 = vsub.f32 %v4104, %v5503
        %5505 = vmatpush1.msra.mxu0 %v5504
        %v5506 = vand.u32 %v4109, 4294901760
        %v5507 = vsub.f32 %v4109, %v5506
        %5508 = vmatprep.subr.mxu0 %v5507
        %v5509 = vand.u32 %v4108, 4294901760
        %v5510 = vsub.f32 %v4108, %v5509
        %5511 = vmatpush1.msra.mxu0 %v5510
        %v5512 = vand.u32 %v4113, 4294901760
        %v5513 = vsub.f32 %v4113, %v5512
        %5514 = vmatprep.subr.mxu0 %v5513
        %v5515 = vand.u32 %v4112, 4294901760
        %v5516 = vsub.f32 %v4112, %v5515
        %5517 = vmatpush1.msra.mxu0 %v5516
        %v5518 = vand.u32 %v4117, 4294901760
        %v5519 = vsub.f32 %v4117, %v5518
        %5520 = vmatprep.subr.mxu0 %v5519
        %v5521 = vand.u32 %v4116, 4294901760
        %v5522 = vsub.f32 %v4116, %v5521
        %5523 = vmatpush1.msra.mxu0 %v5522
        %v5524 = vand.u32 %v4121, 4294901760
        %v5525 = vsub.f32 %v4121, %v5524
        %5526 = vmatprep.subr.mxu0 %v5525
        %v5527 = vand.u32 %v4120, 4294901760
        %v5528 = vsub.f32 %v4120, %v5527
        %5529 = vmatpush1.msra.mxu0 %v5528
        %5530 = vmatprep.subr.mxu0 0.0
        %5531 = vmatpush1.msra.mxu0 0.0
        %5532 = vmatprep.subr.mxu0 0.0
        %5533 = vmatpush1.msra.mxu0 0.0
        %5534 = vmatprep.subr.mxu0 0.0
        %5535 = vmatpush1.msra.mxu0 0.0
        %5536 = vmatprep.subr.mxu0 0.0
        %5537 = vmatpush1.msra.mxu0 0.0
        %5538 = vmatprep.subr.mxu0 0.0
        %5539 = vmatpush1.msra.mxu0 0.0
        %5540 = vmatprep.subr.mxu0 0.0
        %5541 = vmatpush1.msra.mxu0 0.0
        %5542 = vmatprep.subr.mxu0 0.0
        %5543 = vmatpush1.msra.mxu0 0.0
        %5544 = vmatprep.subr.mxu0 0.0
        %5545 = vmatpush1.msra.mxu0 0.0
        %5546 = vmatprep.subr.mxu0 0.0
        %5547 = vmatpush1.msra.mxu0 0.0
        %5548 = vmatprep.subr.mxu0 0.0
        %5549 = vmatpush1.msra.mxu0 0.0
        %5550 = vmatprep.subr.mxu0 0.0
        %5551 = vmatpush1.msra.mxu0 0.0
        %5552 = vmatprep.subr.mxu0 0.0
        %5553 = vmatpush1.msra.mxu0 0.0
        %5554 = vmatprep.subr.mxu0 0.0
        %5555 = vmatpush1.msra.mxu0 0.0
        %5556 = vmatprep.subr.mxu0 0.0
        %5557 = vmatpush1.msra.mxu0 0.0
        %5558 = vmatprep.subr.mxu0 0.0
        %5559 = vmatpush1.msra.mxu0 0.0
        %5560 = vmatprep.subr.mxu0 0.0
        %5561 = vmatpush1.msra.mxu0 0.0
        %5562 = vmatprep.subr.mxu0 0.0
        %5563 = vmatpush1.msra.mxu0 0.0
        %5564 = vmatprep.subr.mxu0 0.0
        %5565 = vmatpush1.msra.mxu0 0.0
        %5566 = vmatprep.subr.mxu0 0.0
        %5567 = vmatpush1.msra.mxu0 0.0
        %5568 = vmatprep.subr.mxu0 0.0
        %5569 = vmatpush1.msra.mxu0 0.0
        %5570 = vmatprep.subr.mxu0 0.0
        %5571 = vmatpush1.msra.mxu0 0.0
        %5572 = vmatprep.subr.mxu0 0.0
        %5573 = vmatpush1.msra.mxu0 0.0
        %5574 = vmatprep.subr.mxu0 0.0
        %5575 = vmatpush1.msra.mxu0 0.0
        %5576 = vmatprep.subr.mxu0 0.0
        %5577 = vmatpush1.msra.mxu0 0.0
        %5578 = vmatprep.mubr.f32.mxu0 0.0
        %v5579 = vand.u32 %v2087, 4294901760
        %v5580 = vsub.f32 %v2087, %v5579
        %5581 = vmatmul.mubr.f32.gmra.mrb[0].mxu0 %v5580
        %v5582 = vpop.f32.mrb[0].mxu0
        %v5583 = vadd.f32 %v5429, %v5582
        %v5584 = vpop.f32.mrb[0].mxu0
        %v5585 = vadd.f32 %v5431, %v5584
        %5586 = vmatprep.mubr.f32.mxu0 0.0
        %v5587 = vand.u32 %v2090, 4294901760
        %v5588 = vsub.f32 %v2090, %v5587
        %5589 = vmatmul.mubr.f32.gmra.mrb[0].mxu0 %v5588
        %v5590 = vpop.f32.mrb[0].mxu0
        %v5591 = vadd.f32 %v5436, %v5590
        %v5592 = vpop.f32.mrb[0].mxu0
        %v5593 = vadd.f32 %v5438, %v5592
        %5594 = vmatprep.mubr.f32.mxu0 0.0
        %v5595 = vand.u32 %v2093, 4294901760
        %v5596 = vsub.f32 %v2093, %v5595
        %5597 = vmatmul.mubr.f32.gmra.mrb[0].mxu0 %v5596
        %v5598 = vpop.f32.mrb[0].mxu0
        %v5599 = vadd.f32 %v5443, %v5598
        %v5600 = vpop.f32.mrb[0].mxu0
        %v5601 = vadd.f32 %v5445, %v5600
        %5602 = vmatprep.mubr.f32.mxu0 0.0
        %v5603 = vand.u32 %v2096, 4294901760
        %v5604 = vsub.f32 %v2096, %v5603
        %5605 = vmatmul.mubr.f32.gmra.mrb[0].mxu0 %v5604
        %v5606 = vpop.f32.mrb[0].mxu0
        %v5607 = vadd.f32 %v5450, %v5606
        %v5608 = vpop.f32.mrb[0].mxu0
        %v5609 = vadd.f32 %v5452, %v5608
        %5610 = vmatprep.mubr.f32.mxu0 0.0
        %v5611 = vand.u32 %v2099, 4294901760
        %v5612 = vsub.f32 %v2099, %v5611
        %5613 = vmatmul.mubr.f32.gmra.mrb[0].mxu0 %v5612
        %v5614 = vpop.f32.mrb[0].mxu0
        %v5615 = vadd.f32 %v5457, %v5614
        %v5616 = vpop.f32.mrb[0].mxu0
        %v5617 = vadd.f32 %v5459, %v5616
        %5618 = vmatprep.mubr.f32.mxu0 0.0
        %v5619 = vand.u32 %v2102, 4294901760
        %v5620 = vsub.f32 %v2102, %v5619
        %5621 = vmatmul.mubr.f32.gmra.mrb[0].mxu0 %v5620
        %v5622 = vpop.f32.mrb[0].mxu0
        %v5623 = vadd.f32 %v5464, %v5622
        %v5624 = vpop.f32.mrb[0].mxu0
        %v5625 = vadd.f32 %v5466, %v5624
        %5626 = vmatprep.mubr.f32.mxu0 0.0
        %v5627 = vand.u32 %v2105, 4294901760
        %v5628 = vsub.f32 %v2105, %v5627
        %5629 = vmatmul.mubr.f32.gmra.mrb[0].mxu0 %v5628
        %v5630 = vpop.f32.mrb[0].mxu0
        %v5631 = vadd.f32 %v5471, %v5630
        %v5632 = vpop.f32.mrb[0].mxu0
        %v5633 = vadd.f32 %v5473, %v5632
        %5634 = vmatprep.mubr.f32.mxu0 0.0
        %v5635 = vand.u32 %v2108, 4294901760
        %v5636 = vsub.f32 %v2108, %v5635
        %5637 = vmatmul.mubr.f32.gmra.mrb[0].mxu0 %v5636
        %v5638 = vpop.f32.mrb[0].mxu0
        %v5639 = vadd.f32 %v5478, %v5638
        %v5640 = vpop.f32.mrb[0].mxu0
        %v5641 = vadd.f32 %v5480, %v5640
        %5642 = vdwg.mxu0
        %v5643 = vand.u32 %v4093, 4294901760
        %5644 = vmatprep.subr.mxu0 %v5643
        %v5645 = vand.u32 %v4092, 4294901760
        %5646 = vmatpush1.msra.mxu0 %v5645
        %v5647 = vand.u32 %v4097, 4294901760
        %5648 = vmatprep.subr.mxu0 %v5647
        %v5649 = vand.u32 %v4096, 4294901760
        %5650 = vmatpush1.msra.mxu0 %v5649
        %v5651 = vand.u32 %v4101, 4294901760
        %5652 = vmatprep.subr.mxu0 %v5651
        %v5653 = vand.u32 %v4100, 4294901760
        %5654 = vmatpush1.msra.mxu0 %v5653
        %v5655 = vand.u32 %v4105, 4294901760
        %5656 = vmatprep.subr.mxu0 %v5655
        %v5657 = vand.u32 %v4104, 4294901760
        %5658 = vmatpush1.msra.mxu0 %v5657
        %v5659 = vand.u32 %v4109, 4294901760
        %5660 = vmatprep.subr.mxu0 %v5659
        %v5661 = vand.u32 %v4108, 4294901760
        %5662 = vmatpush1.msra.mxu0 %v5661
        %v5663 = vand.u32 %v4113, 4294901760
        %5664 = vmatprep.subr.mxu0 %v5663
        %v5665 = vand.u32 %v4112, 4294901760
        %5666 = vmatpush1.msra.mxu0 %v5665
        %v5667 = vand.u32 %v4117, 4294901760
        %5668 = vmatprep.subr.mxu0 %v5667
        %v5669 = vand.u32 %v4116, 4294901760
        %5670 = vmatpush1.msra.mxu0 %v5669
        %v5671 = vand.u32 %v4121, 4294901760
        %5672 = vmatprep.subr.mxu0 %v5671
        %v5673 = vand.u32 %v4120, 4294901760
        %5674 = vmatpush1.msra.mxu0 %v5673
        %5675 = vmatprep.subr.mxu0 0.0
        %5676 = vmatpush1.msra.mxu0 0.0
        %5677 = vmatprep.subr.mxu0 0.0
        %5678 = vmatpush1.msra.mxu0 0.0
        %5679 = vmatprep.subr.mxu0 0.0
        %5680 = vmatpush1.msra.mxu0 0.0
        %5681 = vmatprep.subr.mxu0 0.0
        %5682 = vmatpush1.msra.mxu0 0.0
        %5683 = vmatprep.subr.mxu0 0.0
        %5684 = vmatpush1.msra.mxu0 0.0
        %5685 = vmatprep.subr.mxu0 0.0
        %5686 = vmatpush1.msra.mxu0 0.0
        %5687 = vmatprep.subr.mxu0 0.0
        %5688 = vmatpush1.msra.mxu0 0.0
        %5689 = vmatprep.subr.mxu0 0.0
        %5690 = vmatpush1.msra.mxu0 0.0
        %5691 = vmatprep.subr.mxu0 0.0
        %5692 = vmatpush1.msra.mxu0 0.0
        %5693 = vmatprep.subr.mxu0 0.0
        %5694 = vmatpush1.msra.mxu0 0.0
        %5695 = vmatprep.subr.mxu0 0.0
        %5696 = vmatpush1.msra.mxu0 0.0
        %5697 = vmatprep.subr.mxu0 0.0
        %5698 = vmatpush1.msra.mxu0 0.0
        %5699 = vmatprep.subr.mxu0 0.0
        %5700 = vmatpush1.msra.mxu0 0.0
        %5701 = vmatprep.subr.mxu0 0.0
        %5702 = vmatpush1.msra.mxu0 0.0
        %5703 = vmatprep.subr.mxu0 0.0
        %5704 = vmatpush1.msra.mxu0 0.0
        %5705 = vmatprep.subr.mxu0 0.0
        %5706 = vmatpush1.msra.mxu0 0.0
        %5707 = vmatprep.subr.mxu0 0.0
        %5708 = vmatpush1.msra.mxu0 0.0
        %5709 = vmatprep.subr.mxu0 0.0
        %5710 = vmatpush1.msra.mxu0 0.0
        %5711 = vmatprep.subr.mxu0 0.0
        %5712 = vmatpush1.msra.mxu0 0.0
        %5713 = vmatprep.subr.mxu0 0.0
        %5714 = vmatpush1.msra.mxu0 0.0
        %5715 = vmatprep.subr.mxu0 0.0
        %5716 = vmatpush1.msra.mxu0 0.0
        %5717 = vmatprep.subr.mxu0 0.0
        %5718 = vmatpush1.msra.mxu0 0.0
        %5719 = vmatprep.subr.mxu0 0.0
        %5720 = vmatpush1.msra.mxu0 0.0
        %5721 = vmatprep.subr.mxu0 0.0
        %5722 = vmatpush1.msra.mxu0 0.0
        %5723 = vmatprep.mubr.f32.mxu0 0.0
        %v5724 = vand.u32 %v2087, 4294901760
        %v5725 = vsub.f32 %v2087, %v5724
        %v5726 = vand.u32 %v5725, 4294901760
        %5727 = vmatmul.mubr.f32.gmra.mrb[0].mxu0 %v5726
        %v5728 = vpop.f32.mrb[0].mxu0
        %v5729 = vadd.f32 %v5583, %v5728
        %v5730 = vpop.f32.mrb[0].mxu0
        %v5731 = vadd.f32 %v5585, %v5730
        %5732 = vmatprep.mubr.f32.mxu0 0.0
        %v5733 = vand.u32 %v2090, 4294901760
        %v5734 = vsub.f32 %v2090, %v5733
        %v5735 = vand.u32 %v5734, 4294901760
        %5736 = vmatmul.mubr.f32.gmra.mrb[0].mxu0 %v5735
        %v5737 = vpop.f32.mrb[0].mxu0
        %v5738 = vadd.f32 %v5591, %v5737
        %v5739 = vpop.f32.mrb[0].mxu0
        %v5740 = vadd.f32 %v5593, %v5739
        %5741 = vmatprep.mubr.f32.mxu0 0.0
        %v5742 = vand.u32 %v2093, 4294901760
        %v5743 = vsub.f32 %v2093, %v5742
        %v5744 = vand.u32 %v5743, 4294901760
        %5745 = vmatmul.mubr.f32.gmra.mrb[0].mxu0 %v5744
        %v5746 = vpop.f32.mrb[0].mxu0
        %v5747 = vadd.f32 %v5599, %v5746
        %v5748 = vpop.f32.mrb[0].mxu0
        %v5749 = vadd.f32 %v5601, %v5748
        %5750 = vmatprep.mubr.f32.mxu0 0.0
        %v5751 = vand.u32 %v2096, 4294901760
        %v5752 = vsub.f32 %v2096, %v5751
        %v5753 = vand.u32 %v5752, 4294901760
        %5754 = vmatmul.mubr.f32.gmra.mrb[0].mxu0 %v5753
        %v5755 = vpop.f32.mrb[0].mxu0
        %v5756 = vadd.f32 %v5607, %v5755
        %v5757 = vpop.f32.mrb[0].mxu0
        %v5758 = vadd.f32 %v5609, %v5757
        %5759 = vmatprep.mubr.f32.mxu0 0.0
        %v5760 = vand.u32 %v2099, 4294901760
        %v5761 = vsub.f32 %v2099, %v5760
        %v5762 = vand.u32 %v5761, 4294901760
        %5763 = vmatmul.mubr.f32.gmra.mrb[0].mxu0 %v5762
        %v5764 = vpop.f32.mrb[0].mxu0
        %v5765 = vadd.f32 %v5615, %v5764
        %v5766 = vpop.f32.mrb[0].mxu0
        %v5767 = vadd.f32 %v5617, %v5766
        %5768 = vmatprep.mubr.f32.mxu0 0.0
        %v5769 = vand.u32 %v2102, 4294901760
        %v5770 = vsub.f32 %v2102, %v5769
        %v5771 = vand.u32 %v5770, 4294901760
        %5772 = vmatmul.mubr.f32.gmra.mrb[0].mxu0 %v5771
        %v5773 = vpop.f32.mrb[0].mxu0
        %v5774 = vadd.f32 %v5623, %v5773
        %v5775 = vpop.f32.mrb[0].mxu0
        %v5776 = vadd.f32 %v5625, %v5775
        %5777 = vmatprep.mubr.f32.mxu0 0.0
        %v5778 = vand.u32 %v2105, 4294901760
        %v5779 = vsub.f32 %v2105, %v5778
        %v5780 = vand.u32 %v5779, 4294901760
        %5781 = vmatmul.mubr.f32.gmra.mrb[0].mxu0 %v5780
        %v5782 = vpop.f32.mrb[0].mxu0
        %v5783 = vadd.f32 %v5631, %v5782
        %v5784 = vpop.f32.mrb[0].mxu0
        %v5785 = vadd.f32 %v5633, %v5784
        %5786 = vmatprep.mubr.f32.mxu0 0.0
        %v5787 = vand.u32 %v2108, 4294901760
        %v5788 = vsub.f32 %v2108, %v5787
        %v5789 = vand.u32 %v5788, 4294901760
        %5790 = vmatmul.mubr.f32.gmra.mrb[0].mxu0 %v5789
        %v5791 = vpop.f32.mrb[0].mxu0
        %v5792 = vadd.f32 %v5639, %v5791
        %v5793 = vpop.f32.mrb[0].mxu0
        %v5794 = vadd.f32 %v5641, %v5793
        %5795 = vdwg.mxu0
        %v5796 = vand.u32 %v4093, 4294901760
        %v5797 = vsub.f32 %v4093, %v5796
        %v5798 = vand.u32 %v5797, 4294901760
        %5799 = vmatprep.subr.mxu0 %v5798
        %v5800 = vand.u32 %v4092, 4294901760
        %v5801 = vsub.f32 %v4092, %v5800
        %v5802 = vand.u32 %v5801, 4294901760
        %5803 = vmatpush1.msra.mxu0 %v5802
        %v5804 = vand.u32 %v4097, 4294901760
        %v5805 = vsub.f32 %v4097, %v5804
        %v5806 = vand.u32 %v5805, 4294901760
        %5807 = vmatprep.subr.mxu0 %v5806
        %v5808 = vand.u32 %v4096, 4294901760
        %v5809 = vsub.f32 %v4096, %v5808
        %v5810 = vand.u32 %v5809, 4294901760
        %5811 = vmatpush1.msra.mxu0 %v5810
        %v5812 = vand.u32 %v4101, 4294901760
        %v5813 = vsub.f32 %v4101, %v5812
        %v5814 = vand.u32 %v5813, 4294901760
        %5815 = vmatprep.subr.mxu0 %v5814
        %v5816 = vand.u32 %v4100, 4294901760
        %v5817 = vsub.f32 %v4100, %v5816
        %v5818 = vand.u32 %v5817, 4294901760
        %5819 = vmatpush1.msra.mxu0 %v5818
        %v5820 = vand.u32 %v4105, 4294901760
        %v5821 = vsub.f32 %v4105, %v5820
        %v5822 = vand.u32 %v5821, 4294901760
        %5823 = vmatprep.subr.mxu0 %v5822
        %v5824 = vand.u32 %v4104, 4294901760
        %v5825 = vsub.f32 %v4104, %v5824
        %v5826 = vand.u32 %v5825, 4294901760
        %5827 = vmatpush1.msra.mxu0 %v5826
        %v5828 = vand.u32 %v4109, 4294901760
        %v5829 = vsub.f32 %v4109, %v5828
        %v5830 = vand.u32 %v5829, 4294901760
        %5831 = vmatprep.subr.mxu0 %v5830
        %v5832 = vand.u32 %v4108, 4294901760
        %v5833 = vsub.f32 %v4108, %v5832
        %v5834 = vand.u32 %v5833, 4294901760
        %5835 = vmatpush1.msra.mxu0 %v5834
        %v5836 = vand.u32 %v4113, 4294901760
        %v5837 = vsub.f32 %v4113, %v5836
        %v5838 = vand.u32 %v5837, 4294901760
        %5839 = vmatprep.subr.mxu0 %v5838
        %v5840 = vand.u32 %v4112, 4294901760
        %v5841 = vsub.f32 %v4112, %v5840
        %v5842 = vand.u32 %v5841, 4294901760
        %5843 = vmatpush1.msra.mxu0 %v5842
        %v5844 = vand.u32 %v4117, 4294901760
        %v5845 = vsub.f32 %v4117, %v5844
        %v5846 = vand.u32 %v5845, 4294901760
        %5847 = vmatprep.subr.mxu0 %v5846
        %v5848 = vand.u32 %v4116, 4294901760
        %v5849 = vsub.f32 %v4116, %v5848
        %v5850 = vand.u32 %v5849, 4294901760
        %5851 = vmatpush1.msra.mxu0 %v5850
        %v5852 = vand.u32 %v4121, 4294901760
        %v5853 = vsub.f32 %v4121, %v5852
        %v5854 = vand.u32 %v5853, 4294901760
        %5855 = vmatprep.subr.mxu0 %v5854
        %v5856 = vand.u32 %v4120, 4294901760
        %v5857 = vsub.f32 %v4120, %v5856
        %v5858 = vand.u32 %v5857, 4294901760
        %5859 = vmatpush1.msra.mxu0 %v5858
        %5860 = vmatprep.subr.mxu0 0.0
        %5861 = vmatpush1.msra.mxu0 0.0
        %5862 = vmatprep.subr.mxu0 0.0
        %5863 = vmatpush1.msra.mxu0 0.0
        %5864 = vmatprep.subr.mxu0 0.0
        %5865 = vmatpush1.msra.mxu0 0.0
        %5866 = vmatprep.subr.mxu0 0.0
        %5867 = vmatpush1.msra.mxu0 0.0
        %5868 = vmatprep.subr.mxu0 0.0
        %5869 = vmatpush1.msra.mxu0 0.0
        %5870 = vmatprep.subr.mxu0 0.0
        %5871 = vmatpush1.msra.mxu0 0.0
        %5872 = vmatprep.subr.mxu0 0.0
        %5873 = vmatpush1.msra.mxu0 0.0
        %5874 = vmatprep.subr.mxu0 0.0
        %5875 = vmatpush1.msra.mxu0 0.0
        %5876 = vmatprep.subr.mxu0 0.0
        %5877 = vmatpush1.msra.mxu0 0.0
        %5878 = vmatprep.subr.mxu0 0.0
        %5879 = vmatpush1.msra.mxu0 0.0
        %5880 = vmatprep.subr.mxu0 0.0
        %5881 = vmatpush1.msra.mxu0 0.0
        %5882 = vmatprep.subr.mxu0 0.0
        %5883 = vmatpush1.msra.mxu0 0.0
        %5884 = vmatprep.subr.mxu0 0.0
        %5885 = vmatpush1.msra.mxu0 0.0
        %5886 = vmatprep.subr.mxu0 0.0
        %5887 = vmatpush1.msra.mxu0 0.0
        %5888 = vmatprep.subr.mxu0 0.0
        %5889 = vmatpush1.msra.mxu0 0.0
        %5890 = vmatprep.subr.mxu0 0.0
        %5891 = vmatpush1.msra.mxu0 0.0
        %5892 = vmatprep.subr.mxu0 0.0
        %5893 = vmatpush1.msra.mxu0 0.0
        %5894 = vmatprep.subr.mxu0 0.0
        %5895 = vmatpush1.msra.mxu0 0.0
        %5896 = vmatprep.subr.mxu0 0.0
        %5897 = vmatpush1.msra.mxu0 0.0
        %5898 = vmatprep.subr.mxu0 0.0
        %5899 = vmatpush1.msra.mxu0 0.0
        %5900 = vmatprep.subr.mxu0 0.0
        %5901 = vmatpush1.msra.mxu0 0.0
        %5902 = vmatprep.subr.mxu0 0.0
        %5903 = vmatpush1.msra.mxu0 0.0
        %5904 = vmatprep.subr.mxu0 0.0
        %5905 = vmatpush1.msra.mxu0 0.0
        %5906 = vmatprep.subr.mxu0 0.0
        %5907 = vmatpush1.msra.mxu0 0.0
        %5908 = vmatprep.mubr.f32.mxu0 0.0
        %v5909 = vand.u32 %v2087, 4294901760
        %5910 = vmatmul.mubr.f32.gmra.mrb[0].mxu0 %v5909
        %v5911 = vpop.f32.mrb[0].mxu0
        %v5912 = vadd.f32 %v5729, %v5911
        %v5913 = vpop.f32.mrb[0].mxu0
        %v5914 = vadd.f32 %v5731, %v5913
        %5915 = vmatprep.mubr.f32.mxu0 0.0
        %v5916 = vand.u32 %v2090, 4294901760
        %5917 = vmatmul.mubr.f32.gmra.mrb[0].mxu0 %v5916
        %v5918 = vpop.f32.mrb[0].mxu0
        %v5919 = vadd.f32 %v5738, %v5918
        %v5920 = vpop.f32.mrb[0].mxu0
        %v5921 = vadd.f32 %v5740, %v5920
        %5922 = vmatprep.mubr.f32.mxu0 0.0
        %v5923 = vand.u32 %v2093, 4294901760
        %5924 = vmatmul.mubr.f32.gmra.mrb[0].mxu0 %v5923
        %v5925 = vpop.f32.mrb[0].mxu0
        %v5926 = vadd.f32 %v5747, %v5925
        %v5927 = vpop.f32.mrb[0].mxu0
        %v5928 = vadd.f32 %v5749, %v5927
        %5929 = vmatprep.mubr.f32.mxu0 0.0
        %v5930 = vand.u32 %v2096, 4294901760
        %5931 = vmatmul.mubr.f32.gmra.mrb[0].mxu0 %v5930
        %v5932 = vpop.f32.mrb[0].mxu0
        %v5933 = vadd.f32 %v5756, %v5932
        %v5934 = vpop.f32.mrb[0].mxu0
        %v5935 = vadd.f32 %v5758, %v5934
        %5936 = vmatprep.mubr.f32.mxu0 0.0
        %v5937 = vand.u32 %v2099, 4294901760
        %5938 = vmatmul.mubr.f32.gmra.mrb[0].mxu0 %v5937
        %v5939 = vpop.f32.mrb[0].mxu0
        %v5940 = vadd.f32 %v5765, %v5939
        %v5941 = vpop.f32.mrb[0].mxu0
        %v5942 = vadd.f32 %v5767, %v5941
        %5943 = vmatprep.mubr.f32.mxu0 0.0
        %v5944 = vand.u32 %v2102, 4294901760
        %5945 = vmatmul.mubr.f32.gmra.mrb[0].mxu0 %v5944
        %v5946 = vpop.f32.mrb[0].mxu0
        %v5947 = vadd.f32 %v5774, %v5946
        %v5948 = vpop.f32.mrb[0].mxu0
        %v5949 = vadd.f32 %v5776, %v5948
        %5950 = vmatprep.mubr.f32.mxu0 0.0
        %v5951 = vand.u32 %v2105, 4294901760
        %5952 = vmatmul.mubr.f32.gmra.mrb[0].mxu0 %v5951
        %v5953 = vpop.f32.mrb[0].mxu0
        %v5954 = vadd.f32 %v5783, %v5953
        %v5955 = vpop.f32.mrb[0].mxu0
        %v5956 = vadd.f32 %v5785, %v5955
        %5957 = vmatprep.mubr.f32.mxu0 0.0
        %v5958 = vand.u32 %v2108, 4294901760
        %5959 = vmatmul.mubr.f32.gmra.mrb[0].mxu0 %v5958
        %v5960 = vpop.f32.mrb[0].mxu0
        %v5961 = vadd.f32 %v5792, %v5960
        %v5962 = vpop.f32.mrb[0].mxu0
        %v5963 = vadd.f32 %v5794, %v5962
        %5964 = vdwg.mxu0
        %v5965 = vand.u32 %v4093, 4294901760
        %5966 = vmatprep.subr.mxu0 %v5965
        %v5967 = vand.u32 %v4092, 4294901760
        %5968 = vmatpush1.msra.mxu0 %v5967
        %v5969 = vand.u32 %v4097, 4294901760
        %5970 = vmatprep.subr.mxu0 %v5969
        %v5971 = vand.u32 %v4096, 4294901760
        %5972 = vmatpush1.msra.mxu0 %v5971
        %v5973 = vand.u32 %v4101, 4294901760
        %5974 = vmatprep.subr.mxu0 %v5973
        %v5975 = vand.u32 %v4100, 4294901760
        %5976 = vmatpush1.msra.mxu0 %v5975
        %v5977 = vand.u32 %v4105, 4294901760
        %5978 = vmatprep.subr.mxu0 %v5977
        %v5979 = vand.u32 %v4104, 4294901760
        %5980 = vmatpush1.msra.mxu0 %v5979
        %v5981 = vand.u32 %v4109, 4294901760
        %5982 = vmatprep.subr.mxu0 %v5981
        %v5983 = vand.u32 %v4108, 4294901760
        %5984 = vmatpush1.msra.mxu0 %v5983
        %v5985 = vand.u32 %v4113, 4294901760
        %5986 = vmatprep.subr.mxu0 %v5985
        %v5987 = vand.u32 %v4112, 4294901760
        %5988 = vmatpush1.msra.mxu0 %v5987
        %v5989 = vand.u32 %v4117, 4294901760
        %5990 = vmatprep.subr.mxu0 %v5989
        %v5991 = vand.u32 %v4116, 4294901760
        %5992 = vmatpush1.msra.mxu0 %v5991
        %v5993 = vand.u32 %v4121, 4294901760
        %5994 = vmatprep.subr.mxu0 %v5993
        %v5995 = vand.u32 %v4120, 4294901760
        %5996 = vmatpush1.msra.mxu0 %v5995
        %5997 = vmatprep.subr.mxu0 0.0
        %5998 = vmatpush1.msra.mxu0 0.0
        %5999 = vmatprep.subr.mxu0 0.0
        %6000 = vmatpush1.msra.mxu0 0.0
        %6001 = vmatprep.subr.mxu0 0.0
        %6002 = vmatpush1.msra.mxu0 0.0
        %6003 = vmatprep.subr.mxu0 0.0
        %6004 = vmatpush1.msra.mxu0 0.0
        %6005 = vmatprep.subr.mxu0 0.0
        %6006 = vmatpush1.msra.mxu0 0.0
        %6007 = vmatprep.subr.mxu0 0.0
        %6008 = vmatpush1.msra.mxu0 0.0
        %6009 = vmatprep.subr.mxu0 0.0
        %6010 = vmatpush1.msra.mxu0 0.0
        %6011 = vmatprep.subr.mxu0 0.0
        %6012 = vmatpush1.msra.mxu0 0.0
        %6013 = vmatprep.subr.mxu0 0.0
        %6014 = vmatpush1.msra.mxu0 0.0
        %6015 = vmatprep.subr.mxu0 0.0
        %6016 = vmatpush1.msra.mxu0 0.0
        %6017 = vmatprep.subr.mxu0 0.0
        %6018 = vmatpush1.msra.mxu0 0.0
        %6019 = vmatprep.subr.mxu0 0.0
        %6020 = vmatpush1.msra.mxu0 0.0
        %6021 = vmatprep.subr.mxu0 0.0
        %6022 = vmatpush1.msra.mxu0 0.0
        %6023 = vmatprep.subr.mxu0 0.0
        %6024 = vmatpush1.msra.mxu0 0.0
        %6025 = vmatprep.subr.mxu0 0.0
        %6026 = vmatpush1.msra.mxu0 0.0
        %6027 = vmatprep.subr.mxu0 0.0
        %6028 = vmatpush1.msra.mxu0 0.0
        %6029 = vmatprep.subr.mxu0 0.0
        %6030 = vmatpush1.msra.mxu0 0.0
        %6031 = vmatprep.subr.mxu0 0.0
        %6032 = vmatpush1.msra.mxu0 0.0
        %6033 = vmatprep.subr.mxu0 0.0
        %6034 = vmatpush1.msra.mxu0 0.0
        %6035 = vmatprep.subr.mxu0 0.0
        %6036 = vmatpush1.msra.mxu0 0.0
        %6037 = vmatprep.subr.mxu0 0.0
        %6038 = vmatpush1.msra.mxu0 0.0
        %6039 = vmatprep.subr.mxu0 0.0
        %6040 = vmatpush1.msra.mxu0 0.0
        %6041 = vmatprep.subr.mxu0 0.0
        %6042 = vmatpush1.msra.mxu0 0.0
        %6043 = vmatprep.subr.mxu0 0.0
        %6044 = vmatpush1.msra.mxu0 0.0
        %6045 = vmatprep.mubr.f32.mxu0 0.0
        %v6046 = vand.u32 %v2087, 4294901760
        %6047 = vmatmul.mubr.f32.gmra.mrb[0].mxu0 %v6046
        %v6048 = vpop.f32.mrb[0].mxu0
        %v6049 = vadd.f32 %v5912, %v6048
        %v6050 = vpop.f32.mrb[0].mxu0
        %v6051 = vadd.f32 %v5914, %v6050
        %6052 = vmatprep.mubr.f32.mxu0 0.0
        %v6053 = vand.u32 %v2090, 4294901760
        %6054 = vmatmul.mubr.f32.gmra.mrb[0].mxu0 %v6053
        %v6055 = vpop.f32.mrb[0].mxu0
        %v6056 = vadd.f32 %v5919, %v6055
        %v6057 = vpop.f32.mrb[0].mxu0
        %v6058 = vadd.f32 %v5921, %v6057
        %6059 = vmatprep.mubr.f32.mxu0 0.0
        %v6060 = vand.u32 %v2093, 4294901760
        %6061 = vmatmul.mubr.f32.gmra.mrb[0].mxu0 %v6060
        %v6062 = vpop.f32.mrb[0].mxu0
        %v6063 = vadd.f32 %v5926, %v6062
        %v6064 = vpop.f32.mrb[0].mxu0
        %v6065 = vadd.f32 %v5928, %v6064
        %6066 = vmatprep.mubr.f32.mxu0 0.0
        %v6067 = vand.u32 %v2096, 4294901760
        %6068 = vmatmul.mubr.f32.gmra.mrb[0].mxu0 %v6067
        %v6069 = vpop.f32.mrb[0].mxu0
        %v6070 = vadd.f32 %v5933, %v6069
        %v6071 = vpop.f32.mrb[0].mxu0
        %v6072 = vadd.f32 %v5935, %v6071
        %6073 = vmatprep.mubr.f32.mxu0 0.0
        %v6074 = vand.u32 %v2099, 4294901760
        %6075 = vmatmul.mubr.f32.gmra.mrb[0].mxu0 %v6074
        %v6076 = vpop.f32.mrb[0].mxu0
        %v6077 = vadd.f32 %v5940, %v6076
        %v6078 = vpop.f32.mrb[0].mxu0
        %v6079 = vadd.f32 %v5942, %v6078
        %6080 = vmatprep.mubr.f32.mxu0 0.0
        %v6081 = vand.u32 %v2102, 4294901760
        %6082 = vmatmul.mubr.f32.gmra.mrb[0].mxu0 %v6081
        %v6083 = vpop.f32.mrb[0].mxu0
        %v6084 = vadd.f32 %v5947, %v6083
        %v6085 = vpop.f32.mrb[0].mxu0
        %v6086 = vadd.f32 %v5949, %v6085
        %6087 = vmatprep.mubr.f32.mxu0 0.0
        %v6088 = vand.u32 %v2105, 4294901760
        %6089 = vmatmul.mubr.f32.gmra.mrb[0].mxu0 %v6088
        %v6090 = vpop.f32.mrb[0].mxu0
        %v6091 = vadd.f32 %v5954, %v6090
        %v6092 = vpop.f32.mrb[0].mxu0
        %v6093 = vadd.f32 %v5956, %v6092
        %6094 = vmatprep.mubr.f32.mxu0 0.0
        %v6095 = vand.u32 %v2108, 4294901760
        %6096 = vmatmul.mubr.f32.gmra.mrb[0].mxu0 %v6095
        %v6097 = vpop.f32.mrb[0].mxu0
        %v6098 = vadd.f32 %v5961, %v6097
        %v6099 = vpop.f32.mrb[0].mxu0
        %v6100 = vadd.f32 %v5963, %v6099
        %6101 = vdwg.mxu0
        %v6102 = vtanh.pop %v5059
        %v6103 = vtanh.pop %v5061
        %v6104 = vtanh.pop %v6049
        %v6105 = vtanh.pop %v6051
        %v6106 = vtanh.pop %v5066
        %v6107 = vtanh.pop %v5068
        %v6108 = vtanh.pop %v6056
        %v6109 = vtanh.pop %v6058
        %v6110 = vtanh.pop %v5073
        %v6111 = vtanh.pop %v5075
        %v6112 = vtanh.pop %v6063
        %v6113 = vtanh.pop %v6065
        %v6114 = vtanh.pop %v5080
        %v6115 = vtanh.pop %v5082
        %v6116 = vtanh.pop %v6070
        %v6117 = vtanh.pop %v6072
        %v6118 = vtanh.pop %v5087
        %v6119 = vtanh.pop %v5089
        %v6120 = vtanh.pop %v6077
        %v6121 = vtanh.pop %v6079
        %v6122 = vtanh.pop %v5094
        %v6123 = vtanh.pop %v5096
        %v6124 = vtanh.pop %v6084
        %v6125 = vtanh.pop %v6086
        %v6126 = vtanh.pop %v5101
        %v6127 = vtanh.pop %v5103
        %v6128 = vtanh.pop %v6091
        %v6129 = vtanh.pop %v6093
        %v6130 = vtanh.pop %v5108
        %v6131 = vtanh.pop %v5110
        %v6132 = vtanh.pop %v6098
        %v6133 = vtanh.pop %v6100
        %v6134 = vand.u32 %v6103, 4294901760
        %6135 = vmatprep.subr.mxu0 %v6134
        %v6136 = vand.u32 %v6102, 4294901760
        %6137 = vmatpush1.msra.mxu0 %v6136
        %v6138 = vand.u32 %v6107, 4294901760
        %6139 = vmatprep.subr.mxu0 %v6138
        %v6140 = vand.u32 %v6106, 4294901760
        %6141 = vmatpush1.msra.mxu0 %v6140
        %v6142 = vand.u32 %v6111, 4294901760
        %6143 = vmatprep.subr.mxu0 %v6142
        %v6144 = vand.u32 %v6110, 4294901760
        %6145 = vmatpush1.msra.mxu0 %v6144
        %v6146 = vand.u32 %v6115, 4294901760
        %6147 = vmatprep.subr.mxu0 %v6146
        %v6148 = vand.u32 %v6114, 4294901760
        %6149 = vmatpush1.msra.mxu0 %v6148
        %v6150 = vand.u32 %v6119, 4294901760
        %6151 = vmatprep.subr.mxu0 %v6150
        %v6152 = vand.u32 %v6118, 4294901760
        %6153 = vmatpush1.msra.mxu0 %v6152
        %v6154 = vand.u32 %v6123, 4294901760
        %6155 = vmatprep.subr.mxu0 %v6154
        %v6156 = vand.u32 %v6122, 4294901760
        %6157 = vmatpush1.msra.mxu0 %v6156
        %v6158 = vand.u32 %v6127, 4294901760
        %6159 = vmatprep.subr.mxu0 %v6158
        %v6160 = vand.u32 %v6126, 4294901760
        %6161 = vmatpush1.msra.mxu0 %v6160
        %v6162 = vand.u32 %v6131, 4294901760
        %6163 = vmatprep.subr.mxu0 %v6162
        %v6164 = vand.u32 %v6130, 4294901760
        %6165 = vmatpush1.msra.mxu0 %v6164
        %6166 = vmatprep.subr.mxu0 0.0
        %6167 = vmatpush1.msra.mxu0 0.0
        %6168 = vmatprep.subr.mxu0 0.0
        %6169 = vmatpush1.msra.mxu0 0.0
        %6170 = vmatprep.subr.mxu0 0.0
        %6171 = vmatpush1.msra.mxu0 0.0
        %6172 = vmatprep.subr.mxu0 0.0
        %6173 = vmatpush1.msra.mxu0 0.0
        %6174 = vmatprep.subr.mxu0 0.0
        %6175 = vmatpush1.msra.mxu0 0.0
        %6176 = vmatprep.subr.mxu0 0.0
        %6177 = vmatpush1.msra.mxu0 0.0
        %6178 = vmatprep.subr.mxu0 0.0
        %6179 = vmatpush1.msra.mxu0 0.0
        %6180 = vmatprep.subr.mxu0 0.0
        %6181 = vmatpush1.msra.mxu0 0.0
        %6182 = vmatprep.subr.mxu0 0.0
        %6183 = vmatpush1.msra.mxu0 0.0
        %6184 = vmatprep.subr.mxu0 0.0
        %6185 = vmatpush1.msra.mxu0 0.0
        %6186 = vmatprep.subr.mxu0 0.0
        %6187 = vmatpush1.msra.mxu0 0.0
        %6188 = vmatprep.subr.mxu0 0.0
        %6189 = vmatpush1.msra.mxu0 0.0
        %6190 = vmatprep.subr.mxu0 0.0
        %6191 = vmatpush1.msra.mxu0 0.0
        %6192 = vmatprep.subr.mxu0 0.0
        %6193 = vmatpush1.msra.mxu0 0.0
        %6194 = vmatprep.subr.mxu0 0.0
        %6195 = vmatpush1.msra.mxu0 0.0
        %6196 = vmatprep.subr.mxu0 0.0
        %6197 = vmatpush1.msra.mxu0 0.0
        %6198 = vmatprep.subr.mxu0 0.0
        %6199 = vmatpush1.msra.mxu0 0.0
        %6200 = vmatprep.subr.mxu0 0.0
        %6201 = vmatpush1.msra.mxu0 0.0
        %6202 = vmatprep.subr.mxu0 0.0
        %6203 = vmatpush1.msra.mxu0 0.0
        %6204 = vmatprep.subr.mxu0 0.0
        %6205 = vmatpush1.msra.mxu0 0.0
        %6206 = vmatprep.subr.mxu0 0.0
        %6207 = vmatpush1.msra.mxu0 0.0
        %6208 = vmatprep.subr.mxu0 0.0
        %6209 = vmatpush1.msra.mxu0 0.0
        %6210 = vmatprep.subr.mxu0 0.0
        %6211 = vmatpush1.msra.mxu0 0.0
        %6212 = vmatprep.subr.mxu0 0.0
        %6213 = vmatpush1.msra.mxu0 0.0
        %6214 = vmatprep.mubr.f32.mxu0 0.0
        %v6215 = vand.u32 %v2087, 4294901760
        %v6216 = vsub.f32 %v2087, %v6215
        %v6217 = vand.u32 %v6216, 4294901760
        %v6218 = vsub.f32 %v6216, %v6217
        %v6219 = vand.u32 %v6218, 4294901760
        %6220 = vmatmul.mubr.f32.gmra.mrb[0].mxu0 %v6219
        %v6221 = vpop.f32.mrb[0].mxu0
        %v6222 = vadd.f32 %v2048, %v6221
        %v6223 = vpop.f32.mrb[0].mxu0
        %v6224 = vadd.f32 %v2048, %v6223
        %6225 = vmatprep.mubr.f32.mxu0 0.0
        %v6226 = vand.u32 %v2090, 4294901760
        %v6227 = vsub.f32 %v2090, %v6226
        %v6228 = vand.u32 %v6227, 4294901760
        %v6229 = vsub.f32 %v6227, %v6228
        %v6230 = vand.u32 %v6229, 4294901760
        %6231 = vmatmul.mubr.f32.gmra.mrb[0].mxu0 %v6230
        %v6232 = vpop.f32.mrb[0].mxu0
        %v6233 = vadd.f32 %v2053, %v6232
        %v6234 = vpop.f32.mrb[0].mxu0
        %v6235 = vadd.f32 %v2053, %v6234
        %6236 = vmatprep.mubr.f32.mxu0 0.0
        %v6237 = vand.u32 %v2093, 4294901760
        %v6238 = vsub.f32 %v2093, %v6237
        %v6239 = vand.u32 %v6238, 4294901760
        %v6240 = vsub.f32 %v6238, %v6239
        %v6241 = vand.u32 %v6240, 4294901760
        %6242 = vmatmul.mubr.f32.gmra.mrb[0].mxu0 %v6241
        %v6243 = vpop.f32.mrb[0].mxu0
        %v6244 = vadd.f32 %v2058, %v6243
        %v6245 = vpop.f32.mrb[0].mxu0
        %v6246 = vadd.f32 %v2058, %v6245
        %6247 = vmatprep.mubr.f32.mxu0 0.0
        %v6248 = vand.u32 %v2096, 4294901760
        %v6249 = vsub.f32 %v2096, %v6248
        %v6250 = vand.u32 %v6249, 4294901760
        %v6251 = vsub.f32 %v6249, %v6250
        %v6252 = vand.u32 %v6251, 4294901760
        %6253 = vmatmul.mubr.f32.gmra.mrb[0].mxu0 %v6252
        %v6254 = vpop.f32.mrb[0].mxu0
        %v6255 = vadd.f32 %v2063, %v6254
        %v6256 = vpop.f32.mrb[0].mxu0
        %v6257 = vadd.f32 %v2063, %v6256
        %6258 = vmatprep.mubr.f32.mxu0 0.0
        %v6259 = vand.u32 %v2099, 4294901760
        %v6260 = vsub.f32 %v2099, %v6259
        %v6261 = vand.u32 %v6260, 4294901760
        %v6262 = vsub.f32 %v6260, %v6261
        %v6263 = vand.u32 %v6262, 4294901760
        %6264 = vmatmul.mubr.f32.gmra.mrb[0].mxu0 %v6263
        %v6265 = vpop.f32.mrb[0].mxu0
        %v6266 = vadd.f32 %v2068, %v6265
        %v6267 = vpop.f32.mrb[0].mxu0
        %v6268 = vadd.f32 %v2068, %v6267
        %6269 = vmatprep.mubr.f32.mxu0 0.0
        %v6270 = vand.u32 %v2102, 4294901760
        %v6271 = vsub.f32 %v2102, %v6270
        %v6272 = vand.u32 %v6271, 4294901760
        %v6273 = vsub.f32 %v6271, %v6272
        %v6274 = vand.u32 %v6273, 4294901760
        %6275 = vmatmul.mubr.f32.gmra.mrb[0].mxu0 %v6274
        %v6276 = vpop.f32.mrb[0].mxu0
        %v6277 = vadd.f32 %v2073, %v6276
        %v6278 = vpop.f32.mrb[0].mxu0
        %v6279 = vadd.f32 %v2073, %v6278
        %6280 = vmatprep.mubr.f32.mxu0 0.0
        %v6281 = vand.u32 %v2105, 4294901760
        %v6282 = vsub.f32 %v2105, %v6281
        %v6283 = vand.u32 %v6282, 4294901760
        %v6284 = vsub.f32 %v6282, %v6283
        %v6285 = vand.u32 %v6284, 4294901760
        %6286 = vmatmul.mubr.f32.gmra.mrb[0].mxu0 %v6285
        %v6287 = vpop.f32.mrb[0].mxu0
        %v6288 = vadd.f32 %v2078, %v6287
        %v6289 = vpop.f32.mrb[0].mxu0
        %v6290 = vadd.f32 %v2078, %v6289
        %6291 = vmatprep.mubr.f32.mxu0 0.0
        %v6292 = vand.u32 %v2108, 4294901760
        %v6293 = vsub.f32 %v2108, %v6292
        %v6294 = vand.u32 %v6293, 4294901760
        %v6295 = vsub.f32 %v6293, %v6294
        %v6296 = vand.u32 %v6295, 4294901760
        %6297 = vmatmul.mubr.f32.gmra.mrb[0].mxu0 %v6296
        %v6298 = vpop.f32.mrb[0].mxu0
        %v6299 = vadd.f32 %v2083, %v6298
        %v6300 = vpop.f32.mrb[0].mxu0
        %v6301 = vadd.f32 %v2083, %v6300
        %6302 = vdwg.mxu0
        %v6303 = vand.u32 %v6103, 4294901760
        %v6304 = vsub.f32 %v6103, %v6303
        %v6305 = vand.u32 %v6304, 4294901760
        %v6306 = vsub.f32 %v6304, %v6305
        %v6307 = vand.u32 %v6306, 4294901760
        %6308 = vmatprep.subr.mxu0 %v6307
        %v6309 = vand.u32 %v6102, 4294901760
        %v6310 = vsub.f32 %v6102, %v6309
        %v6311 = vand.u32 %v6310, 4294901760
        %v6312 = vsub.f32 %v6310, %v6311
        %v6313 = vand.u32 %v6312, 4294901760
        %6314 = vmatpush1.msra.mxu0 %v6313
        %v6315 = vand.u32 %v6107, 4294901760
        %v6316 = vsub.f32 %v6107, %v6315
        %v6317 = vand.u32 %v6316, 4294901760
        %v6318 = vsub.f32 %v6316, %v6317
        %v6319 = vand.u32 %v6318, 4294901760
        %6320 = vmatprep.subr.mxu0 %v6319
        %v6321 = vand.u32 %v6106, 4294901760
        %v6322 = vsub.f32 %v6106, %v6321
        %v6323 = vand.u32 %v6322, 4294901760
        %v6324 = vsub.f32 %v6322, %v6323
        %v6325 = vand.u32 %v6324, 4294901760
        %6326 = vmatpush1.msra.mxu0 %v6325
        %v6327 = vand.u32 %v6111, 4294901760
        %v6328 = vsub.f32 %v6111, %v6327
        %v6329 = vand.u32 %v6328, 4294901760
        %v6330 = vsub.f32 %v6328, %v6329
        %v6331 = vand.u32 %v6330, 4294901760
        %6332 = vmatprep.subr.mxu0 %v6331
        %v6333 = vand.u32 %v6110, 4294901760
        %v6334 = vsub.f32 %v6110, %v6333
        %v6335 = vand.u32 %v6334, 4294901760
        %v6336 = vsub.f32 %v6334, %v6335
        %v6337 = vand.u32 %v6336, 4294901760
        %6338 = vmatpush1.msra.mxu0 %v6337
        %v6339 = vand.u32 %v6115, 4294901760
        %v6340 = vsub.f32 %v6115, %v6339
        %v6341 = vand.u32 %v6340, 4294901760
        %v6342 = vsub.f32 %v6340, %v6341
        %v6343 = vand.u32 %v6342, 4294901760
        %6344 = vmatprep.subr.mxu0 %v6343
        %v6345 = vand.u32 %v6114, 4294901760
        %v6346 = vsub.f32 %v6114, %v6345
        %v6347 = vand.u32 %v6346, 4294901760
        %v6348 = vsub.f32 %v6346, %v6347
        %v6349 = vand.u32 %v6348, 4294901760
        %6350 = vmatpush1.msra.mxu0 %v6349
        %v6351 = vand.u32 %v6119, 4294901760
        %v6352 = vsub.f32 %v6119, %v6351
        %v6353 = vand.u32 %v6352, 4294901760
        %v6354 = vsub.f32 %v6352, %v6353
        %v6355 = vand.u32 %v6354, 4294901760
        %6356 = vmatprep.subr.mxu0 %v6355
        %v6357 = vand.u32 %v6118, 4294901760
        %v6358 = vsub.f32 %v6118, %v6357
        %v6359 = vand.u32 %v6358, 4294901760
        %v6360 = vsub.f32 %v6358, %v6359
        %v6361 = vand.u32 %v6360, 4294901760
        %6362 = vmatpush1.msra.mxu0 %v6361
        %v6363 = vand.u32 %v6123, 4294901760
        %v6364 = vsub.f32 %v6123, %v6363
        %v6365 = vand.u32 %v6364, 4294901760
        %v6366 = vsub.f32 %v6364, %v6365
        %v6367 = vand.u32 %v6366, 4294901760
        %6368 = vmatprep.subr.mxu0 %v6367
        %v6369 = vand.u32 %v6122, 4294901760
        %v6370 = vsub.f32 %v6122, %v6369
        %v6371 = vand.u32 %v6370, 4294901760
        %v6372 = vsub.f32 %v6370, %v6371
        %v6373 = vand.u32 %v6372, 4294901760
        %6374 = vmatpush1.msra.mxu0 %v6373
        %v6375 = vand.u32 %v6127, 4294901760
        %v6376 = vsub.f32 %v6127, %v6375
        %v6377 = vand.u32 %v6376, 4294901760
        %v6378 = vsub.f32 %v6376, %v6377
        %v6379 = vand.u32 %v6378, 4294901760
        %6380 = vmatprep.subr.mxu0 %v6379
        %v6381 = vand.u32 %v6126, 4294901760
        %v6382 = vsub.f32 %v6126, %v6381
        %v6383 = vand.u32 %v6382, 4294901760
        %v6384 = vsub.f32 %v6382, %v6383
        %v6385 = vand.u32 %v6384, 4294901760
        %6386 = vmatpush1.msra.mxu0 %v6385
        %v6387 = vand.u32 %v6131, 4294901760
        %v6388 = vsub.f32 %v6131, %v6387
        %v6389 = vand.u32 %v6388, 4294901760
        %v6390 = vsub.f32 %v6388, %v6389
        %v6391 = vand.u32 %v6390, 4294901760
        %6392 = vmatprep.subr.mxu0 %v6391
        %v6393 = vand.u32 %v6130, 4294901760
        %v6394 = vsub.f32 %v6130, %v6393
        %v6395 = vand.u32 %v6394, 4294901760
        %v6396 = vsub.f32 %v6394, %v6395
        %v6397 = vand.u32 %v6396, 4294901760
        %6398 = vmatpush1.msra.mxu0 %v6397
        %6399 = vmatprep.subr.mxu0 0.0
        %6400 = vmatpush1.msra.mxu0 0.0
        %6401 = vmatprep.subr.mxu0 0.0
        %6402 = vmatpush1.msra.mxu0 0.0
        %6403 = vmatprep.subr.mxu0 0.0
        %6404 = vmatpush1.msra.mxu0 0.0
        %6405 = vmatprep.subr.mxu0 0.0
        %6406 = vmatpush1.msra.mxu0 0.0
        %6407 = vmatprep.subr.mxu0 0.0
        %6408 = vmatpush1.msra.mxu0 0.0
        %6409 = vmatprep.subr.mxu0 0.0
        %6410 = vmatpush1.msra.mxu0 0.0
        %6411 = vmatprep.subr.mxu0 0.0
        %6412 = vmatpush1.msra.mxu0 0.0
        %6413 = vmatprep.subr.mxu0 0.0
        %6414 = vmatpush1.msra.mxu0 0.0
        %6415 = vmatprep.subr.mxu0 0.0
        %6416 = vmatpush1.msra.mxu0 0.0
        %6417 = vmatprep.subr.mxu0 0.0
        %6418 = vmatpush1.msra.mxu0 0.0
        %6419 = vmatprep.subr.mxu0 0.0
        %6420 = vmatpush1.msra.mxu0 0.0
        %6421 = vmatprep.subr.mxu0 0.0
        %6422 = vmatpush1.msra.mxu0 0.0
        %6423 = vmatprep.subr.mxu0 0.0
        %6424 = vmatpush1.msra.mxu0 0.0
        %6425 = vmatprep.subr.mxu0 0.0
        %6426 = vmatpush1.msra.mxu0 0.0
        %6427 = vmatprep.subr.mxu0 0.0
        %6428 = vmatpush1.msra.mxu0 0.0
        %6429 = vmatprep.subr.mxu0 0.0
        %6430 = vmatpush1.msra.mxu0 0.0
        %6431 = vmatprep.subr.mxu0 0.0
        %6432 = vmatpush1.msra.mxu0 0.0
        %6433 = vmatprep.subr.mxu0 0.0
        %6434 = vmatpush1.msra.mxu0 0.0
        %6435 = vmatprep.subr.mxu0 0.0
        %6436 = vmatpush1.msra.mxu0 0.0
        %6437 = vmatprep.subr.mxu0 0.0
        %6438 = vmatpush1.msra.mxu0 0.0
        %6439 = vmatprep.subr.mxu0 0.0
        %6440 = vmatpush1.msra.mxu0 0.0
        %6441 = vmatprep.subr.mxu0 0.0
        %6442 = vmatpush1.msra.mxu0 0.0
        %6443 = vmatprep.subr.mxu0 0.0
        %6444 = vmatpush1.msra.mxu0 0.0
        %6445 = vmatprep.subr.mxu0 0.0
        %6446 = vmatpush1.msra.mxu0 0.0
        %6447 = vmatprep.mubr.f32.mxu0 0.0
        %v6448 = vand.u32 %v2087, 4294901760
        %6449 = vmatmul.mubr.f32.gmra.mrb[0].mxu0 %v6448
        %v6450 = vpop.f32.mrb[0].mxu0
        %v6451 = vadd.f32 %v6222, %v6450
        %v6452 = vpop.f32.mrb[0].mxu0
        %v6453 = vadd.f32 %v6224, %v6452
        %6454 = vmatprep.mubr.f32.mxu0 0.0
        %v6455 = vand.u32 %v2090, 4294901760
        %6456 = vmatmul.mubr.f32.gmra.mrb[0].mxu0 %v6455
        %v6457 = vpop.f32.mrb[0].mxu0
        %v6458 = vadd.f32 %v6233, %v6457
        %v6459 = vpop.f32.mrb[0].mxu0
        %v6460 = vadd.f32 %v6235, %v6459
        %6461 = vmatprep.mubr.f32.mxu0 0.0
        %v6462 = vand.u32 %v2093, 4294901760
        %6463 = vmatmul.mubr.f32.gmra.mrb[0].mxu0 %v6462
        %v6464 = vpop.f32.mrb[0].mxu0
        %v6465 = vadd.f32 %v6244, %v6464
        %v6466 = vpop.f32.mrb[0].mxu0
        %v6467 = vadd.f32 %v6246, %v6466
        %6468 = vmatprep.mubr.f32.mxu0 0.0
        %v6469 = vand.u32 %v2096, 4294901760
        %6470 = vmatmul.mubr.f32.gmra.mrb[0].mxu0 %v6469
        %v6471 = vpop.f32.mrb[0].mxu0
        %v6472 = vadd.f32 %v6255, %v6471
        %v6473 = vpop.f32.mrb[0].mxu0
        %v6474 = vadd.f32 %v6257, %v6473
        %6475 = vmatprep.mubr.f32.mxu0 0.0
        %v6476 = vand.u32 %v2099, 4294901760
        %6477 = vmatmul.mubr.f32.gmra.mrb[0].mxu0 %v6476
        %v6478 = vpop.f32.mrb[0].mxu0
        %v6479 = vadd.f32 %v6266, %v6478
        %v6480 = vpop.f32.mrb[0].mxu0
        %v6481 = vadd.f32 %v6268, %v6480
        %6482 = vmatprep.mubr.f32.mxu0 0.0
        %v6483 = vand.u32 %v2102, 4294901760
        %6484 = vmatmul.mubr.f32.gmra.mrb[0].mxu0 %v6483
        %v6485 = vpop.f32.mrb[0].mxu0
        %v6486 = vadd.f32 %v6277, %v6485
        %v6487 = vpop.f32.mrb[0].mxu0
        %v6488 = vadd.f32 %v6279, %v6487
        %6489 = vmatprep.mubr.f32.mxu0 0.0
        %v6490 = vand.u32 %v2105, 4294901760
        %6491 = vmatmul.mubr.f32.gmra.mrb[0].mxu0 %v6490
        %v6492 = vpop.f32.mrb[0].mxu0
        %v6493 = vadd.f32 %v6288, %v6492
        %v6494 = vpop.f32.mrb[0].mxu0
        %v6495 = vadd.f32 %v6290, %v6494
        %6496 = vmatprep.mubr.f32.mxu0 0.0
        %v6497 = vand.u32 %v2108, 4294901760
        %6498 = vmatmul.mubr.f32.gmra.mrb[0].mxu0 %v6497
        %v6499 = vpop.f32.mrb[0].mxu0
        %v6500 = vadd.f32 %v6299, %v6499
        %v6501 = vpop.f32.mrb[0].mxu0
        %v6502 = vadd.f32 %v6301, %v6501
        %6503 = vdwg.mxu0
        %v6504 = vand.u32 %v6103, 4294901760
        %v6505 = vsub.f32 %v6103, %v6504
        %6506 = vmatprep.subr.mxu0 %v6505
        %v6507 = vand.u32 %v6102, 4294901760
        %v6508 = vsub.f32 %v6102, %v6507
        %6509 = vmatpush1.msra.mxu0 %v6508
        %v6510 = vand.u32 %v6107, 4294901760
        %v6511 = vsub.f32 %v6107, %v6510
        %6512 = vmatprep.subr.mxu0 %v6511
        %v6513 = vand.u32 %v6106, 4294901760
        %v6514 = vsub.f32 %v6106, %v6513
        %6515 = vmatpush1.msra.mxu0 %v6514
        %v6516 = vand.u32 %v6111, 4294901760
        %v6517 = vsub.f32 %v6111, %v6516
        %6518 = vmatprep.subr.mxu0 %v6517
        %v6519 = vand.u32 %v6110, 4294901760
        %v6520 = vsub.f32 %v6110, %v6519
        %6521 = vmatpush1.msra.mxu0 %v6520
        %v6522 = vand.u32 %v6115, 4294901760
        %v6523 = vsub.f32 %v6115, %v6522
        %6524 = vmatprep.subr.mxu0 %v6523
        %v6525 = vand.u32 %v6114, 4294901760
        %v6526 = vsub.f32 %v6114, %v6525
        %6527 = vmatpush1.msra.mxu0 %v6526
        %v6528 = vand.u32 %v6119, 4294901760
        %v6529 = vsub.f32 %v6119, %v6528
        %6530 = vmatprep.subr.mxu0 %v6529
        %v6531 = vand.u32 %v6118, 4294901760
        %v6532 = vsub.f32 %v6118, %v6531
        %6533 = vmatpush1.msra.mxu0 %v6532
        %v6534 = vand.u32 %v6123, 4294901760
        %v6535 = vsub.f32 %v6123, %v6534
        %6536 = vmatprep.subr.mxu0 %v6535
        %v6537 = vand.u32 %v6122, 4294901760
        %v6538 = vsub.f32 %v6122, %v6537
        %6539 = vmatpush1.msra.mxu0 %v6538
        %v6540 = vand.u32 %v6127, 4294901760
        %v6541 = vsub.f32 %v6127, %v6540
        %6542 = vmatprep.subr.mxu0 %v6541
        %v6543 = vand.u32 %v6126, 4294901760
        %v6544 = vsub.f32 %v6126, %v6543
        %6545 = vmatpush1.msra.mxu0 %v6544
        %v6546 = vand.u32 %v6131, 4294901760
        %v6547 = vsub.f32 %v6131, %v6546
        %6548 = vmatprep.subr.mxu0 %v6547
        %v6549 = vand.u32 %v6130, 4294901760
        %v6550 = vsub.f32 %v6130, %v6549
        %6551 = vmatpush1.msra.mxu0 %v6550
        %6552 = vmatprep.subr.mxu0 0.0
        %6553 = vmatpush1.msra.mxu0 0.0
        %6554 = vmatprep.subr.mxu0 0.0
        %6555 = vmatpush1.msra.mxu0 0.0
        %6556 = vmatprep.subr.mxu0 0.0
        %6557 = vmatpush1.msra.mxu0 0.0
        %6558 = vmatprep.subr.mxu0 0.0
        %6559 = vmatpush1.msra.mxu0 0.0
        %6560 = vmatprep.subr.mxu0 0.0
        %6561 = vmatpush1.msra.mxu0 0.0
        %6562 = vmatprep.subr.mxu0 0.0
        %6563 = vmatpush1.msra.mxu0 0.0
        %6564 = vmatprep.subr.mxu0 0.0
        %6565 = vmatpush1.msra.mxu0 0.0
        %6566 = vmatprep.subr.mxu0 0.0
        %6567 = vmatpush1.msra.mxu0 0.0
        %6568 = vmatprep.subr.mxu0 0.0
        %6569 = vmatpush1.msra.mxu0 0.0
        %6570 = vmatprep.subr.mxu0 0.0
        %6571 = vmatpush1.msra.mxu0 0.0
        %6572 = vmatprep.subr.mxu0 0.0
        %6573 = vmatpush1.msra.mxu0 0.0
        %6574 = vmatprep.subr.mxu0 0.0
        %6575 = vmatpush1.msra.mxu0 0.0
        %6576 = vmatprep.subr.mxu0 0.0
        %6577 = vmatpush1.msra.mxu0 0.0
        %6578 = vmatprep.subr.mxu0 0.0
        %6579 = vmatpush1.msra.mxu0 0.0
        %6580 = vmatprep.subr.mxu0 0.0
        %6581 = vmatpush1.msra.mxu0 0.0
        %6582 = vmatprep.subr.mxu0 0.0
        %6583 = vmatpush1.msra.mxu0 0.0
        %6584 = vmatprep.subr.mxu0 0.0
        %6585 = vmatpush1.msra.mxu0 0.0
        %6586 = vmatprep.subr.mxu0 0.0
        %6587 = vmatpush1.msra.mxu0 0.0
        %6588 = vmatprep.subr.mxu0 0.0
        %6589 = vmatpush1.msra.mxu0 0.0
        %6590 = vmatprep.subr.mxu0 0.0
        %6591 = vmatpush1.msra.mxu0 0.0
        %6592 = vmatprep.subr.mxu0 0.0
        %6593 = vmatpush1.msra.mxu0 0.0
        %6594 = vmatprep.subr.mxu0 0.0
        %6595 = vmatpush1.msra.mxu0 0.0
        %6596 = vmatprep.subr.mxu0 0.0
        %6597 = vmatpush1.msra.mxu0 0.0
        %6598 = vmatprep.subr.mxu0 0.0
        %6599 = vmatpush1.msra.mxu0 0.0
        %6600 = vmatprep.mubr.f32.mxu0 0.0
        %v6601 = vand.u32 %v2087, 4294901760
        %v6602 = vsub.f32 %v2087, %v6601
        %6603 = vmatmul.mubr.f32.gmra.mrb[0].mxu0 %v6602
        %v6604 = vpop.f32.mrb[0].mxu0
        %v6605 = vadd.f32 %v6451, %v6604
        %v6606 = vpop.f32.mrb[0].mxu0
        %v6607 = vadd.f32 %v6453, %v6606
        %6608 = vmatprep.mubr.f32.mxu0 0.0
        %v6609 = vand.u32 %v2090, 4294901760
        %v6610 = vsub.f32 %v2090, %v6609
        %6611 = vmatmul.mubr.f32.gmra.mrb[0].mxu0 %v6610
        %v6612 = vpop.f32.mrb[0].mxu0
        %v6613 = vadd.f32 %v6458, %v6612
        %v6614 = vpop.f32.mrb[0].mxu0
        %v6615 = vadd.f32 %v6460, %v6614
        %6616 = vmatprep.mubr.f32.mxu0 0.0
        %v6617 = vand.u32 %v2093, 4294901760
        %v6618 = vsub.f32 %v2093, %v6617
        %6619 = vmatmul.mubr.f32.gmra.mrb[0].mxu0 %v6618
        %v6620 = vpop.f32.mrb[0].mxu0
        %v6621 = vadd.f32 %v6465, %v6620
        %v6622 = vpop.f32.mrb[0].mxu0
        %v6623 = vadd.f32 %v6467, %v6622
        %6624 = vmatprep.mubr.f32.mxu0 0.0
        %v6625 = vand.u32 %v2096, 4294901760
        %v6626 = vsub.f32 %v2096, %v6625
        %6627 = vmatmul.mubr.f32.gmra.mrb[0].mxu0 %v6626
        %v6628 = vpop.f32.mrb[0].mxu0
        %v6629 = vadd.f32 %v6472, %v6628
        %v6630 = vpop.f32.mrb[0].mxu0
        %v6631 = vadd.f32 %v6474, %v6630
        %6632 = vmatprep.mubr.f32.mxu0 0.0
        %v6633 = vand.u32 %v2099, 4294901760
        %v6634 = vsub.f32 %v2099, %v6633
        %6635 = vmatmul.mubr.f32.gmra.mrb[0].mxu0 %v6634
        %v6636 = vpop.f32.mrb[0].mxu0
        %v6637 = vadd.f32 %v6479, %v6636
        %v6638 = vpop.f32.mrb[0].mxu0
        %v6639 = vadd.f32 %v6481, %v6638
        %6640 = vmatprep.mubr.f32.mxu0 0.0
        %v6641 = vand.u32 %v2102, 4294901760
        %v6642 = vsub.f32 %v2102, %v6641
        %6643 = vmatmul.mubr.f32.gmra.mrb[0].mxu0 %v6642
        %v6644 = vpop.f32.mrb[0].mxu0
        %v6645 = vadd.f32 %v6486, %v6644
        %v6646 = vpop.f32.mrb[0].mxu0
        %v6647 = vadd.f32 %v6488, %v6646
        %6648 = vmatprep.mubr.f32.mxu0 0.0
        %v6649 = vand.u32 %v2105, 4294901760
        %v6650 = vsub.f32 %v2105, %v6649
        %6651 = vmatmul.mubr.f32.gmra.mrb[0].mxu0 %v6650
        %v6652 = vpop.f32.mrb[0].mxu0
        %v6653 = vadd.f32 %v6493, %v6652
        %v6654 = vpop.f32.mrb[0].mxu0
        %v6655 = vadd.f32 %v6495, %v6654
        %6656 = vmatprep.mubr.f32.mxu0 0.0
        %v6657 = vand.u32 %v2108, 4294901760
        %v6658 = vsub.f32 %v2108, %v6657
        %6659 = vmatmul.mubr.f32.gmra.mrb[0].mxu0 %v6658
        %v6660 = vpop.f32.mrb[0].mxu0
        %v6661 = vadd.f32 %v6500, %v6660
        %v6662 = vpop.f32.mrb[0].mxu0
        %v6663 = vadd.f32 %v6502, %v6662
        %6664 = vdwg.mxu0
        %v6665 = vand.u32 %v6103, 4294901760
        %6666 = vmatprep.subr.mxu0 %v6665
        %v6667 = vand.u32 %v6102, 4294901760
        %6668 = vmatpush1.msra.mxu0 %v6667
        %v6669 = vand.u32 %v6107, 4294901760
        %6670 = vmatprep.subr.mxu0 %v6669
        %v6671 = vand.u32 %v6106, 4294901760
        %6672 = vmatpush1.msra.mxu0 %v6671
        %v6673 = vand.u32 %v6111, 4294901760
        %6674 = vmatprep.subr.mxu0 %v6673
        %v6675 = vand.u32 %v6110, 4294901760
        %6676 = vmatpush1.msra.mxu0 %v6675
        %v6677 = vand.u32 %v6115, 4294901760
        %6678 = vmatprep.subr.mxu0 %v6677
        %v6679 = vand.u32 %v6114, 4294901760
        %6680 = vmatpush1.msra.mxu0 %v6679
        %v6681 = vand.u32 %v6119, 4294901760
        %6682 = vmatprep.subr.mxu0 %v6681
        %v6683 = vand.u32 %v6118, 4294901760
        %6684 = vmatpush1.msra.mxu0 %v6683
        %v6685 = vand.u32 %v6123, 4294901760
        %6686 = vmatprep.subr.mxu0 %v6685
        %v6687 = vand.u32 %v6122, 4294901760
        %6688 = vmatpush1.msra.mxu0 %v6687
        %v6689 = vand.u32 %v6127, 4294901760
        %6690 = vmatprep.subr.mxu0 %v6689
        %v6691 = vand.u32 %v6126, 4294901760
        %6692 = vmatpush1.msra.mxu0 %v6691
        %v6693 = vand.u32 %v6131, 4294901760
        %6694 = vmatprep.subr.mxu0 %v6693
        %v6695 = vand.u32 %v6130, 4294901760
        %6696 = vmatpush1.msra.mxu0 %v6695
        %6697 = vmatprep.subr.mxu0 0.0
        %6698 = vmatpush1.msra.mxu0 0.0
        %6699 = vmatprep.subr.mxu0 0.0
        %6700 = vmatpush1.msra.mxu0 0.0
        %6701 = vmatprep.subr.mxu0 0.0
        %6702 = vmatpush1.msra.mxu0 0.0
        %6703 = vmatprep.subr.mxu0 0.0
        %6704 = vmatpush1.msra.mxu0 0.0
        %6705 = vmatprep.subr.mxu0 0.0
        %6706 = vmatpush1.msra.mxu0 0.0
        %6707 = vmatprep.subr.mxu0 0.0
        %6708 = vmatpush1.msra.mxu0 0.0
        %6709 = vmatprep.subr.mxu0 0.0
        %6710 = vmatpush1.msra.mxu0 0.0
        %6711 = vmatprep.subr.mxu0 0.0
        %6712 = vmatpush1.msra.mxu0 0.0
        %6713 = vmatprep.subr.mxu0 0.0
        %6714 = vmatpush1.msra.mxu0 0.0
        %6715 = vmatprep.subr.mxu0 0.0
        %6716 = vmatpush1.msra.mxu0 0.0
        %6717 = vmatprep.subr.mxu0 0.0
        %6718 = vmatpush1.msra.mxu0 0.0
        %6719 = vmatprep.subr.mxu0 0.0
        %6720 = vmatpush1.msra.mxu0 0.0
        %6721 = vmatprep.subr.mxu0 0.0
        %6722 = vmatpush1.msra.mxu0 0.0
        %6723 = vmatprep.subr.mxu0 0.0
        %6724 = vmatpush1.msra.mxu0 0.0
        %6725 = vmatprep.subr.mxu0 0.0
        %6726 = vmatpush1.msra.mxu0 0.0
        %6727 = vmatprep.subr.mxu0 0.0
        %6728 = vmatpush1.msra.mxu0 0.0
        %6729 = vmatprep.subr.mxu0 0.0
        %6730 = vmatpush1.msra.mxu0 0.0
        %6731 = vmatprep.subr.mxu0 0.0
        %6732 = vmatpush1.msra.mxu0 0.0
        %6733 = vmatprep.subr.mxu0 0.0
        %6734 = vmatpush1.msra.mxu0 0.0
        %6735 = vmatprep.subr.mxu0 0.0
        %6736 = vmatpush1.msra.mxu0 0.0
        %6737 = vmatprep.subr.mxu0 0.0
        %6738 = vmatpush1.msra.mxu0 0.0
        %6739 = vmatprep.subr.mxu0 0.0
        %6740 = vmatpush1.msra.mxu0 0.0
        %6741 = vmatprep.subr.mxu0 0.0
        %6742 = vmatpush1.msra.mxu0 0.0
        %6743 = vmatprep.subr.mxu0 0.0
        %6744 = vmatpush1.msra.mxu0 0.0
        %6745 = vmatprep.mubr.f32.mxu0 0.0
        %v6746 = vand.u32 %v2087, 4294901760
        %v6747 = vsub.f32 %v2087, %v6746
        %v6748 = vand.u32 %v6747, 4294901760
        %6749 = vmatmul.mubr.f32.gmra.mrb[0].mxu0 %v6748
        %v6750 = vpop.f32.mrb[0].mxu0
        %v6751 = vadd.f32 %v6605, %v6750
        %v6752 = vpop.f32.mrb[0].mxu0
        %v6753 = vadd.f32 %v6607, %v6752
        %6754 = vmatprep.mubr.f32.mxu0 0.0
        %v6755 = vand.u32 %v2090, 4294901760
        %v6756 = vsub.f32 %v2090, %v6755
        %v6757 = vand.u32 %v6756, 4294901760
        %6758 = vmatmul.mubr.f32.gmra.mrb[0].mxu0 %v6757
        %v6759 = vpop.f32.mrb[0].mxu0
        %v6760 = vadd.f32 %v6613, %v6759
        %v6761 = vpop.f32.mrb[0].mxu0
        %v6762 = vadd.f32 %v6615, %v6761
        %6763 = vmatprep.mubr.f32.mxu0 0.0
        %v6764 = vand.u32 %v2093, 4294901760
        %v6765 = vsub.f32 %v2093, %v6764
        %v6766 = vand.u32 %v6765, 4294901760
        %6767 = vmatmul.mubr.f32.gmra.mrb[0].mxu0 %v6766
        %v6768 = vpop.f32.mrb[0].mxu0
        %v6769 = vadd.f32 %v6621, %v6768
        %v6770 = vpop.f32.mrb[0].mxu0
        %v6771 = vadd.f32 %v6623, %v6770
        %6772 = vmatprep.mubr.f32.mxu0 0.0
        %v6773 = vand.u32 %v2096, 4294901760
        %v6774 = vsub.f32 %v2096, %v6773
        %v6775 = vand.u32 %v6774, 4294901760
        %6776 = vmatmul.mubr.f32.gmra.mrb[0].mxu0 %v6775
        %v6777 = vpop.f32.mrb[0].mxu0
        %v6778 = vadd.f32 %v6629, %v6777
        %v6779 = vpop.f32.mrb[0].mxu0
        %v6780 = vadd.f32 %v6631, %v6779
        %6781 = vmatprep.mubr.f32.mxu0 0.0
        %v6782 = vand.u32 %v2099, 4294901760
        %v6783 = vsub.f32 %v2099, %v6782
        %v6784 = vand.u32 %v6783, 4294901760
        %6785 = vmatmul.mubr.f32.gmra.mrb[0].mxu0 %v6784
        %v6786 = vpop.f32.mrb[0].mxu0
        %v6787 = vadd.f32 %v6637, %v6786
        %v6788 = vpop.f32.mrb[0].mxu0
        %v6789 = vadd.f32 %v6639, %v6788
        %6790 = vmatprep.mubr.f32.mxu0 0.0
        %v6791 = vand.u32 %v2102, 4294901760
        %v6792 = vsub.f32 %v2102, %v6791
        %v6793 = vand.u32 %v6792, 4294901760
        %6794 = vmatmul.mubr.f32.gmra.mrb[0].mxu0 %v6793
        %v6795 = vpop.f32.mrb[0].mxu0
        %v6796 = vadd.f32 %v6645, %v6795
        %v6797 = vpop.f32.mrb[0].mxu0
        %v6798 = vadd.f32 %v6647, %v6797
        %6799 = vmatprep.mubr.f32.mxu0 0.0
        %v6800 = vand.u32 %v2105, 4294901760
        %v6801 = vsub.f32 %v2105, %v6800
        %v6802 = vand.u32 %v6801, 4294901760
        %6803 = vmatmul.mubr.f32.gmra.mrb[0].mxu0 %v6802
        %v6804 = vpop.f32.mrb[0].mxu0
        %v6805 = vadd.f32 %v6653, %v6804
        %v6806 = vpop.f32.mrb[0].mxu0
        %v6807 = vadd.f32 %v6655, %v6806
        %6808 = vmatprep.mubr.f32.mxu0 0.0
        %v6809 = vand.u32 %v2108, 4294901760
        %v6810 = vsub.f32 %v2108, %v6809
        %v6811 = vand.u32 %v6810, 4294901760
        %6812 = vmatmul.mubr.f32.gmra.mrb[0].mxu0 %v6811
        %v6813 = vpop.f32.mrb[0].mxu0
        %v6814 = vadd.f32 %v6661, %v6813
        %v6815 = vpop.f32.mrb[0].mxu0
        %v6816 = vadd.f32 %v6663, %v6815
        %6817 = vdwg.mxu0
        %v6818 = vand.u32 %v6103, 4294901760
        %v6819 = vsub.f32 %v6103, %v6818
        %v6820 = vand.u32 %v6819, 4294901760
        %6821 = vmatprep.subr.mxu0 %v6820
        %v6822 = vand.u32 %v6102, 4294901760
        %v6823 = vsub.f32 %v6102, %v6822
        %v6824 = vand.u32 %v6823, 4294901760
        %6825 = vmatpush1.msra.mxu0 %v6824
        %v6826 = vand.u32 %v6107, 4294901760
        %v6827 = vsub.f32 %v6107, %v6826
        %v6828 = vand.u32 %v6827, 4294901760
        %6829 = vmatprep.subr.mxu0 %v6828
        %v6830 = vand.u32 %v6106, 4294901760
        %v6831 = vsub.f32 %v6106, %v6830
        %v6832 = vand.u32 %v6831, 4294901760
        %6833 = vmatpush1.msra.mxu0 %v6832
        %v6834 = vand.u32 %v6111, 4294901760
        %v6835 = vsub.f32 %v6111, %v6834
        %v6836 = vand.u32 %v6835, 4294901760
        %6837 = vmatprep.subr.mxu0 %v6836
        %v6838 = vand.u32 %v6110, 4294901760
        %v6839 = vsub.f32 %v6110, %v6838
        %v6840 = vand.u32 %v6839, 4294901760
        %6841 = vmatpush1.msra.mxu0 %v6840
        %v6842 = vand.u32 %v6115, 4294901760
        %v6843 = vsub.f32 %v6115, %v6842
        %v6844 = vand.u32 %v6843, 4294901760
        %6845 = vmatprep.subr.mxu0 %v6844
        %v6846 = vand.u32 %v6114, 4294901760
        %v6847 = vsub.f32 %v6114, %v6846
        %v6848 = vand.u32 %v6847, 4294901760
        %6849 = vmatpush1.msra.mxu0 %v6848
        %v6850 = vand.u32 %v6119, 4294901760
        %v6851 = vsub.f32 %v6119, %v6850
        %v6852 = vand.u32 %v6851, 4294901760
        %6853 = vmatprep.subr.mxu0 %v6852
        %v6854 = vand.u32 %v6118, 4294901760
        %v6855 = vsub.f32 %v6118, %v6854
        %v6856 = vand.u32 %v6855, 4294901760
        %6857 = vmatpush1.msra.mxu0 %v6856
        %v6858 = vand.u32 %v6123, 4294901760
        %v6859 = vsub.f32 %v6123, %v6858
        %v6860 = vand.u32 %v6859, 4294901760
        %6861 = vmatprep.subr.mxu0 %v6860
        %v6862 = vand.u32 %v6122, 4294901760
        %v6863 = vsub.f32 %v6122, %v6862
        %v6864 = vand.u32 %v6863, 4294901760
        %6865 = vmatpush1.msra.mxu0 %v6864
        %v6866 = vand.u32 %v6127, 4294901760
        %v6867 = vsub.f32 %v6127, %v6866
        %v6868 = vand.u32 %v6867, 4294901760
        %6869 = vmatprep.subr.mxu0 %v6868
        %v6870 = vand.u32 %v6126, 4294901760
        %v6871 = vsub.f32 %v6126, %v6870
        %v6872 = vand.u32 %v6871, 4294901760
        %6873 = vmatpush1.msra.mxu0 %v6872
        %v6874 = vand.u32 %v6131, 4294901760
        %v6875 = vsub.f32 %v6131, %v6874
        %v6876 = vand.u32 %v6875, 4294901760
        %6877 = vmatprep.subr.mxu0 %v6876
        %v6878 = vand.u32 %v6130, 4294901760
        %v6879 = vsub.f32 %v6130, %v6878
        %v6880 = vand.u32 %v6879, 4294901760
        %6881 = vmatpush1.msra.mxu0 %v6880
        %6882 = vmatprep.subr.mxu0 0.0
        %6883 = vmatpush1.msra.mxu0 0.0
        %6884 = vmatprep.subr.mxu0 0.0
        %6885 = vmatpush1.msra.mxu0 0.0
        %6886 = vmatprep.subr.mxu0 0.0
        %6887 = vmatpush1.msra.mxu0 0.0
        %6888 = vmatprep.subr.mxu0 0.0
        %6889 = vmatpush1.msra.mxu0 0.0
        %6890 = vmatprep.subr.mxu0 0.0
        %6891 = vmatpush1.msra.mxu0 0.0
        %6892 = vmatprep.subr.mxu0 0.0
        %6893 = vmatpush1.msra.mxu0 0.0
        %6894 = vmatprep.subr.mxu0 0.0
        %6895 = vmatpush1.msra.mxu0 0.0
        %6896 = vmatprep.subr.mxu0 0.0
        %6897 = vmatpush1.msra.mxu0 0.0
        %6898 = vmatprep.subr.mxu0 0.0
        %6899 = vmatpush1.msra.mxu0 0.0
        %6900 = vmatprep.subr.mxu0 0.0
        %6901 = vmatpush1.msra.mxu0 0.0
        %6902 = vmatprep.subr.mxu0 0.0
        %6903 = vmatpush1.msra.mxu0 0.0
        %6904 = vmatprep.subr.mxu0 0.0
        %6905 = vmatpush1.msra.mxu0 0.0
        %6906 = vmatprep.subr.mxu0 0.0
        %6907 = vmatpush1.msra.mxu0 0.0
        %6908 = vmatprep.subr.mxu0 0.0
        %6909 = vmatpush1.msra.mxu0 0.0
        %6910 = vmatprep.subr.mxu0 0.0
        %6911 = vmatpush1.msra.mxu0 0.0
        %6912 = vmatprep.subr.mxu0 0.0
        %6913 = vmatpush1.msra.mxu0 0.0
        %6914 = vmatprep.subr.mxu0 0.0
        %6915 = vmatpush1.msra.mxu0 0.0
        %6916 = vmatprep.subr.mxu0 0.0
        %6917 = vmatpush1.msra.mxu0 0.0
        %6918 = vmatprep.subr.mxu0 0.0
        %6919 = vmatpush1.msra.mxu0 0.0
        %6920 = vmatprep.subr.mxu0 0.0
        %6921 = vmatpush1.msra.mxu0 0.0
        %6922 = vmatprep.subr.mxu0 0.0
        %6923 = vmatpush1.msra.mxu0 0.0
        %6924 = vmatprep.subr.mxu0 0.0
        %6925 = vmatpush1.msra.mxu0 0.0
        %6926 = vmatprep.subr.mxu0 0.0
        %6927 = vmatpush1.msra.mxu0 0.0
        %6928 = vmatprep.subr.mxu0 0.0
        %6929 = vmatpush1.msra.mxu0 0.0
        %6930 = vmatprep.mubr.f32.mxu0 0.0
        %v6931 = vand.u32 %v2087, 4294901760
        %6932 = vmatmul.mubr.f32.gmra.mrb[0].mxu0 %v6931
        %v6933 = vpop.f32.mrb[0].mxu0
        %v6934 = vadd.f32 %v6751, %v6933
        %v6935 = vpop.f32.mrb[0].mxu0
        %v6936 = vadd.f32 %v6753, %v6935
        %6937 = vmatprep.mubr.f32.mxu0 0.0
        %v6938 = vand.u32 %v2090, 4294901760
        %6939 = vmatmul.mubr.f32.gmra.mrb[0].mxu0 %v6938
        %v6940 = vpop.f32.mrb[0].mxu0
        %v6941 = vadd.f32 %v6760, %v6940
        %v6942 = vpop.f32.mrb[0].mxu0
        %v6943 = vadd.f32 %v6762, %v6942
        %6944 = vmatprep.mubr.f32.mxu0 0.0
        %v6945 = vand.u32 %v2093, 4294901760
        %6946 = vmatmul.mubr.f32.gmra.mrb[0].mxu0 %v6945
        %v6947 = vpop.f32.mrb[0].mxu0
        %v6948 = vadd.f32 %v6769, %v6947
        %v6949 = vpop.f32.mrb[0].mxu0
        %v6950 = vadd.f32 %v6771, %v6949
        %6951 = vmatprep.mubr.f32.mxu0 0.0
        %v6952 = vand.u32 %v2096, 4294901760
        %6953 = vmatmul.mubr.f32.gmra.mrb[0].mxu0 %v6952
        %v6954 = vpop.f32.mrb[0].mxu0
        %v6955 = vadd.f32 %v6778, %v6954
        %v6956 = vpop.f32.mrb[0].mxu0
        %v6957 = vadd.f32 %v6780, %v6956
        %6958 = vmatprep.mubr.f32.mxu0 0.0
        %v6959 = vand.u32 %v2099, 4294901760
        %6960 = vmatmul.mubr.f32.gmra.mrb[0].mxu0 %v6959
        %v6961 = vpop.f32.mrb[0].mxu0
        %v6962 = vadd.f32 %v6787, %v6961
        %v6963 = vpop.f32.mrb[0].mxu0
        %v6964 = vadd.f32 %v6789, %v6963
        %6965 = vmatprep.mubr.f32.mxu0 0.0
        %v6966 = vand.u32 %v2102, 4294901760
        %6967 = vmatmul.mubr.f32.gmra.mrb[0].mxu0 %v6966
        %v6968 = vpop.f32.mrb[0].mxu0
        %v6969 = vadd.f32 %v6796, %v6968
        %v6970 = vpop.f32.mrb[0].mxu0
        %v6971 = vadd.f32 %v6798, %v6970
        %6972 = vmatprep.mubr.f32.mxu0 0.0
        %v6973 = vand.u32 %v2105, 4294901760
        %6974 = vmatmul.mubr.f32.gmra.mrb[0].mxu0 %v6973
        %v6975 = vpop.f32.mrb[0].mxu0
        %v6976 = vadd.f32 %v6805, %v6975
        %v6977 = vpop.f32.mrb[0].mxu0
        %v6978 = vadd.f32 %v6807, %v6977
        %6979 = vmatprep.mubr.f32.mxu0 0.0
        %v6980 = vand.u32 %v2108, 4294901760
        %6981 = vmatmul.mubr.f32.gmra.mrb[0].mxu0 %v6980
        %v6982 = vpop.f32.mrb[0].mxu0
        %v6983 = vadd.f32 %v6814, %v6982
        %v6984 = vpop.f32.mrb[0].mxu0
        %v6985 = vadd.f32 %v6816, %v6984
        %6986 = vdwg.mxu0
        %v6987 = vand.u32 %v6103, 4294901760
        %6988 = vmatprep.subr.mxu0 %v6987
        %v6989 = vand.u32 %v6102, 4294901760
        %6990 = vmatpush1.msra.mxu0 %v6989
        %v6991 = vand.u32 %v6107, 4294901760
        %6992 = vmatprep.subr.mxu0 %v6991
        %v6993 = vand.u32 %v6106, 4294901760
        %6994 = vmatpush1.msra.mxu0 %v6993
        %v6995 = vand.u32 %v6111, 4294901760
        %6996 = vmatprep.subr.mxu0 %v6995
        %v6997 = vand.u32 %v6110, 4294901760
        %6998 = vmatpush1.msra.mxu0 %v6997
        %v6999 = vand.u32 %v6115, 4294901760
        %7000 = vmatprep.subr.mxu0 %v6999
        %v7001 = vand.u32 %v6114, 4294901760
        %7002 = vmatpush1.msra.mxu0 %v7001
        %v7003 = vand.u32 %v6119, 4294901760
        %7004 = vmatprep.subr.mxu0 %v7003
        %v7005 = vand.u32 %v6118, 4294901760
        %7006 = vmatpush1.msra.mxu0 %v7005
        %v7007 = vand.u32 %v6123, 4294901760
        %7008 = vmatprep.subr.mxu0 %v7007
        %v7009 = vand.u32 %v6122, 4294901760
        %7010 = vmatpush1.msra.mxu0 %v7009
        %v7011 = vand.u32 %v6127, 4294901760
        %7012 = vmatprep.subr.mxu0 %v7011
        %v7013 = vand.u32 %v6126, 4294901760
        %7014 = vmatpush1.msra.mxu0 %v7013
        %v7015 = vand.u32 %v6131, 4294901760
        %7016 = vmatprep.subr.mxu0 %v7015
        %v7017 = vand.u32 %v6130, 4294901760
        %7018 = vmatpush1.msra.mxu0 %v7017
        %7019 = vmatprep.subr.mxu0 0.0
        %7020 = vmatpush1.msra.mxu0 0.0
        %7021 = vmatprep.subr.mxu0 0.0
        %7022 = vmatpush1.msra.mxu0 0.0
        %7023 = vmatprep.subr.mxu0 0.0
        %7024 = vmatpush1.msra.mxu0 0.0
        %7025 = vmatprep.subr.mxu0 0.0
        %7026 = vmatpush1.msra.mxu0 0.0
        %7027 = vmatprep.subr.mxu0 0.0
        %7028 = vmatpush1.msra.mxu0 0.0
        %7029 = vmatprep.subr.mxu0 0.0
        %7030 = vmatpush1.msra.mxu0 0.0
        %7031 = vmatprep.subr.mxu0 0.0
        %7032 = vmatpush1.msra.mxu0 0.0
        %7033 = vmatprep.subr.mxu0 0.0
        %7034 = vmatpush1.msra.mxu0 0.0
        %7035 = vmatprep.subr.mxu0 0.0
        %7036 = vmatpush1.msra.mxu0 0.0
        %7037 = vmatprep.subr.mxu0 0.0
        %7038 = vmatpush1.msra.mxu0 0.0
        %7039 = vmatprep.subr.mxu0 0.0
        %7040 = vmatpush1.msra.mxu0 0.0
        %7041 = vmatprep.subr.mxu0 0.0
        %7042 = vmatpush1.msra.mxu0 0.0
        %7043 = vmatprep.subr.mxu0 0.0
        %7044 = vmatpush1.msra.mxu0 0.0
        %7045 = vmatprep.subr.mxu0 0.0
        %7046 = vmatpush1.msra.mxu0 0.0
        %7047 = vmatprep.subr.mxu0 0.0
        %7048 = vmatpush1.msra.mxu0 0.0
        %7049 = vmatprep.subr.mxu0 0.0
        %7050 = vmatpush1.msra.mxu0 0.0
        %7051 = vmatprep.subr.mxu0 0.0
        %7052 = vmatpush1.msra.mxu0 0.0
        %7053 = vmatprep.subr.mxu0 0.0
        %7054 = vmatpush1.msra.mxu0 0.0
        %7055 = vmatprep.subr.mxu0 0.0
        %7056 = vmatpush1.msra.mxu0 0.0
        %7057 = vmatprep.subr.mxu0 0.0
        %7058 = vmatpush1.msra.mxu0 0.0
        %7059 = vmatprep.subr.mxu0 0.0
        %7060 = vmatpush1.msra.mxu0 0.0
        %7061 = vmatprep.subr.mxu0 0.0
        %7062 = vmatpush1.msra.mxu0 0.0
        %7063 = vmatprep.subr.mxu0 0.0
        %7064 = vmatpush1.msra.mxu0 0.0
        %7065 = vmatprep.subr.mxu0 0.0
        %7066 = vmatpush1.msra.mxu0 0.0
        %7067 = vmatprep.mubr.f32.mxu0 0.0
        %v7068 = vand.u32 %v2087, 4294901760
        %7069 = vmatmul.mubr.f32.gmra.mrb[0].mxu0 %v7068
        %v7070 = vpop.f32.mrb[0].mxu0
        %v7071 = vadd.f32 %v6934, %v7070
        %v7072 = vpop.f32.mrb[0].mxu0
        %v7073 = vadd.f32 %v6936, %v7072
        %7074 = vmatprep.mubr.f32.mxu0 0.0
        %v7075 = vand.u32 %v2090, 4294901760
        %7076 = vmatmul.mubr.f32.gmra.mrb[0].mxu0 %v7075
        %v7077 = vpop.f32.mrb[0].mxu0
        %v7078 = vadd.f32 %v6941, %v7077
        %v7079 = vpop.f32.mrb[0].mxu0
        %v7080 = vadd.f32 %v6943, %v7079
        %7081 = vmatprep.mubr.f32.mxu0 0.0
        %v7082 = vand.u32 %v2093, 4294901760
        %7083 = vmatmul.mubr.f32.gmra.mrb[0].mxu0 %v7082
        %v7084 = vpop.f32.mrb[0].mxu0
        %v7085 = vadd.f32 %v6948, %v7084
        %v7086 = vpop.f32.mrb[0].mxu0
        %v7087 = vadd.f32 %v6950, %v7086
        %7088 = vmatprep.mubr.f32.mxu0 0.0
        %v7089 = vand.u32 %v2096, 4294901760
        %7090 = vmatmul.mubr.f32.gmra.mrb[0].mxu0 %v7089
        %v7091 = vpop.f32.mrb[0].mxu0
        %v7092 = vadd.f32 %v6955, %v7091
        %v7093 = vpop.f32.mrb[0].mxu0
        %v7094 = vadd.f32 %v6957, %v7093
        %7095 = vmatprep.mubr.f32.mxu0 0.0
        %v7096 = vand.u32 %v2099, 4294901760
        %7097 = vmatmul.mubr.f32.gmra.mrb[0].mxu0 %v7096
        %v7098 = vpop.f32.mrb[0].mxu0
        %v7099 = vadd.f32 %v6962, %v7098
        %v7100 = vpop.f32.mrb[0].mxu0
        %v7101 = vadd.f32 %v6964, %v7100
        %7102 = vmatprep.mubr.f32.mxu0 0.0
        %v7103 = vand.u32 %v2102, 4294901760
        %7104 = vmatmul.mubr.f32.gmra.mrb[0].mxu0 %v7103
        %v7105 = vpop.f32.mrb[0].mxu0
        %v7106 = vadd.f32 %v6969, %v7105
        %v7107 = vpop.f32.mrb[0].mxu0
        %v7108 = vadd.f32 %v6971, %v7107
        %7109 = vmatprep.mubr.f32.mxu0 0.0
        %v7110 = vand.u32 %v2105, 4294901760
        %7111 = vmatmul.mubr.f32.gmra.mrb[0].mxu0 %v7110
        %v7112 = vpop.f32.mrb[0].mxu0
        %v7113 = vadd.f32 %v6976, %v7112
        %v7114 = vpop.f32.mrb[0].mxu0
        %v7115 = vadd.f32 %v6978, %v7114
        %7116 = vmatprep.mubr.f32.mxu0 0.0
        %v7117 = vand.u32 %v2108, 4294901760
        %7118 = vmatmul.mubr.f32.gmra.mrb[0].mxu0 %v7117
        %v7119 = vpop.f32.mrb[0].mxu0
        %v7120 = vadd.f32 %v6983, %v7119
        %v7121 = vpop.f32.mrb[0].mxu0
        %v7122 = vadd.f32 %v6985, %v7121
        %7123 = vdwg.mxu0
        %v7124 = vand.u32 %v6105, 4294901760
        %7125 = vmatprep.subr.mxu0 %v7124
        %v7126 = vand.u32 %v6104, 4294901760
        %7127 = vmatpush1.msra.mxu0 %v7126
        %v7128 = vand.u32 %v6109, 4294901760
        %7129 = vmatprep.subr.mxu0 %v7128
        %v7130 = vand.u32 %v6108, 4294901760
        %7131 = vmatpush1.msra.mxu0 %v7130
        %v7132 = vand.u32 %v6113, 4294901760
        %7133 = vmatprep.subr.mxu0 %v7132
        %v7134 = vand.u32 %v6112, 4294901760
        %7135 = vmatpush1.msra.mxu0 %v7134
        %v7136 = vand.u32 %v6117, 4294901760
        %7137 = vmatprep.subr.mxu0 %v7136
        %v7138 = vand.u32 %v6116, 4294901760
        %7139 = vmatpush1.msra.mxu0 %v7138
        %v7140 = vand.u32 %v6121, 4294901760
        %7141 = vmatprep.subr.mxu0 %v7140
        %v7142 = vand.u32 %v6120, 4294901760
        %7143 = vmatpush1.msra.mxu0 %v7142
        %v7144 = vand.u32 %v6125, 4294901760
        %7145 = vmatprep.subr.mxu0 %v7144
        %v7146 = vand.u32 %v6124, 4294901760
        %7147 = vmatpush1.msra.mxu0 %v7146
        %v7148 = vand.u32 %v6129, 4294901760
        %7149 = vmatprep.subr.mxu0 %v7148
        %v7150 = vand.u32 %v6128, 4294901760
        %7151 = vmatpush1.msra.mxu0 %v7150
        %v7152 = vand.u32 %v6133, 4294901760
        %7153 = vmatprep.subr.mxu0 %v7152
        %v7154 = vand.u32 %v6132, 4294901760
        %7155 = vmatpush1.msra.mxu0 %v7154
        %7156 = vmatprep.subr.mxu0 0.0
        %7157 = vmatpush1.msra.mxu0 0.0
        %7158 = vmatprep.subr.mxu0 0.0
        %7159 = vmatpush1.msra.mxu0 0.0
        %7160 = vmatprep.subr.mxu0 0.0
        %7161 = vmatpush1.msra.mxu0 0.0
        %7162 = vmatprep.subr.mxu0 0.0
        %7163 = vmatpush1.msra.mxu0 0.0
        %7164 = vmatprep.subr.mxu0 0.0
        %7165 = vmatpush1.msra.mxu0 0.0
        %7166 = vmatprep.subr.mxu0 0.0
        %7167 = vmatpush1.msra.mxu0 0.0
        %7168 = vmatprep.subr.mxu0 0.0
        %7169 = vmatpush1.msra.mxu0 0.0
        %7170 = vmatprep.subr.mxu0 0.0
        %7171 = vmatpush1.msra.mxu0 0.0
        %7172 = vmatprep.subr.mxu0 0.0
        %7173 = vmatpush1.msra.mxu0 0.0
        %7174 = vmatprep.subr.mxu0 0.0
        %7175 = vmatpush1.msra.mxu0 0.0
        %7176 = vmatprep.subr.mxu0 0.0
        %7177 = vmatpush1.msra.mxu0 0.0
        %7178 = vmatprep.subr.mxu0 0.0
        %7179 = vmatpush1.msra.mxu0 0.0
        %7180 = vmatprep.subr.mxu0 0.0
        %7181 = vmatpush1.msra.mxu0 0.0
        %7182 = vmatprep.subr.mxu0 0.0
        %7183 = vmatpush1.msra.mxu0 0.0
        %7184 = vmatprep.subr.mxu0 0.0
        %7185 = vmatpush1.msra.mxu0 0.0
        %7186 = vmatprep.subr.mxu0 0.0
        %7187 = vmatpush1.msra.mxu0 0.0
        %7188 = vmatprep.subr.mxu0 0.0
        %7189 = vmatpush1.msra.mxu0 0.0
        %7190 = vmatprep.subr.mxu0 0.0
        %7191 = vmatpush1.msra.mxu0 0.0
        %7192 = vmatprep.subr.mxu0 0.0
        %7193 = vmatpush1.msra.mxu0 0.0
        %7194 = vmatprep.subr.mxu0 0.0
        %7195 = vmatpush1.msra.mxu0 0.0
        %7196 = vmatprep.subr.mxu0 0.0
        %7197 = vmatpush1.msra.mxu0 0.0
        %7198 = vmatprep.subr.mxu0 0.0
        %7199 = vmatpush1.msra.mxu0 0.0
        %7200 = vmatprep.subr.mxu0 0.0
        %7201 = vmatpush1.msra.mxu0 0.0
        %7202 = vmatprep.subr.mxu0 0.0
        %7203 = vmatpush1.msra.mxu0 0.0
        %7204 = vmatprep.mubr.f32.mxu0 0.0
        %v7205 = vand.u32 %v2087, 4294901760
        %v7206 = vsub.f32 %v2087, %v7205
        %v7207 = vand.u32 %v7206, 4294901760
        %v7208 = vsub.f32 %v7206, %v7207
        %v7209 = vand.u32 %v7208, 4294901760
        %7210 = vmatmul.mubr.f32.gmra.mrb[0].mxu0 %v7209
        %v7211 = vpop.f32.mrb[0].mxu0
        %v7212 = vadd.f32 %v2048, %v7211
        %v7213 = vpop.f32.mrb[0].mxu0
        %v7214 = vadd.f32 %v2048, %v7213
        %7215 = vmatprep.mubr.f32.mxu0 0.0
        %v7216 = vand.u32 %v2090, 4294901760
        %v7217 = vsub.f32 %v2090, %v7216
        %v7218 = vand.u32 %v7217, 4294901760
        %v7219 = vsub.f32 %v7217, %v7218
        %v7220 = vand.u32 %v7219, 4294901760
        %7221 = vmatmul.mubr.f32.gmra.mrb[0].mxu0 %v7220
        %v7222 = vpop.f32.mrb[0].mxu0
        %v7223 = vadd.f32 %v2053, %v7222
        %v7224 = vpop.f32.mrb[0].mxu0
        %v7225 = vadd.f32 %v2053, %v7224
        %7226 = vmatprep.mubr.f32.mxu0 0.0
        %v7227 = vand.u32 %v2093, 4294901760
        %v7228 = vsub.f32 %v2093, %v7227
        %v7229 = vand.u32 %v7228, 4294901760
        %v7230 = vsub.f32 %v7228, %v7229
        %v7231 = vand.u32 %v7230, 4294901760
        %7232 = vmatmul.mubr.f32.gmra.mrb[0].mxu0 %v7231
        %v7233 = vpop.f32.mrb[0].mxu0
        %v7234 = vadd.f32 %v2058, %v7233
        %v7235 = vpop.f32.mrb[0].mxu0
        %v7236 = vadd.f32 %v2058, %v7235
        %7237 = vmatprep.mubr.f32.mxu0 0.0
        %v7238 = vand.u32 %v2096, 4294901760
        %v7239 = vsub.f32 %v2096, %v7238
        %v7240 = vand.u32 %v7239, 4294901760
        %v7241 = vsub.f32 %v7239, %v7240
        %v7242 = vand.u32 %v7241, 4294901760
        %7243 = vmatmul.mubr.f32.gmra.mrb[0].mxu0 %v7242
        %v7244 = vpop.f32.mrb[0].mxu0
        %v7245 = vadd.f32 %v2063, %v7244
        %v7246 = vpop.f32.mrb[0].mxu0
        %v7247 = vadd.f32 %v2063, %v7246
        %7248 = vmatprep.mubr.f32.mxu0 0.0
        %v7249 = vand.u32 %v2099, 4294901760
        %v7250 = vsub.f32 %v2099, %v7249
        %v7251 = vand.u32 %v7250, 4294901760
        %v7252 = vsub.f32 %v7250, %v7251
        %v7253 = vand.u32 %v7252, 4294901760
        %7254 = vmatmul.mubr.f32.gmra.mrb[0].mxu0 %v7253
        %v7255 = vpop.f32.mrb[0].mxu0
        %v7256 = vadd.f32 %v2068, %v7255
        %v7257 = vpop.f32.mrb[0].mxu0
        %v7258 = vadd.f32 %v2068, %v7257
        %7259 = vmatprep.mubr.f32.mxu0 0.0
        %v7260 = vand.u32 %v2102, 4294901760
        %v7261 = vsub.f32 %v2102, %v7260
        %v7262 = vand.u32 %v7261, 4294901760
        %v7263 = vsub.f32 %v7261, %v7262
        %v7264 = vand.u32 %v7263, 4294901760
        %7265 = vmatmul.mubr.f32.gmra.mrb[0].mxu0 %v7264
        %v7266 = vpop.f32.mrb[0].mxu0
        %v7267 = vadd.f32 %v2073, %v7266
        %v7268 = vpop.f32.mrb[0].mxu0
        %v7269 = vadd.f32 %v2073, %v7268
        %7270 = vmatprep.mubr.f32.mxu0 0.0
        %v7271 = vand.u32 %v2105, 4294901760
        %v7272 = vsub.f32 %v2105, %v7271
        %v7273 = vand.u32 %v7272, 4294901760
        %v7274 = vsub.f32 %v7272, %v7273
        %v7275 = vand.u32 %v7274, 4294901760
        %7276 = vmatmul.mubr.f32.gmra.mrb[0].mxu0 %v7275
        %v7277 = vpop.f32.mrb[0].mxu0
        %v7278 = vadd.f32 %v2078, %v7277
        %v7279 = vpop.f32.mrb[0].mxu0
        %v7280 = vadd.f32 %v2078, %v7279
        %7281 = vmatprep.mubr.f32.mxu0 0.0
        %v7282 = vand.u32 %v2108, 4294901760
        %v7283 = vsub.f32 %v2108, %v7282
        %v7284 = vand.u32 %v7283, 4294901760
        %v7285 = vsub.f32 %v7283, %v7284
        %v7286 = vand.u32 %v7285, 4294901760
        %7287 = vmatmul.mubr.f32.gmra.mrb[0].mxu0 %v7286
        %v7288 = vpop.f32.mrb[0].mxu0
        %v7289 = vadd.f32 %v2083, %v7288
        %v7290 = vpop.f32.mrb[0].mxu0
        %v7291 = vadd.f32 %v2083, %v7290
        %7292 = vdwg.mxu0
        %v7293 = vand.u32 %v6105, 4294901760
        %v7294 = vsub.f32 %v6105, %v7293
        %v7295 = vand.u32 %v7294, 4294901760
        %v7296 = vsub.f32 %v7294, %v7295
        %v7297 = vand.u32 %v7296, 4294901760
        %7298 = vmatprep.subr.mxu0 %v7297
        %v7299 = vand.u32 %v6104, 4294901760
        %v7300 = vsub.f32 %v6104, %v7299
        %v7301 = vand.u32 %v7300, 4294901760
        %v7302 = vsub.f32 %v7300, %v7301
        %v7303 = vand.u32 %v7302, 4294901760
        %7304 = vmatpush1.msra.mxu0 %v7303
        %v7305 = vand.u32 %v6109, 4294901760
        %v7306 = vsub.f32 %v6109, %v7305
        %v7307 = vand.u32 %v7306, 4294901760
        %v7308 = vsub.f32 %v7306, %v7307
        %v7309 = vand.u32 %v7308, 4294901760
        %7310 = vmatprep.subr.mxu0 %v7309
        %v7311 = vand.u32 %v6108, 4294901760
        %v7312 = vsub.f32 %v6108, %v7311
        %v7313 = vand.u32 %v7312, 4294901760
        %v7314 = vsub.f32 %v7312, %v7313
        %v7315 = vand.u32 %v7314, 4294901760
        %7316 = vmatpush1.msra.mxu0 %v7315
        %v7317 = vand.u32 %v6113, 4294901760
        %v7318 = vsub.f32 %v6113, %v7317
        %v7319 = vand.u32 %v7318, 4294901760
        %v7320 = vsub.f32 %v7318, %v7319
        %v7321 = vand.u32 %v7320, 4294901760
        %7322 = vmatprep.subr.mxu0 %v7321
        %v7323 = vand.u32 %v6112, 4294901760
        %v7324 = vsub.f32 %v6112, %v7323
        %v7325 = vand.u32 %v7324, 4294901760
        %v7326 = vsub.f32 %v7324, %v7325
        %v7327 = vand.u32 %v7326, 4294901760
        %7328 = vmatpush1.msra.mxu0 %v7327
        %v7329 = vand.u32 %v6117, 4294901760
        %v7330 = vsub.f32 %v6117, %v7329
        %v7331 = vand.u32 %v7330, 4294901760
        %v7332 = vsub.f32 %v7330, %v7331
        %v7333 = vand.u32 %v7332, 4294901760
        %7334 = vmatprep.subr.mxu0 %v7333
        %v7335 = vand.u32 %v6116, 4294901760
        %v7336 = vsub.f32 %v6116, %v7335
        %v7337 = vand.u32 %v7336, 4294901760
        %v7338 = vsub.f32 %v7336, %v7337
        %v7339 = vand.u32 %v7338, 4294901760
        %7340 = vmatpush1.msra.mxu0 %v7339
        %v7341 = vand.u32 %v6121, 4294901760
        %v7342 = vsub.f32 %v6121, %v7341
        %v7343 = vand.u32 %v7342, 4294901760
        %v7344 = vsub.f32 %v7342, %v7343
        %v7345 = vand.u32 %v7344, 4294901760
        %7346 = vmatprep.subr.mxu0 %v7345
        %v7347 = vand.u32 %v6120, 4294901760
        %v7348 = vsub.f32 %v6120, %v7347
        %v7349 = vand.u32 %v7348, 4294901760
        %v7350 = vsub.f32 %v7348, %v7349
        %v7351 = vand.u32 %v7350, 4294901760
        %7352 = vmatpush1.msra.mxu0 %v7351
        %v7353 = vand.u32 %v6125, 4294901760
        %v7354 = vsub.f32 %v6125, %v7353
        %v7355 = vand.u32 %v7354, 4294901760
        %v7356 = vsub.f32 %v7354, %v7355
        %v7357 = vand.u32 %v7356, 4294901760
        %7358 = vmatprep.subr.mxu0 %v7357
        %v7359 = vand.u32 %v6124, 4294901760
        %v7360 = vsub.f32 %v6124, %v7359
        %v7361 = vand.u32 %v7360, 4294901760
        %v7362 = vsub.f32 %v7360, %v7361
        %v7363 = vand.u32 %v7362, 4294901760
        %7364 = vmatpush1.msra.mxu0 %v7363
        %v7365 = vand.u32 %v6129, 4294901760
        %v7366 = vsub.f32 %v6129, %v7365
        %v7367 = vand.u32 %v7366, 4294901760
        %v7368 = vsub.f32 %v7366, %v7367
        %v7369 = vand.u32 %v7368, 4294901760
        %7370 = vmatprep.subr.mxu0 %v7369
        %v7371 = vand.u32 %v6128, 4294901760
        %v7372 = vsub.f32 %v6128, %v7371
        %v7373 = vand.u32 %v7372, 4294901760
        %v7374 = vsub.f32 %v7372, %v7373
        %v7375 = vand.u32 %v7374, 4294901760
        %7376 = vmatpush1.msra.mxu0 %v7375
        %v7377 = vand.u32 %v6133, 4294901760
        %v7378 = vsub.f32 %v6133, %v7377
        %v7379 = vand.u32 %v7378, 4294901760
        %v7380 = vsub.f32 %v7378, %v7379
        %v7381 = vand.u32 %v7380, 4294901760
        %7382 = vmatprep.subr.mxu0 %v7381
        %v7383 = vand.u32 %v6132, 4294901760
        %v7384 = vsub.f32 %v6132, %v7383
        %v7385 = vand.u32 %v7384, 4294901760
        %v7386 = vsub.f32 %v7384, %v7385
        %v7387 = vand.u32 %v7386, 4294901760
        %7388 = vmatpush1.msra.mxu0 %v7387
        %7389 = vmatprep.subr.mxu0 0.0
        %7390 = vmatpush1.msra.mxu0 0.0
        %7391 = vmatprep.subr.mxu0 0.0
        %7392 = vmatpush1.msra.mxu0 0.0
        %7393 = vmatprep.subr.mxu0 0.0
        %7394 = vmatpush1.msra.mxu0 0.0
        %7395 = vmatprep.subr.mxu0 0.0
        %7396 = vmatpush1.msra.mxu0 0.0
        %7397 = vmatprep.subr.mxu0 0.0
        %7398 = vmatpush1.msra.mxu0 0.0
        %7399 = vmatprep.subr.mxu0 0.0
        %7400 = vmatpush1.msra.mxu0 0.0
        %7401 = vmatprep.subr.mxu0 0.0
        %7402 = vmatpush1.msra.mxu0 0.0
        %7403 = vmatprep.subr.mxu0 0.0
        %7404 = vmatpush1.msra.mxu0 0.0
        %7405 = vmatprep.subr.mxu0 0.0
        %7406 = vmatpush1.msra.mxu0 0.0
        %7407 = vmatprep.subr.mxu0 0.0
        %7408 = vmatpush1.msra.mxu0 0.0
        %7409 = vmatprep.subr.mxu0 0.0
        %7410 = vmatpush1.msra.mxu0 0.0
        %7411 = vmatprep.subr.mxu0 0.0
        %7412 = vmatpush1.msra.mxu0 0.0
        %7413 = vmatprep.subr.mxu0 0.0
        %7414 = vmatpush1.msra.mxu0 0.0
        %7415 = vmatprep.subr.mxu0 0.0
        %7416 = vmatpush1.msra.mxu0 0.0
        %7417 = vmatprep.subr.mxu0 0.0
        %7418 = vmatpush1.msra.mxu0 0.0
        %7419 = vmatprep.subr.mxu0 0.0
        %7420 = vmatpush1.msra.mxu0 0.0
        %7421 = vmatprep.subr.mxu0 0.0
        %7422 = vmatpush1.msra.mxu0 0.0
        %7423 = vmatprep.subr.mxu0 0.0
        %7424 = vmatpush1.msra.mxu0 0.0
        %7425 = vmatprep.subr.mxu0 0.0
        %7426 = vmatpush1.msra.mxu0 0.0
        %7427 = vmatprep.subr.mxu0 0.0
        %7428 = vmatpush1.msra.mxu0 0.0
        %7429 = vmatprep.subr.mxu0 0.0
        %7430 = vmatpush1.msra.mxu0 0.0
        %7431 = vmatprep.subr.mxu0 0.0
        %7432 = vmatpush1.msra.mxu0 0.0
        %7433 = vmatprep.subr.mxu0 0.0
        %7434 = vmatpush1.msra.mxu0 0.0
        %7435 = vmatprep.subr.mxu0 0.0
        %7436 = vmatpush1.msra.mxu0 0.0
        %7437 = vmatprep.mubr.f32.mxu0 0.0
        %v7438 = vand.u32 %v2087, 4294901760
        %7439 = vmatmul.mubr.f32.gmra.mrb[0].mxu0 %v7438
        %v7440 = vpop.f32.mrb[0].mxu0
        %v7441 = vadd.f32 %v7212, %v7440
        %v7442 = vpop.f32.mrb[0].mxu0
        %v7443 = vadd.f32 %v7214, %v7442
        %7444 = vmatprep.mubr.f32.mxu0 0.0
        %v7445 = vand.u32 %v2090, 4294901760
        %7446 = vmatmul.mubr.f32.gmra.mrb[0].mxu0 %v7445
        %v7447 = vpop.f32.mrb[0].mxu0
        %v7448 = vadd.f32 %v7223, %v7447
        %v7449 = vpop.f32.mrb[0].mxu0
        %v7450 = vadd.f32 %v7225, %v7449
        %7451 = vmatprep.mubr.f32.mxu0 0.0
        %v7452 = vand.u32 %v2093, 4294901760
        %7453 = vmatmul.mubr.f32.gmra.mrb[0].mxu0 %v7452
        %v7454 = vpop.f32.mrb[0].mxu0
        %v7455 = vadd.f32 %v7234, %v7454
        %v7456 = vpop.f32.mrb[0].mxu0
        %v7457 = vadd.f32 %v7236, %v7456
        %7458 = vmatprep.mubr.f32.mxu0 0.0
        %v7459 = vand.u32 %v2096, 4294901760
        %7460 = vmatmul.mubr.f32.gmra.mrb[0].mxu0 %v7459
        %v7461 = vpop.f32.mrb[0].mxu0
        %v7462 = vadd.f32 %v7245, %v7461
        %v7463 = vpop.f32.mrb[0].mxu0
        %v7464 = vadd.f32 %v7247, %v7463
        %7465 = vmatprep.mubr.f32.mxu0 0.0
        %v7466 = vand.u32 %v2099, 4294901760
        %7467 = vmatmul.mubr.f32.gmra.mrb[0].mxu0 %v7466
        %v7468 = vpop.f32.mrb[0].mxu0
        %v7469 = vadd.f32 %v7256, %v7468
        %v7470 = vpop.f32.mrb[0].mxu0
        %v7471 = vadd.f32 %v7258, %v7470
        %7472 = vmatprep.mubr.f32.mxu0 0.0
        %v7473 = vand.u32 %v2102, 4294901760
        %7474 = vmatmul.mubr.f32.gmra.mrb[0].mxu0 %v7473
        %v7475 = vpop.f32.mrb[0].mxu0
        %v7476 = vadd.f32 %v7267, %v7475
        %v7477 = vpop.f32.mrb[0].mxu0
        %v7478 = vadd.f32 %v7269, %v7477
        %7479 = vmatprep.mubr.f32.mxu0 0.0
        %v7480 = vand.u32 %v2105, 4294901760
        %7481 = vmatmul.mubr.f32.gmra.mrb[0].mxu0 %v7480
        %v7482 = vpop.f32.mrb[0].mxu0
        %v7483 = vadd.f32 %v7278, %v7482
        %v7484 = vpop.f32.mrb[0].mxu0
        %v7485 = vadd.f32 %v7280, %v7484
        %7486 = vmatprep.mubr.f32.mxu0 0.0
        %v7487 = vand.u32 %v2108, 4294901760
        %7488 = vmatmul.mubr.f32.gmra.mrb[0].mxu0 %v7487
        %v7489 = vpop.f32.mrb[0].mxu0
        %v7490 = vadd.f32 %v7289, %v7489
        %v7491 = vpop.f32.mrb[0].mxu0
        %v7492 = vadd.f32 %v7291, %v7491
        %7493 = vdwg.mxu0
        %v7494 = vand.u32 %v6105, 4294901760
        %v7495 = vsub.f32 %v6105, %v7494
        %7496 = vmatprep.subr.mxu0 %v7495
        %v7497 = vand.u32 %v6104, 4294901760
        %v7498 = vsub.f32 %v6104, %v7497
        %7499 = vmatpush1.msra.mxu0 %v7498
        %v7500 = vand.u32 %v6109, 4294901760
        %v7501 = vsub.f32 %v6109, %v7500
        %7502 = vmatprep.subr.mxu0 %v7501
        %v7503 = vand.u32 %v6108, 4294901760
        %v7504 = vsub.f32 %v6108, %v7503
        %7505 = vmatpush1.msra.mxu0 %v7504
        %v7506 = vand.u32 %v6113, 4294901760
        %v7507 = vsub.f32 %v6113, %v7506
        %7508 = vmatprep.subr.mxu0 %v7507
        %v7509 = vand.u32 %v6112, 4294901760
        %v7510 = vsub.f32 %v6112, %v7509
        %7511 = vmatpush1.msra.mxu0 %v7510
        %v7512 = vand.u32 %v6117, 4294901760
        %v7513 = vsub.f32 %v6117, %v7512
        %7514 = vmatprep.subr.mxu0 %v7513
        %v7515 = vand.u32 %v6116, 4294901760
        %v7516 = vsub.f32 %v6116, %v7515
        %7517 = vmatpush1.msra.mxu0 %v7516
        %v7518 = vand.u32 %v6121, 4294901760
        %v7519 = vsub.f32 %v6121, %v7518
        %7520 = vmatprep.subr.mxu0 %v7519
        %v7521 = vand.u32 %v6120, 4294901760
        %v7522 = vsub.f32 %v6120, %v7521
        %7523 = vmatpush1.msra.mxu0 %v7522
        %v7524 = vand.u32 %v6125, 4294901760
        %v7525 = vsub.f32 %v6125, %v7524
        %7526 = vmatprep.subr.mxu0 %v7525
        %v7527 = vand.u32 %v6124, 4294901760
        %v7528 = vsub.f32 %v6124, %v7527
        %7529 = vmatpush1.msra.mxu0 %v7528
        %v7530 = vand.u32 %v6129, 4294901760
        %v7531 = vsub.f32 %v6129, %v7530
        %7532 = vmatprep.subr.mxu0 %v7531
        %v7533 = vand.u32 %v6128, 4294901760
        %v7534 = vsub.f32 %v6128, %v7533
        %7535 = vmatpush1.msra.mxu0 %v7534
        %v7536 = vand.u32 %v6133, 4294901760
        %v7537 = vsub.f32 %v6133, %v7536
        %7538 = vmatprep.subr.mxu0 %v7537
        %v7539 = vand.u32 %v6132, 4294901760
        %v7540 = vsub.f32 %v6132, %v7539
        %7541 = vmatpush1.msra.mxu0 %v7540
        %7542 = vmatprep.subr.mxu0 0.0
        %7543 = vmatpush1.msra.mxu0 0.0
        %7544 = vmatprep.subr.mxu0 0.0
        %7545 = vmatpush1.msra.mxu0 0.0
        %7546 = vmatprep.subr.mxu0 0.0
        %7547 = vmatpush1.msra.mxu0 0.0
        %7548 = vmatprep.subr.mxu0 0.0
        %7549 = vmatpush1.msra.mxu0 0.0
        %7550 = vmatprep.subr.mxu0 0.0
        %7551 = vmatpush1.msra.mxu0 0.0
        %7552 = vmatprep.subr.mxu0 0.0
        %7553 = vmatpush1.msra.mxu0 0.0
        %7554 = vmatprep.subr.mxu0 0.0
        %7555 = vmatpush1.msra.mxu0 0.0
        %7556 = vmatprep.subr.mxu0 0.0
        %7557 = vmatpush1.msra.mxu0 0.0
        %7558 = vmatprep.subr.mxu0 0.0
        %7559 = vmatpush1.msra.mxu0 0.0
        %7560 = vmatprep.subr.mxu0 0.0
        %7561 = vmatpush1.msra.mxu0 0.0
        %7562 = vmatprep.subr.mxu0 0.0
        %7563 = vmatpush1.msra.mxu0 0.0
        %7564 = vmatprep.subr.mxu0 0.0
        %7565 = vmatpush1.msra.mxu0 0.0
        %7566 = vmatprep.subr.mxu0 0.0
        %7567 = vmatpush1.msra.mxu0 0.0
        %7568 = vmatprep.subr.mxu0 0.0
        %7569 = vmatpush1.msra.mxu0 0.0
        %7570 = vmatprep.subr.mxu0 0.0
        %7571 = vmatpush1.msra.mxu0 0.0
        %7572 = vmatprep.subr.mxu0 0.0
        %7573 = vmatpush1.msra.mxu0 0.0
        %7574 = vmatprep.subr.mxu0 0.0
        %7575 = vmatpush1.msra.mxu0 0.0
        %7576 = vmatprep.subr.mxu0 0.0
        %7577 = vmatpush1.msra.mxu0 0.0
        %7578 = vmatprep.subr.mxu0 0.0
        %7579 = vmatpush1.msra.mxu0 0.0
        %7580 = vmatprep.subr.mxu0 0.0
        %7581 = vmatpush1.msra.mxu0 0.0
        %7582 = vmatprep.subr.mxu0 0.0
        %7583 = vmatpush1.msra.mxu0 0.0
        %7584 = vmatprep.subr.mxu0 0.0
        %7585 = vmatpush1.msra.mxu0 0.0
        %7586 = vmatprep.subr.mxu0 0.0
        %7587 = vmatpush1.msra.mxu0 0.0
        %7588 = vmatprep.subr.mxu0 0.0
        %7589 = vmatpush1.msra.mxu0 0.0
        %7590 = vmatprep.mubr.f32.mxu0 0.0
        %v7591 = vand.u32 %v2087, 4294901760
        %v7592 = vsub.f32 %v2087, %v7591
        %7593 = vmatmul.mubr.f32.gmra.mrb[0].mxu0 %v7592
        %v7594 = vpop.f32.mrb[0].mxu0
        %v7595 = vadd.f32 %v7441, %v7594
        %v7596 = vpop.f32.mrb[0].mxu0
        %v7597 = vadd.f32 %v7443, %v7596
        %7598 = vmatprep.mubr.f32.mxu0 0.0
        %v7599 = vand.u32 %v2090, 4294901760
        %v7600 = vsub.f32 %v2090, %v7599
        %7601 = vmatmul.mubr.f32.gmra.mrb[0].mxu0 %v7600
        %v7602 = vpop.f32.mrb[0].mxu0
        %v7603 = vadd.f32 %v7448, %v7602
        %v7604 = vpop.f32.mrb[0].mxu0
        %v7605 = vadd.f32 %v7450, %v7604
        %7606 = vmatprep.mubr.f32.mxu0 0.0
        %v7607 = vand.u32 %v2093, 4294901760
        %v7608 = vsub.f32 %v2093, %v7607
        %7609 = vmatmul.mubr.f32.gmra.mrb[0].mxu0 %v7608
        %v7610 = vpop.f32.mrb[0].mxu0
        %v7611 = vadd.f32 %v7455, %v7610
        %v7612 = vpop.f32.mrb[0].mxu0
        %v7613 = vadd.f32 %v7457, %v7612
        %7614 = vmatprep.mubr.f32.mxu0 0.0
        %v7615 = vand.u32 %v2096, 4294901760
        %v7616 = vsub.f32 %v2096, %v7615
        %7617 = vmatmul.mubr.f32.gmra.mrb[0].mxu0 %v7616
        %v7618 = vpop.f32.mrb[0].mxu0
        %v7619 = vadd.f32 %v7462, %v7618
        %v7620 = vpop.f32.mrb[0].mxu0
        %v7621 = vadd.f32 %v7464, %v7620
        %7622 = vmatprep.mubr.f32.mxu0 0.0
        %v7623 = vand.u32 %v2099, 4294901760
        %v7624 = vsub.f32 %v2099, %v7623
        %7625 = vmatmul.mubr.f32.gmra.mrb[0].mxu0 %v7624
        %v7626 = vpop.f32.mrb[0].mxu0
        %v7627 = vadd.f32 %v7469, %v7626
        %v7628 = vpop.f32.mrb[0].mxu0
        %v7629 = vadd.f32 %v7471, %v7628
        %7630 = vmatprep.mubr.f32.mxu0 0.0
        %v7631 = vand.u32 %v2102, 4294901760
        %v7632 = vsub.f32 %v2102, %v7631
        %7633 = vmatmul.mubr.f32.gmra.mrb[0].mxu0 %v7632
        %v7634 = vpop.f32.mrb[0].mxu0
        %v7635 = vadd.f32 %v7476, %v7634
        %v7636 = vpop.f32.mrb[0].mxu0
        %v7637 = vadd.f32 %v7478, %v7636
        %7638 = vmatprep.mubr.f32.mxu0 0.0
        %v7639 = vand.u32 %v2105, 4294901760
        %v7640 = vsub.f32 %v2105, %v7639
        %7641 = vmatmul.mubr.f32.gmra.mrb[0].mxu0 %v7640
        %v7642 = vpop.f32.mrb[0].mxu0
        %v7643 = vadd.f32 %v7483, %v7642
        %v7644 = vpop.f32.mrb[0].mxu0
        %v7645 = vadd.f32 %v7485, %v7644
        %7646 = vmatprep.mubr.f32.mxu0 0.0
        %v7647 = vand.u32 %v2108, 4294901760
        %v7648 = vsub.f32 %v2108, %v7647
        %7649 = vmatmul.mubr.f32.gmra.mrb[0].mxu0 %v7648
        %v7650 = vpop.f32.mrb[0].mxu0
        %v7651 = vadd.f32 %v7490, %v7650
        %v7652 = vpop.f32.mrb[0].mxu0
        %v7653 = vadd.f32 %v7492, %v7652
        %7654 = vdwg.mxu0
        %v7655 = vand.u32 %v6105, 4294901760
        %7656 = vmatprep.subr.mxu0 %v7655
        %v7657 = vand.u32 %v6104, 4294901760
        %7658 = vmatpush1.msra.mxu0 %v7657
        %v7659 = vand.u32 %v6109, 4294901760
        %7660 = vmatprep.subr.mxu0 %v7659
        %v7661 = vand.u32 %v6108, 4294901760
        %7662 = vmatpush1.msra.mxu0 %v7661
        %v7663 = vand.u32 %v6113, 4294901760
        %7664 = vmatprep.subr.mxu0 %v7663
        %v7665 = vand.u32 %v6112, 4294901760
        %7666 = vmatpush1.msra.mxu0 %v7665
        %v7667 = vand.u32 %v6117, 4294901760
        %7668 = vmatprep.subr.mxu0 %v7667
        %v7669 = vand.u32 %v6116, 4294901760
        %7670 = vmatpush1.msra.mxu0 %v7669
        %v7671 = vand.u32 %v6121, 4294901760
        %7672 = vmatprep.subr.mxu0 %v7671
        %v7673 = vand.u32 %v6120, 4294901760
        %7674 = vmatpush1.msra.mxu0 %v7673
        %v7675 = vand.u32 %v6125, 4294901760
        %7676 = vmatprep.subr.mxu0 %v7675
        %v7677 = vand.u32 %v6124, 4294901760
        %7678 = vmatpush1.msra.mxu0 %v7677
        %v7679 = vand.u32 %v6129, 4294901760
        %7680 = vmatprep.subr.mxu0 %v7679
        %v7681 = vand.u32 %v6128, 4294901760
        %7682 = vmatpush1.msra.mxu0 %v7681
        %v7683 = vand.u32 %v6133, 4294901760
        %7684 = vmatprep.subr.mxu0 %v7683
        %v7685 = vand.u32 %v6132, 4294901760
        %7686 = vmatpush1.msra.mxu0 %v7685
        %7687 = vmatprep.subr.mxu0 0.0
        %7688 = vmatpush1.msra.mxu0 0.0
        %7689 = vmatprep.subr.mxu0 0.0
        %7690 = vmatpush1.msra.mxu0 0.0
        %7691 = vmatprep.subr.mxu0 0.0
        %7692 = vmatpush1.msra.mxu0 0.0
        %7693 = vmatprep.subr.mxu0 0.0
        %7694 = vmatpush1.msra.mxu0 0.0
        %7695 = vmatprep.subr.mxu0 0.0
        %7696 = vmatpush1.msra.mxu0 0.0
        %7697 = vmatprep.subr.mxu0 0.0
        %7698 = vmatpush1.msra.mxu0 0.0
        %7699 = vmatprep.subr.mxu0 0.0
        %7700 = vmatpush1.msra.mxu0 0.0
        %7701 = vmatprep.subr.mxu0 0.0
        %7702 = vmatpush1.msra.mxu0 0.0
        %7703 = vmatprep.subr.mxu0 0.0
        %7704 = vmatpush1.msra.mxu0 0.0
        %7705 = vmatprep.subr.mxu0 0.0
        %7706 = vmatpush1.msra.mxu0 0.0
        %7707 = vmatprep.subr.mxu0 0.0
        %7708 = vmatpush1.msra.mxu0 0.0
        %7709 = vmatprep.subr.mxu0 0.0
        %7710 = vmatpush1.msra.mxu0 0.0
        %7711 = vmatprep.subr.mxu0 0.0
        %7712 = vmatpush1.msra.mxu0 0.0
        %7713 = vmatprep.subr.mxu0 0.0
        %7714 = vmatpush1.msra.mxu0 0.0
        %7715 = vmatprep.subr.mxu0 0.0
        %7716 = vmatpush1.msra.mxu0 0.0
        %7717 = vmatprep.subr.mxu0 0.0
        %7718 = vmatpush1.msra.mxu0 0.0
        %7719 = vmatprep.subr.mxu0 0.0
        %7720 = vmatpush1.msra.mxu0 0.0
        %7721 = vmatprep.subr.mxu0 0.0
        %7722 = vmatpush1.msra.mxu0 0.0
        %7723 = vmatprep.subr.mxu0 0.0
        %7724 = vmatpush1.msra.mxu0 0.0
        %7725 = vmatprep.subr.mxu0 0.0
        %7726 = vmatpush1.msra.mxu0 0.0
        %7727 = vmatprep.subr.mxu0 0.0
        %7728 = vmatpush1.msra.mxu0 0.0
        %7729 = vmatprep.subr.mxu0 0.0
        %7730 = vmatpush1.msra.mxu0 0.0
        %7731 = vmatprep.subr.mxu0 0.0
        %7732 = vmatpush1.msra.mxu0 0.0
        %7733 = vmatprep.subr.mxu0 0.0
        %7734 = vmatpush1.msra.mxu0 0.0
        %7735 = vmatprep.mubr.f32.mxu0 0.0
        %v7736 = vand.u32 %v2087, 4294901760
        %v7737 = vsub.f32 %v2087, %v7736
        %v7738 = vand.u32 %v7737, 4294901760
        %7739 = vmatmul.mubr.f32.gmra.mrb[0].mxu0 %v7738
        %v7740 = vpop.f32.mrb[0].mxu0
        %v7741 = vadd.f32 %v7595, %v7740
        %v7742 = vpop.f32.mrb[0].mxu0
        %v7743 = vadd.f32 %v7597, %v7742
        %7744 = vmatprep.mubr.f32.mxu0 0.0
        %v7745 = vand.u32 %v2090, 4294901760
        %v7746 = vsub.f32 %v2090, %v7745
        %v7747 = vand.u32 %v7746, 4294901760
        %7748 = vmatmul.mubr.f32.gmra.mrb[0].mxu0 %v7747
        %v7749 = vpop.f32.mrb[0].mxu0
        %v7750 = vadd.f32 %v7603, %v7749
        %v7751 = vpop.f32.mrb[0].mxu0
        %v7752 = vadd.f32 %v7605, %v7751
        %7753 = vmatprep.mubr.f32.mxu0 0.0
        %v7754 = vand.u32 %v2093, 4294901760
        %v7755 = vsub.f32 %v2093, %v7754
        %v7756 = vand.u32 %v7755, 4294901760
        %7757 = vmatmul.mubr.f32.gmra.mrb[0].mxu0 %v7756
        %v7758 = vpop.f32.mrb[0].mxu0
        %v7759 = vadd.f32 %v7611, %v7758
        %v7760 = vpop.f32.mrb[0].mxu0
        %v7761 = vadd.f32 %v7613, %v7760
        %7762 = vmatprep.mubr.f32.mxu0 0.0
        %v7763 = vand.u32 %v2096, 4294901760
        %v7764 = vsub.f32 %v2096, %v7763
        %v7765 = vand.u32 %v7764, 4294901760
        %7766 = vmatmul.mubr.f32.gmra.mrb[0].mxu0 %v7765
        %v7767 = vpop.f32.mrb[0].mxu0
        %v7768 = vadd.f32 %v7619, %v7767
        %v7769 = vpop.f32.mrb[0].mxu0
        %v7770 = vadd.f32 %v7621, %v7769
        %7771 = vmatprep.mubr.f32.mxu0 0.0
        %v7772 = vand.u32 %v2099, 4294901760
        %v7773 = vsub.f32 %v2099, %v7772
        %v7774 = vand.u32 %v7773, 4294901760
        %7775 = vmatmul.mubr.f32.gmra.mrb[0].mxu0 %v7774
        %v7776 = vpop.f32.mrb[0].mxu0
        %v7777 = vadd.f32 %v7627, %v7776
        %v7778 = vpop.f32.mrb[0].mxu0
        %v7779 = vadd.f32 %v7629, %v7778
        %7780 = vmatprep.mubr.f32.mxu0 0.0
        %v7781 = vand.u32 %v2102, 4294901760
        %v7782 = vsub.f32 %v2102, %v7781
        %v7783 = vand.u32 %v7782, 4294901760
        %7784 = vmatmul.mubr.f32.gmra.mrb[0].mxu0 %v7783
        %v7785 = vpop.f32.mrb[0].mxu0
        %v7786 = vadd.f32 %v7635, %v7785
        %v7787 = vpop.f32.mrb[0].mxu0
        %v7788 = vadd.f32 %v7637, %v7787
        %7789 = vmatprep.mubr.f32.mxu0 0.0
        %v7790 = vand.u32 %v2105, 4294901760
        %v7791 = vsub.f32 %v2105, %v7790
        %v7792 = vand.u32 %v7791, 4294901760
        %7793 = vmatmul.mubr.f32.gmra.mrb[0].mxu0 %v7792
        %v7794 = vpop.f32.mrb[0].mxu0
        %v7795 = vadd.f32 %v7643, %v7794
        %v7796 = vpop.f32.mrb[0].mxu0
        %v7797 = vadd.f32 %v7645, %v7796
        %7798 = vmatprep.mubr.f32.mxu0 0.0
        %v7799 = vand.u32 %v2108, 4294901760
        %v7800 = vsub.f32 %v2108, %v7799
        %v7801 = vand.u32 %v7800, 4294901760
        %7802 = vmatmul.mubr.f32.gmra.mrb[0].mxu0 %v7801
        %v7803 = vpop.f32.mrb[0].mxu0
        %v7804 = vadd.f32 %v7651, %v7803
        %v7805 = vpop.f32.mrb[0].mxu0
        %v7806 = vadd.f32 %v7653, %v7805
        %7807 = vdwg.mxu0
        %v7808 = vand.u32 %v6105, 4294901760
        %v7809 = vsub.f32 %v6105, %v7808
        %v7810 = vand.u32 %v7809, 4294901760
        %7811 = vmatprep.subr.mxu0 %v7810
        %v7812 = vand.u32 %v6104, 4294901760
        %v7813 = vsub.f32 %v6104, %v7812
        %v7814 = vand.u32 %v7813, 4294901760
        %7815 = vmatpush1.msra.mxu0 %v7814
        %v7816 = vand.u32 %v6109, 4294901760
        %v7817 = vsub.f32 %v6109, %v7816
        %v7818 = vand.u32 %v7817, 4294901760
        %7819 = vmatprep.subr.mxu0 %v7818
        %v7820 = vand.u32 %v6108, 4294901760
        %v7821 = vsub.f32 %v6108, %v7820
        %v7822 = vand.u32 %v7821, 4294901760
        %7823 = vmatpush1.msra.mxu0 %v7822
        %v7824 = vand.u32 %v6113, 4294901760
        %v7825 = vsub.f32 %v6113, %v7824
        %v7826 = vand.u32 %v7825, 4294901760
        %7827 = vmatprep.subr.mxu0 %v7826
        %v7828 = vand.u32 %v6112, 4294901760
        %v7829 = vsub.f32 %v6112, %v7828
        %v7830 = vand.u32 %v7829, 4294901760
        %7831 = vmatpush1.msra.mxu0 %v7830
        %v7832 = vand.u32 %v6117, 4294901760
        %v7833 = vsub.f32 %v6117, %v7832
        %v7834 = vand.u32 %v7833, 4294901760
        %7835 = vmatprep.subr.mxu0 %v7834
        %v7836 = vand.u32 %v6116, 4294901760
        %v7837 = vsub.f32 %v6116, %v7836
        %v7838 = vand.u32 %v7837, 4294901760
        %7839 = vmatpush1.msra.mxu0 %v7838
        %v7840 = vand.u32 %v6121, 4294901760
        %v7841 = vsub.f32 %v6121, %v7840
        %v7842 = vand.u32 %v7841, 4294901760
        %7843 = vmatprep.subr.mxu0 %v7842
        %v7844 = vand.u32 %v6120, 4294901760
        %v7845 = vsub.f32 %v6120, %v7844
        %v7846 = vand.u32 %v7845, 4294901760
        %7847 = vmatpush1.msra.mxu0 %v7846
        %v7848 = vand.u32 %v6125, 4294901760
        %v7849 = vsub.f32 %v6125, %v7848
        %v7850 = vand.u32 %v7849, 4294901760
        %7851 = vmatprep.subr.mxu0 %v7850
        %v7852 = vand.u32 %v6124, 4294901760
        %v7853 = vsub.f32 %v6124, %v7852
        %v7854 = vand.u32 %v7853, 4294901760
        %7855 = vmatpush1.msra.mxu0 %v7854
        %v7856 = vand.u32 %v6129, 4294901760
        %v7857 = vsub.f32 %v6129, %v7856
        %v7858 = vand.u32 %v7857, 4294901760
        %7859 = vmatprep.subr.mxu0 %v7858
        %v7860 = vand.u32 %v6128, 4294901760
        %v7861 = vsub.f32 %v6128, %v7860
        %v7862 = vand.u32 %v7861, 4294901760
        %7863 = vmatpush1.msra.mxu0 %v7862
        %v7864 = vand.u32 %v6133, 4294901760
        %v7865 = vsub.f32 %v6133, %v7864
        %v7866 = vand.u32 %v7865, 4294901760
        %7867 = vmatprep.subr.mxu0 %v7866
        %v7868 = vand.u32 %v6132, 4294901760
        %v7869 = vsub.f32 %v6132, %v7868
        %v7870 = vand.u32 %v7869, 4294901760
        %7871 = vmatpush1.msra.mxu0 %v7870
        %7872 = vmatprep.subr.mxu0 0.0
        %7873 = vmatpush1.msra.mxu0 0.0
        %7874 = vmatprep.subr.mxu0 0.0
        %7875 = vmatpush1.msra.mxu0 0.0
        %7876 = vmatprep.subr.mxu0 0.0
        %7877 = vmatpush1.msra.mxu0 0.0
        %7878 = vmatprep.subr.mxu0 0.0
        %7879 = vmatpush1.msra.mxu0 0.0
        %7880 = vmatprep.subr.mxu0 0.0
        %7881 = vmatpush1.msra.mxu0 0.0
        %7882 = vmatprep.subr.mxu0 0.0
        %7883 = vmatpush1.msra.mxu0 0.0
        %7884 = vmatprep.subr.mxu0 0.0
        %7885 = vmatpush1.msra.mxu0 0.0
        %7886 = vmatprep.subr.mxu0 0.0
        %7887 = vmatpush1.msra.mxu0 0.0
        %7888 = vmatprep.subr.mxu0 0.0
        %7889 = vmatpush1.msra.mxu0 0.0
        %7890 = vmatprep.subr.mxu0 0.0
        %7891 = vmatpush1.msra.mxu0 0.0
        %7892 = vmatprep.subr.mxu0 0.0
        %7893 = vmatpush1.msra.mxu0 0.0
        %7894 = vmatprep.subr.mxu0 0.0
        %7895 = vmatpush1.msra.mxu0 0.0
        %7896 = vmatprep.subr.mxu0 0.0
        %7897 = vmatpush1.msra.mxu0 0.0
        %7898 = vmatprep.subr.mxu0 0.0
        %7899 = vmatpush1.msra.mxu0 0.0
        %7900 = vmatprep.subr.mxu0 0.0
        %7901 = vmatpush1.msra.mxu0 0.0
        %7902 = vmatprep.subr.mxu0 0.0
        %7903 = vmatpush1.msra.mxu0 0.0
        %7904 = vmatprep.subr.mxu0 0.0
        %7905 = vmatpush1.msra.mxu0 0.0
        %7906 = vmatprep.subr.mxu0 0.0
        %7907 = vmatpush1.msra.mxu0 0.0
        %7908 = vmatprep.subr.mxu0 0.0
        %7909 = vmatpush1.msra.mxu0 0.0
        %7910 = vmatprep.subr.mxu0 0.0
        %7911 = vmatpush1.msra.mxu0 0.0
        %7912 = vmatprep.subr.mxu0 0.0
        %7913 = vmatpush1.msra.mxu0 0.0
        %7914 = vmatprep.subr.mxu0 0.0
        %7915 = vmatpush1.msra.mxu0 0.0
        %7916 = vmatprep.subr.mxu0 0.0
        %7917 = vmatpush1.msra.mxu0 0.0
        %7918 = vmatprep.subr.mxu0 0.0
        %7919 = vmatpush1.msra.mxu0 0.0
        %7920 = vmatprep.mubr.f32.mxu0 0.0
        %v7921 = vand.u32 %v2087, 4294901760
        %7922 = vmatmul.mubr.f32.gmra.mrb[0].mxu0 %v7921
        %v7923 = vpop.f32.mrb[0].mxu0
        %v7924 = vadd.f32 %v7741, %v7923
        %v7925 = vpop.f32.mrb[0].mxu0
        %v7926 = vadd.f32 %v7743, %v7925
        %7927 = vmatprep.mubr.f32.mxu0 0.0
        %v7928 = vand.u32 %v2090, 4294901760
        %7929 = vmatmul.mubr.f32.gmra.mrb[0].mxu0 %v7928
        %v7930 = vpop.f32.mrb[0].mxu0
        %v7931 = vadd.f32 %v7750, %v7930
        %v7932 = vpop.f32.mrb[0].mxu0
        %v7933 = vadd.f32 %v7752, %v7932
        %7934 = vmatprep.mubr.f32.mxu0 0.0
        %v7935 = vand.u32 %v2093, 4294901760
        %7936 = vmatmul.mubr.f32.gmra.mrb[0].mxu0 %v7935
        %v7937 = vpop.f32.mrb[0].mxu0
        %v7938 = vadd.f32 %v7759, %v7937
        %v7939 = vpop.f32.mrb[0].mxu0
        %v7940 = vadd.f32 %v7761, %v7939
        %7941 = vmatprep.mubr.f32.mxu0 0.0
        %v7942 = vand.u32 %v2096, 4294901760
        %7943 = vmatmul.mubr.f32.gmra.mrb[0].mxu0 %v7942
        %v7944 = vpop.f32.mrb[0].mxu0
        %v7945 = vadd.f32 %v7768, %v7944
        %v7946 = vpop.f32.mrb[0].mxu0
        %v7947 = vadd.f32 %v7770, %v7946
        %7948 = vmatprep.mubr.f32.mxu0 0.0
        %v7949 = vand.u32 %v2099, 4294901760
        %7950 = vmatmul.mubr.f32.gmra.mrb[0].mxu0 %v7949
        %v7951 = vpop.f32.mrb[0].mxu0
        %v7952 = vadd.f32 %v7777, %v7951
        %v7953 = vpop.f32.mrb[0].mxu0
        %v7954 = vadd.f32 %v7779, %v7953
        %7955 = vmatprep.mubr.f32.mxu0 0.0
        %v7956 = vand.u32 %v2102, 4294901760
        %7957 = vmatmul.mubr.f32.gmra.mrb[0].mxu0 %v7956
        %v7958 = vpop.f32.mrb[0].mxu0
        %v7959 = vadd.f32 %v7786, %v7958
        %v7960 = vpop.f32.mrb[0].mxu0
        %v7961 = vadd.f32 %v7788, %v7960
        %7962 = vmatprep.mubr.f32.mxu0 0.0
        %v7963 = vand.u32 %v2105, 4294901760
        %7964 = vmatmul.mubr.f32.gmra.mrb[0].mxu0 %v7963
        %v7965 = vpop.f32.mrb[0].mxu0
        %v7966 = vadd.f32 %v7795, %v7965
        %v7967 = vpop.f32.mrb[0].mxu0
        %v7968 = vadd.f32 %v7797, %v7967
        %7969 = vmatprep.mubr.f32.mxu0 0.0
        %v7970 = vand.u32 %v2108, 4294901760
        %7971 = vmatmul.mubr.f32.gmra.mrb[0].mxu0 %v7970
        %v7972 = vpop.f32.mrb[0].mxu0
        %v7973 = vadd.f32 %v7804, %v7972
        %v7974 = vpop.f32.mrb[0].mxu0
        %v7975 = vadd.f32 %v7806, %v7974
        %7976 = vdwg.mxu0
        %v7977 = vand.u32 %v6105, 4294901760
        %7978 = vmatprep.subr.mxu0 %v7977
        %v7979 = vand.u32 %v6104, 4294901760
        %7980 = vmatpush1.msra.mxu0 %v7979
        %v7981 = vand.u32 %v6109, 4294901760
        %7982 = vmatprep.subr.mxu0 %v7981
        %v7983 = vand.u32 %v6108, 4294901760
        %7984 = vmatpush1.msra.mxu0 %v7983
        %v7985 = vand.u32 %v6113, 4294901760
        %7986 = vmatprep.subr.mxu0 %v7985
        %v7987 = vand.u32 %v6112, 4294901760
        %7988 = vmatpush1.msra.mxu0 %v7987
        %v7989 = vand.u32 %v6117, 4294901760
        %7990 = vmatprep.subr.mxu0 %v7989
        %v7991 = vand.u32 %v6116, 4294901760
        %7992 = vmatpush1.msra.mxu0 %v7991
        %v7993 = vand.u32 %v6121, 4294901760
        %7994 = vmatprep.subr.mxu0 %v7993
        %v7995 = vand.u32 %v6120, 4294901760
        %7996 = vmatpush1.msra.mxu0 %v7995
        %v7997 = vand.u32 %v6125, 4294901760
        %7998 = vmatprep.subr.mxu0 %v7997
        %v7999 = vand.u32 %v6124, 4294901760
        %8000 = vmatpush1.msra.mxu0 %v7999
        %v8001 = vand.u32 %v6129, 4294901760
        %8002 = vmatprep.subr.mxu0 %v8001
        %v8003 = vand.u32 %v6128, 4294901760
        %8004 = vmatpush1.msra.mxu0 %v8003
        %v8005 = vand.u32 %v6133, 4294901760
        %8006 = vmatprep.subr.mxu0 %v8005
        %v8007 = vand.u32 %v6132, 4294901760
        %8008 = vmatpush1.msra.mxu0 %v8007
        %8009 = vmatprep.subr.mxu0 0.0
        %8010 = vmatpush1.msra.mxu0 0.0
        %8011 = vmatprep.subr.mxu0 0.0
        %8012 = vmatpush1.msra.mxu0 0.0
        %8013 = vmatprep.subr.mxu0 0.0
        %8014 = vmatpush1.msra.mxu0 0.0
        %8015 = vmatprep.subr.mxu0 0.0
        %8016 = vmatpush1.msra.mxu0 0.0
        %8017 = vmatprep.subr.mxu0 0.0
        %8018 = vmatpush1.msra.mxu0 0.0
        %8019 = vmatprep.subr.mxu0 0.0
        %8020 = vmatpush1.msra.mxu0 0.0
        %8021 = vmatprep.subr.mxu0 0.0
        %8022 = vmatpush1.msra.mxu0 0.0
        %8023 = vmatprep.subr.mxu0 0.0
        %8024 = vmatpush1.msra.mxu0 0.0
        %8025 = vmatprep.subr.mxu0 0.0
        %8026 = vmatpush1.msra.mxu0 0.0
        %8027 = vmatprep.subr.mxu0 0.0
        %8028 = vmatpush1.msra.mxu0 0.0
        %8029 = vmatprep.subr.mxu0 0.0
        %8030 = vmatpush1.msra.mxu0 0.0
        %8031 = vmatprep.subr.mxu0 0.0
        %8032 = vmatpush1.msra.mxu0 0.0
        %8033 = vmatprep.subr.mxu0 0.0
        %8034 = vmatpush1.msra.mxu0 0.0
        %8035 = vmatprep.subr.mxu0 0.0
        %8036 = vmatpush1.msra.mxu0 0.0
        %8037 = vmatprep.subr.mxu0 0.0
        %8038 = vmatpush1.msra.mxu0 0.0
        %8039 = vmatprep.subr.mxu0 0.0
        %8040 = vmatpush1.msra.mxu0 0.0
        %8041 = vmatprep.subr.mxu0 0.0
        %8042 = vmatpush1.msra.mxu0 0.0
        %8043 = vmatprep.subr.mxu0 0.0
        %8044 = vmatpush1.msra.mxu0 0.0
        %8045 = vmatprep.subr.mxu0 0.0
        %8046 = vmatpush1.msra.mxu0 0.0
        %8047 = vmatprep.subr.mxu0 0.0
        %8048 = vmatpush1.msra.mxu0 0.0
        %8049 = vmatprep.subr.mxu0 0.0
        %8050 = vmatpush1.msra.mxu0 0.0
        %8051 = vmatprep.subr.mxu0 0.0
        %8052 = vmatpush1.msra.mxu0 0.0
        %8053 = vmatprep.subr.mxu0 0.0
        %8054 = vmatpush1.msra.mxu0 0.0
        %8055 = vmatprep.subr.mxu0 0.0
        %8056 = vmatpush1.msra.mxu0 0.0
        %8057 = vmatprep.mubr.f32.mxu0 0.0
        %v8058 = vand.u32 %v2087, 4294901760
        %8059 = vmatmul.mubr.f32.gmra.mrb[0].mxu0 %v8058
        %v8060 = vpop.f32.mrb[0].mxu0
        %v8061 = vadd.f32 %v7924, %v8060
        %v8062 = vpop.f32.mrb[0].mxu0
        %v8063 = vadd.f32 %v7926, %v8062
        %8064 = vmatprep.mubr.f32.mxu0 0.0
        %v8065 = vand.u32 %v2090, 4294901760
        %8066 = vmatmul.mubr.f32.gmra.mrb[0].mxu0 %v8065
        %v8067 = vpop.f32.mrb[0].mxu0
        %v8068 = vadd.f32 %v7931, %v8067
        %v8069 = vpop.f32.mrb[0].mxu0
        %v8070 = vadd.f32 %v7933, %v8069
        %8071 = vmatprep.mubr.f32.mxu0 0.0
        %v8072 = vand.u32 %v2093, 4294901760
        %8073 = vmatmul.mubr.f32.gmra.mrb[0].mxu0 %v8072
        %v8074 = vpop.f32.mrb[0].mxu0
        %v8075 = vadd.f32 %v7938, %v8074
        %v8076 = vpop.f32.mrb[0].mxu0
        %v8077 = vadd.f32 %v7940, %v8076
        %8078 = vmatprep.mubr.f32.mxu0 0.0
        %v8079 = vand.u32 %v2096, 4294901760
        %8080 = vmatmul.mubr.f32.gmra.mrb[0].mxu0 %v8079
        %v8081 = vpop.f32.mrb[0].mxu0
        %v8082 = vadd.f32 %v7945, %v8081
        %v8083 = vpop.f32.mrb[0].mxu0
        %v8084 = vadd.f32 %v7947, %v8083
        %8085 = vmatprep.mubr.f32.mxu0 0.0
        %v8086 = vand.u32 %v2099, 4294901760
        %8087 = vmatmul.mubr.f32.gmra.mrb[0].mxu0 %v8086
        %v8088 = vpop.f32.mrb[0].mxu0
        %v8089 = vadd.f32 %v7952, %v8088
        %v8090 = vpop.f32.mrb[0].mxu0
        %v8091 = vadd.f32 %v7954, %v8090
        %8092 = vmatprep.mubr.f32.mxu0 0.0
        %v8093 = vand.u32 %v2102, 4294901760
        %8094 = vmatmul.mubr.f32.gmra.mrb[0].mxu0 %v8093
        %v8095 = vpop.f32.mrb[0].mxu0
        %v8096 = vadd.f32 %v7959, %v8095
        %v8097 = vpop.f32.mrb[0].mxu0
        %v8098 = vadd.f32 %v7961, %v8097
        %8099 = vmatprep.mubr.f32.mxu0 0.0
        %v8100 = vand.u32 %v2105, 4294901760
        %8101 = vmatmul.mubr.f32.gmra.mrb[0].mxu0 %v8100
        %v8102 = vpop.f32.mrb[0].mxu0
        %v8103 = vadd.f32 %v7966, %v8102
        %v8104 = vpop.f32.mrb[0].mxu0
        %v8105 = vadd.f32 %v7968, %v8104
        %8106 = vmatprep.mubr.f32.mxu0 0.0
        %v8107 = vand.u32 %v2108, 4294901760
        %8108 = vmatmul.mubr.f32.gmra.mrb[0].mxu0 %v8107
        %v8109 = vpop.f32.mrb[0].mxu0
        %v8110 = vadd.f32 %v7973, %v8109
        %v8111 = vpop.f32.mrb[0].mxu0
        %v8112 = vadd.f32 %v7975, %v8111
        %8113 = vdwg.mxu0
        %v8114 = vtanh.pop %v7071
        %v8115 = vtanh.pop %v7073
        %v8116 = vtanh.pop %v8061
        %v8117 = vtanh.pop %v8063
        %v8118 = vtanh.pop %v7078
        %v8119 = vtanh.pop %v7080
        %v8120 = vtanh.pop %v8068
        %v8121 = vtanh.pop %v8070
        %v8122 = vtanh.pop %v7085
        %v8123 = vtanh.pop %v7087
        %v8124 = vtanh.pop %v8075
        %v8125 = vtanh.pop %v8077
        %v8126 = vtanh.pop %v7092
        %v8127 = vtanh.pop %v7094
        %v8128 = vtanh.pop %v8082
        %v8129 = vtanh.pop %v8084
        %v8130 = vtanh.pop %v7099
        %v8131 = vtanh.pop %v7101
        %v8132 = vtanh.pop %v8089
        %v8133 = vtanh.pop %v8091
        %v8134 = vtanh.pop %v7106
        %v8135 = vtanh.pop %v7108
        %v8136 = vtanh.pop %v8096
        %v8137 = vtanh.pop %v8098
        %v8138 = vtanh.pop %v7113
        %v8139 = vtanh.pop %v7115
        %v8140 = vtanh.pop %v8103
        %v8141 = vtanh.pop %v8105
        %v8142 = vtanh.pop %v7120
        %v8143 = vtanh.pop %v7122
        %v8144 = vtanh.pop %v8110
        %v8145 = vtanh.pop %v8112
        %v8146 = vadd.f32 %v8114, %v1997
        %v8147 = vadd.f32 %v8115, %v1998
        %v8148 = vadd.f32 %v8116, %v1999
        %v8149 = vadd.f32 %v8117, %v2000
        %v8150 = vadd.f32 %v8118, %v2001
        %v8151 = vadd.f32 %v8119, %v2002
        %v8152 = vadd.f32 %v8120, %v2003
        %v8153 = vadd.f32 %v8121, %v2004
        %v8154 = vadd.f32 %v8122, %v2005
        %v8155 = vadd.f32 %v8123, %v2006
        %v8156 = vadd.f32 %v8124, %v2007
        %v8157 = vadd.f32 %v8125, %v2008
        %v8158 = vadd.f32 %v8126, %v2009
        %v8159 = vadd.f32 %v8127, %v2010
        %v8160 = vadd.f32 %v8128, %v2011
        %v8161 = vadd.f32 %v8129, %v2012
        %v8162 = vadd.f32 %v8130, %v2013
        %v8163 = vadd.f32 %v8131, %v2014
        %v8164 = vadd.f32 %v8132, %v2015
        %v8165 = vadd.f32 %v8133, %v2016
        %v8166 = vadd.f32 %v8134, %v2017
        %v8167 = vadd.f32 %v8135, %v2018
        %v8168 = vadd.f32 %v8136, %v2019
        %v8169 = vadd.f32 %v8137, %v2020
        %v8170 = vadd.f32 %v8138, %v2021
        %v8171 = vadd.f32 %v8139, %v2022
        %v8172 = vadd.f32 %v8140, %v2023
        %v8173 = vadd.f32 %v8141, %v2024
        %v8174 = vadd.f32 %v8142, %v2025
        %v8175 = vadd.f32 %v8143, %v2026
        %v8176 = vadd.f32 %v8144, %v2027
        %v8177 = vadd.f32 %v8145, %v2028
        %v8178 = vld [vmem:[%s4] sm:$0xff]
        %v8179 = vld [vmem:[%s4 + $0x8] sm:$0xff]
        %v8180 = vld [vmem:[%s4 + $0x10] sm:$0xff]
        %v8181 = vld [vmem:[%s4 + $0x18] sm:$0xff]
        %v8182 = vld [vmem:[%s4 + $0x20] sm:$0xff]
        %v8183 = vld [vmem:[%s4 + $0x28] sm:$0xff]
        %v8184 = vld [vmem:[%s4 + $0x30] sm:$0xff]
        %v8185 = vld [vmem:[%s4 + $0x38] sm:$0xff]
        %8187 = vset.pattern.permute.xlu0 0
        %8188 = vperm.xlu0 %8187, %v8178
        %v8189 = vpop.permute.xlu0 %8188
        %8192 = vset.pattern.permute.xlu0 0
        %8193 = vperm.xlu0 %8192, %v8179
        %v8194 = vpop.permute.xlu0 %8193
        %8197 = vset.pattern.permute.xlu0 0
        %8198 = vperm.xlu0 %8197, %v8180
        %v8199 = vpop.permute.xlu0 %8198
        %8202 = vset.pattern.permute.xlu0 0
        %8203 = vperm.xlu0 %8202, %v8181
        %v8204 = vpop.permute.xlu0 %8203
        %8207 = vset.pattern.permute.xlu0 0
        %8208 = vperm.xlu0 %8207, %v8182
        %v8209 = vpop.permute.xlu0 %8208
        %8212 = vset.pattern.permute.xlu0 0
        %8213 = vperm.xlu0 %8212, %v8183
        %v8214 = vpop.permute.xlu0 %8213
        %8217 = vset.pattern.permute.xlu0 0
        %8218 = vperm.xlu0 %8217, %v8184
        %v8219 = vpop.permute.xlu0 %8218
        %8222 = vset.pattern.permute.xlu0 0
        %8223 = vperm.xlu0 %8222, %v8185
        %v8224 = vpop.permute.xlu0 %8223
        %v8226 = vmul.f32 %v8146, %v8189
        %v8227 = vmul.f32 %v8147, %v8189
        %v8228 = vmul.f32 %v8148, %v8189
        %v8229 = vmul.f32 %v8149, %v8189
        %v8230 = vmul.f32 %v8150, %v8194
        %v8231 = vmul.f32 %v8151, %v8194
        %v8232 = vmul.f32 %v8152, %v8194
        %v8233 = vmul.f32 %v8153, %v8194
        %v8234 = vmul.f32 %v8154, %v8199
        %v8235 = vmul.f32 %v8155, %v8199
        %v8236 = vmul.f32 %v8156, %v8199
        %v8237 = vmul.f32 %v8157, %v8199
        %v8238 = vmul.f32 %v8158, %v8204
        %v8239 = vmul.f32 %v8159, %v8204
        %v8240 = vmul.f32 %v8160, %v8204
        %v8241 = vmul.f32 %v8161, %v8204
        %v8242 = vmul.f32 %v8162, %v8209
        %v8243 = vmul.f32 %v8163, %v8209
        %v8244 = vmul.f32 %v8164, %v8209
        %v8245 = vmul.f32 %v8165, %v8209
        %v8246 = vmul.f32 %v8166, %v8214
        %v8247 = vmul.f32 %v8167, %v8214
        %v8248 = vmul.f32 %v8168, %v8214
        %v8249 = vmul.f32 %v8169, %v8214
        %v8250 = vmul.f32 %v8170, %v8219
        %v8251 = vmul.f32 %v8171, %v8219
        %v8252 = vmul.f32 %v8172, %v8219
        %v8253 = vmul.f32 %v8173, %v8219
        %v8254 = vmul.f32 %v8174, %v8224
        %v8255 = vmul.f32 %v8175, %v8224
        %v8256 = vmul.f32 %v8176, %v8224
        %v8257 = vmul.f32 %v8177, %v8224
        %v8258 = vadd.f32 %v8226, %v8230
        %v8259 = vadd.f32 %v8258, %v8234
        %v8260 = vadd.f32 %v8259, %v8238
        %v8261 = vadd.f32 %v8260, %v8242
        %v8262 = vadd.f32 %v8261, %v8246
        %v8263 = vadd.f32 %v8262, %v8250
        %v8264 = vadd.f32 %v8263, %v8254
        %v8265 = vrot.slane %v8264, 4
        %v8266 = vadd.f32 %v8264, %v8265
        %v8267 = vrot.slane %v8266, 2
        %v8268 = vadd.f32 %v8266, %v8267
        %v8269 = vrot.slane %v8268, 1
        %v8270 = vadd.f32 %v8268, %v8269
        %v8271 = vadd.f32 %v8227, %v8231
        %v8272 = vadd.f32 %v8271, %v8235
        %v8273 = vadd.f32 %v8272, %v8239
        %v8274 = vadd.f32 %v8273, %v8243
        %v8275 = vadd.f32 %v8274, %v8247
        %v8276 = vadd.f32 %v8275, %v8251
        %v8277 = vadd.f32 %v8276, %v8255
        %v8278 = vrot.slane %v8277, 4
        %v8279 = vadd.f32 %v8277, %v8278
        %v8280 = vrot.slane %v8279, 2
        %v8281 = vadd.f32 %v8279, %v8280
        %v8282 = vrot.slane %v8281, 1
        %v8283 = vadd.f32 %v8281, %v8282
        %v8284 = vadd.f32 %v8228, %v8232
        %v8285 = vadd.f32 %v8284, %v8236
        %v8286 = vadd.f32 %v8285, %v8240
        %v8287 = vadd.f32 %v8286, %v8244
        %v8288 = vadd.f32 %v8287, %v8248
        %v8289 = vadd.f32 %v8288, %v8252
        %v8290 = vadd.f32 %v8289, %v8256
        %v8291 = vrot.slane %v8290, 4
        %v8292 = vadd.f32 %v8290, %v8291
        %v8293 = vrot.slane %v8292, 2
        %v8294 = vadd.f32 %v8292, %v8293
        %v8295 = vrot.slane %v8294, 1
        %v8296 = vadd.f32 %v8294, %v8295
        %v8297 = vadd.f32 %v8229, %v8233
        %v8298 = vadd.f32 %v8297, %v8237
        %v8299 = vadd.f32 %v8298, %v8241
        %v8300 = vadd.f32 %v8299, %v8245
        %v8301 = vadd.f32 %v8300, %v8249
        %v8302 = vadd.f32 %v8301, %v8253
        %v8303 = vadd.f32 %v8302, %v8257
        %v8304 = vrot.slane %v8303, 4
        %v8305 = vadd.f32 %v8303, %v8304
        %v8306 = vrot.slane %v8305, 2
        %v8307 = vadd.f32 %v8305, %v8306
        %v8308 = vrot.slane %v8307, 1
        %v8309 = vadd.f32 %v8307, %v8308
        %v8310 = vld [vmem:[#allocation2] sm:$0x1]
        %8312 = vset.pattern.permute.xlu0 0
        %8313 = vperm.xlu0 %8312, %v8310
        %v8314 = vpop.permute.xlu0 %8313
        %v8316 = vlaneseq
        %v8317 = vshrl.u32 %v8316, 7
        %v8318 = vsub.s32 0, %v8317
        %v8319 = vrot.slane %v8314, %v8318
        %v8320 = vadd.f32 %v8270, %v8319
        %v8321 = vadd.f32 %v8283, %v8319
        %v8322 = vadd.f32 %v8296, %v8319
        %v8323 = vadd.f32 %v8309, %v8319
        %v8324 = vxor.u32 %v8320, 2147483648
        %v8325 = vxor.u32 %v8321, 2147483648
        %v8326 = vxor.u32 %v8322, 2147483648
        %v8327 = vxor.u32 %v8323, 2147483648
        %v8328 = vmul.f32 %v8324, 1.442695
        %v8329 = vpow.pop %v8328
        %v8330 = vmul.f32 %v8325, 1.442695
        %v8331 = vpow.pop %v8330
        %v8332 = vmul.f32 %v8326, 1.442695
        %v8333 = vpow.pop %v8332
        %v8334 = vmul.f32 %v8327, 1.442695
        %v8335 = vpow.pop %v8334
        %v8336 = vadd.f32 %v8329, 1.0
        %v8337 = vadd.f32 %v8331, 1.0
        %v8338 = vadd.f32 %v8333, 1.0
        %v8339 = vadd.f32 %v8335, 1.0
        %v8340 = vrcp.pop %v8336
        %v8341 = vmul.f32 1.0, %v8340
        %v8342 = vrcp.pop %v8337
        %v8343 = vmul.f32 1.0, %v8342
        %v8344 = vrcp.pop %v8338
        %v8345 = vmul.f32 1.0, %v8344
        %v8346 = vrcp.pop %v8339
        %v8347 = vmul.f32 1.0, %v8346
        %v8352 = vcombine.low %v8341, %v8343
        %v8353 = vcombine.low %v8345, %v8347
        %v8355 = vunpack.c.l.s4 1966171168
        %v8356 = vunpack.c.0.s8 %v8355
        %v8357 = vlaneseq
        %v8358 = vshrl.u32 %v8357, 7
        %v8359 = vsub.s32 %v8356, %v8358
        %v8360 = vrot.slane %v8352, %v8359
        %v8362 = vunpack.c.l.s4 1966171168
        %v8363 = vunpack.c.0.s8 %v8362
        %v8364 = vlaneseq
        %v8365 = vshrl.u32 %v8364, 7
        %v8366 = vsub.s32 %v8363, %v8365
        %v8367 = vrot.slane %v8353, %v8366
        %v8368 = vcombine.low %v8360, %v8367
        %v8370 = vunpack.c.l.s4 1966171168
        %v8371 = vunpack.c.0.s8 %v8370
        %v8372 = vlaneseq
        %v8373 = vshrl.u32 %v8372, 7
        %v8374 = vsub.s32 %v8371, %v8373
        %v8375 = vrot.slane %v8368, %v8374
        %v8377 = vlaneseq
        %vm8378 = vcmp.ge.s32.totalorder %v8377, 0
        %vm8379 = vcmp.lt.s32.totalorder %v8377, 512
        %vm8380 = vmand %vm8378, %vm8379
        %8381 = vst.msk [vmem:[%s286] sm:$0xf] %vm8380, %v8375
        %s8382 = smul.u32 4, %s19
        %p8383 = scmp.lt.s32.totalorder %s8382, 7
        %s8384 = scalar_select %p8383, %s8382, 7
        %s8385 = scalar_lea.vmem %s6, %s8384
        // Predicated region
        $region68: #{generator_forward.1} parent=62 // pred_check
          %p8386 = pneg %p168
        $region69: #{generator_forward.1} parent=62 // pred_check_branch
          %8388 = sbr.rel (%p8386) target = $region71
        $region70: #{generator_forward.1} parent=62 // pred_region
          %s8389 = smul.u32 4, %s19
        $region71: #{generator_forward.1} parent=62 // pred_fallthru
          _
      $region63: #{generator_forward.1} parent=5 // pred_fallthru
        _
      %p8390 = scmp.le.s32.totalorder 2, %s14
      // Predicated region
      $region72: #{generator_forward.1} parent=5 // pred_check
        %p8391 = pneg %p8390
      $region73: #{generator_forward.1} parent=5 // pred_check_branch
        %8393 = sbr.rel (%p8391) target = $region75
      $region74: #{generator_forward.1} parent=5 // pred_region
        %s8394 = ssub.s32 %s14, 2
        // Predicated region
        $region76: #{generator_forward.1} parent=74 // pred_check
          %p8395 = pneg %p174
        $region77: #{generator_forward.1} parent=74 // pred_check_branch
          %8397 = sbr.rel (%p8395) target = $region79
        $region78: #{generator_forward.1} parent=74 // pred_region
          %s8398 = smul.u32 4, %s20
          %p8399 = scmp.lt.s32.totalorder %s8398, 7
          %s8400 = scalar_select %p8399, %s8398, 7
          %s8401 = scalar_lea.vmem %s6, %s8400
        $region79: #{generator_forward.1} parent=74 // pred_fallthru
          _
      $region75: #{generator_forward.1} parent=5 // pred_fallthru
        _
    $region6: #{generator_forward.1} parent=1 // loop_footer
      %s18 = sadd.s32 1, %s14
    $region7: #{generator_forward.1} parent=1 // loop_footer_branch
      %13 = sbr.rel target = $region3
    $region8: #{generator_forward.1} parent=1 // loop_exit
      _

</llo_original>
